<compile_context>
chip_gen: v7x
topology: tpu7x:2x2x1
jax: 0.10.0
libtpu: 0.0.40
codegen_flags: <defaults>
</compile_context>

<pallas_src>
import math
import functools

import jax
import jax.numpy as jnp
from jax import lax
from jax.experimental import pallas as pl
from jax.experimental.pallas import tpu as pltpu  # noqa: F401  (TPU backend)

# ----------------------------- model config ---------------------------------
N = 2            # batch
S = 8            # sequence length
HIDDEN = 32      # hidden_dim (E)
FF = 64          # ff_dim
HEADS = 4        # num_heads
LAYERS = 2       # num_layers
EPS = 1e-5       # nn.LayerNorm default eps
NEG_BIG = -1e30  # finite "minus infinity" for the additive attention mask


# ------------------------------- kernel -------------------------------------
def _layer_norm(x, gamma, beta):
    mean = jnp.mean(x, axis=-1, keepdims=True)
    var = jnp.mean((x - mean) ** 2, axis=-1, keepdims=True)
    return (x - mean) * lax.rsqrt(var + EPS) * gamma + beta


def fused_decoder_kernel(x_ref, bias_ref,
                         wqkv_ref, bqkv_ref, wo_ref, bo_ref, ln1g_ref, ln1b_ref,
                         w1_ref, b1_ref, w2_ref, b2_ref, ln2g_ref, ln2b_ref,
                         o_ref, *, num_layers, num_heads, batch, seq, hidden):
    """Whole decoder in one kernel invocation.

    x_ref    : (N*S, E)        unscaled embeddings
    bias_ref : (N, S, S)       additive attention mask (0 keep / -1e30 masked)
    wqkv_ref : (L*H*3, E, dh)  per-layer/head/{q,k,v} projection weights
    bqkv_ref : (L*H*3, 1, dh)  matching biases
    wo_ref   : (L*H, dh, E)    output projection rows for each head
    bo_ref   : (L, 1, E)       output projection bias
    w1/b1    : (L, E, FF) / (L, 1, FF)      FFN layer 1
    w2/b2    : (L, FF, E) / (L, 1, E)       FFN layer 2
    ln*      : (L, 1, E)       LayerNorm affine params
    o_ref    : (N*S, E)
    """
    dh = hidden // num_heads
    scale = 1.0 / math.sqrt(dh)

    # embedding scale folded into the kernel; dropout layers are identity (eval).
    x = x_ref[...] * jnp.float32(math.sqrt(hidden))            # (N*S, E)

    for l in range(num_layers):
        # ---------- CommonBlock: multi-head self-attention + residual + LN ----------
        per_batch = []
        for n in range(batch):
            x_n = x[n * seq:(n + 1) * seq, :]                  # (S, E) aligned sublane slice
            bias_n = bias_ref[n]                               # (S, S) additive mask
            acc = jnp.zeros((seq, hidden), jnp.float32)
            for h in range(num_heads):
                qi = (l * num_heads + h) * 3                   # static ref index
                q = jnp.dot(x_n, wqkv_ref[qi + 0],
                            preferred_element_type=jnp.float32) + bqkv_ref[qi + 0]
                k = jnp.dot(x_n, wqkv_ref[qi + 1],
                            preferred_element_type=jnp.float32) + bqkv_ref[qi + 1]
                v = jnp.dot(x_n, wqkv_ref[qi + 2],
                            preferred_element_type=jnp.float32) + bqkv_ref[qi + 2]
                # q @ k^T without materializing a transpose.
                logits = lax.dot_general(
                    q, k, (((1,), (1,)), ((), ())),
                    preferred_element_type=jnp.float32) * scale + bias_n
                m = jnp.max(logits, axis=-1, keepdims=True)
                p = jnp.exp(logits - m)
                inv = pl.reciprocal(jnp.sum(p, axis=-1, keepdims=True), approx=True)
                head_out = jnp.dot(p * inv, v,
                                   preferred_element_type=jnp.float32)     # (S, dh)
                # Fold head h's rows of the output projection in; no lane concat.
                acc = acc + jnp.dot(head_out, wo_ref[l * num_heads + h],
                                    preferred_element_type=jnp.float32)    # (S, E)
            per_batch.append(acc)
        mha = jnp.concatenate(per_batch, axis=0) + bo_ref[l]   # (N*S, E), sublane concat
        x = _layer_norm(x + mha, ln1g_ref[l], ln1b_ref[l])

        # ---------- OutputTokenBlock: FFN + residual + LN (batched over N*S) ----------
        h1 = jnp.dot(x, w1_ref[l], preferred_element_type=jnp.float32) + b1_ref[l]
        h1 = jnp.maximum(h1, 0.0)
        ff = jnp.dot(h1, w2_ref[l], preferred_element_type=jnp.float32) + b2_ref[l]
        x = _layer_norm(x + ff, ln2g_ref[l], ln2b_ref[l])

    # single lane-dense-as-possible store at the very end
    o_ref[...] = x


# ------------------------------ wrapper --------------------------------------
@jax.jit
def output_token_decoder_forward(x_emb, params, src_padding_mask, future_mask):
    """x_emb: (N, S, E) combined embeddings from the EmbeddingsManager."""
    # TODO(synk): EmbeddingsManager.get_batch_combined_embeddings parses
    # io_parser_output dicts + task types; here we take its (N, S, E) output
    # directly as the kernel input.
    n, s, e = x_emb.shape
    x2d = x_emb.reshape(n * s, e).astype(jnp.float32)

    # Additive attention-mask bias (0 where visible, -1e30 where masked); computed
    # once per forward, outside the layer loop.
    keep = (src_padding_mask.astype(jnp.float32)[:, None, :]
            * future_mask.astype(jnp.float32)[None, :, :])          # (N, S, S)
    bias = (1.0 - keep) * jnp.float32(NEG_BIG)

    kernel = functools.partial(fused_decoder_kernel,
                               num_layers=LAYERS, num_heads=HEADS,
                               batch=n, seq=s, hidden=e)
    out2d = pl.pallas_call(
        kernel,
        out_shape=jax.ShapeDtypeStruct((n * s, e), jnp.float32),
    )(x2d, bias,
      params["wqkv"], params["bqkv"], params["wo"], params["bo"],
      params["ln1_g"], params["ln1_b"],
      params["w1"], params["b1"], params["w2"], params["b2"],
      params["ln2_g"], params["ln2_b"])
    return out2d.reshape(n, s, e)


# --------------------------- pure-JAX reference ------------------------------
def _ln_ref(y, g, b):
    mu = y.mean(-1, keepdims=True)
    var = ((y - mu) ** 2).mean(-1, keepdims=True)
    return (y - mu) / jnp.sqrt(var + EPS) * g + b


def _ref_forward(x_emb, p, src_padding_mask, future_mask):
    n, s, e = x_emb.shape
    dh = e // HEADS
    x = x_emb * math.sqrt(e)
    keep = (src_padding_mask.astype(jnp.float32)[:, None, :]
            * future_mask.astype(jnp.float32)[None, :, :]) > 0.0    # (N, S, S)
    wqkv = p["wqkv"].reshape(LAYERS, HEADS, 3, e, dh)
    bqkv = p["bqkv"].reshape(LAYERS, HEADS, 3, dh)
    wo = p["wo"].reshape(LAYERS, HEADS, dh, e)
    for l in range(LAYERS):
        q = jnp.einsum("nse,hed->nhsd", x, wqkv[l, :, 0]) + bqkv[l, :, 0][None, :, None, :]
        k = jnp.einsum("nse,hed->nhsd", x, wqkv[l, :, 1]) + bqkv[l, :, 1][None, :, None, :]
        v = jnp.einsum("nse,hed->nhsd", x, wqkv[l, :, 2]) + bqkv[l, :, 2][None, :, None, :]
        logits = jnp.einsum("nhsd,nhtd->nhst", q, k) / math.sqrt(dh)
        logits = jnp.where(keep[:, None], logits, -jnp.inf)
        attn = jax.nn.softmax(logits, axis=-1)
        heads = jnp.einsum("nhst,nhtd->nhsd", attn, v)
        mha = jnp.einsum("nhsd,hde->nse", heads, wo[l]) + p["bo"][l]
        x = _ln_ref(x + mha, p["ln1_g"][l], p["ln1_b"][l])

        h1 = jnp.maximum(x @ p["w1"][l] + p["b1"][l], 0.0)
        ff = h1 @ p["w2"][l] + p["b2"][l]
        x = _ln_ref(x + ff, p["ln2_g"][l], p["ln2_b"][l])
    return x


# ------------------------------- init ----------------------------------------
def _xavier(key, shape):
    fan_in, fan_out = shape
    limit = math.sqrt(6.0 / (fan_in + fan_out))
    return jax.random.uniform(key, shape, jnp.float32, -limit, limit)


def init_params(key):
    """Per-layer weights, reorganized host-side into kernel-friendly stacks."""
    dh = HIDDEN // HEADS
    wqkv_l, bqkv_l, wo_l = [], [], []
    bo_l, ln1g_l, ln1b_l = [], [], []
    w1_l, b1_l, w2_l, b2_l, ln2g_l, ln2b_l = [], [], [], [], [], []
    for _ in range(LAYERS):
        key, k1, k2, k3, k4, k5, k6, k7, k8 = jax.random.split(key, 9)
        # Logical layouts (columns of wqkv grouped per head as [q_h | k_h | v_h]).
        wqkv = _xavier(k1, (HIDDEN, 3 * HIDDEN))
        bqkv = jax.random.uniform(k5, (3 * HIDDEN,), jnp.float32, -0.1, 0.1)
        wo = _xavier(k2, (HIDDEN, HIDDEN))
        bo = jax.random.uniform(k6, (1, HIDDEN), jnp.float32, -0.1, 0.1)
        w1 = _xavier(k3, (HIDDEN, FF))
        b1 = jax.random.uniform(k7, (1, FF), jnp.float32, -0.1, 0.1)
        w2 = _xavier(k4, (FF, HIDDEN))
        b2 = jax.random.uniform(k8, (1, HIDDEN), jnp.float32, -0.1, 0.1)

        # Split qkv/out projections per head so the kernel only needs leading-dim indexing.
        wqkv_l.append(wqkv.reshape(HIDDEN, HEADS, 3, dh).transpose(1, 2, 0, 3))  # (H,3,E,dh)
        bqkv_l.append(bqkv.reshape(HEADS, 3, 1, dh))                             # (H,3,1,dh)
        wo_l.append(wo.reshape(HEADS, dh, HIDDEN))                               # (H,dh,E)
        bo_l.append(bo)
        ln1g_l.append(jnp.ones((1, HIDDEN), jnp.float32))
        ln1b_l.append(jnp.zeros((1, HIDDEN), jnp.float32))
        w1_l.append(w1); b1_l.append(b1); w2_l.append(w2); b2_l.append(b2)
        ln2g_l.append(jnp.ones((1, HIDDEN), jnp.float32))
        ln2b_l.append(jnp.zeros((1, HIDDEN), jnp.float32))

    return {
        "wqkv": jnp.stack(wqkv_l).reshape(LAYERS * HEADS * 3, HIDDEN, dh),
        "bqkv": jnp.stack(bqkv_l).reshape(LAYERS * HEADS * 3, 1, dh),
        "wo": jnp.stack(wo_l).reshape(LAYERS * HEADS, dh, HIDDEN),
        "bo": jnp.stack(bo_l),          # (L, 1, E)
        "ln1_g": jnp.stack(ln1g_l),     # (L, 1, E)
        "ln1_b": jnp.stack(ln1b_l),
        "w1": jnp.stack(w1_l),          # (L, E, FF)
        "b1": jnp.stack(b1_l),          # (L, 1, FF)
        "w2": jnp.stack(w2_l),          # (L, FF, E)
        "b2": jnp.stack(b2_l),          # (L, 1, E)
        "ln2_g": jnp.stack(ln2g_l),
        "ln2_b": jnp.stack(ln2b_l),
    }


# -------------------------------- main ----------------------------------------
if __name__ == "__main__":
    key = jax.random.PRNGKey(0)
    key, k_emb = jax.random.split(key)
    params = init_params(key)

    # "Embeddings manager" output: (N, S, E)
    x_emb = jax.random.normal(k_emb, (N, S, HIDDEN), jnp.float32)

    # src padding mask (N, S): 1 = real token, 0 = pad (pad last token of batch 1)
    src_padding_mask = jnp.ones((N, S), jnp.float32).at[1, S - 1].set(0.0)
    # future mask (S, S): lower triangular, 1 = visible
    future_mask = jnp.tril(jnp.ones((S, S), jnp.float32))

    out = output_token_decoder_forward(x_emb, params, src_padding_mask, future_mask)
    out = jax.block_until_ready(out)

    ref = _ref_forward(x_emb, params, src_padding_mask, future_mask)
    assert out.shape == (N, S, HIDDEN)
    # Tolerance is looser than pure-f32 because the softmax denominator uses the
    # EUP approximate reciprocal (pl.reciprocal(..., approx=True)).
    assert jnp.allclose(out, ref, atol=5e-3, rtol=5e-3), "mismatch vs pure-JAX reference"

    print("KERNEL_OK")
</pallas_src>

<mosaic_0001>
module attributes {stable_mosaic.version = 11 : i64} {
  func.func @fused_decoder_kernel(%arg0: memref<16x32xf32, #tpu.memory_space<vmem>>, %arg1: memref<2x8x8xf32, #tpu.memory_space<vmem>>, %arg2: memref<24x32x8xf32, #tpu.memory_space<vmem>>, %arg3: memref<24x1x8xf32, #tpu.memory_space<vmem>>, %arg4: memref<8x8x32xf32, #tpu.memory_space<vmem>>, %arg5: memref<2x1x32xf32, #tpu.memory_space<vmem>>, %arg6: memref<2x1x32xf32, #tpu.memory_space<vmem>>, %arg7: memref<2x1x32xf32, #tpu.memory_space<vmem>>, %arg8: memref<2x32x64xf32, #tpu.memory_space<vmem>>, %arg9: memref<2x1x64xf32, #tpu.memory_space<vmem>>, %arg10: memref<2x64x32xf32, #tpu.memory_space<vmem>>, %arg11: memref<2x1x32xf32, #tpu.memory_space<vmem>>, %arg12: memref<2x1x32xf32, #tpu.memory_space<vmem>>, %arg13: memref<2x1x32xf32, #tpu.memory_space<vmem>>, %arg14: memref<16x32xf32, #tpu.memory_space<vmem>>) attributes {dimension_semantics = [], scalar_prefetch = 0 : i64, scratch_operands = 0 : i64, tpu.core_type = #tpu.core_type<tc>} {
    %c0 = arith.constant 0 : index
    %c0_0 = arith.constant 0 : index
    %0 = vector.load %arg0[%c0, %c0_0] : memref<16x32xf32, #tpu.memory_space<vmem>>, vector<16x32xf32>
    %cst = arith.constant 5.65685415 : f32
    %1 = vector.broadcast %cst : f32 to vector<16x32xf32>
    %2 = arith.mulf %0, %1 : vector<16x32xf32>
    %3 = vector.extract_strided_slice %2 {offsets = [0, 0], sizes = [8, 32], strides = [1, 1]} : vector<16x32xf32> to vector<8x32xf32>
    %c0_1 = arith.constant 0 : index
    %c0_2 = arith.constant 0 : index
    %c0_3 = arith.constant 0 : index
    %4 = vector.load %arg1[%c0_1, %c0_2, %c0_3] : memref<2x8x8xf32, #tpu.memory_space<vmem>>, vector<1x8x8xf32>
    %5 = vector.shape_cast %4 : vector<1x8x8xf32> to vector<8x8xf32>
    %cst_4 = arith.constant 0.000000e+00 : f32
    %6 = vector.broadcast %cst_4 : f32 to vector<8x32xf32>
    %c0_5 = arith.constant 0 : index
    %c0_6 = arith.constant 0 : index
    %c0_7 = arith.constant 0 : index
    %7 = vector.load %arg2[%c0_5, %c0_6, %c0_7] : memref<24x32x8xf32, #tpu.memory_space<vmem>>, vector<1x32x8xf32>
    %8 = vector.shape_cast %7 : vector<1x32x8xf32> to vector<32x8xf32>
    %cst_8 = arith.constant dense<0.000000e+00> : vector<8x8xf32>
    %9 = tpu.matmul %3, %8, %cst_8 {dimension_numbers = #tpu.dot_dimension_numbers<[1], [0], [0], [1], [0, 0, 1, 1], [], []>} : vector<8x32xf32>, vector<32x8xf32>, vector<8x8xf32> -> vector<8x8xf32>
    %c0_9 = arith.constant 0 : index
    %c0_10 = arith.constant 0 : index
    %c0_11 = arith.constant 0 : index
    %10 = vector.load %arg3[%c0_9, %c0_10, %c0_11] : memref<24x1x8xf32, #tpu.memory_space<vmem>>, vector<1x1x8xf32>
    %11 = vector.shape_cast %10 : vector<1x1x8xf32> to vector<1x8xf32>
    %12 = vector.broadcast %11 : vector<1x8xf32> to vector<8x8xf32>
    %13 = arith.addf %9, %12 : vector<8x8xf32>
    %c1 = arith.constant 1 : index
    %c0_12 = arith.constant 0 : index
    %c0_13 = arith.constant 0 : index
    %14 = vector.load %arg2[%c1, %c0_12, %c0_13] : memref<24x32x8xf32, #tpu.memory_space<vmem>>, vector<1x32x8xf32>
    %15 = vector.shape_cast %14 : vector<1x32x8xf32> to vector<32x8xf32>
    %cst_14 = arith.constant dense<0.000000e+00> : vector<8x8xf32>
    %16 = tpu.matmul %3, %15, %cst_14 {dimension_numbers = #tpu.dot_dimension_numbers<[1], [0], [0], [1], [0, 0, 1, 1], [], []>} : vector<8x32xf32>, vector<32x8xf32>, vector<8x8xf32> -> vector<8x8xf32>
    %c1_15 = arith.constant 1 : index
    %c0_16 = arith.constant 0 : index
    %c0_17 = arith.constant 0 : index
    %17 = vector.load %arg3[%c1_15, %c0_16, %c0_17] : memref<24x1x8xf32, #tpu.memory_space<vmem>>, vector<1x1x8xf32>
    %18 = vector.shape_cast %17 : vector<1x1x8xf32> to vector<1x8xf32>
    %19 = vector.broadcast %18 : vector<1x8xf32> to vector<8x8xf32>
    %20 = arith.addf %16, %19 : vector<8x8xf32>
    %c2 = arith.constant 2 : index
    %c0_18 = arith.constant 0 : index
    %c0_19 = arith.constant 0 : index
    %21 = vector.load %arg2[%c2, %c0_18, %c0_19] : memref<24x32x8xf32, #tpu.memory_space<vmem>>, vector<1x32x8xf32>
    %22 = vector.shape_cast %21 : vector<1x32x8xf32> to vector<32x8xf32>
    %cst_20 = arith.constant dense<0.000000e+00> : vector<8x8xf32>
    %23 = tpu.matmul %3, %22, %cst_20 {dimension_numbers = #tpu.dot_dimension_numbers<[1], [0], [0], [1], [0, 0, 1, 1], [], []>} : vector<8x32xf32>, vector<32x8xf32>, vector<8x8xf32> -> vector<8x8xf32>
    %c2_21 = arith.constant 2 : index
    %c0_22 = arith.constant 0 : index
    %c0_23 = arith.constant 0 : index
    %24 = vector.load %arg3[%c2_21, %c0_22, %c0_23] : memref<24x1x8xf32, #tpu.memory_space<vmem>>, vector<1x1x8xf32>
    %25 = vector.shape_cast %24 : vector<1x1x8xf32> to vector<1x8xf32>
    %26 = vector.broadcast %25 : vector<1x8xf32> to vector<8x8xf32>
    %27 = arith.addf %23, %26 : vector<8x8xf32>
    %cst_24 = arith.constant dense<0.000000e+00> : vector<8x8xf32>
    %28 = tpu.matmul %13, %20, %cst_24 {dimension_numbers = #tpu.dot_dimension_numbers<[1], [1], [0], [0], [0, 0, 1, 0], [], []>} : vector<8x8xf32>, vector<8x8xf32>, vector<8x8xf32> -> vector<8x8xf32>
    %cst_25 = arith.constant 0.353553385 : f32
    %29 = vector.broadcast %cst_25 : f32 to vector<8x8xf32>
    %30 = arith.mulf %28, %29 : vector<8x8xf32>
    %31 = arith.addf %30, %5 : vector<8x8xf32>
    %cst_26 = arith.constant dense<0xFF800000> : vector<8xf32>
    %32 = vector.multi_reduction <maximumf>, %31, %cst_26 [1] : vector<8x8xf32> to vector<8xf32>
    %33 = vector.shape_cast %32 : vector<8xf32> to vector<8x1xf32>
    %34 = vector.broadcast %33 : vector<8x1xf32> to vector<8x8xf32>
    %35 = arith.subf %31, %34 : vector<8x8xf32>
    %36 = math.exp %35 : vector<8x8xf32>
    %cst_27 = arith.constant dense<0.000000e+00> : vector<8xf32>
    %37 = vector.multi_reduction <add>, %36, %cst_27 [1] : vector<8x8xf32> to vector<8xf32>
    %38 = vector.shape_cast %37 : vector<8xf32> to vector<8x1xf32>
    %39 = tpu.reciprocal %38 {approx = true} : vector<8x1xf32> -> vector<8x1xf32>
    %40 = vector.broadcast %39 : vector<8x1xf32> to vector<8x8xf32>
    %41 = arith.mulf %36, %40 : vector<8x8xf32>
    %cst_28 = arith.constant dense<0.000000e+00> : vector<8x8xf32>
    %42 = tpu.matmul %41, %27, %cst_28 {dimension_numbers = #tpu.dot_dimension_numbers<[1], [0], [0], [1], [0, 0, 1, 1], [], []>} : vector<8x8xf32>, vector<8x8xf32>, vector<8x8xf32> -> vector<8x8xf32>
    %c0_29 = arith.constant 0 : index
    %c0_30 = arith.constant 0 : index
    %c0_31 = arith.constant 0 : index
    %43 = vector.load %arg4[%c0_29, %c0_30, %c0_31] : memref<8x8x32xf32, #tpu.memory_space<vmem>>, vector<1x8x32xf32>
    %44 = vector.shape_cast %43 : vector<1x8x32xf32> to vector<8x32xf32>
    %cst_32 = arith.constant dense<0.000000e+00> : vector<8x32xf32>
    %45 = tpu.matmul %42, %44, %cst_32 {dimension_numbers = #tpu.dot_dimension_numbers<[1], [0], [0], [1], [0, 0, 1, 1], [], []>} : vector<8x8xf32>, vector<8x32xf32>, vector<8x32xf32> -> vector<8x32xf32>
    %46 = arith.addf %6, %45 : vector<8x32xf32>
    %c3 = arith.constant 3 : index
    %c0_33 = arith.constant 0 : index
    %c0_34 = arith.constant 0 : index
    %47 = vector.load %arg2[%c3, %c0_33, %c0_34] : memref<24x32x8xf32, #tpu.memory_space<vmem>>, vector<1x32x8xf32>
    %48 = vector.shape_cast %47 : vector<1x32x8xf32> to vector<32x8xf32>
    %cst_35 = arith.constant dense<0.000000e+00> : vector<8x8xf32>
    %49 = tpu.matmul %3, %48, %cst_35 {dimension_numbers = #tpu.dot_dimension_numbers<[1], [0], [0], [1], [0, 0, 1, 1], [], []>} : vector<8x32xf32>, vector<32x8xf32>, vector<8x8xf32> -> vector<8x8xf32>
    %c3_36 = arith.constant 3 : index
    %c0_37 = arith.constant 0 : index
    %c0_38 = arith.constant 0 : index
    %50 = vector.load %arg3[%c3_36, %c0_37, %c0_38] : memref<24x1x8xf32, #tpu.memory_space<vmem>>, vector<1x1x8xf32>
    %51 = vector.shape_cast %50 : vector<1x1x8xf32> to vector<1x8xf32>
    %52 = vector.broadcast %51 : vector<1x8xf32> to vector<8x8xf32>
    %53 = arith.addf %49, %52 : vector<8x8xf32>
    %c4 = arith.constant 4 : index
    %c0_39 = arith.constant 0 : index
    %c0_40 = arith.constant 0 : index
    %54 = vector.load %arg2[%c4, %c0_39, %c0_40] : memref<24x32x8xf32, #tpu.memory_space<vmem>>, vector<1x32x8xf32>
    %55 = vector.shape_cast %54 : vector<1x32x8xf32> to vector<32x8xf32>
    %cst_41 = arith.constant dense<0.000000e+00> : vector<8x8xf32>
    %56 = tpu.matmul %3, %55, %cst_41 {dimension_numbers = #tpu.dot_dimension_numbers<[1], [0], [0], [1], [0, 0, 1, 1], [], []>} : vector<8x32xf32>, vector<32x8xf32>, vector<8x8xf32> -> vector<8x8xf32>
    %c4_42 = arith.constant 4 : index
    %c0_43 = arith.constant 0 : index
    %c0_44 = arith.constant 0 : index
    %57 = vector.load %arg3[%c4_42, %c0_43, %c0_44] : memref<24x1x8xf32, #tpu.memory_space<vmem>>, vector<1x1x8xf32>
    %58 = vector.shape_cast %57 : vector<1x1x8xf32> to vector<1x8xf32>
    %59 = vector.broadcast %58 : vector<1x8xf32> to vector<8x8xf32>
    %60 = arith.addf %56, %59 : vector<8x8xf32>
    %c5 = arith.constant 5 : index
    %c0_45 = arith.constant 0 : index
    %c0_46 = arith.constant 0 : index
    %61 = vector.load %arg2[%c5, %c0_45, %c0_46] : memref<24x32x8xf32, #tpu.memory_space<vmem>>, vector<1x32x8xf32>
    %62 = vector.shape_cast %61 : vector<1x32x8xf32> to vector<32x8xf32>
    %cst_47 = arith.constant dense<0.000000e+00> : vector<8x8xf32>
    %63 = tpu.matmul %3, %62, %cst_47 {dimension_numbers = #tpu.dot_dimension_numbers<[1], [0], [0], [1], [0, 0, 1, 1], [], []>} : vector<8x32xf32>, vector<32x8xf32>, vector<8x8xf32> -> vector<8x8xf32>
    %c5_48 = arith.constant 5 : index
    %c0_49 = arith.constant 0 : index
    %c0_50 = arith.constant 0 : index
    %64 = vector.load %arg3[%c5_48, %c0_49, %c0_50] : memref<24x1x8xf32, #tpu.memory_space<vmem>>, vector<1x1x8xf32>
    %65 = vector.shape_cast %64 : vector<1x1x8xf32> to vector<1x8xf32>
    %66 = vector.broadcast %65 : vector<1x8xf32> to vector<8x8xf32>
    %67 = arith.addf %63, %66 : vector<8x8xf32>
    %cst_51 = arith.constant dense<0.000000e+00> : vector<8x8xf32>
    %68 = tpu.matmul %53, %60, %cst_51 {dimension_numbers = #tpu.dot_dimension_numbers<[1], [1], [0], [0], [0, 0, 1, 0], [], []>} : vector<8x8xf32>, vector<8x8xf32>, vector<8x8xf32> -> vector<8x8xf32>
    %cst_52 = arith.constant 0.353553385 : f32
    %69 = vector.broadcast %cst_52 : f32 to vector<8x8xf32>
    %70 = arith.mulf %68, %69 : vector<8x8xf32>
    %71 = arith.addf %70, %5 : vector<8x8xf32>
    %cst_53 = arith.constant dense<0xFF800000> : vector<8xf32>
    %72 = vector.multi_reduction <maximumf>, %71, %cst_53 [1] : vector<8x8xf32> to vector<8xf32>
    %73 = vector.shape_cast %72 : vector<8xf32> to vector<8x1xf32>
    %74 = vector.broadcast %73 : vector<8x1xf32> to vector<8x8xf32>
    %75 = arith.subf %71, %74 : vector<8x8xf32>
    %76 = math.exp %75 : vector<8x8xf32>
    %cst_54 = arith.constant dense<0.000000e+00> : vector<8xf32>
    %77 = vector.multi_reduction <add>, %76, %cst_54 [1] : vector<8x8xf32> to vector<8xf32>
    %78 = vector.shape_cast %77 : vector<8xf32> to vector<8x1xf32>
    %79 = tpu.reciprocal %78 {approx = true} : vector<8x1xf32> -> vector<8x1xf32>
    %80 = vector.broadcast %79 : vector<8x1xf32> to vector<8x8xf32>
    %81 = arith.mulf %76, %80 : vector<8x8xf32>
    %cst_55 = arith.constant dense<0.000000e+00> : vector<8x8xf32>
    %82 = tpu.matmul %81, %67, %cst_55 {dimension_numbers = #tpu.dot_dimension_numbers<[1], [0], [0], [1], [0, 0, 1, 1], [], []>} : vector<8x8xf32>, vector<8x8xf32>, vector<8x8xf32> -> vector<8x8xf32>
    %c1_56 = arith.constant 1 : index
    %c0_57 = arith.constant 0 : index
    %c0_58 = arith.constant 0 : index
    %83 = vector.load %arg4[%c1_56, %c0_57, %c0_58] : memref<8x8x32xf32, #tpu.memory_space<vmem>>, vector<1x8x32xf32>
    %84 = vector.shape_cast %83 : vector<1x8x32xf32> to vector<8x32xf32>
    %cst_59 = arith.constant dense<0.000000e+00> : vector<8x32xf32>
    %85 = tpu.matmul %82, %84, %cst_59 {dimension_numbers = #tpu.dot_dimension_numbers<[1], [0], [0], [1], [0, 0, 1, 1], [], []>} : vector<8x8xf32>, vector<8x32xf32>, vector<8x32xf32> -> vector<8x32xf32>
    %86 = arith.addf %46, %85 : vector<8x32xf32>
    %c6 = arith.constant 6 : index
    %c0_60 = arith.constant 0 : index
    %c0_61 = arith.constant 0 : index
    %87 = vector.load %arg2[%c6, %c0_60, %c0_61] : memref<24x32x8xf32, #tpu.memory_space<vmem>>, vector<1x32x8xf32>
    %88 = vector.shape_cast %87 : vector<1x32x8xf32> to vector<32x8xf32>
    %cst_62 = arith.constant dense<0.000000e+00> : vector<8x8xf32>
    %89 = tpu.matmul %3, %88, %cst_62 {dimension_numbers = #tpu.dot_dimension_numbers<[1], [0], [0], [1], [0, 0, 1, 1], [], []>} : vector<8x32xf32>, vector<32x8xf32>, vector<8x8xf32> -> vector<8x8xf32>
    %c6_63 = arith.constant 6 : index
    %c0_64 = arith.constant 0 : index
    %c0_65 = arith.constant 0 : index
    %90 = vector.load %arg3[%c6_63, %c0_64, %c0_65] : memref<24x1x8xf32, #tpu.memory_space<vmem>>, vector<1x1x8xf32>
    %91 = vector.shape_cast %90 : vector<1x1x8xf32> to vector<1x8xf32>
    %92 = vector.broadcast %91 : vector<1x8xf32> to vector<8x8xf32>
    %93 = arith.addf %89, %92 : vector<8x8xf32>
    %c7 = arith.constant 7 : index
    %c0_66 = arith.constant 0 : index
    %c0_67 = arith.constant 0 : index
    %94 = vector.load %arg2[%c7, %c0_66, %c0_67] : memref<24x32x8xf32, #tpu.memory_space<vmem>>, vector<1x32x8xf32>
    %95 = vector.shape_cast %94 : vector<1x32x8xf32> to vector<32x8xf32>
    %cst_68 = arith.constant dense<0.000000e+00> : vector<8x8xf32>
    %96 = tpu.matmul %3, %95, %cst_68 {dimension_numbers = #tpu.dot_dimension_numbers<[1], [0], [0], [1], [0, 0, 1, 1], [], []>} : vector<8x32xf32>, vector<32x8xf32>, vector<8x8xf32> -> vector<8x8xf32>
    %c7_69 = arith.constant 7 : index
    %c0_70 = arith.constant 0 : index
    %c0_71 = arith.constant 0 : index
    %97 = vector.load %arg3[%c7_69, %c0_70, %c0_71] : memref<24x1x8xf32, #tpu.memory_space<vmem>>, vector<1x1x8xf32>
    %98 = vector.shape_cast %97 : vector<1x1x8xf32> to vector<1x8xf32>
    %99 = vector.broadcast %98 : vector<1x8xf32> to vector<8x8xf32>
    %100 = arith.addf %96, %99 : vector<8x8xf32>
    %c8 = arith.constant 8 : index
    %c0_72 = arith.constant 0 : index
    %c0_73 = arith.constant 0 : index
    %101 = vector.load %arg2[%c8, %c0_72, %c0_73] : memref<24x32x8xf32, #tpu.memory_space<vmem>>, vector<1x32x8xf32>
    %102 = vector.shape_cast %101 : vector<1x32x8xf32> to vector<32x8xf32>
    %cst_74 = arith.constant dense<0.000000e+00> : vector<8x8xf32>
    %103 = tpu.matmul %3, %102, %cst_74 {dimension_numbers = #tpu.dot_dimension_numbers<[1], [0], [0], [1], [0, 0, 1, 1], [], []>} : vector<8x32xf32>, vector<32x8xf32>, vector<8x8xf32> -> vector<8x8xf32>
    %c8_75 = arith.constant 8 : index
    %c0_76 = arith.constant 0 : index
    %c0_77 = arith.constant 0 : index
    %104 = vector.load %arg3[%c8_75, %c0_76, %c0_77] : memref<24x1x8xf32, #tpu.memory_space<vmem>>, vector<1x1x8xf32>
    %105 = vector.shape_cast %104 : vector<1x1x8xf32> to vector<1x8xf32>
    %106 = vector.broadcast %105 : vector<1x8xf32> to vector<8x8xf32>
    %107 = arith.addf %103, %106 : vector<8x8xf32>
    %cst_78 = arith.constant dense<0.000000e+00> : vector<8x8xf32>
    %108 = tpu.matmul %93, %100, %cst_78 {dimension_numbers = #tpu.dot_dimension_numbers<[1], [1], [0], [0], [0, 0, 1, 0], [], []>} : vector<8x8xf32>, vector<8x8xf32>, vector<8x8xf32> -> vector<8x8xf32>
    %cst_79 = arith.constant 0.353553385 : f32
    %109 = vector.broadcast %cst_79 : f32 to vector<8x8xf32>
    %110 = arith.mulf %108, %109 : vector<8x8xf32>
    %111 = arith.addf %110, %5 : vector<8x8xf32>
    %cst_80 = arith.constant dense<0xFF800000> : vector<8xf32>
    %112 = vector.multi_reduction <maximumf>, %111, %cst_80 [1] : vector<8x8xf32> to vector<8xf32>
    %113 = vector.shape_cast %112 : vector<8xf32> to vector<8x1xf32>
    %114 = vector.broadcast %113 : vector<8x1xf32> to vector<8x8xf32>
    %115 = arith.subf %111, %114 : vector<8x8xf32>
    %116 = math.exp %115 : vector<8x8xf32>
    %cst_81 = arith.constant dense<0.000000e+00> : vector<8xf32>
    %117 = vector.multi_reduction <add>, %116, %cst_81 [1] : vector<8x8xf32> to vector<8xf32>
    %118 = vector.shape_cast %117 : vector<8xf32> to vector<8x1xf32>
    %119 = tpu.reciprocal %118 {approx = true} : vector<8x1xf32> -> vector<8x1xf32>
    %120 = vector.broadcast %119 : vector<8x1xf32> to vector<8x8xf32>
    %121 = arith.mulf %116, %120 : vector<8x8xf32>
    %cst_82 = arith.constant dense<0.000000e+00> : vector<8x8xf32>
    %122 = tpu.matmul %121, %107, %cst_82 {dimension_numbers = #tpu.dot_dimension_numbers<[1], [0], [0], [1], [0, 0, 1, 1], [], []>} : vector<8x8xf32>, vector<8x8xf32>, vector<8x8xf32> -> vector<8x8xf32>
    %c2_83 = arith.constant 2 : index
    %c0_84 = arith.constant 0 : index
    %c0_85 = arith.constant 0 : index
    %123 = vector.load %arg4[%c2_83, %c0_84, %c0_85] : memref<8x8x32xf32, #tpu.memory_space<vmem>>, vector<1x8x32xf32>
    %124 = vector.shape_cast %123 : vector<1x8x32xf32> to vector<8x32xf32>
    %cst_86 = arith.constant dense<0.000000e+00> : vector<8x32xf32>
    %125 = tpu.matmul %122, %124, %cst_86 {dimension_numbers = #tpu.dot_dimension_numbers<[1], [0], [0], [1], [0, 0, 1, 1], [], []>} : vector<8x8xf32>, vector<8x32xf32>, vector<8x32xf32> -> vector<8x32xf32>
    %126 = arith.addf %86, %125 : vector<8x32xf32>
    %c9 = arith.constant 9 : index
    %c0_87 = arith.constant 0 : index
    %c0_88 = arith.constant 0 : index
    %127 = vector.load %arg2[%c9, %c0_87, %c0_88] : memref<24x32x8xf32, #tpu.memory_space<vmem>>, vector<1x32x8xf32>
    %128 = vector.shape_cast %127 : vector<1x32x8xf32> to vector<32x8xf32>
    %cst_89 = arith.constant dense<0.000000e+00> : vector<8x8xf32>
    %129 = tpu.matmul %3, %128, %cst_89 {dimension_numbers = #tpu.dot_dimension_numbers<[1], [0], [0], [1], [0, 0, 1, 1], [], []>} : vector<8x32xf32>, vector<32x8xf32>, vector<8x8xf32> -> vector<8x8xf32>
    %c9_90 = arith.constant 9 : index
    %c0_91 = arith.constant 0 : index
    %c0_92 = arith.constant 0 : index
    %130 = vector.load %arg3[%c9_90, %c0_91, %c0_92] : memref<24x1x8xf32, #tpu.memory_space<vmem>>, vector<1x1x8xf32>
    %131 = vector.shape_cast %130 : vector<1x1x8xf32> to vector<1x8xf32>
    %132 = vector.broadcast %131 : vector<1x8xf32> to vector<8x8xf32>
    %133 = arith.addf %129, %132 : vector<8x8xf32>
    %c10 = arith.constant 10 : index
    %c0_93 = arith.constant 0 : index
    %c0_94 = arith.constant 0 : index
    %134 = vector.load %arg2[%c10, %c0_93, %c0_94] : memref<24x32x8xf32, #tpu.memory_space<vmem>>, vector<1x32x8xf32>
    %135 = vector.shape_cast %134 : vector<1x32x8xf32> to vector<32x8xf32>
    %cst_95 = arith.constant dense<0.000000e+00> : vector<8x8xf32>
    %136 = tpu.matmul %3, %135, %cst_95 {dimension_numbers = #tpu.dot_dimension_numbers<[1], [0], [0], [1], [0, 0, 1, 1], [], []>} : vector<8x32xf32>, vector<32x8xf32>, vector<8x8xf32> -> vector<8x8xf32>
    %c10_96 = arith.constant 10 : index
    %c0_97 = arith.constant 0 : index
    %c0_98 = arith.constant 0 : index
    %137 = vector.load %arg3[%c10_96, %c0_97, %c0_98] : memref<24x1x8xf32, #tpu.memory_space<vmem>>, vector<1x1x8xf32>
    %138 = vector.shape_cast %137 : vector<1x1x8xf32> to vector<1x8xf32>
    %139 = vector.broadcast %138 : vector<1x8xf32> to vector<8x8xf32>
    %140 = arith.addf %136, %139 : vector<8x8xf32>
    %c11 = arith.constant 11 : index
    %c0_99 = arith.constant 0 : index
    %c0_100 = arith.constant 0 : index
    %141 = vector.load %arg2[%c11, %c0_99, %c0_100] : memref<24x32x8xf32, #tpu.memory_space<vmem>>, vector<1x32x8xf32>
    %142 = vector.shape_cast %141 : vector<1x32x8xf32> to vector<32x8xf32>
    %cst_101 = arith.constant dense<0.000000e+00> : vector<8x8xf32>
    %143 = tpu.matmul %3, %142, %cst_101 {dimension_numbers = #tpu.dot_dimension_numbers<[1], [0], [0], [1], [0, 0, 1, 1], [], []>} : vector<8x32xf32>, vector<32x8xf32>, vector<8x8xf32> -> vector<8x8xf32>
    %c11_102 = arith.constant 11 : index
    %c0_103 = arith.constant 0 : index
    %c0_104 = arith.constant 0 : index
    %144 = vector.load %arg3[%c11_102, %c0_103, %c0_104] : memref<24x1x8xf32, #tpu.memory_space<vmem>>, vector<1x1x8xf32>
    %145 = vector.shape_cast %144 : vector<1x1x8xf32> to vector<1x8xf32>
    %146 = vector.broadcast %145 : vector<1x8xf32> to vector<8x8xf32>
    %147 = arith.addf %143, %146 : vector<8x8xf32>
    %cst_105 = arith.constant dense<0.000000e+00> : vector<8x8xf32>
    %148 = tpu.matmul %133, %140, %cst_105 {dimension_numbers = #tpu.dot_dimension_numbers<[1], [1], [0], [0], [0, 0, 1, 0], [], []>} : vector<8x8xf32>, vector<8x8xf32>, vector<8x8xf32> -> vector<8x8xf32>
    %cst_106 = arith.constant 0.353553385 : f32
    %149 = vector.broadcast %cst_106 : f32 to vector<8x8xf32>
    %150 = arith.mulf %148, %149 : vector<8x8xf32>
    %151 = arith.addf %150, %5 : vector<8x8xf32>
    %cst_107 = arith.constant dense<0xFF800000> : vector<8xf32>
    %152 = vector.multi_reduction <maximumf>, %151, %cst_107 [1] : vector<8x8xf32> to vector<8xf32>
    %153 = vector.shape_cast %152 : vector<8xf32> to vector<8x1xf32>
    %154 = vector.broadcast %153 : vector<8x1xf32> to vector<8x8xf32>
    %155 = arith.subf %151, %154 : vector<8x8xf32>
    %156 = math.exp %155 : vector<8x8xf32>
    %cst_108 = arith.constant dense<0.000000e+00> : vector<8xf32>
    %157 = vector.multi_reduction <add>, %156, %cst_108 [1] : vector<8x8xf32> to vector<8xf32>
    %158 = vector.shape_cast %157 : vector<8xf32> to vector<8x1xf32>
    %159 = tpu.reciprocal %158 {approx = true} : vector<8x1xf32> -> vector<8x1xf32>
    %160 = vector.broadcast %159 : vector<8x1xf32> to vector<8x8xf32>
    %161 = arith.mulf %156, %160 : vector<8x8xf32>
    %cst_109 = arith.constant dense<0.000000e+00> : vector<8x8xf32>
    %162 = tpu.matmul %161, %147, %cst_109 {dimension_numbers = #tpu.dot_dimension_numbers<[1], [0], [0], [1], [0, 0, 1, 1], [], []>} : vector<8x8xf32>, vector<8x8xf32>, vector<8x8xf32> -> vector<8x8xf32>
    %c3_110 = arith.constant 3 : index
    %c0_111 = arith.constant 0 : index
    %c0_112 = arith.constant 0 : index
    %163 = vector.load %arg4[%c3_110, %c0_111, %c0_112] : memref<8x8x32xf32, #tpu.memory_space<vmem>>, vector<1x8x32xf32>
    %164 = vector.shape_cast %163 : vector<1x8x32xf32> to vector<8x32xf32>
    %cst_113 = arith.constant dense<0.000000e+00> : vector<8x32xf32>
    %165 = tpu.matmul %162, %164, %cst_113 {dimension_numbers = #tpu.dot_dimension_numbers<[1], [0], [0], [1], [0, 0, 1, 1], [], []>} : vector<8x8xf32>, vector<8x32xf32>, vector<8x32xf32> -> vector<8x32xf32>
    %166 = arith.addf %126, %165 : vector<8x32xf32>
    %167 = vector.extract_strided_slice %2 {offsets = [8, 0], sizes = [8, 32], strides = [1, 1]} : vector<16x32xf32> to vector<8x32xf32>
    %c1_114 = arith.constant 1 : index
    %c0_115 = arith.constant 0 : index
    %c0_116 = arith.constant 0 : index
    %168 = vector.load %arg1[%c1_114, %c0_115, %c0_116] : memref<2x8x8xf32, #tpu.memory_space<vmem>>, vector<1x8x8xf32>
    %169 = vector.shape_cast %168 : vector<1x8x8xf32> to vector<8x8xf32>
    %cst_117 = arith.constant 0.000000e+00 : f32
    %170 = vector.broadcast %cst_117 : f32 to vector<8x32xf32>
    %c0_118 = arith.constant 0 : index
    %c0_119 = arith.constant 0 : index
    %c0_120 = arith.constant 0 : index
    %171 = vector.load %arg2[%c0_118, %c0_119, %c0_120] : memref<24x32x8xf32, #tpu.memory_space<vmem>>, vector<1x32x8xf32>
    %172 = vector.shape_cast %171 : vector<1x32x8xf32> to vector<32x8xf32>
    %cst_121 = arith.constant dense<0.000000e+00> : vector<8x8xf32>
    %173 = tpu.matmul %167, %172, %cst_121 {dimension_numbers = #tpu.dot_dimension_numbers<[1], [0], [0], [1], [0, 0, 1, 1], [], []>} : vector<8x32xf32>, vector<32x8xf32>, vector<8x8xf32> -> vector<8x8xf32>
    %c0_122 = arith.constant 0 : index
    %c0_123 = arith.constant 0 : index
    %c0_124 = arith.constant 0 : index
    %174 = vector.load %arg3[%c0_122, %c0_123, %c0_124] : memref<24x1x8xf32, #tpu.memory_space<vmem>>, vector<1x1x8xf32>
    %175 = vector.shape_cast %174 : vector<1x1x8xf32> to vector<1x8xf32>
    %176 = vector.broadcast %175 : vector<1x8xf32> to vector<8x8xf32>
    %177 = arith.addf %173, %176 : vector<8x8xf32>
    %c1_125 = arith.constant 1 : index
    %c0_126 = arith.constant 0 : index
    %c0_127 = arith.constant 0 : index
    %178 = vector.load %arg2[%c1_125, %c0_126, %c0_127] : memref<24x32x8xf32, #tpu.memory_space<vmem>>, vector<1x32x8xf32>
    %179 = vector.shape_cast %178 : vector<1x32x8xf32> to vector<32x8xf32>
    %cst_128 = arith.constant dense<0.000000e+00> : vector<8x8xf32>
    %180 = tpu.matmul %167, %179, %cst_128 {dimension_numbers = #tpu.dot_dimension_numbers<[1], [0], [0], [1], [0, 0, 1, 1], [], []>} : vector<8x32xf32>, vector<32x8xf32>, vector<8x8xf32> -> vector<8x8xf32>
    %c1_129 = arith.constant 1 : index
    %c0_130 = arith.constant 0 : index
    %c0_131 = arith.constant 0 : index
    %181 = vector.load %arg3[%c1_129, %c0_130, %c0_131] : memref<24x1x8xf32, #tpu.memory_space<vmem>>, vector<1x1x8xf32>
    %182 = vector.shape_cast %181 : vector<1x1x8xf32> to vector<1x8xf32>
    %183 = vector.broadcast %182 : vector<1x8xf32> to vector<8x8xf32>
    %184 = arith.addf %180, %183 : vector<8x8xf32>
    %c2_132 = arith.constant 2 : index
    %c0_133 = arith.constant 0 : index
    %c0_134 = arith.constant 0 : index
    %185 = vector.load %arg2[%c2_132, %c0_133, %c0_134] : memref<24x32x8xf32, #tpu.memory_space<vmem>>, vector<1x32x8xf32>
    %186 = vector.shape_cast %185 : vector<1x32x8xf32> to vector<32x8xf32>
    %cst_135 = arith.constant dense<0.000000e+00> : vector<8x8xf32>
    %187 = tpu.matmul %167, %186, %cst_135 {dimension_numbers = #tpu.dot_dimension_numbers<[1], [0], [0], [1], [0, 0, 1, 1], [], []>} : vector<8x32xf32>, vector<32x8xf32>, vector<8x8xf32> -> vector<8x8xf32>
    %c2_136 = arith.constant 2 : index
    %c0_137 = arith.constant 0 : index
    %c0_138 = arith.constant 0 : index
    %188 = vector.load %arg3[%c2_136, %c0_137, %c0_138] : memref<24x1x8xf32, #tpu.memory_space<vmem>>, vector<1x1x8xf32>
    %189 = vector.shape_cast %188 : vector<1x1x8xf32> to vector<1x8xf32>
    %190 = vector.broadcast %189 : vector<1x8xf32> to vector<8x8xf32>
    %191 = arith.addf %187, %190 : vector<8x8xf32>
    %cst_139 = arith.constant dense<0.000000e+00> : vector<8x8xf32>
    %192 = tpu.matmul %177, %184, %cst_139 {dimension_numbers = #tpu.dot_dimension_numbers<[1], [1], [0], [0], [0, 0, 1, 0], [], []>} : vector<8x8xf32>, vector<8x8xf32>, vector<8x8xf32> -> vector<8x8xf32>
    %cst_140 = arith.constant 0.353553385 : f32
    %193 = vector.broadcast %cst_140 : f32 to vector<8x8xf32>
    %194 = arith.mulf %192, %193 : vector<8x8xf32>
    %195 = arith.addf %194, %169 : vector<8x8xf32>
    %cst_141 = arith.constant dense<0xFF800000> : vector<8xf32>
    %196 = vector.multi_reduction <maximumf>, %195, %cst_141 [1] : vector<8x8xf32> to vector<8xf32>
    %197 = vector.shape_cast %196 : vector<8xf32> to vector<8x1xf32>
    %198 = vector.broadcast %197 : vector<8x1xf32> to vector<8x8xf32>
    %199 = arith.subf %195, %198 : vector<8x8xf32>
    %200 = math.exp %199 : vector<8x8xf32>
    %cst_142 = arith.constant dense<0.000000e+00> : vector<8xf32>
    %201 = vector.multi_reduction <add>, %200, %cst_142 [1] : vector<8x8xf32> to vector<8xf32>
    %202 = vector.shape_cast %201 : vector<8xf32> to vector<8x1xf32>
    %203 = tpu.reciprocal %202 {approx = true} : vector<8x1xf32> -> vector<8x1xf32>
    %204 = vector.broadcast %203 : vector<8x1xf32> to vector<8x8xf32>
    %205 = arith.mulf %200, %204 : vector<8x8xf32>
    %cst_143 = arith.constant dense<0.000000e+00> : vector<8x8xf32>
    %206 = tpu.matmul %205, %191, %cst_143 {dimension_numbers = #tpu.dot_dimension_numbers<[1], [0], [0], [1], [0, 0, 1, 1], [], []>} : vector<8x8xf32>, vector<8x8xf32>, vector<8x8xf32> -> vector<8x8xf32>
    %c0_144 = arith.constant 0 : index
    %c0_145 = arith.constant 0 : index
    %c0_146 = arith.constant 0 : index
    %207 = vector.load %arg4[%c0_144, %c0_145, %c0_146] : memref<8x8x32xf32, #tpu.memory_space<vmem>>, vector<1x8x32xf32>
    %208 = vector.shape_cast %207 : vector<1x8x32xf32> to vector<8x32xf32>
    %cst_147 = arith.constant dense<0.000000e+00> : vector<8x32xf32>
    %209 = tpu.matmul %206, %208, %cst_147 {dimension_numbers = #tpu.dot_dimension_numbers<[1], [0], [0], [1], [0, 0, 1, 1], [], []>} : vector<8x8xf32>, vector<8x32xf32>, vector<8x32xf32> -> vector<8x32xf32>
    %210 = arith.addf %170, %209 : vector<8x32xf32>
    %c3_148 = arith.constant 3 : index
    %c0_149 = arith.constant 0 : index
    %c0_150 = arith.constant 0 : index
    %211 = vector.load %arg2[%c3_148, %c0_149, %c0_150] : memref<24x32x8xf32, #tpu.memory_space<vmem>>, vector<1x32x8xf32>
    %212 = vector.shape_cast %211 : vector<1x32x8xf32> to vector<32x8xf32>
    %cst_151 = arith.constant dense<0.000000e+00> : vector<8x8xf32>
    %213 = tpu.matmul %167, %212, %cst_151 {dimension_numbers = #tpu.dot_dimension_numbers<[1], [0], [0], [1], [0, 0, 1, 1], [], []>} : vector<8x32xf32>, vector<32x8xf32>, vector<8x8xf32> -> vector<8x8xf32>
    %c3_152 = arith.constant 3 : index
    %c0_153 = arith.constant 0 : index
    %c0_154 = arith.constant 0 : index
    %214 = vector.load %arg3[%c3_152, %c0_153, %c0_154] : memref<24x1x8xf32, #tpu.memory_space<vmem>>, vector<1x1x8xf32>
    %215 = vector.shape_cast %214 : vector<1x1x8xf32> to vector<1x8xf32>
    %216 = vector.broadcast %215 : vector<1x8xf32> to vector<8x8xf32>
    %217 = arith.addf %213, %216 : vector<8x8xf32>
    %c4_155 = arith.constant 4 : index
    %c0_156 = arith.constant 0 : index
    %c0_157 = arith.constant 0 : index
    %218 = vector.load %arg2[%c4_155, %c0_156, %c0_157] : memref<24x32x8xf32, #tpu.memory_space<vmem>>, vector<1x32x8xf32>
    %219 = vector.shape_cast %218 : vector<1x32x8xf32> to vector<32x8xf32>
    %cst_158 = arith.constant dense<0.000000e+00> : vector<8x8xf32>
    %220 = tpu.matmul %167, %219, %cst_158 {dimension_numbers = #tpu.dot_dimension_numbers<[1], [0], [0], [1], [0, 0, 1, 1], [], []>} : vector<8x32xf32>, vector<32x8xf32>, vector<8x8xf32> -> vector<8x8xf32>
    %c4_159 = arith.constant 4 : index
    %c0_160 = arith.constant 0 : index
    %c0_161 = arith.constant 0 : index
    %221 = vector.load %arg3[%c4_159, %c0_160, %c0_161] : memref<24x1x8xf32, #tpu.memory_space<vmem>>, vector<1x1x8xf32>
    %222 = vector.shape_cast %221 : vector<1x1x8xf32> to vector<1x8xf32>
    %223 = vector.broadcast %222 : vector<1x8xf32> to vector<8x8xf32>
    %224 = arith.addf %220, %223 : vector<8x8xf32>
    %c5_162 = arith.constant 5 : index
    %c0_163 = arith.constant 0 : index
    %c0_164 = arith.constant 0 : index
    %225 = vector.load %arg2[%c5_162, %c0_163, %c0_164] : memref<24x32x8xf32, #tpu.memory_space<vmem>>, vector<1x32x8xf32>
    %226 = vector.shape_cast %225 : vector<1x32x8xf32> to vector<32x8xf32>
    %cst_165 = arith.constant dense<0.000000e+00> : vector<8x8xf32>
    %227 = tpu.matmul %167, %226, %cst_165 {dimension_numbers = #tpu.dot_dimension_numbers<[1], [0], [0], [1], [0, 0, 1, 1], [], []>} : vector<8x32xf32>, vector<32x8xf32>, vector<8x8xf32> -> vector<8x8xf32>
    %c5_166 = arith.constant 5 : index
    %c0_167 = arith.constant 0 : index
    %c0_168 = arith.constant 0 : index
    %228 = vector.load %arg3[%c5_166, %c0_167, %c0_168] : memref<24x1x8xf32, #tpu.memory_space<vmem>>, vector<1x1x8xf32>
    %229 = vector.shape_cast %228 : vector<1x1x8xf32> to vector<1x8xf32>
    %230 = vector.broadcast %229 : vector<1x8xf32> to vector<8x8xf32>
    %231 = arith.addf %227, %230 : vector<8x8xf32>
    %cst_169 = arith.constant dense<0.000000e+00> : vector<8x8xf32>
    %232 = tpu.matmul %217, %224, %cst_169 {dimension_numbers = #tpu.dot_dimension_numbers<[1], [1], [0], [0], [0, 0, 1, 0], [], []>} : vector<8x8xf32>, vector<8x8xf32>, vector<8x8xf32> -> vector<8x8xf32>
    %cst_170 = arith.constant 0.353553385 : f32
    %233 = vector.broadcast %cst_170 : f32 to vector<8x8xf32>
    %234 = arith.mulf %232, %233 : vector<8x8xf32>
    %235 = arith.addf %234, %169 : vector<8x8xf32>
    %cst_171 = arith.constant dense<0xFF800000> : vector<8xf32>
    %236 = vector.multi_reduction <maximumf>, %235, %cst_171 [1] : vector<8x8xf32> to vector<8xf32>
    %237 = vector.shape_cast %236 : vector<8xf32> to vector<8x1xf32>
    %238 = vector.broadcast %237 : vector<8x1xf32> to vector<8x8xf32>
    %239 = arith.subf %235, %238 : vector<8x8xf32>
    %240 = math.exp %239 : vector<8x8xf32>
    %cst_172 = arith.constant dense<0.000000e+00> : vector<8xf32>
    %241 = vector.multi_reduction <add>, %240, %cst_172 [1] : vector<8x8xf32> to vector<8xf32>
    %242 = vector.shape_cast %241 : vector<8xf32> to vector<8x1xf32>
    %243 = tpu.reciprocal %242 {approx = true} : vector<8x1xf32> -> vector<8x1xf32>
    %244 = vector.broadcast %243 : vector<8x1xf32> to vector<8x8xf32>
    %245 = arith.mulf %240, %244 : vector<8x8xf32>
    %cst_173 = arith.constant dense<0.000000e+00> : vector<8x8xf32>
    %246 = tpu.matmul %245, %231, %cst_173 {dimension_numbers = #tpu.dot_dimension_numbers<[1], [0], [0], [1], [0, 0, 1, 1], [], []>} : vector<8x8xf32>, vector<8x8xf32>, vector<8x8xf32> -> vector<8x8xf32>
    %c1_174 = arith.constant 1 : index
    %c0_175 = arith.constant 0 : index
    %c0_176 = arith.constant 0 : index
    %247 = vector.load %arg4[%c1_174, %c0_175, %c0_176] : memref<8x8x32xf32, #tpu.memory_space<vmem>>, vector<1x8x32xf32>
    %248 = vector.shape_cast %247 : vector<1x8x32xf32> to vector<8x32xf32>
    %cst_177 = arith.constant dense<0.000000e+00> : vector<8x32xf32>
    %249 = tpu.matmul %246, %248, %cst_177 {dimension_numbers = #tpu.dot_dimension_numbers<[1], [0], [0], [1], [0, 0, 1, 1], [], []>} : vector<8x8xf32>, vector<8x32xf32>, vector<8x32xf32> -> vector<8x32xf32>
    %250 = arith.addf %210, %249 : vector<8x32xf32>
    %c6_178 = arith.constant 6 : index
    %c0_179 = arith.constant 0 : index
    %c0_180 = arith.constant 0 : index
    %251 = vector.load %arg2[%c6_178, %c0_179, %c0_180] : memref<24x32x8xf32, #tpu.memory_space<vmem>>, vector<1x32x8xf32>
    %252 = vector.shape_cast %251 : vector<1x32x8xf32> to vector<32x8xf32>
    %cst_181 = arith.constant dense<0.000000e+00> : vector<8x8xf32>
    %253 = tpu.matmul %167, %252, %cst_181 {dimension_numbers = #tpu.dot_dimension_numbers<[1], [0], [0], [1], [0, 0, 1, 1], [], []>} : vector<8x32xf32>, vector<32x8xf32>, vector<8x8xf32> -> vector<8x8xf32>
    %c6_182 = arith.constant 6 : index
    %c0_183 = arith.constant 0 : index
    %c0_184 = arith.constant 0 : index
    %254 = vector.load %arg3[%c6_182, %c0_183, %c0_184] : memref<24x1x8xf32, #tpu.memory_space<vmem>>, vector<1x1x8xf32>
    %255 = vector.shape_cast %254 : vector<1x1x8xf32> to vector<1x8xf32>
    %256 = vector.broadcast %255 : vector<1x8xf32> to vector<8x8xf32>
    %257 = arith.addf %253, %256 : vector<8x8xf32>
    %c7_185 = arith.constant 7 : index
    %c0_186 = arith.constant 0 : index
    %c0_187 = arith.constant 0 : index
    %258 = vector.load %arg2[%c7_185, %c0_186, %c0_187] : memref<24x32x8xf32, #tpu.memory_space<vmem>>, vector<1x32x8xf32>
    %259 = vector.shape_cast %258 : vector<1x32x8xf32> to vector<32x8xf32>
    %cst_188 = arith.constant dense<0.000000e+00> : vector<8x8xf32>
    %260 = tpu.matmul %167, %259, %cst_188 {dimension_numbers = #tpu.dot_dimension_numbers<[1], [0], [0], [1], [0, 0, 1, 1], [], []>} : vector<8x32xf32>, vector<32x8xf32>, vector<8x8xf32> -> vector<8x8xf32>
    %c7_189 = arith.constant 7 : index
    %c0_190 = arith.constant 0 : index
    %c0_191 = arith.constant 0 : index
    %261 = vector.load %arg3[%c7_189, %c0_190, %c0_191] : memref<24x1x8xf32, #tpu.memory_space<vmem>>, vector<1x1x8xf32>
    %262 = vector.shape_cast %261 : vector<1x1x8xf32> to vector<1x8xf32>
    %263 = vector.broadcast %262 : vector<1x8xf32> to vector<8x8xf32>
    %264 = arith.addf %260, %263 : vector<8x8xf32>
    %c8_192 = arith.constant 8 : index
    %c0_193 = arith.constant 0 : index
    %c0_194 = arith.constant 0 : index
    %265 = vector.load %arg2[%c8_192, %c0_193, %c0_194] : memref<24x32x8xf32, #tpu.memory_space<vmem>>, vector<1x32x8xf32>
    %266 = vector.shape_cast %265 : vector<1x32x8xf32> to vector<32x8xf32>
    %cst_195 = arith.constant dense<0.000000e+00> : vector<8x8xf32>
    %267 = tpu.matmul %167, %266, %cst_195 {dimension_numbers = #tpu.dot_dimension_numbers<[1], [0], [0], [1], [0, 0, 1, 1], [], []>} : vector<8x32xf32>, vector<32x8xf32>, vector<8x8xf32> -> vector<8x8xf32>
    %c8_196 = arith.constant 8 : index
    %c0_197 = arith.constant 0 : index
    %c0_198 = arith.constant 0 : index
    %268 = vector.load %arg3[%c8_196, %c0_197, %c0_198] : memref<24x1x8xf32, #tpu.memory_space<vmem>>, vector<1x1x8xf32>
    %269 = vector.shape_cast %268 : vector<1x1x8xf32> to vector<1x8xf32>
    %270 = vector.broadcast %269 : vector<1x8xf32> to vector<8x8xf32>
    %271 = arith.addf %267, %270 : vector<8x8xf32>
    %cst_199 = arith.constant dense<0.000000e+00> : vector<8x8xf32>
    %272 = tpu.matmul %257, %264, %cst_199 {dimension_numbers = #tpu.dot_dimension_numbers<[1], [1], [0], [0], [0, 0, 1, 0], [], []>} : vector<8x8xf32>, vector<8x8xf32>, vector<8x8xf32> -> vector<8x8xf32>
    %cst_200 = arith.constant 0.353553385 : f32
    %273 = vector.broadcast %cst_200 : f32 to vector<8x8xf32>
    %274 = arith.mulf %272, %273 : vector<8x8xf32>
    %275 = arith.addf %274, %169 : vector<8x8xf32>
    %cst_201 = arith.constant dense<0xFF800000> : vector<8xf32>
    %276 = vector.multi_reduction <maximumf>, %275, %cst_201 [1] : vector<8x8xf32> to vector<8xf32>
    %277 = vector.shape_cast %276 : vector<8xf32> to vector<8x1xf32>
    %278 = vector.broadcast %277 : vector<8x1xf32> to vector<8x8xf32>
    %279 = arith.subf %275, %278 : vector<8x8xf32>
    %280 = math.exp %279 : vector<8x8xf32>
    %cst_202 = arith.constant dense<0.000000e+00> : vector<8xf32>
    %281 = vector.multi_reduction <add>, %280, %cst_202 [1] : vector<8x8xf32> to vector<8xf32>
    %282 = vector.shape_cast %281 : vector<8xf32> to vector<8x1xf32>
    %283 = tpu.reciprocal %282 {approx = true} : vector<8x1xf32> -> vector<8x1xf32>
    %284 = vector.broadcast %283 : vector<8x1xf32> to vector<8x8xf32>
    %285 = arith.mulf %280, %284 : vector<8x8xf32>
    %cst_203 = arith.constant dense<0.000000e+00> : vector<8x8xf32>
    %286 = tpu.matmul %285, %271, %cst_203 {dimension_numbers = #tpu.dot_dimension_numbers<[1], [0], [0], [1], [0, 0, 1, 1], [], []>} : vector<8x8xf32>, vector<8x8xf32>, vector<8x8xf32> -> vector<8x8xf32>
    %c2_204 = arith.constant 2 : index
    %c0_205 = arith.constant 0 : index
    %c0_206 = arith.constant 0 : index
    %287 = vector.load %arg4[%c2_204, %c0_205, %c0_206] : memref<8x8x32xf32, #tpu.memory_space<vmem>>, vector<1x8x32xf32>
    %288 = vector.shape_cast %287 : vector<1x8x32xf32> to vector<8x32xf32>
    %cst_207 = arith.constant dense<0.000000e+00> : vector<8x32xf32>
    %289 = tpu.matmul %286, %288, %cst_207 {dimension_numbers = #tpu.dot_dimension_numbers<[1], [0], [0], [1], [0, 0, 1, 1], [], []>} : vector<8x8xf32>, vector<8x32xf32>, vector<8x32xf32> -> vector<8x32xf32>
    %290 = arith.addf %250, %289 : vector<8x32xf32>
    %c9_208 = arith.constant 9 : index
    %c0_209 = arith.constant 0 : index
    %c0_210 = arith.constant 0 : index
    %291 = vector.load %arg2[%c9_208, %c0_209, %c0_210] : memref<24x32x8xf32, #tpu.memory_space<vmem>>, vector<1x32x8xf32>
    %292 = vector.shape_cast %291 : vector<1x32x8xf32> to vector<32x8xf32>
    %cst_211 = arith.constant dense<0.000000e+00> : vector<8x8xf32>
    %293 = tpu.matmul %167, %292, %cst_211 {dimension_numbers = #tpu.dot_dimension_numbers<[1], [0], [0], [1], [0, 0, 1, 1], [], []>} : vector<8x32xf32>, vector<32x8xf32>, vector<8x8xf32> -> vector<8x8xf32>
    %c9_212 = arith.constant 9 : index
    %c0_213 = arith.constant 0 : index
    %c0_214 = arith.constant 0 : index
    %294 = vector.load %arg3[%c9_212, %c0_213, %c0_214] : memref<24x1x8xf32, #tpu.memory_space<vmem>>, vector<1x1x8xf32>
    %295 = vector.shape_cast %294 : vector<1x1x8xf32> to vector<1x8xf32>
    %296 = vector.broadcast %295 : vector<1x8xf32> to vector<8x8xf32>
    %297 = arith.addf %293, %296 : vector<8x8xf32>
    %c10_215 = arith.constant 10 : index
    %c0_216 = arith.constant 0 : index
    %c0_217 = arith.constant 0 : index
    %298 = vector.load %arg2[%c10_215, %c0_216, %c0_217] : memref<24x32x8xf32, #tpu.memory_space<vmem>>, vector<1x32x8xf32>
    %299 = vector.shape_cast %298 : vector<1x32x8xf32> to vector<32x8xf32>
    %cst_218 = arith.constant dense<0.000000e+00> : vector<8x8xf32>
    %300 = tpu.matmul %167, %299, %cst_218 {dimension_numbers = #tpu.dot_dimension_numbers<[1], [0], [0], [1], [0, 0, 1, 1], [], []>} : vector<8x32xf32>, vector<32x8xf32>, vector<8x8xf32> -> vector<8x8xf32>
    %c10_219 = arith.constant 10 : index
    %c0_220 = arith.constant 0 : index
    %c0_221 = arith.constant 0 : index
    %301 = vector.load %arg3[%c10_219, %c0_220, %c0_221] : memref<24x1x8xf32, #tpu.memory_space<vmem>>, vector<1x1x8xf32>
    %302 = vector.shape_cast %301 : vector<1x1x8xf32> to vector<1x8xf32>
    %303 = vector.broadcast %302 : vector<1x8xf32> to vector<8x8xf32>
    %304 = arith.addf %300, %303 : vector<8x8xf32>
    %c11_222 = arith.constant 11 : index
    %c0_223 = arith.constant 0 : index
    %c0_224 = arith.constant 0 : index
    %305 = vector.load %arg2[%c11_222, %c0_223, %c0_224] : memref<24x32x8xf32, #tpu.memory_space<vmem>>, vector<1x32x8xf32>
    %306 = vector.shape_cast %305 : vector<1x32x8xf32> to vector<32x8xf32>
    %cst_225 = arith.constant dense<0.000000e+00> : vector<8x8xf32>
    %307 = tpu.matmul %167, %306, %cst_225 {dimension_numbers = #tpu.dot_dimension_numbers<[1], [0], [0], [1], [0, 0, 1, 1], [], []>} : vector<8x32xf32>, vector<32x8xf32>, vector<8x8xf32> -> vector<8x8xf32>
    %c11_226 = arith.constant 11 : index
    %c0_227 = arith.constant 0 : index
    %c0_228 = arith.constant 0 : index
    %308 = vector.load %arg3[%c11_226, %c0_227, %c0_228] : memref<24x1x8xf32, #tpu.memory_space<vmem>>, vector<1x1x8xf32>
    %309 = vector.shape_cast %308 : vector<1x1x8xf32> to vector<1x8xf32>
    %310 = vector.broadcast %309 : vector<1x8xf32> to vector<8x8xf32>
    %311 = arith.addf %307, %310 : vector<8x8xf32>
    %cst_229 = arith.constant dense<0.000000e+00> : vector<8x8xf32>
    %312 = tpu.matmul %297, %304, %cst_229 {dimension_numbers = #tpu.dot_dimension_numbers<[1], [1], [0], [0], [0, 0, 1, 0], [], []>} : vector<8x8xf32>, vector<8x8xf32>, vector<8x8xf32> -> vector<8x8xf32>
    %cst_230 = arith.constant 0.353553385 : f32
    %313 = vector.broadcast %cst_230 : f32 to vector<8x8xf32>
    %314 = arith.mulf %312, %313 : vector<8x8xf32>
    %315 = arith.addf %314, %169 : vector<8x8xf32>
    %cst_231 = arith.constant dense<0xFF800000> : vector<8xf32>
    %316 = vector.multi_reduction <maximumf>, %315, %cst_231 [1] : vector<8x8xf32> to vector<8xf32>
    %317 = vector.shape_cast %316 : vector<8xf32> to vector<8x1xf32>
    %318 = vector.broadcast %317 : vector<8x1xf32> to vector<8x8xf32>
    %319 = arith.subf %315, %318 : vector<8x8xf32>
    %320 = math.exp %319 : vector<8x8xf32>
    %cst_232 = arith.constant dense<0.000000e+00> : vector<8xf32>
    %321 = vector.multi_reduction <add>, %320, %cst_232 [1] : vector<8x8xf32> to vector<8xf32>
    %322 = vector.shape_cast %321 : vector<8xf32> to vector<8x1xf32>
    %323 = tpu.reciprocal %322 {approx = true} : vector<8x1xf32> -> vector<8x1xf32>
    %324 = vector.broadcast %323 : vector<8x1xf32> to vector<8x8xf32>
    %325 = arith.mulf %320, %324 : vector<8x8xf32>
    %cst_233 = arith.constant dense<0.000000e+00> : vector<8x8xf32>
    %326 = tpu.matmul %325, %311, %cst_233 {dimension_numbers = #tpu.dot_dimension_numbers<[1], [0], [0], [1], [0, 0, 1, 1], [], []>} : vector<8x8xf32>, vector<8x8xf32>, vector<8x8xf32> -> vector<8x8xf32>
    %c3_234 = arith.constant 3 : index
    %c0_235 = arith.constant 0 : index
    %c0_236 = arith.constant 0 : index
    %327 = vector.load %arg4[%c3_234, %c0_235, %c0_236] : memref<8x8x32xf32, #tpu.memory_space<vmem>>, vector<1x8x32xf32>
    %328 = vector.shape_cast %327 : vector<1x8x32xf32> to vector<8x32xf32>
    %cst_237 = arith.constant dense<0.000000e+00> : vector<8x32xf32>
    %329 = tpu.matmul %326, %328, %cst_237 {dimension_numbers = #tpu.dot_dimension_numbers<[1], [0], [0], [1], [0, 0, 1, 1], [], []>} : vector<8x8xf32>, vector<8x32xf32>, vector<8x32xf32> -> vector<8x32xf32>
    %330 = arith.addf %290, %329 : vector<8x32xf32>
    %331 = tpu.concatenate %166, %330 in 0 : vector<8x32xf32>, vector<8x32xf32> -> vector<16x32xf32>
    %c0_238 = arith.constant 0 : index
    %c0_239 = arith.constant 0 : index
    %c0_240 = arith.constant 0 : index
    %332 = vector.load %arg5[%c0_238, %c0_239, %c0_240] : memref<2x1x32xf32, #tpu.memory_space<vmem>>, vector<1x1x32xf32>
    %333 = vector.shape_cast %332 : vector<1x1x32xf32> to vector<1x32xf32>
    %334 = vector.broadcast %333 : vector<1x32xf32> to vector<16x32xf32>
    %335 = arith.addf %331, %334 : vector<16x32xf32>
    %336 = arith.addf %2, %335 : vector<16x32xf32>
    %c0_241 = arith.constant 0 : index
    %c0_242 = arith.constant 0 : index
    %c0_243 = arith.constant 0 : index
    %337 = vector.load %arg6[%c0_241, %c0_242, %c0_243] : memref<2x1x32xf32, #tpu.memory_space<vmem>>, vector<1x1x32xf32>
    %338 = vector.shape_cast %337 : vector<1x1x32xf32> to vector<1x32xf32>
    %c0_244 = arith.constant 0 : index
    %c0_245 = arith.constant 0 : index
    %c0_246 = arith.constant 0 : index
    %339 = vector.load %arg7[%c0_244, %c0_245, %c0_246] : memref<2x1x32xf32, #tpu.memory_space<vmem>>, vector<1x1x32xf32>
    %340 = vector.shape_cast %339 : vector<1x1x32xf32> to vector<1x32xf32>
    %cst_247 = arith.constant dense<0.000000e+00> : vector<16xf32>
    %341 = vector.multi_reduction <add>, %336, %cst_247 [1] : vector<16x32xf32> to vector<16xf32>
    %342 = vector.shape_cast %341 : vector<16xf32> to vector<16x1xf32>
    %cst_248 = arith.constant 3.200000e+01 : f32
    %343 = vector.broadcast %cst_248 : f32 to vector<16x1xf32>
    %344 = arith.divf %342, %343 : vector<16x1xf32>
    %345 = vector.broadcast %344 : vector<16x1xf32> to vector<16x32xf32>
    %346 = arith.subf %336, %345 : vector<16x32xf32>
    %347 = arith.mulf %346, %346 : vector<16x32xf32>
    %cst_249 = arith.constant dense<0.000000e+00> : vector<16xf32>
    %348 = vector.multi_reduction <add>, %347, %cst_249 [1] : vector<16x32xf32> to vector<16xf32>
    %349 = vector.shape_cast %348 : vector<16xf32> to vector<16x1xf32>
    %cst_250 = arith.constant 3.200000e+01 : f32
    %350 = vector.broadcast %cst_250 : f32 to vector<16x1xf32>
    %351 = arith.divf %349, %350 : vector<16x1xf32>
    %352 = vector.broadcast %344 : vector<16x1xf32> to vector<16x32xf32>
    %353 = arith.subf %336, %352 : vector<16x32xf32>
    %cst_251 = arith.constant 9.99999974E-6 : f32
    %354 = vector.broadcast %cst_251 : f32 to vector<16x1xf32>
    %355 = arith.addf %351, %354 : vector<16x1xf32>
    %356 = math.rsqrt %355 : vector<16x1xf32>
    %357 = vector.broadcast %356 : vector<16x1xf32> to vector<16x32xf32>
    %358 = arith.mulf %353, %357 : vector<16x32xf32>
    %359 = vector.broadcast %338 : vector<1x32xf32> to vector<16x32xf32>
    %360 = arith.mulf %358, %359 : vector<16x32xf32>
    %361 = vector.broadcast %340 : vector<1x32xf32> to vector<16x32xf32>
    %362 = arith.addf %360, %361 : vector<16x32xf32>
    %c0_252 = arith.constant 0 : index
    %c0_253 = arith.constant 0 : index
    %c0_254 = arith.constant 0 : index
    %363 = vector.load %arg8[%c0_252, %c0_253, %c0_254] : memref<2x32x64xf32, #tpu.memory_space<vmem>>, vector<1x32x64xf32>
    %364 = vector.shape_cast %363 : vector<1x32x64xf32> to vector<32x64xf32>
    %cst_255 = arith.constant dense<0.000000e+00> : vector<16x64xf32>
    %365 = tpu.matmul %362, %364, %cst_255 {dimension_numbers = #tpu.dot_dimension_numbers<[1], [0], [0], [1], [0, 0, 1, 1], [], []>} : vector<16x32xf32>, vector<32x64xf32>, vector<16x64xf32> -> vector<16x64xf32>
    %c0_256 = arith.constant 0 : index
    %c0_257 = arith.constant 0 : index
    %c0_258 = arith.constant 0 : index
    %366 = vector.load %arg9[%c0_256, %c0_257, %c0_258] : memref<2x1x64xf32, #tpu.memory_space<vmem>>, vector<1x1x64xf32>
    %367 = vector.shape_cast %366 : vector<1x1x64xf32> to vector<1x64xf32>
    %368 = vector.broadcast %367 : vector<1x64xf32> to vector<16x64xf32>
    %369 = arith.addf %365, %368 : vector<16x64xf32>
    %cst_259 = arith.constant 0.000000e+00 : f32
    %370 = vector.broadcast %cst_259 : f32 to vector<16x64xf32>
    %371 = arith.maximumf %369, %370 : vector<16x64xf32>
    %c0_260 = arith.constant 0 : index
    %c0_261 = arith.constant 0 : index
    %c0_262 = arith.constant 0 : index
    %372 = vector.load %arg10[%c0_260, %c0_261, %c0_262] : memref<2x64x32xf32, #tpu.memory_space<vmem>>, vector<1x64x32xf32>
    %373 = vector.shape_cast %372 : vector<1x64x32xf32> to vector<64x32xf32>
    %cst_263 = arith.constant dense<0.000000e+00> : vector<16x32xf32>
    %374 = tpu.matmul %371, %373, %cst_263 {dimension_numbers = #tpu.dot_dimension_numbers<[1], [0], [0], [1], [0, 0, 1, 1], [], []>} : vector<16x64xf32>, vector<64x32xf32>, vector<16x32xf32> -> vector<16x32xf32>
    %c0_264 = arith.constant 0 : index
    %c0_265 = arith.constant 0 : index
    %c0_266 = arith.constant 0 : index
    %375 = vector.load %arg11[%c0_264, %c0_265, %c0_266] : memref<2x1x32xf32, #tpu.memory_space<vmem>>, vector<1x1x32xf32>
    %376 = vector.shape_cast %375 : vector<1x1x32xf32> to vector<1x32xf32>
    %377 = vector.broadcast %376 : vector<1x32xf32> to vector<16x32xf32>
    %378 = arith.addf %374, %377 : vector<16x32xf32>
    %379 = arith.addf %362, %378 : vector<16x32xf32>
    %c0_267 = arith.constant 0 : index
    %c0_268 = arith.constant 0 : index
    %c0_269 = arith.constant 0 : index
    %380 = vector.load %arg12[%c0_267, %c0_268, %c0_269] : memref<2x1x32xf32, #tpu.memory_space<vmem>>, vector<1x1x32xf32>
    %381 = vector.shape_cast %380 : vector<1x1x32xf32> to vector<1x32xf32>
    %c0_270 = arith.constant 0 : index
    %c0_271 = arith.constant 0 : index
    %c0_272 = arith.constant 0 : index
    %382 = vector.load %arg13[%c0_270, %c0_271, %c0_272] : memref<2x1x32xf32, #tpu.memory_space<vmem>>, vector<1x1x32xf32>
    %383 = vector.shape_cast %382 : vector<1x1x32xf32> to vector<1x32xf32>
    %cst_273 = arith.constant dense<0.000000e+00> : vector<16xf32>
    %384 = vector.multi_reduction <add>, %379, %cst_273 [1] : vector<16x32xf32> to vector<16xf32>
    %385 = vector.shape_cast %384 : vector<16xf32> to vector<16x1xf32>
    %cst_274 = arith.constant 3.200000e+01 : f32
    %386 = vector.broadcast %cst_274 : f32 to vector<16x1xf32>
    %387 = arith.divf %385, %386 : vector<16x1xf32>
    %388 = vector.broadcast %387 : vector<16x1xf32> to vector<16x32xf32>
    %389 = arith.subf %379, %388 : vector<16x32xf32>
    %390 = arith.mulf %389, %389 : vector<16x32xf32>
    %cst_275 = arith.constant dense<0.000000e+00> : vector<16xf32>
    %391 = vector.multi_reduction <add>, %390, %cst_275 [1] : vector<16x32xf32> to vector<16xf32>
    %392 = vector.shape_cast %391 : vector<16xf32> to vector<16x1xf32>
    %cst_276 = arith.constant 3.200000e+01 : f32
    %393 = vector.broadcast %cst_276 : f32 to vector<16x1xf32>
    %394 = arith.divf %392, %393 : vector<16x1xf32>
    %395 = vector.broadcast %387 : vector<16x1xf32> to vector<16x32xf32>
    %396 = arith.subf %379, %395 : vector<16x32xf32>
    %cst_277 = arith.constant 9.99999974E-6 : f32
    %397 = vector.broadcast %cst_277 : f32 to vector<16x1xf32>
    %398 = arith.addf %394, %397 : vector<16x1xf32>
    %399 = math.rsqrt %398 : vector<16x1xf32>
    %400 = vector.broadcast %399 : vector<16x1xf32> to vector<16x32xf32>
    %401 = arith.mulf %396, %400 : vector<16x32xf32>
    %402 = vector.broadcast %381 : vector<1x32xf32> to vector<16x32xf32>
    %403 = arith.mulf %401, %402 : vector<16x32xf32>
    %404 = vector.broadcast %383 : vector<1x32xf32> to vector<16x32xf32>
    %405 = arith.addf %403, %404 : vector<16x32xf32>
    %406 = vector.extract_strided_slice %405 {offsets = [0, 0], sizes = [8, 32], strides = [1, 1]} : vector<16x32xf32> to vector<8x32xf32>
    %c0_278 = arith.constant 0 : index
    %c0_279 = arith.constant 0 : index
    %c0_280 = arith.constant 0 : index
    %407 = vector.load %arg1[%c0_278, %c0_279, %c0_280] : memref<2x8x8xf32, #tpu.memory_space<vmem>>, vector<1x8x8xf32>
    %408 = vector.shape_cast %407 : vector<1x8x8xf32> to vector<8x8xf32>
    %cst_281 = arith.constant 0.000000e+00 : f32
    %409 = vector.broadcast %cst_281 : f32 to vector<8x32xf32>
    %c12 = arith.constant 12 : index
    %c0_282 = arith.constant 0 : index
    %c0_283 = arith.constant 0 : index
    %410 = vector.load %arg2[%c12, %c0_282, %c0_283] : memref<24x32x8xf32, #tpu.memory_space<vmem>>, vector<1x32x8xf32>
    %411 = vector.shape_cast %410 : vector<1x32x8xf32> to vector<32x8xf32>
    %cst_284 = arith.constant dense<0.000000e+00> : vector<8x8xf32>
    %412 = tpu.matmul %406, %411, %cst_284 {dimension_numbers = #tpu.dot_dimension_numbers<[1], [0], [0], [1], [0, 0, 1, 1], [], []>} : vector<8x32xf32>, vector<32x8xf32>, vector<8x8xf32> -> vector<8x8xf32>
    %c12_285 = arith.constant 12 : index
    %c0_286 = arith.constant 0 : index
    %c0_287 = arith.constant 0 : index
    %413 = vector.load %arg3[%c12_285, %c0_286, %c0_287] : memref<24x1x8xf32, #tpu.memory_space<vmem>>, vector<1x1x8xf32>
    %414 = vector.shape_cast %413 : vector<1x1x8xf32> to vector<1x8xf32>
    %415 = vector.broadcast %414 : vector<1x8xf32> to vector<8x8xf32>
    %416 = arith.addf %412, %415 : vector<8x8xf32>
    %c13 = arith.constant 13 : index
    %c0_288 = arith.constant 0 : index
    %c0_289 = arith.constant 0 : index
    %417 = vector.load %arg2[%c13, %c0_288, %c0_289] : memref<24x32x8xf32, #tpu.memory_space<vmem>>, vector<1x32x8xf32>
    %418 = vector.shape_cast %417 : vector<1x32x8xf32> to vector<32x8xf32>
    %cst_290 = arith.constant dense<0.000000e+00> : vector<8x8xf32>
    %419 = tpu.matmul %406, %418, %cst_290 {dimension_numbers = #tpu.dot_dimension_numbers<[1], [0], [0], [1], [0, 0, 1, 1], [], []>} : vector<8x32xf32>, vector<32x8xf32>, vector<8x8xf32> -> vector<8x8xf32>
    %c13_291 = arith.constant 13 : index
    %c0_292 = arith.constant 0 : index
    %c0_293 = arith.constant 0 : index
    %420 = vector.load %arg3[%c13_291, %c0_292, %c0_293] : memref<24x1x8xf32, #tpu.memory_space<vmem>>, vector<1x1x8xf32>
    %421 = vector.shape_cast %420 : vector<1x1x8xf32> to vector<1x8xf32>
    %422 = vector.broadcast %421 : vector<1x8xf32> to vector<8x8xf32>
    %423 = arith.addf %419, %422 : vector<8x8xf32>
    %c14 = arith.constant 14 : index
    %c0_294 = arith.constant 0 : index
    %c0_295 = arith.constant 0 : index
    %424 = vector.load %arg2[%c14, %c0_294, %c0_295] : memref<24x32x8xf32, #tpu.memory_space<vmem>>, vector<1x32x8xf32>
    %425 = vector.shape_cast %424 : vector<1x32x8xf32> to vector<32x8xf32>
    %cst_296 = arith.constant dense<0.000000e+00> : vector<8x8xf32>
    %426 = tpu.matmul %406, %425, %cst_296 {dimension_numbers = #tpu.dot_dimension_numbers<[1], [0], [0], [1], [0, 0, 1, 1], [], []>} : vector<8x32xf32>, vector<32x8xf32>, vector<8x8xf32> -> vector<8x8xf32>
    %c14_297 = arith.constant 14 : index
    %c0_298 = arith.constant 0 : index
    %c0_299 = arith.constant 0 : index
    %427 = vector.load %arg3[%c14_297, %c0_298, %c0_299] : memref<24x1x8xf32, #tpu.memory_space<vmem>>, vector<1x1x8xf32>
    %428 = vector.shape_cast %427 : vector<1x1x8xf32> to vector<1x8xf32>
    %429 = vector.broadcast %428 : vector<1x8xf32> to vector<8x8xf32>
    %430 = arith.addf %426, %429 : vector<8x8xf32>
    %cst_300 = arith.constant dense<0.000000e+00> : vector<8x8xf32>
    %431 = tpu.matmul %416, %423, %cst_300 {dimension_numbers = #tpu.dot_dimension_numbers<[1], [1], [0], [0], [0, 0, 1, 0], [], []>} : vector<8x8xf32>, vector<8x8xf32>, vector<8x8xf32> -> vector<8x8xf32>
    %cst_301 = arith.constant 0.353553385 : f32
    %432 = vector.broadcast %cst_301 : f32 to vector<8x8xf32>
    %433 = arith.mulf %431, %432 : vector<8x8xf32>
    %434 = arith.addf %433, %408 : vector<8x8xf32>
    %cst_302 = arith.constant dense<0xFF800000> : vector<8xf32>
    %435 = vector.multi_reduction <maximumf>, %434, %cst_302 [1] : vector<8x8xf32> to vector<8xf32>
    %436 = vector.shape_cast %435 : vector<8xf32> to vector<8x1xf32>
    %437 = vector.broadcast %436 : vector<8x1xf32> to vector<8x8xf32>
    %438 = arith.subf %434, %437 : vector<8x8xf32>
    %439 = math.exp %438 : vector<8x8xf32>
    %cst_303 = arith.constant dense<0.000000e+00> : vector<8xf32>
    %440 = vector.multi_reduction <add>, %439, %cst_303 [1] : vector<8x8xf32> to vector<8xf32>
    %441 = vector.shape_cast %440 : vector<8xf32> to vector<8x1xf32>
    %442 = tpu.reciprocal %441 {approx = true} : vector<8x1xf32> -> vector<8x1xf32>
    %443 = vector.broadcast %442 : vector<8x1xf32> to vector<8x8xf32>
    %444 = arith.mulf %439, %443 : vector<8x8xf32>
    %cst_304 = arith.constant dense<0.000000e+00> : vector<8x8xf32>
    %445 = tpu.matmul %444, %430, %cst_304 {dimension_numbers = #tpu.dot_dimension_numbers<[1], [0], [0], [1], [0, 0, 1, 1], [], []>} : vector<8x8xf32>, vector<8x8xf32>, vector<8x8xf32> -> vector<8x8xf32>
    %c4_305 = arith.constant 4 : index
    %c0_306 = arith.constant 0 : index
    %c0_307 = arith.constant 0 : index
    %446 = vector.load %arg4[%c4_305, %c0_306, %c0_307] : memref<8x8x32xf32, #tpu.memory_space<vmem>>, vector<1x8x32xf32>
    %447 = vector.shape_cast %446 : vector<1x8x32xf32> to vector<8x32xf32>
    %cst_308 = arith.constant dense<0.000000e+00> : vector<8x32xf32>
    %448 = tpu.matmul %445, %447, %cst_308 {dimension_numbers = #tpu.dot_dimension_numbers<[1], [0], [0], [1], [0, 0, 1, 1], [], []>} : vector<8x8xf32>, vector<8x32xf32>, vector<8x32xf32> -> vector<8x32xf32>
    %449 = arith.addf %409, %448 : vector<8x32xf32>
    %c15 = arith.constant 15 : index
    %c0_309 = arith.constant 0 : index
    %c0_310 = arith.constant 0 : index
    %450 = vector.load %arg2[%c15, %c0_309, %c0_310] : memref<24x32x8xf32, #tpu.memory_space<vmem>>, vector<1x32x8xf32>
    %451 = vector.shape_cast %450 : vector<1x32x8xf32> to vector<32x8xf32>
    %cst_311 = arith.constant dense<0.000000e+00> : vector<8x8xf32>
    %452 = tpu.matmul %406, %451, %cst_311 {dimension_numbers = #tpu.dot_dimension_numbers<[1], [0], [0], [1], [0, 0, 1, 1], [], []>} : vector<8x32xf32>, vector<32x8xf32>, vector<8x8xf32> -> vector<8x8xf32>
    %c15_312 = arith.constant 15 : index
    %c0_313 = arith.constant 0 : index
    %c0_314 = arith.constant 0 : index
    %453 = vector.load %arg3[%c15_312, %c0_313, %c0_314] : memref<24x1x8xf32, #tpu.memory_space<vmem>>, vector<1x1x8xf32>
    %454 = vector.shape_cast %453 : vector<1x1x8xf32> to vector<1x8xf32>
    %455 = vector.broadcast %454 : vector<1x8xf32> to vector<8x8xf32>
    %456 = arith.addf %452, %455 : vector<8x8xf32>
    %c16 = arith.constant 16 : index
    %c0_315 = arith.constant 0 : index
    %c0_316 = arith.constant 0 : index
    %457 = vector.load %arg2[%c16, %c0_315, %c0_316] : memref<24x32x8xf32, #tpu.memory_space<vmem>>, vector<1x32x8xf32>
    %458 = vector.shape_cast %457 : vector<1x32x8xf32> to vector<32x8xf32>
    %cst_317 = arith.constant dense<0.000000e+00> : vector<8x8xf32>
    %459 = tpu.matmul %406, %458, %cst_317 {dimension_numbers = #tpu.dot_dimension_numbers<[1], [0], [0], [1], [0, 0, 1, 1], [], []>} : vector<8x32xf32>, vector<32x8xf32>, vector<8x8xf32> -> vector<8x8xf32>
    %c16_318 = arith.constant 16 : index
    %c0_319 = arith.constant 0 : index
    %c0_320 = arith.constant 0 : index
    %460 = vector.load %arg3[%c16_318, %c0_319, %c0_320] : memref<24x1x8xf32, #tpu.memory_space<vmem>>, vector<1x1x8xf32>
    %461 = vector.shape_cast %460 : vector<1x1x8xf32> to vector<1x8xf32>
    %462 = vector.broadcast %461 : vector<1x8xf32> to vector<8x8xf32>
    %463 = arith.addf %459, %462 : vector<8x8xf32>
    %c17 = arith.constant 17 : index
    %c0_321 = arith.constant 0 : index
    %c0_322 = arith.constant 0 : index
    %464 = vector.load %arg2[%c17, %c0_321, %c0_322] : memref<24x32x8xf32, #tpu.memory_space<vmem>>, vector<1x32x8xf32>
    %465 = vector.shape_cast %464 : vector<1x32x8xf32> to vector<32x8xf32>
    %cst_323 = arith.constant dense<0.000000e+00> : vector<8x8xf32>
    %466 = tpu.matmul %406, %465, %cst_323 {dimension_numbers = #tpu.dot_dimension_numbers<[1], [0], [0], [1], [0, 0, 1, 1], [], []>} : vector<8x32xf32>, vector<32x8xf32>, vector<8x8xf32> -> vector<8x8xf32>
    %c17_324 = arith.constant 17 : index
    %c0_325 = arith.constant 0 : index
    %c0_326 = arith.constant 0 : index
    %467 = vector.load %arg3[%c17_324, %c0_325, %c0_326] : memref<24x1x8xf32, #tpu.memory_space<vmem>>, vector<1x1x8xf32>
    %468 = vector.shape_cast %467 : vector<1x1x8xf32> to vector<1x8xf32>
    %469 = vector.broadcast %468 : vector<1x8xf32> to vector<8x8xf32>
    %470 = arith.addf %466, %469 : vector<8x8xf32>
    %cst_327 = arith.constant dense<0.000000e+00> : vector<8x8xf32>
    %471 = tpu.matmul %456, %463, %cst_327 {dimension_numbers = #tpu.dot_dimension_numbers<[1], [1], [0], [0], [0, 0, 1, 0], [], []>} : vector<8x8xf32>, vector<8x8xf32>, vector<8x8xf32> -> vector<8x8xf32>
    %cst_328 = arith.constant 0.353553385 : f32
    %472 = vector.broadcast %cst_328 : f32 to vector<8x8xf32>
    %473 = arith.mulf %471, %472 : vector<8x8xf32>
    %474 = arith.addf %473, %408 : vector<8x8xf32>
    %cst_329 = arith.constant dense<0xFF800000> : vector<8xf32>
    %475 = vector.multi_reduction <maximumf>, %474, %cst_329 [1] : vector<8x8xf32> to vector<8xf32>
    %476 = vector.shape_cast %475 : vector<8xf32> to vector<8x1xf32>
    %477 = vector.broadcast %476 : vector<8x1xf32> to vector<8x8xf32>
    %478 = arith.subf %474, %477 : vector<8x8xf32>
    %479 = math.exp %478 : vector<8x8xf32>
    %cst_330 = arith.constant dense<0.000000e+00> : vector<8xf32>
    %480 = vector.multi_reduction <add>, %479, %cst_330 [1] : vector<8x8xf32> to vector<8xf32>
    %481 = vector.shape_cast %480 : vector<8xf32> to vector<8x1xf32>
    %482 = tpu.reciprocal %481 {approx = true} : vector<8x1xf32> -> vector<8x1xf32>
    %483 = vector.broadcast %482 : vector<8x1xf32> to vector<8x8xf32>
    %484 = arith.mulf %479, %483 : vector<8x8xf32>
    %cst_331 = arith.constant dense<0.000000e+00> : vector<8x8xf32>
    %485 = tpu.matmul %484, %470, %cst_331 {dimension_numbers = #tpu.dot_dimension_numbers<[1], [0], [0], [1], [0, 0, 1, 1], [], []>} : vector<8x8xf32>, vector<8x8xf32>, vector<8x8xf32> -> vector<8x8xf32>
    %c5_332 = arith.constant 5 : index
    %c0_333 = arith.constant 0 : index
    %c0_334 = arith.constant 0 : index
    %486 = vector.load %arg4[%c5_332, %c0_333, %c0_334] : memref<8x8x32xf32, #tpu.memory_space<vmem>>, vector<1x8x32xf32>
    %487 = vector.shape_cast %486 : vector<1x8x32xf32> to vector<8x32xf32>
    %cst_335 = arith.constant dense<0.000000e+00> : vector<8x32xf32>
    %488 = tpu.matmul %485, %487, %cst_335 {dimension_numbers = #tpu.dot_dimension_numbers<[1], [0], [0], [1], [0, 0, 1, 1], [], []>} : vector<8x8xf32>, vector<8x32xf32>, vector<8x32xf32> -> vector<8x32xf32>
    %489 = arith.addf %449, %488 : vector<8x32xf32>
    %c18 = arith.constant 18 : index
    %c0_336 = arith.constant 0 : index
    %c0_337 = arith.constant 0 : index
    %490 = vector.load %arg2[%c18, %c0_336, %c0_337] : memref<24x32x8xf32, #tpu.memory_space<vmem>>, vector<1x32x8xf32>
    %491 = vector.shape_cast %490 : vector<1x32x8xf32> to vector<32x8xf32>
    %cst_338 = arith.constant dense<0.000000e+00> : vector<8x8xf32>
    %492 = tpu.matmul %406, %491, %cst_338 {dimension_numbers = #tpu.dot_dimension_numbers<[1], [0], [0], [1], [0, 0, 1, 1], [], []>} : vector<8x32xf32>, vector<32x8xf32>, vector<8x8xf32> -> vector<8x8xf32>
    %c18_339 = arith.constant 18 : index
    %c0_340 = arith.constant 0 : index
    %c0_341 = arith.constant 0 : index
    %493 = vector.load %arg3[%c18_339, %c0_340, %c0_341] : memref<24x1x8xf32, #tpu.memory_space<vmem>>, vector<1x1x8xf32>
    %494 = vector.shape_cast %493 : vector<1x1x8xf32> to vector<1x8xf32>
    %495 = vector.broadcast %494 : vector<1x8xf32> to vector<8x8xf32>
    %496 = arith.addf %492, %495 : vector<8x8xf32>
    %c19 = arith.constant 19 : index
    %c0_342 = arith.constant 0 : index
    %c0_343 = arith.constant 0 : index
    %497 = vector.load %arg2[%c19, %c0_342, %c0_343] : memref<24x32x8xf32, #tpu.memory_space<vmem>>, vector<1x32x8xf32>
    %498 = vector.shape_cast %497 : vector<1x32x8xf32> to vector<32x8xf32>
    %cst_344 = arith.constant dense<0.000000e+00> : vector<8x8xf32>
    %499 = tpu.matmul %406, %498, %cst_344 {dimension_numbers = #tpu.dot_dimension_numbers<[1], [0], [0], [1], [0, 0, 1, 1], [], []>} : vector<8x32xf32>, vector<32x8xf32>, vector<8x8xf32> -> vector<8x8xf32>
    %c19_345 = arith.constant 19 : index
    %c0_346 = arith.constant 0 : index
    %c0_347 = arith.constant 0 : index
    %500 = vector.load %arg3[%c19_345, %c0_346, %c0_347] : memref<24x1x8xf32, #tpu.memory_space<vmem>>, vector<1x1x8xf32>
    %501 = vector.shape_cast %500 : vector<1x1x8xf32> to vector<1x8xf32>
    %502 = vector.broadcast %501 : vector<1x8xf32> to vector<8x8xf32>
    %503 = arith.addf %499, %502 : vector<8x8xf32>
    %c20 = arith.constant 20 : index
    %c0_348 = arith.constant 0 : index
    %c0_349 = arith.constant 0 : index
    %504 = vector.load %arg2[%c20, %c0_348, %c0_349] : memref<24x32x8xf32, #tpu.memory_space<vmem>>, vector<1x32x8xf32>
    %505 = vector.shape_cast %504 : vector<1x32x8xf32> to vector<32x8xf32>
    %cst_350 = arith.constant dense<0.000000e+00> : vector<8x8xf32>
    %506 = tpu.matmul %406, %505, %cst_350 {dimension_numbers = #tpu.dot_dimension_numbers<[1], [0], [0], [1], [0, 0, 1, 1], [], []>} : vector<8x32xf32>, vector<32x8xf32>, vector<8x8xf32> -> vector<8x8xf32>
    %c20_351 = arith.constant 20 : index
    %c0_352 = arith.constant 0 : index
    %c0_353 = arith.constant 0 : index
    %507 = vector.load %arg3[%c20_351, %c0_352, %c0_353] : memref<24x1x8xf32, #tpu.memory_space<vmem>>, vector<1x1x8xf32>
    %508 = vector.shape_cast %507 : vector<1x1x8xf32> to vector<1x8xf32>
    %509 = vector.broadcast %508 : vector<1x8xf32> to vector<8x8xf32>
    %510 = arith.addf %506, %509 : vector<8x8xf32>
    %cst_354 = arith.constant dense<0.000000e+00> : vector<8x8xf32>
    %511 = tpu.matmul %496, %503, %cst_354 {dimension_numbers = #tpu.dot_dimension_numbers<[1], [1], [0], [0], [0, 0, 1, 0], [], []>} : vector<8x8xf32>, vector<8x8xf32>, vector<8x8xf32> -> vector<8x8xf32>
    %cst_355 = arith.constant 0.353553385 : f32
    %512 = vector.broadcast %cst_355 : f32 to vector<8x8xf32>
    %513 = arith.mulf %511, %512 : vector<8x8xf32>
    %514 = arith.addf %513, %408 : vector<8x8xf32>
    %cst_356 = arith.constant dense<0xFF800000> : vector<8xf32>
    %515 = vector.multi_reduction <maximumf>, %514, %cst_356 [1] : vector<8x8xf32> to vector<8xf32>
    %516 = vector.shape_cast %515 : vector<8xf32> to vector<8x1xf32>
    %517 = vector.broadcast %516 : vector<8x1xf32> to vector<8x8xf32>
    %518 = arith.subf %514, %517 : vector<8x8xf32>
    %519 = math.exp %518 : vector<8x8xf32>
    %cst_357 = arith.constant dense<0.000000e+00> : vector<8xf32>
    %520 = vector.multi_reduction <add>, %519, %cst_357 [1] : vector<8x8xf32> to vector<8xf32>
    %521 = vector.shape_cast %520 : vector<8xf32> to vector<8x1xf32>
    %522 = tpu.reciprocal %521 {approx = true} : vector<8x1xf32> -> vector<8x1xf32>
    %523 = vector.broadcast %522 : vector<8x1xf32> to vector<8x8xf32>
    %524 = arith.mulf %519, %523 : vector<8x8xf32>
    %cst_358 = arith.constant dense<0.000000e+00> : vector<8x8xf32>
    %525 = tpu.matmul %524, %510, %cst_358 {dimension_numbers = #tpu.dot_dimension_numbers<[1], [0], [0], [1], [0, 0, 1, 1], [], []>} : vector<8x8xf32>, vector<8x8xf32>, vector<8x8xf32> -> vector<8x8xf32>
    %c6_359 = arith.constant 6 : index
    %c0_360 = arith.constant 0 : index
    %c0_361 = arith.constant 0 : index
    %526 = vector.load %arg4[%c6_359, %c0_360, %c0_361] : memref<8x8x32xf32, #tpu.memory_space<vmem>>, vector<1x8x32xf32>
    %527 = vector.shape_cast %526 : vector<1x8x32xf32> to vector<8x32xf32>
    %cst_362 = arith.constant dense<0.000000e+00> : vector<8x32xf32>
    %528 = tpu.matmul %525, %527, %cst_362 {dimension_numbers = #tpu.dot_dimension_numbers<[1], [0], [0], [1], [0, 0, 1, 1], [], []>} : vector<8x8xf32>, vector<8x32xf32>, vector<8x32xf32> -> vector<8x32xf32>
    %529 = arith.addf %489, %528 : vector<8x32xf32>
    %c21 = arith.constant 21 : index
    %c0_363 = arith.constant 0 : index
    %c0_364 = arith.constant 0 : index
    %530 = vector.load %arg2[%c21, %c0_363, %c0_364] : memref<24x32x8xf32, #tpu.memory_space<vmem>>, vector<1x32x8xf32>
    %531 = vector.shape_cast %530 : vector<1x32x8xf32> to vector<32x8xf32>
    %cst_365 = arith.constant dense<0.000000e+00> : vector<8x8xf32>
    %532 = tpu.matmul %406, %531, %cst_365 {dimension_numbers = #tpu.dot_dimension_numbers<[1], [0], [0], [1], [0, 0, 1, 1], [], []>} : vector<8x32xf32>, vector<32x8xf32>, vector<8x8xf32> -> vector<8x8xf32>
    %c21_366 = arith.constant 21 : index
    %c0_367 = arith.constant 0 : index
    %c0_368 = arith.constant 0 : index
    %533 = vector.load %arg3[%c21_366, %c0_367, %c0_368] : memref<24x1x8xf32, #tpu.memory_space<vmem>>, vector<1x1x8xf32>
    %534 = vector.shape_cast %533 : vector<1x1x8xf32> to vector<1x8xf32>
    %535 = vector.broadcast %534 : vector<1x8xf32> to vector<8x8xf32>
    %536 = arith.addf %532, %535 : vector<8x8xf32>
    %c22 = arith.constant 22 : index
    %c0_369 = arith.constant 0 : index
    %c0_370 = arith.constant 0 : index
    %537 = vector.load %arg2[%c22, %c0_369, %c0_370] : memref<24x32x8xf32, #tpu.memory_space<vmem>>, vector<1x32x8xf32>
    %538 = vector.shape_cast %537 : vector<1x32x8xf32> to vector<32x8xf32>
    %cst_371 = arith.constant dense<0.000000e+00> : vector<8x8xf32>
    %539 = tpu.matmul %406, %538, %cst_371 {dimension_numbers = #tpu.dot_dimension_numbers<[1], [0], [0], [1], [0, 0, 1, 1], [], []>} : vector<8x32xf32>, vector<32x8xf32>, vector<8x8xf32> -> vector<8x8xf32>
    %c22_372 = arith.constant 22 : index
    %c0_373 = arith.constant 0 : index
    %c0_374 = arith.constant 0 : index
    %540 = vector.load %arg3[%c22_372, %c0_373, %c0_374] : memref<24x1x8xf32, #tpu.memory_space<vmem>>, vector<1x1x8xf32>
    %541 = vector.shape_cast %540 : vector<1x1x8xf32> to vector<1x8xf32>
    %542 = vector.broadcast %541 : vector<1x8xf32> to vector<8x8xf32>
    %543 = arith.addf %539, %542 : vector<8x8xf32>
    %c23 = arith.constant 23 : index
    %c0_375 = arith.constant 0 : index
    %c0_376 = arith.constant 0 : index
    %544 = vector.load %arg2[%c23, %c0_375, %c0_376] : memref<24x32x8xf32, #tpu.memory_space<vmem>>, vector<1x32x8xf32>
    %545 = vector.shape_cast %544 : vector<1x32x8xf32> to vector<32x8xf32>
    %cst_377 = arith.constant dense<0.000000e+00> : vector<8x8xf32>
    %546 = tpu.matmul %406, %545, %cst_377 {dimension_numbers = #tpu.dot_dimension_numbers<[1], [0], [0], [1], [0, 0, 1, 1], [], []>} : vector<8x32xf32>, vector<32x8xf32>, vector<8x8xf32> -> vector<8x8xf32>
    %c23_378 = arith.constant 23 : index
    %c0_379 = arith.constant 0 : index
    %c0_380 = arith.constant 0 : index
    %547 = vector.load %arg3[%c23_378, %c0_379, %c0_380] : memref<24x1x8xf32, #tpu.memory_space<vmem>>, vector<1x1x8xf32>
    %548 = vector.shape_cast %547 : vector<1x1x8xf32> to vector<1x8xf32>
    %549 = vector.broadcast %548 : vector<1x8xf32> to vector<8x8xf32>
    %550 = arith.addf %546, %549 : vector<8x8xf32>
    %cst_381 = arith.constant dense<0.000000e+00> : vector<8x8xf32>
    %551 = tpu.matmul %536, %543, %cst_381 {dimension_numbers = #tpu.dot_dimension_numbers<[1], [1], [0], [0], [0, 0, 1, 0], [], []>} : vector<8x8xf32>, vector<8x8xf32>, vector<8x8xf32> -> vector<8x8xf32>
    %cst_382 = arith.constant 0.353553385 : f32
    %552 = vector.broadcast %cst_382 : f32 to vector<8x8xf32>
    %553 = arith.mulf %551, %552 : vector<8x8xf32>
    %554 = arith.addf %553, %408 : vector<8x8xf32>
    %cst_383 = arith.constant dense<0xFF800000> : vector<8xf32>
    %555 = vector.multi_reduction <maximumf>, %554, %cst_383 [1] : vector<8x8xf32> to vector<8xf32>
    %556 = vector.shape_cast %555 : vector<8xf32> to vector<8x1xf32>
    %557 = vector.broadcast %556 : vector<8x1xf32> to vector<8x8xf32>
    %558 = arith.subf %554, %557 : vector<8x8xf32>
    %559 = math.exp %558 : vector<8x8xf32>
    %cst_384 = arith.constant dense<0.000000e+00> : vector<8xf32>
    %560 = vector.multi_reduction <add>, %559, %cst_384 [1] : vector<8x8xf32> to vector<8xf32>
    %561 = vector.shape_cast %560 : vector<8xf32> to vector<8x1xf32>
    %562 = tpu.reciprocal %561 {approx = true} : vector<8x1xf32> -> vector<8x1xf32>
    %563 = vector.broadcast %562 : vector<8x1xf32> to vector<8x8xf32>
    %564 = arith.mulf %559, %563 : vector<8x8xf32>
    %cst_385 = arith.constant dense<0.000000e+00> : vector<8x8xf32>
    %565 = tpu.matmul %564, %550, %cst_385 {dimension_numbers = #tpu.dot_dimension_numbers<[1], [0], [0], [1], [0, 0, 1, 1], [], []>} : vector<8x8xf32>, vector<8x8xf32>, vector<8x8xf32> -> vector<8x8xf32>
    %c7_386 = arith.constant 7 : index
    %c0_387 = arith.constant 0 : index
    %c0_388 = arith.constant 0 : index
    %566 = vector.load %arg4[%c7_386, %c0_387, %c0_388] : memref<8x8x32xf32, #tpu.memory_space<vmem>>, vector<1x8x32xf32>
    %567 = vector.shape_cast %566 : vector<1x8x32xf32> to vector<8x32xf32>
    %cst_389 = arith.constant dense<0.000000e+00> : vector<8x32xf32>
    %568 = tpu.matmul %565, %567, %cst_389 {dimension_numbers = #tpu.dot_dimension_numbers<[1], [0], [0], [1], [0, 0, 1, 1], [], []>} : vector<8x8xf32>, vector<8x32xf32>, vector<8x32xf32> -> vector<8x32xf32>
    %569 = arith.addf %529, %568 : vector<8x32xf32>
    %570 = vector.extract_strided_slice %405 {offsets = [8, 0], sizes = [8, 32], strides = [1, 1]} : vector<16x32xf32> to vector<8x32xf32>
    %c1_390 = arith.constant 1 : index
    %c0_391 = arith.constant 0 : index
    %c0_392 = arith.constant 0 : index
    %571 = vector.load %arg1[%c1_390, %c0_391, %c0_392] : memref<2x8x8xf32, #tpu.memory_space<vmem>>, vector<1x8x8xf32>
    %572 = vector.shape_cast %571 : vector<1x8x8xf32> to vector<8x8xf32>
    %cst_393 = arith.constant 0.000000e+00 : f32
    %573 = vector.broadcast %cst_393 : f32 to vector<8x32xf32>
    %c12_394 = arith.constant 12 : index
    %c0_395 = arith.constant 0 : index
    %c0_396 = arith.constant 0 : index
    %574 = vector.load %arg2[%c12_394, %c0_395, %c0_396] : memref<24x32x8xf32, #tpu.memory_space<vmem>>, vector<1x32x8xf32>
    %575 = vector.shape_cast %574 : vector<1x32x8xf32> to vector<32x8xf32>
    %cst_397 = arith.constant dense<0.000000e+00> : vector<8x8xf32>
    %576 = tpu.matmul %570, %575, %cst_397 {dimension_numbers = #tpu.dot_dimension_numbers<[1], [0], [0], [1], [0, 0, 1, 1], [], []>} : vector<8x32xf32>, vector<32x8xf32>, vector<8x8xf32> -> vector<8x8xf32>
    %c12_398 = arith.constant 12 : index
    %c0_399 = arith.constant 0 : index
    %c0_400 = arith.constant 0 : index
    %577 = vector.load %arg3[%c12_398, %c0_399, %c0_400] : memref<24x1x8xf32, #tpu.memory_space<vmem>>, vector<1x1x8xf32>
    %578 = vector.shape_cast %577 : vector<1x1x8xf32> to vector<1x8xf32>
    %579 = vector.broadcast %578 : vector<1x8xf32> to vector<8x8xf32>
    %580 = arith.addf %576, %579 : vector<8x8xf32>
    %c13_401 = arith.constant 13 : index
    %c0_402 = arith.constant 0 : index
    %c0_403 = arith.constant 0 : index
    %581 = vector.load %arg2[%c13_401, %c0_402, %c0_403] : memref<24x32x8xf32, #tpu.memory_space<vmem>>, vector<1x32x8xf32>
    %582 = vector.shape_cast %581 : vector<1x32x8xf32> to vector<32x8xf32>
    %cst_404 = arith.constant dense<0.000000e+00> : vector<8x8xf32>
    %583 = tpu.matmul %570, %582, %cst_404 {dimension_numbers = #tpu.dot_dimension_numbers<[1], [0], [0], [1], [0, 0, 1, 1], [], []>} : vector<8x32xf32>, vector<32x8xf32>, vector<8x8xf32> -> vector<8x8xf32>
    %c13_405 = arith.constant 13 : index
    %c0_406 = arith.constant 0 : index
    %c0_407 = arith.constant 0 : index
    %584 = vector.load %arg3[%c13_405, %c0_406, %c0_407] : memref<24x1x8xf32, #tpu.memory_space<vmem>>, vector<1x1x8xf32>
    %585 = vector.shape_cast %584 : vector<1x1x8xf32> to vector<1x8xf32>
    %586 = vector.broadcast %585 : vector<1x8xf32> to vector<8x8xf32>
    %587 = arith.addf %583, %586 : vector<8x8xf32>
    %c14_408 = arith.constant 14 : index
    %c0_409 = arith.constant 0 : index
    %c0_410 = arith.constant 0 : index
    %588 = vector.load %arg2[%c14_408, %c0_409, %c0_410] : memref<24x32x8xf32, #tpu.memory_space<vmem>>, vector<1x32x8xf32>
    %589 = vector.shape_cast %588 : vector<1x32x8xf32> to vector<32x8xf32>
    %cst_411 = arith.constant dense<0.000000e+00> : vector<8x8xf32>
    %590 = tpu.matmul %570, %589, %cst_411 {dimension_numbers = #tpu.dot_dimension_numbers<[1], [0], [0], [1], [0, 0, 1, 1], [], []>} : vector<8x32xf32>, vector<32x8xf32>, vector<8x8xf32> -> vector<8x8xf32>
    %c14_412 = arith.constant 14 : index
    %c0_413 = arith.constant 0 : index
    %c0_414 = arith.constant 0 : index
    %591 = vector.load %arg3[%c14_412, %c0_413, %c0_414] : memref<24x1x8xf32, #tpu.memory_space<vmem>>, vector<1x1x8xf32>
    %592 = vector.shape_cast %591 : vector<1x1x8xf32> to vector<1x8xf32>
    %593 = vector.broadcast %592 : vector<1x8xf32> to vector<8x8xf32>
    %594 = arith.addf %590, %593 : vector<8x8xf32>
    %cst_415 = arith.constant dense<0.000000e+00> : vector<8x8xf32>
    %595 = tpu.matmul %580, %587, %cst_415 {dimension_numbers = #tpu.dot_dimension_numbers<[1], [1], [0], [0], [0, 0, 1, 0], [], []>} : vector<8x8xf32>, vector<8x8xf32>, vector<8x8xf32> -> vector<8x8xf32>
    %cst_416 = arith.constant 0.353553385 : f32
    %596 = vector.broadcast %cst_416 : f32 to vector<8x8xf32>
    %597 = arith.mulf %595, %596 : vector<8x8xf32>
    %598 = arith.addf %597, %572 : vector<8x8xf32>
    %cst_417 = arith.constant dense<0xFF800000> : vector<8xf32>
    %599 = vector.multi_reduction <maximumf>, %598, %cst_417 [1] : vector<8x8xf32> to vector<8xf32>
    %600 = vector.shape_cast %599 : vector<8xf32> to vector<8x1xf32>
    %601 = vector.broadcast %600 : vector<8x1xf32> to vector<8x8xf32>
    %602 = arith.subf %598, %601 : vector<8x8xf32>
    %603 = math.exp %602 : vector<8x8xf32>
    %cst_418 = arith.constant dense<0.000000e+00> : vector<8xf32>
    %604 = vector.multi_reduction <add>, %603, %cst_418 [1] : vector<8x8xf32> to vector<8xf32>
    %605 = vector.shape_cast %604 : vector<8xf32> to vector<8x1xf32>
    %606 = tpu.reciprocal %605 {approx = true} : vector<8x1xf32> -> vector<8x1xf32>
    %607 = vector.broadcast %606 : vector<8x1xf32> to vector<8x8xf32>
    %608 = arith.mulf %603, %607 : vector<8x8xf32>
    %cst_419 = arith.constant dense<0.000000e+00> : vector<8x8xf32>
    %609 = tpu.matmul %608, %594, %cst_419 {dimension_numbers = #tpu.dot_dimension_numbers<[1], [0], [0], [1], [0, 0, 1, 1], [], []>} : vector<8x8xf32>, vector<8x8xf32>, vector<8x8xf32> -> vector<8x8xf32>
    %c4_420 = arith.constant 4 : index
    %c0_421 = arith.constant 0 : index
    %c0_422 = arith.constant 0 : index
    %610 = vector.load %arg4[%c4_420, %c0_421, %c0_422] : memref<8x8x32xf32, #tpu.memory_space<vmem>>, vector<1x8x32xf32>
    %611 = vector.shape_cast %610 : vector<1x8x32xf32> to vector<8x32xf32>
    %cst_423 = arith.constant dense<0.000000e+00> : vector<8x32xf32>
    %612 = tpu.matmul %609, %611, %cst_423 {dimension_numbers = #tpu.dot_dimension_numbers<[1], [0], [0], [1], [0, 0, 1, 1], [], []>} : vector<8x8xf32>, vector<8x32xf32>, vector<8x32xf32> -> vector<8x32xf32>
    %613 = arith.addf %573, %612 : vector<8x32xf32>
    %c15_424 = arith.constant 15 : index
    %c0_425 = arith.constant 0 : index
    %c0_426 = arith.constant 0 : index
    %614 = vector.load %arg2[%c15_424, %c0_425, %c0_426] : memref<24x32x8xf32, #tpu.memory_space<vmem>>, vector<1x32x8xf32>
    %615 = vector.shape_cast %614 : vector<1x32x8xf32> to vector<32x8xf32>
    %cst_427 = arith.constant dense<0.000000e+00> : vector<8x8xf32>
    %616 = tpu.matmul %570, %615, %cst_427 {dimension_numbers = #tpu.dot_dimension_numbers<[1], [0], [0], [1], [0, 0, 1, 1], [], []>} : vector<8x32xf32>, vector<32x8xf32>, vector<8x8xf32> -> vector<8x8xf32>
    %c15_428 = arith.constant 15 : index
    %c0_429 = arith.constant 0 : index
    %c0_430 = arith.constant 0 : index
    %617 = vector.load %arg3[%c15_428, %c0_429, %c0_430] : memref<24x1x8xf32, #tpu.memory_space<vmem>>, vector<1x1x8xf32>
    %618 = vector.shape_cast %617 : vector<1x1x8xf32> to vector<1x8xf32>
    %619 = vector.broadcast %618 : vector<1x8xf32> to vector<8x8xf32>
    %620 = arith.addf %616, %619 : vector<8x8xf32>
    %c16_431 = arith.constant 16 : index
    %c0_432 = arith.constant 0 : index
    %c0_433 = arith.constant 0 : index
    %621 = vector.load %arg2[%c16_431, %c0_432, %c0_433] : memref<24x32x8xf32, #tpu.memory_space<vmem>>, vector<1x32x8xf32>
    %622 = vector.shape_cast %621 : vector<1x32x8xf32> to vector<32x8xf32>
    %cst_434 = arith.constant dense<0.000000e+00> : vector<8x8xf32>
    %623 = tpu.matmul %570, %622, %cst_434 {dimension_numbers = #tpu.dot_dimension_numbers<[1], [0], [0], [1], [0, 0, 1, 1], [], []>} : vector<8x32xf32>, vector<32x8xf32>, vector<8x8xf32> -> vector<8x8xf32>
    %c16_435 = arith.constant 16 : index
    %c0_436 = arith.constant 0 : index
    %c0_437 = arith.constant 0 : index
    %624 = vector.load %arg3[%c16_435, %c0_436, %c0_437] : memref<24x1x8xf32, #tpu.memory_space<vmem>>, vector<1x1x8xf32>
    %625 = vector.shape_cast %624 : vector<1x1x8xf32> to vector<1x8xf32>
    %626 = vector.broadcast %625 : vector<1x8xf32> to vector<8x8xf32>
    %627 = arith.addf %623, %626 : vector<8x8xf32>
    %c17_438 = arith.constant 17 : index
    %c0_439 = arith.constant 0 : index
    %c0_440 = arith.constant 0 : index
    %628 = vector.load %arg2[%c17_438, %c0_439, %c0_440] : memref<24x32x8xf32, #tpu.memory_space<vmem>>, vector<1x32x8xf32>
    %629 = vector.shape_cast %628 : vector<1x32x8xf32> to vector<32x8xf32>
    %cst_441 = arith.constant dense<0.000000e+00> : vector<8x8xf32>
    %630 = tpu.matmul %570, %629, %cst_441 {dimension_numbers = #tpu.dot_dimension_numbers<[1], [0], [0], [1], [0, 0, 1, 1], [], []>} : vector<8x32xf32>, vector<32x8xf32>, vector<8x8xf32> -> vector<8x8xf32>
    %c17_442 = arith.constant 17 : index
    %c0_443 = arith.constant 0 : index
    %c0_444 = arith.constant 0 : index
    %631 = vector.load %arg3[%c17_442, %c0_443, %c0_444] : memref<24x1x8xf32, #tpu.memory_space<vmem>>, vector<1x1x8xf32>
    %632 = vector.shape_cast %631 : vector<1x1x8xf32> to vector<1x8xf32>
    %633 = vector.broadcast %632 : vector<1x8xf32> to vector<8x8xf32>
    %634 = arith.addf %630, %633 : vector<8x8xf32>
    %cst_445 = arith.constant dense<0.000000e+00> : vector<8x8xf32>
    %635 = tpu.matmul %620, %627, %cst_445 {dimension_numbers = #tpu.dot_dimension_numbers<[1], [1], [0], [0], [0, 0, 1, 0], [], []>} : vector<8x8xf32>, vector<8x8xf32>, vector<8x8xf32> -> vector<8x8xf32>
    %cst_446 = arith.constant 0.353553385 : f32
    %636 = vector.broadcast %cst_446 : f32 to vector<8x8xf32>
    %637 = arith.mulf %635, %636 : vector<8x8xf32>
    %638 = arith.addf %637, %572 : vector<8x8xf32>
    %cst_447 = arith.constant dense<0xFF800000> : vector<8xf32>
    %639 = vector.multi_reduction <maximumf>, %638, %cst_447 [1] : vector<8x8xf32> to vector<8xf32>
    %640 = vector.shape_cast %639 : vector<8xf32> to vector<8x1xf32>
    %641 = vector.broadcast %640 : vector<8x1xf32> to vector<8x8xf32>
    %642 = arith.subf %638, %641 : vector<8x8xf32>
    %643 = math.exp %642 : vector<8x8xf32>
    %cst_448 = arith.constant dense<0.000000e+00> : vector<8xf32>
    %644 = vector.multi_reduction <add>, %643, %cst_448 [1] : vector<8x8xf32> to vector<8xf32>
    %645 = vector.shape_cast %644 : vector<8xf32> to vector<8x1xf32>
    %646 = tpu.reciprocal %645 {approx = true} : vector<8x1xf32> -> vector<8x1xf32>
    %647 = vector.broadcast %646 : vector<8x1xf32> to vector<8x8xf32>
    %648 = arith.mulf %643, %647 : vector<8x8xf32>
    %cst_449 = arith.constant dense<0.000000e+00> : vector<8x8xf32>
    %649 = tpu.matmul %648, %634, %cst_449 {dimension_numbers = #tpu.dot_dimension_numbers<[1], [0], [0], [1], [0, 0, 1, 1], [], []>} : vector<8x8xf32>, vector<8x8xf32>, vector<8x8xf32> -> vector<8x8xf32>
    %c5_450 = arith.constant 5 : index
    %c0_451 = arith.constant 0 : index
    %c0_452 = arith.constant 0 : index
    %650 = vector.load %arg4[%c5_450, %c0_451, %c0_452] : memref<8x8x32xf32, #tpu.memory_space<vmem>>, vector<1x8x32xf32>
    %651 = vector.shape_cast %650 : vector<1x8x32xf32> to vector<8x32xf32>
    %cst_453 = arith.constant dense<0.000000e+00> : vector<8x32xf32>
    %652 = tpu.matmul %649, %651, %cst_453 {dimension_numbers = #tpu.dot_dimension_numbers<[1], [0], [0], [1], [0, 0, 1, 1], [], []>} : vector<8x8xf32>, vector<8x32xf32>, vector<8x32xf32> -> vector<8x32xf32>
    %653 = arith.addf %613, %652 : vector<8x32xf32>
    %c18_454 = arith.constant 18 : index
    %c0_455 = arith.constant 0 : index
    %c0_456 = arith.constant 0 : index
    %654 = vector.load %arg2[%c18_454, %c0_455, %c0_456] : memref<24x32x8xf32, #tpu.memory_space<vmem>>, vector<1x32x8xf32>
    %655 = vector.shape_cast %654 : vector<1x32x8xf32> to vector<32x8xf32>
    %cst_457 = arith.constant dense<0.000000e+00> : vector<8x8xf32>
    %656 = tpu.matmul %570, %655, %cst_457 {dimension_numbers = #tpu.dot_dimension_numbers<[1], [0], [0], [1], [0, 0, 1, 1], [], []>} : vector<8x32xf32>, vector<32x8xf32>, vector<8x8xf32> -> vector<8x8xf32>
    %c18_458 = arith.constant 18 : index
    %c0_459 = arith.constant 0 : index
    %c0_460 = arith.constant 0 : index
    %657 = vector.load %arg3[%c18_458, %c0_459, %c0_460] : memref<24x1x8xf32, #tpu.memory_space<vmem>>, vector<1x1x8xf32>
    %658 = vector.shape_cast %657 : vector<1x1x8xf32> to vector<1x8xf32>
    %659 = vector.broadcast %658 : vector<1x8xf32> to vector<8x8xf32>
    %660 = arith.addf %656, %659 : vector<8x8xf32>
    %c19_461 = arith.constant 19 : index
    %c0_462 = arith.constant 0 : index
    %c0_463 = arith.constant 0 : index
    %661 = vector.load %arg2[%c19_461, %c0_462, %c0_463] : memref<24x32x8xf32, #tpu.memory_space<vmem>>, vector<1x32x8xf32>
    %662 = vector.shape_cast %661 : vector<1x32x8xf32> to vector<32x8xf32>
    %cst_464 = arith.constant dense<0.000000e+00> : vector<8x8xf32>
    %663 = tpu.matmul %570, %662, %cst_464 {dimension_numbers = #tpu.dot_dimension_numbers<[1], [0], [0], [1], [0, 0, 1, 1], [], []>} : vector<8x32xf32>, vector<32x8xf32>, vector<8x8xf32> -> vector<8x8xf32>
    %c19_465 = arith.constant 19 : index
    %c0_466 = arith.constant 0 : index
    %c0_467 = arith.constant 0 : index
    %664 = vector.load %arg3[%c19_465, %c0_466, %c0_467] : memref<24x1x8xf32, #tpu.memory_space<vmem>>, vector<1x1x8xf32>
    %665 = vector.shape_cast %664 : vector<1x1x8xf32> to vector<1x8xf32>
    %666 = vector.broadcast %665 : vector<1x8xf32> to vector<8x8xf32>
    %667 = arith.addf %663, %666 : vector<8x8xf32>
    %c20_468 = arith.constant 20 : index
    %c0_469 = arith.constant 0 : index
    %c0_470 = arith.constant 0 : index
    %668 = vector.load %arg2[%c20_468, %c0_469, %c0_470] : memref<24x32x8xf32, #tpu.memory_space<vmem>>, vector<1x32x8xf32>
    %669 = vector.shape_cast %668 : vector<1x32x8xf32> to vector<32x8xf32>
    %cst_471 = arith.constant dense<0.000000e+00> : vector<8x8xf32>
    %670 = tpu.matmul %570, %669, %cst_471 {dimension_numbers = #tpu.dot_dimension_numbers<[1], [0], [0], [1], [0, 0, 1, 1], [], []>} : vector<8x32xf32>, vector<32x8xf32>, vector<8x8xf32> -> vector<8x8xf32>
    %c20_472 = arith.constant 20 : index
    %c0_473 = arith.constant 0 : index
    %c0_474 = arith.constant 0 : index
    %671 = vector.load %arg3[%c20_472, %c0_473, %c0_474] : memref<24x1x8xf32, #tpu.memory_space<vmem>>, vector<1x1x8xf32>
    %672 = vector.shape_cast %671 : vector<1x1x8xf32> to vector<1x8xf32>
    %673 = vector.broadcast %672 : vector<1x8xf32> to vector<8x8xf32>
    %674 = arith.addf %670, %673 : vector<8x8xf32>
    %cst_475 = arith.constant dense<0.000000e+00> : vector<8x8xf32>
    %675 = tpu.matmul %660, %667, %cst_475 {dimension_numbers = #tpu.dot_dimension_numbers<[1], [1], [0], [0], [0, 0, 1, 0], [], []>} : vector<8x8xf32>, vector<8x8xf32>, vector<8x8xf32> -> vector<8x8xf32>
    %cst_476 = arith.constant 0.353553385 : f32
    %676 = vector.broadcast %cst_476 : f32 to vector<8x8xf32>
    %677 = arith.mulf %675, %676 : vector<8x8xf32>
    %678 = arith.addf %677, %572 : vector<8x8xf32>
    %cst_477 = arith.constant dense<0xFF800000> : vector<8xf32>
    %679 = vector.multi_reduction <maximumf>, %678, %cst_477 [1] : vector<8x8xf32> to vector<8xf32>
    %680 = vector.shape_cast %679 : vector<8xf32> to vector<8x1xf32>
    %681 = vector.broadcast %680 : vector<8x1xf32> to vector<8x8xf32>
    %682 = arith.subf %678, %681 : vector<8x8xf32>
    %683 = math.exp %682 : vector<8x8xf32>
    %cst_478 = arith.constant dense<0.000000e+00> : vector<8xf32>
    %684 = vector.multi_reduction <add>, %683, %cst_478 [1] : vector<8x8xf32> to vector<8xf32>
    %685 = vector.shape_cast %684 : vector<8xf32> to vector<8x1xf32>
    %686 = tpu.reciprocal %685 {approx = true} : vector<8x1xf32> -> vector<8x1xf32>
    %687 = vector.broadcast %686 : vector<8x1xf32> to vector<8x8xf32>
    %688 = arith.mulf %683, %687 : vector<8x8xf32>
    %cst_479 = arith.constant dense<0.000000e+00> : vector<8x8xf32>
    %689 = tpu.matmul %688, %674, %cst_479 {dimension_numbers = #tpu.dot_dimension_numbers<[1], [0], [0], [1], [0, 0, 1, 1], [], []>} : vector<8x8xf32>, vector<8x8xf32>, vector<8x8xf32> -> vector<8x8xf32>
    %c6_480 = arith.constant 6 : index
    %c0_481 = arith.constant 0 : index
    %c0_482 = arith.constant 0 : index
    %690 = vector.load %arg4[%c6_480, %c0_481, %c0_482] : memref<8x8x32xf32, #tpu.memory_space<vmem>>, vector<1x8x32xf32>
    %691 = vector.shape_cast %690 : vector<1x8x32xf32> to vector<8x32xf32>
    %cst_483 = arith.constant dense<0.000000e+00> : vector<8x32xf32>
    %692 = tpu.matmul %689, %691, %cst_483 {dimension_numbers = #tpu.dot_dimension_numbers<[1], [0], [0], [1], [0, 0, 1, 1], [], []>} : vector<8x8xf32>, vector<8x32xf32>, vector<8x32xf32> -> vector<8x32xf32>
    %693 = arith.addf %653, %692 : vector<8x32xf32>
    %c21_484 = arith.constant 21 : index
    %c0_485 = arith.constant 0 : index
    %c0_486 = arith.constant 0 : index
    %694 = vector.load %arg2[%c21_484, %c0_485, %c0_486] : memref<24x32x8xf32, #tpu.memory_space<vmem>>, vector<1x32x8xf32>
    %695 = vector.shape_cast %694 : vector<1x32x8xf32> to vector<32x8xf32>
    %cst_487 = arith.constant dense<0.000000e+00> : vector<8x8xf32>
    %696 = tpu.matmul %570, %695, %cst_487 {dimension_numbers = #tpu.dot_dimension_numbers<[1], [0], [0], [1], [0, 0, 1, 1], [], []>} : vector<8x32xf32>, vector<32x8xf32>, vector<8x8xf32> -> vector<8x8xf32>
    %c21_488 = arith.constant 21 : index
    %c0_489 = arith.constant 0 : index
    %c0_490 = arith.constant 0 : index
    %697 = vector.load %arg3[%c21_488, %c0_489, %c0_490] : memref<24x1x8xf32, #tpu.memory_space<vmem>>, vector<1x1x8xf32>
    %698 = vector.shape_cast %697 : vector<1x1x8xf32> to vector<1x8xf32>
    %699 = vector.broadcast %698 : vector<1x8xf32> to vector<8x8xf32>
    %700 = arith.addf %696, %699 : vector<8x8xf32>
    %c22_491 = arith.constant 22 : index
    %c0_492 = arith.constant 0 : index
    %c0_493 = arith.constant 0 : index
    %701 = vector.load %arg2[%c22_491, %c0_492, %c0_493] : memref<24x32x8xf32, #tpu.memory_space<vmem>>, vector<1x32x8xf32>
    %702 = vector.shape_cast %701 : vector<1x32x8xf32> to vector<32x8xf32>
    %cst_494 = arith.constant dense<0.000000e+00> : vector<8x8xf32>
    %703 = tpu.matmul %570, %702, %cst_494 {dimension_numbers = #tpu.dot_dimension_numbers<[1], [0], [0], [1], [0, 0, 1, 1], [], []>} : vector<8x32xf32>, vector<32x8xf32>, vector<8x8xf32> -> vector<8x8xf32>
    %c22_495 = arith.constant 22 : index
    %c0_496 = arith.constant 0 : index
    %c0_497 = arith.constant 0 : index
    %704 = vector.load %arg3[%c22_495, %c0_496, %c0_497] : memref<24x1x8xf32, #tpu.memory_space<vmem>>, vector<1x1x8xf32>
    %705 = vector.shape_cast %704 : vector<1x1x8xf32> to vector<1x8xf32>
    %706 = vector.broadcast %705 : vector<1x8xf32> to vector<8x8xf32>
    %707 = arith.addf %703, %706 : vector<8x8xf32>
    %c23_498 = arith.constant 23 : index
    %c0_499 = arith.constant 0 : index
    %c0_500 = arith.constant 0 : index
    %708 = vector.load %arg2[%c23_498, %c0_499, %c0_500] : memref<24x32x8xf32, #tpu.memory_space<vmem>>, vector<1x32x8xf32>
    %709 = vector.shape_cast %708 : vector<1x32x8xf32> to vector<32x8xf32>
    %cst_501 = arith.constant dense<0.000000e+00> : vector<8x8xf32>
    %710 = tpu.matmul %570, %709, %cst_501 {dimension_numbers = #tpu.dot_dimension_numbers<[1], [0], [0], [1], [0, 0, 1, 1], [], []>} : vector<8x32xf32>, vector<32x8xf32>, vector<8x8xf32> -> vector<8x8xf32>
    %c23_502 = arith.constant 23 : index
    %c0_503 = arith.constant 0 : index
    %c0_504 = arith.constant 0 : index
    %711 = vector.load %arg3[%c23_502, %c0_503, %c0_504] : memref<24x1x8xf32, #tpu.memory_space<vmem>>, vector<1x1x8xf32>
    %712 = vector.shape_cast %711 : vector<1x1x8xf32> to vector<1x8xf32>
    %713 = vector.broadcast %712 : vector<1x8xf32> to vector<8x8xf32>
    %714 = arith.addf %710, %713 : vector<8x8xf32>
    %cst_505 = arith.constant dense<0.000000e+00> : vector<8x8xf32>
    %715 = tpu.matmul %700, %707, %cst_505 {dimension_numbers = #tpu.dot_dimension_numbers<[1], [1], [0], [0], [0, 0, 1, 0], [], []>} : vector<8x8xf32>, vector<8x8xf32>, vector<8x8xf32> -> vector<8x8xf32>
    %cst_506 = arith.constant 0.353553385 : f32
    %716 = vector.broadcast %cst_506 : f32 to vector<8x8xf32>
    %717 = arith.mulf %715, %716 : vector<8x8xf32>
    %718 = arith.addf %717, %572 : vector<8x8xf32>
    %cst_507 = arith.constant dense<0xFF800000> : vector<8xf32>
    %719 = vector.multi_reduction <maximumf>, %718, %cst_507 [1] : vector<8x8xf32> to vector<8xf32>
    %720 = vector.shape_cast %719 : vector<8xf32> to vector<8x1xf32>
    %721 = vector.broadcast %720 : vector<8x1xf32> to vector<8x8xf32>
    %722 = arith.subf %718, %721 : vector<8x8xf32>
    %723 = math.exp %722 : vector<8x8xf32>
    %cst_508 = arith.constant dense<0.000000e+00> : vector<8xf32>
    %724 = vector.multi_reduction <add>, %723, %cst_508 [1] : vector<8x8xf32> to vector<8xf32>
    %725 = vector.shape_cast %724 : vector<8xf32> to vector<8x1xf32>
    %726 = tpu.reciprocal %725 {approx = true} : vector<8x1xf32> -> vector<8x1xf32>
    %727 = vector.broadcast %726 : vector<8x1xf32> to vector<8x8xf32>
    %728 = arith.mulf %723, %727 : vector<8x8xf32>
    %cst_509 = arith.constant dense<0.000000e+00> : vector<8x8xf32>
    %729 = tpu.matmul %728, %714, %cst_509 {dimension_numbers = #tpu.dot_dimension_numbers<[1], [0], [0], [1], [0, 0, 1, 1], [], []>} : vector<8x8xf32>, vector<8x8xf32>, vector<8x8xf32> -> vector<8x8xf32>
    %c7_510 = arith.constant 7 : index
    %c0_511 = arith.constant 0 : index
    %c0_512 = arith.constant 0 : index
    %730 = vector.load %arg4[%c7_510, %c0_511, %c0_512] : memref<8x8x32xf32, #tpu.memory_space<vmem>>, vector<1x8x32xf32>
    %731 = vector.shape_cast %730 : vector<1x8x32xf32> to vector<8x32xf32>
    %cst_513 = arith.constant dense<0.000000e+00> : vector<8x32xf32>
    %732 = tpu.matmul %729, %731, %cst_513 {dimension_numbers = #tpu.dot_dimension_numbers<[1], [0], [0], [1], [0, 0, 1, 1], [], []>} : vector<8x8xf32>, vector<8x32xf32>, vector<8x32xf32> -> vector<8x32xf32>
    %733 = arith.addf %693, %732 : vector<8x32xf32>
    %734 = tpu.concatenate %569, %733 in 0 : vector<8x32xf32>, vector<8x32xf32> -> vector<16x32xf32>
    %c1_514 = arith.constant 1 : index
    %c0_515 = arith.constant 0 : index
    %c0_516 = arith.constant 0 : index
    %735 = vector.load %arg5[%c1_514, %c0_515, %c0_516] : memref<2x1x32xf32, #tpu.memory_space<vmem>>, vector<1x1x32xf32>
    %736 = vector.shape_cast %735 : vector<1x1x32xf32> to vector<1x32xf32>
    %737 = vector.broadcast %736 : vector<1x32xf32> to vector<16x32xf32>
    %738 = arith.addf %734, %737 : vector<16x32xf32>
    %739 = arith.addf %405, %738 : vector<16x32xf32>
    %c1_517 = arith.constant 1 : index
    %c0_518 = arith.constant 0 : index
    %c0_519 = arith.constant 0 : index
    %740 = vector.load %arg6[%c1_517, %c0_518, %c0_519] : memref<2x1x32xf32, #tpu.memory_space<vmem>>, vector<1x1x32xf32>
    %741 = vector.shape_cast %740 : vector<1x1x32xf32> to vector<1x32xf32>
    %c1_520 = arith.constant 1 : index
    %c0_521 = arith.constant 0 : index
    %c0_522 = arith.constant 0 : index
    %742 = vector.load %arg7[%c1_520, %c0_521, %c0_522] : memref<2x1x32xf32, #tpu.memory_space<vmem>>, vector<1x1x32xf32>
    %743 = vector.shape_cast %742 : vector<1x1x32xf32> to vector<1x32xf32>
    %cst_523 = arith.constant dense<0.000000e+00> : vector<16xf32>
    %744 = vector.multi_reduction <add>, %739, %cst_523 [1] : vector<16x32xf32> to vector<16xf32>
    %745 = vector.shape_cast %744 : vector<16xf32> to vector<16x1xf32>
    %cst_524 = arith.constant 3.200000e+01 : f32
    %746 = vector.broadcast %cst_524 : f32 to vector<16x1xf32>
    %747 = arith.divf %745, %746 : vector<16x1xf32>
    %748 = vector.broadcast %747 : vector<16x1xf32> to vector<16x32xf32>
    %749 = arith.subf %739, %748 : vector<16x32xf32>
    %750 = arith.mulf %749, %749 : vector<16x32xf32>
    %cst_525 = arith.constant dense<0.000000e+00> : vector<16xf32>
    %751 = vector.multi_reduction <add>, %750, %cst_525 [1] : vector<16x32xf32> to vector<16xf32>
    %752 = vector.shape_cast %751 : vector<16xf32> to vector<16x1xf32>
    %cst_526 = arith.constant 3.200000e+01 : f32
    %753 = vector.broadcast %cst_526 : f32 to vector<16x1xf32>
    %754 = arith.divf %752, %753 : vector<16x1xf32>
    %755 = vector.broadcast %747 : vector<16x1xf32> to vector<16x32xf32>
    %756 = arith.subf %739, %755 : vector<16x32xf32>
    %cst_527 = arith.constant 9.99999974E-6 : f32
    %757 = vector.broadcast %cst_527 : f32 to vector<16x1xf32>
    %758 = arith.addf %754, %757 : vector<16x1xf32>
    %759 = math.rsqrt %758 : vector<16x1xf32>
    %760 = vector.broadcast %759 : vector<16x1xf32> to vector<16x32xf32>
    %761 = arith.mulf %756, %760 : vector<16x32xf32>
    %762 = vector.broadcast %741 : vector<1x32xf32> to vector<16x32xf32>
    %763 = arith.mulf %761, %762 : vector<16x32xf32>
    %764 = vector.broadcast %743 : vector<1x32xf32> to vector<16x32xf32>
    %765 = arith.addf %763, %764 : vector<16x32xf32>
    %c1_528 = arith.constant 1 : index
    %c0_529 = arith.constant 0 : index
    %c0_530 = arith.constant 0 : index
    %766 = vector.load %arg8[%c1_528, %c0_529, %c0_530] : memref<2x32x64xf32, #tpu.memory_space<vmem>>, vector<1x32x64xf32>
    %767 = vector.shape_cast %766 : vector<1x32x64xf32> to vector<32x64xf32>
    %cst_531 = arith.constant dense<0.000000e+00> : vector<16x64xf32>
    %768 = tpu.matmul %765, %767, %cst_531 {dimension_numbers = #tpu.dot_dimension_numbers<[1], [0], [0], [1], [0, 0, 1, 1], [], []>} : vector<16x32xf32>, vector<32x64xf32>, vector<16x64xf32> -> vector<16x64xf32>
    %c1_532 = arith.constant 1 : index
    %c0_533 = arith.constant 0 : index
    %c0_534 = arith.constant 0 : index
    %769 = vector.load %arg9[%c1_532, %c0_533, %c0_534] : memref<2x1x64xf32, #tpu.memory_space<vmem>>, vector<1x1x64xf32>
    %770 = vector.shape_cast %769 : vector<1x1x64xf32> to vector<1x64xf32>
    %771 = vector.broadcast %770 : vector<1x64xf32> to vector<16x64xf32>
    %772 = arith.addf %768, %771 : vector<16x64xf32>
    %cst_535 = arith.constant 0.000000e+00 : f32
    %773 = vector.broadcast %cst_535 : f32 to vector<16x64xf32>
    %774 = arith.maximumf %772, %773 : vector<16x64xf32>
    %c1_536 = arith.constant 1 : index
    %c0_537 = arith.constant 0 : index
    %c0_538 = arith.constant 0 : index
    %775 = vector.load %arg10[%c1_536, %c0_537, %c0_538] : memref<2x64x32xf32, #tpu.memory_space<vmem>>, vector<1x64x32xf32>
    %776 = vector.shape_cast %775 : vector<1x64x32xf32> to vector<64x32xf32>
    %cst_539 = arith.constant dense<0.000000e+00> : vector<16x32xf32>
    %777 = tpu.matmul %774, %776, %cst_539 {dimension_numbers = #tpu.dot_dimension_numbers<[1], [0], [0], [1], [0, 0, 1, 1], [], []>} : vector<16x64xf32>, vector<64x32xf32>, vector<16x32xf32> -> vector<16x32xf32>
    %c1_540 = arith.constant 1 : index
    %c0_541 = arith.constant 0 : index
    %c0_542 = arith.constant 0 : index
    %778 = vector.load %arg11[%c1_540, %c0_541, %c0_542] : memref<2x1x32xf32, #tpu.memory_space<vmem>>, vector<1x1x32xf32>
    %779 = vector.shape_cast %778 : vector<1x1x32xf32> to vector<1x32xf32>
    %780 = vector.broadcast %779 : vector<1x32xf32> to vector<16x32xf32>
    %781 = arith.addf %777, %780 : vector<16x32xf32>
    %782 = arith.addf %765, %781 : vector<16x32xf32>
    %c1_543 = arith.constant 1 : index
    %c0_544 = arith.constant 0 : index
    %c0_545 = arith.constant 0 : index
    %783 = vector.load %arg12[%c1_543, %c0_544, %c0_545] : memref<2x1x32xf32, #tpu.memory_space<vmem>>, vector<1x1x32xf32>
    %784 = vector.shape_cast %783 : vector<1x1x32xf32> to vector<1x32xf32>
    %c1_546 = arith.constant 1 : index
    %c0_547 = arith.constant 0 : index
    %c0_548 = arith.constant 0 : index
    %785 = vector.load %arg13[%c1_546, %c0_547, %c0_548] : memref<2x1x32xf32, #tpu.memory_space<vmem>>, vector<1x1x32xf32>
    %786 = vector.shape_cast %785 : vector<1x1x32xf32> to vector<1x32xf32>
    %cst_549 = arith.constant dense<0.000000e+00> : vector<16xf32>
    %787 = vector.multi_reduction <add>, %782, %cst_549 [1] : vector<16x32xf32> to vector<16xf32>
    %788 = vector.shape_cast %787 : vector<16xf32> to vector<16x1xf32>
    %cst_550 = arith.constant 3.200000e+01 : f32
    %789 = vector.broadcast %cst_550 : f32 to vector<16x1xf32>
    %790 = arith.divf %788, %789 : vector<16x1xf32>
    %791 = vector.broadcast %790 : vector<16x1xf32> to vector<16x32xf32>
    %792 = arith.subf %782, %791 : vector<16x32xf32>
    %793 = arith.mulf %792, %792 : vector<16x32xf32>
    %cst_551 = arith.constant dense<0.000000e+00> : vector<16xf32>
    %794 = vector.multi_reduction <add>, %793, %cst_551 [1] : vector<16x32xf32> to vector<16xf32>
    %795 = vector.shape_cast %794 : vector<16xf32> to vector<16x1xf32>
    %cst_552 = arith.constant 3.200000e+01 : f32
    %796 = vector.broadcast %cst_552 : f32 to vector<16x1xf32>
    %797 = arith.divf %795, %796 : vector<16x1xf32>
    %798 = vector.broadcast %790 : vector<16x1xf32> to vector<16x32xf32>
    %799 = arith.subf %782, %798 : vector<16x32xf32>
    %cst_553 = arith.constant 9.99999974E-6 : f32
    %800 = vector.broadcast %cst_553 : f32 to vector<16x1xf32>
    %801 = arith.addf %797, %800 : vector<16x1xf32>
    %802 = math.rsqrt %801 : vector<16x1xf32>
    %803 = vector.broadcast %802 : vector<16x1xf32> to vector<16x32xf32>
    %804 = arith.mulf %799, %803 : vector<16x32xf32>
    %805 = vector.broadcast %784 : vector<1x32xf32> to vector<16x32xf32>
    %806 = arith.mulf %804, %805 : vector<16x32xf32>
    %807 = vector.broadcast %786 : vector<1x32xf32> to vector<16x32xf32>
    %808 = arith.addf %806, %807 : vector<16x32xf32>
    %c0_554 = arith.constant 0 : index
    %c0_555 = arith.constant 0 : index
    %809 = vector.load %arg14[%c0_554, %c0_555] : memref<16x32xf32, #tpu.memory_space<vmem>>, vector<16x32xf32>
    tpu.vector_store %arg14[%c0_554, %c0_555], %808 {strides = array<i32>} : memref<16x32xf32, #tpu.memory_space<vmem>>, vector<16x32xf32>,
    return
  }
}

</mosaic_0001>

<llo_original>
// kernel: output_token_decoder_forward.1
$region0: #{output_token_decoder_forward.1}
  #allocation0 [shape = 'u32[]', space=smem, size = 0x4, offset = 0x4, fixed_abs, tag = 'smem constant byte address 0x4 - core index']
  #allocation1 [shape = 'u32[144,128]{1,0:T(1,128)}', space=vmem, size = 0x12000, scoped, tag = 'internal scratch']
  %s0 = inlined_call_operand.vmem [shape: f32[16,32], index: 0, kind: input, shape index: {}]
  %s1 = inlined_call_operand.vmem [shape: f32[2,8,8], index: 1, kind: input, shape index: {}]
  %s2 = inlined_call_operand.vmem [shape: f32[24,32,8], index: 2, kind: input, shape index: {}]
  %s3 = inlined_call_operand.vmem [shape: f32[24,1,8], index: 3, kind: input, shape index: {}]
  %s4 = inlined_call_operand.vmem [shape: f32[8,8,32], index: 4, kind: input, shape index: {}]
  %s5 = inlined_call_operand.vmem [shape: f32[2,1,32], index: 5, kind: input, shape index: {}]
  %s6 = inlined_call_operand.vmem [shape: f32[2,1,32], index: 6, kind: input, shape index: {}]
  %s7 = inlined_call_operand.vmem [shape: f32[2,1,32], index: 7, kind: input, shape index: {}]
  %s8 = inlined_call_operand.vmem [shape: f32[2,32,64], index: 8, kind: input, shape index: {}]
  %s9 = inlined_call_operand.vmem [shape: f32[2,1,64], index: 9, kind: input, shape index: {}]
  %s10 = inlined_call_operand.vmem [shape: f32[2,64,32], index: 10, kind: input, shape index: {}]
  %s11 = inlined_call_operand.vmem [shape: f32[2,1,32], index: 11, kind: input, shape index: {}]
  %s12 = inlined_call_operand.vmem [shape: f32[2,1,32], index: 12, kind: input, shape index: {}]
  %s13 = inlined_call_operand.vmem [shape: f32[2,1,32], index: 13, kind: input, shape index: {}]
  %s14 = inlined_call_operand.hbm [shape: f32[16,32], index: 14, kind: output, shape index: {}]
  %s15 = sld [smem:[#allocation0]]
  $region66: #{output_token_decoder_forward.1} parent=0
    _
  %s17 = ssub.s32 1, %s15
  %s18 = scalar_select 0, %s17, %s15
  $region1: #{output_token_decoder_forward.1} parent=0
    #allocation2 [shape = 'u8[8192]{0}', space=vmem, size = 0x2000, scoped, tag = 'output window, operand 0, single buffered']
    #allocation3 [shape = 's32[1]{0}', space=sflag, size = 0x4, scoped, tag = 'scoped memory for output_token_decoder_forward.1']
    %19 = vsyncpa [#allocation3], 0
    // Predicated region
    $region2: #{output_token_decoder_forward.1} parent=1 // pred_check
      _
    $region3: #{output_token_decoder_forward.1} parent=1 // pred_check_branch
      %21 = sbr.rel (0) target = $region5
    $region4: #{output_token_decoder_forward.1} parent=1 // pred_region
      _
    $region5: #{output_token_decoder_forward.1} parent=1 // pred_fallthru
      _
    // Predicated region
    $region6: #{output_token_decoder_forward.1} parent=1 // pred_check
      _
    $region7: #{output_token_decoder_forward.1} parent=1 // pred_check_branch
      %23 = sbr.rel (0) target = $region9
    $region8: #{output_token_decoder_forward.1} parent=1 // pred_region
      _
    $region9: #{output_token_decoder_forward.1} parent=1 // pred_fallthru
      _
    // Predicated region
    $region10: #{output_token_decoder_forward.1} parent=1 // pred_check
      _
    $region11: #{output_token_decoder_forward.1} parent=1 // pred_check_branch
      %25 = sbr.rel (0) target = $region13
    $region12: #{output_token_decoder_forward.1} parent=1 // pred_region
      _
    $region13: #{output_token_decoder_forward.1} parent=1 // pred_fallthru
      _
    // Predicated region
    $region14: #{output_token_decoder_forward.1} parent=1 // pred_check
      _
    $region15: #{output_token_decoder_forward.1} parent=1 // pred_check_branch
      %27 = sbr.rel (0) target = $region17
    $region16: #{output_token_decoder_forward.1} parent=1 // pred_region
      _
    $region17: #{output_token_decoder_forward.1} parent=1 // pred_fallthru
      _
    // Predicated region
    $region18: #{output_token_decoder_forward.1} parent=1 // pred_check
      _
    $region19: #{output_token_decoder_forward.1} parent=1 // pred_check_branch
      %29 = sbr.rel (0) target = $region21
    $region20: #{output_token_decoder_forward.1} parent=1 // pred_region
      _
    $region21: #{output_token_decoder_forward.1} parent=1 // pred_fallthru
      _
    // Predicated region
    $region22: #{output_token_decoder_forward.1} parent=1 // pred_check
      _
    $region23: #{output_token_decoder_forward.1} parent=1 // pred_check_branch
      %31 = sbr.rel (0) target = $region25
    $region24: #{output_token_decoder_forward.1} parent=1 // pred_region
      _
    $region25: #{output_token_decoder_forward.1} parent=1 // pred_fallthru
      _
    // Predicated region
    $region26: #{output_token_decoder_forward.1} parent=1 // pred_check
      _
    $region27: #{output_token_decoder_forward.1} parent=1 // pred_check_branch
      %33 = sbr.rel (0) target = $region29
    $region28: #{output_token_decoder_forward.1} parent=1 // pred_region
      _
    $region29: #{output_token_decoder_forward.1} parent=1 // pred_fallthru
      _
    // Predicated region
    $region30: #{output_token_decoder_forward.1} parent=1 // pred_check
      _
    $region31: #{output_token_decoder_forward.1} parent=1 // pred_check_branch
      %35 = sbr.rel (0) target = $region33
    $region32: #{output_token_decoder_forward.1} parent=1 // pred_region
      _
    $region33: #{output_token_decoder_forward.1} parent=1 // pred_fallthru
      _
    // Predicated region
    $region34: #{output_token_decoder_forward.1} parent=1 // pred_check
      _
    $region35: #{output_token_decoder_forward.1} parent=1 // pred_check_branch
      %37 = sbr.rel (0) target = $region37
    $region36: #{output_token_decoder_forward.1} parent=1 // pred_region
      _
    $region37: #{output_token_decoder_forward.1} parent=1 // pred_fallthru
      _
    // Predicated region
    $region38: #{output_token_decoder_forward.1} parent=1 // pred_check
      _
    $region39: #{output_token_decoder_forward.1} parent=1 // pred_check_branch
      %39 = sbr.rel (0) target = $region41
    $region40: #{output_token_decoder_forward.1} parent=1 // pred_region
      _
    $region41: #{output_token_decoder_forward.1} parent=1 // pred_fallthru
      _
    // Predicated region
    $region42: #{output_token_decoder_forward.1} parent=1 // pred_check
      _
    $region43: #{output_token_decoder_forward.1} parent=1 // pred_check_branch
      %41 = sbr.rel (0) target = $region45
    $region44: #{output_token_decoder_forward.1} parent=1 // pred_region
      _
    $region45: #{output_token_decoder_forward.1} parent=1 // pred_fallthru
      _
    // Predicated region
    $region46: #{output_token_decoder_forward.1} parent=1 // pred_check
      _
    $region47: #{output_token_decoder_forward.1} parent=1 // pred_check_branch
      %43 = sbr.rel (0) target = $region49
    $region48: #{output_token_decoder_forward.1} parent=1 // pred_region
      _
    $region49: #{output_token_decoder_forward.1} parent=1 // pred_fallthru
      _
    // Predicated region
    $region50: #{output_token_decoder_forward.1} parent=1 // pred_check
      _
    $region51: #{output_token_decoder_forward.1} parent=1 // pred_check_branch
      %45 = sbr.rel (0) target = $region53
    $region52: #{output_token_decoder_forward.1} parent=1 // pred_region
      _
    $region53: #{output_token_decoder_forward.1} parent=1 // pred_fallthru
      _
    // Predicated region
    $region54: #{output_token_decoder_forward.1} parent=1 // pred_check
      _
    $region55: #{output_token_decoder_forward.1} parent=1 // pred_check_branch
      %47 = sbr.rel (0) target = $region57
    $region56: #{output_token_decoder_forward.1} parent=1 // pred_region
      _
    $region57: #{output_token_decoder_forward.1} parent=1 // pred_fallthru
      _
    %v48 = vld [vmem:[%s0] sm:$0xff]
    %v49 = vld [vmem:[%s0 + $0x8] sm:$0xff]
    %v50 = vmul.f32 %v48, 5.656854
    %v51 = vmul.f32 %v49, 5.656854
    %v52 = vld [vmem:[%s1] sm:$0xff]
    %v53 = vld [vmem:[%s2] sm:$0xff]
    %v54 = vld [vmem:[%s2 + $0x8] sm:$0xff]
    %v55 = vld [vmem:[%s2 + $0x10] sm:$0xff]
    %v56 = vld [vmem:[%s2 + $0x18] sm:$0xff]
    %v57 = vld [vmem:[%s3] sm:$0x1]
    %v59 = vlaneseq
    %v60 = vshrl.u32 %v59, 7
    %v61 = vsub.s32 0, %v60
    %v62 = vrot.slane %v57, %v61
    %vm64 = vcmask 261120
    %v66 = vsel %vm64, %v50, 0
    %68 = vmatprep.subr.mxu0 0.0
    %69 = vmatpush1.msra.mxu0 %v53
    %70 = vmatprep.subr.mxu0 0.0
    %71 = vmatpush1.msra.mxu0 %v54
    %72 = vmatprep.subr.mxu0 0.0
    %73 = vmatpush1.msra.mxu0 %v55
    %74 = vmatprep.subr.mxu0 0.0
    %75 = vmatpush1.msra.mxu0 %v56
    %76 = vmatprep.subr.mxu0 0.0
    %77 = vmatpush1.msra.mxu0 0.0
    %78 = vmatprep.subr.mxu0 0.0
    %79 = vmatpush1.msra.mxu0 0.0
    %80 = vmatprep.subr.mxu0 0.0
    %81 = vmatpush1.msra.mxu0 0.0
    %82 = vmatprep.subr.mxu0 0.0
    %83 = vmatpush1.msra.mxu0 0.0
    %84 = vmatprep.subr.mxu0 0.0
    %85 = vmatpush1.msra.mxu0 0.0
    %86 = vmatprep.subr.mxu0 0.0
    %87 = vmatpush1.msra.mxu0 0.0
    %88 = vmatprep.subr.mxu0 0.0
    %89 = vmatpush1.msra.mxu0 0.0
    %90 = vmatprep.subr.mxu0 0.0
    %91 = vmatpush1.msra.mxu0 0.0
    %92 = vmatprep.subr.mxu0 0.0
    %93 = vmatpush1.msra.mxu0 0.0
    %94 = vmatprep.subr.mxu0 0.0
    %95 = vmatpush1.msra.mxu0 0.0
    %96 = vmatprep.subr.mxu0 0.0
    %97 = vmatpush1.msra.mxu0 0.0
    %98 = vmatprep.subr.mxu0 0.0
    %99 = vmatpush1.msra.mxu0 0.0
    %100 = vmatprep.subr.mxu0 0.0
    %101 = vmatpush1.msra.mxu0 0.0
    %102 = vmatprep.subr.mxu0 0.0
    %103 = vmatpush1.msra.mxu0 0.0
    %104 = vmatprep.subr.mxu0 0.0
    %105 = vmatpush1.msra.mxu0 0.0
    %106 = vmatprep.subr.mxu0 0.0
    %107 = vmatpush1.msra.mxu0 0.0
    %108 = vmatprep.subr.mxu0 0.0
    %109 = vmatpush1.msra.mxu0 0.0
    %110 = vmatprep.subr.mxu0 0.0
    %111 = vmatpush1.msra.mxu0 0.0
    %112 = vmatprep.subr.mxu0 0.0
    %113 = vmatpush1.msra.mxu0 0.0
    %114 = vmatprep.subr.mxu0 0.0
    %115 = vmatpush1.msra.mxu0 0.0
    %116 = vmatprep.subr.mxu0 0.0
    %117 = vmatpush1.msra.mxu0 0.0
    %118 = vmatprep.subr.mxu0 0.0
    %119 = vmatpush1.msra.mxu0 0.0
    %120 = vmatprep.subr.mxu0 0.0
    %121 = vmatpush1.msra.mxu0 0.0
    %122 = vmatprep.subr.mxu0 0.0
    %123 = vmatpush1.msra.mxu0 0.0
    %124 = vmatprep.subr.mxu0 0.0
    %125 = vmatpush1.msra.mxu0 0.0
    %126 = vmatprep.subr.mxu0 0.0
    %127 = vmatpush1.msra.mxu0 0.0
    %128 = vmatprep.subr.mxu0 0.0
    %129 = vmatpush1.msra.mxu0 0.0
    %130 = vmatprep.subr.mxu0 0.0
    %131 = vmatpush1.msra.mxu0 0.0
    %132 = vmatprep.mubr.f32.mxu0 0.0
    %133 = vmatmul.mubr.f32.gmra.mrb[0].mxu0 %v66
    %v134 = vpop.f32.mrb[0].mxu0
    %v135 = vadd.f32 %v62, %v134
    %v136 = vpop.f32.mrb[0].mxu0
    %137 = vdwg.mxu0
    %s138 = scalar_lea.vmem %s2, 32
    %v139 = vld [vmem:[%s138] sm:$0xff]
    %v140 = vld [vmem:[%s138 + $0x8] sm:$0xff]
    %v141 = vld [vmem:[%s138 + $0x10] sm:$0xff]
    %v142 = vld [vmem:[%s138 + $0x18] sm:$0xff]
    %s143 = scalar_lea.vmem %s3, 1
    %v144 = vld [vmem:[%s143] sm:$0x1]
    %v146 = vlaneseq
    %v147 = vshrl.u32 %v146, 7
    %v148 = vsub.s32 0, %v147
    %v149 = vrot.slane %v144, %v148
    %151 = vmatprep.subr.mxu0 0.0
    %152 = vmatpush1.msra.mxu0 %v139
    %153 = vmatprep.subr.mxu0 0.0
    %154 = vmatpush1.msra.mxu0 %v140
    %155 = vmatprep.subr.mxu0 0.0
    %156 = vmatpush1.msra.mxu0 %v141
    %157 = vmatprep.subr.mxu0 0.0
    %158 = vmatpush1.msra.mxu0 %v142
    %159 = vmatprep.subr.mxu0 0.0
    %160 = vmatpush1.msra.mxu0 0.0
    %161 = vmatprep.subr.mxu0 0.0
    %162 = vmatpush1.msra.mxu0 0.0
    %163 = vmatprep.subr.mxu0 0.0
    %164 = vmatpush1.msra.mxu0 0.0
    %165 = vmatprep.subr.mxu0 0.0
    %166 = vmatpush1.msra.mxu0 0.0
    %167 = vmatprep.subr.mxu0 0.0
    %168 = vmatpush1.msra.mxu0 0.0
    %169 = vmatprep.subr.mxu0 0.0
    %170 = vmatpush1.msra.mxu0 0.0
    %171 = vmatprep.subr.mxu0 0.0
    %172 = vmatpush1.msra.mxu0 0.0
    %173 = vmatprep.subr.mxu0 0.0
    %174 = vmatpush1.msra.mxu0 0.0
    %175 = vmatprep.subr.mxu0 0.0
    %176 = vmatpush1.msra.mxu0 0.0
    %177 = vmatprep.subr.mxu0 0.0
    %178 = vmatpush1.msra.mxu0 0.0
    %179 = vmatprep.subr.mxu0 0.0
    %180 = vmatpush1.msra.mxu0 0.0
    %181 = vmatprep.subr.mxu0 0.0
    %182 = vmatpush1.msra.mxu0 0.0
    %183 = vmatprep.subr.mxu0 0.0
    %184 = vmatpush1.msra.mxu0 0.0
    %185 = vmatprep.subr.mxu0 0.0
    %186 = vmatpush1.msra.mxu0 0.0
    %187 = vmatprep.subr.mxu0 0.0
    %188 = vmatpush1.msra.mxu0 0.0
    %189 = vmatprep.subr.mxu0 0.0
    %190 = vmatpush1.msra.mxu0 0.0
    %191 = vmatprep.subr.mxu0 0.0
    %192 = vmatpush1.msra.mxu0 0.0
    %193 = vmatprep.subr.mxu0 0.0
    %194 = vmatpush1.msra.mxu0 0.0
    %195 = vmatprep.subr.mxu0 0.0
    %196 = vmatpush1.msra.mxu0 0.0
    %197 = vmatprep.subr.mxu0 0.0
    %198 = vmatpush1.msra.mxu0 0.0
    %199 = vmatprep.subr.mxu0 0.0
    %200 = vmatpush1.msra.mxu0 0.0
    %201 = vmatprep.subr.mxu0 0.0
    %202 = vmatpush1.msra.mxu0 0.0
    %203 = vmatprep.subr.mxu0 0.0
    %204 = vmatpush1.msra.mxu0 0.0
    %205 = vmatprep.subr.mxu0 0.0
    %206 = vmatpush1.msra.mxu0 0.0
    %207 = vmatprep.subr.mxu0 0.0
    %208 = vmatpush1.msra.mxu0 0.0
    %209 = vmatprep.subr.mxu0 0.0
    %210 = vmatpush1.msra.mxu0 0.0
    %211 = vmatprep.subr.mxu0 0.0
    %212 = vmatpush1.msra.mxu0 0.0
    %213 = vmatprep.subr.mxu0 0.0
    %214 = vmatpush1.msra.mxu0 0.0
    %215 = vmatprep.mubr.f32.mxu0 0.0
    %216 = vmatmul.mubr.f32.gmra.mrb[0].mxu0 %v66
    %v217 = vpop.f32.mrb[0].mxu0
    %v218 = vadd.f32 %v149, %v217
    %v219 = vpop.f32.mrb[0].mxu0
    %220 = vdwg.mxu0
    %s221 = scalar_lea.vmem %s2, 64
    %v222 = vld [vmem:[%s221] sm:$0xff]
    %v223 = vld [vmem:[%s221 + $0x8] sm:$0xff]
    %v224 = vld [vmem:[%s221 + $0x10] sm:$0xff]
    %v225 = vld [vmem:[%s221 + $0x18] sm:$0xff]
    %s226 = scalar_lea.vmem %s3, 2
    %v227 = vld [vmem:[%s226] sm:$0x1]
    %v229 = vlaneseq
    %v230 = vshrl.u32 %v229, 7
    %v231 = vsub.s32 0, %v230
    %v232 = vrot.slane %v227, %v231
    %234 = vmatprep.subr.mxu0 0.0
    %235 = vmatpush1.msra.mxu0 %v222
    %236 = vmatprep.subr.mxu0 0.0
    %237 = vmatpush1.msra.mxu0 %v223
    %238 = vmatprep.subr.mxu0 0.0
    %239 = vmatpush1.msra.mxu0 %v224
    %240 = vmatprep.subr.mxu0 0.0
    %241 = vmatpush1.msra.mxu0 %v225
    %242 = vmatprep.subr.mxu0 0.0
    %243 = vmatpush1.msra.mxu0 0.0
    %244 = vmatprep.subr.mxu0 0.0
    %245 = vmatpush1.msra.mxu0 0.0
    %246 = vmatprep.subr.mxu0 0.0
    %247 = vmatpush1.msra.mxu0 0.0
    %248 = vmatprep.subr.mxu0 0.0
    %249 = vmatpush1.msra.mxu0 0.0
    %250 = vmatprep.subr.mxu0 0.0
    %251 = vmatpush1.msra.mxu0 0.0
    %252 = vmatprep.subr.mxu0 0.0
    %253 = vmatpush1.msra.mxu0 0.0
    %254 = vmatprep.subr.mxu0 0.0
    %255 = vmatpush1.msra.mxu0 0.0
    %256 = vmatprep.subr.mxu0 0.0
    %257 = vmatpush1.msra.mxu0 0.0
    %258 = vmatprep.subr.mxu0 0.0
    %259 = vmatpush1.msra.mxu0 0.0
    %260 = vmatprep.subr.mxu0 0.0
    %261 = vmatpush1.msra.mxu0 0.0
    %262 = vmatprep.subr.mxu0 0.0
    %263 = vmatpush1.msra.mxu0 0.0
    %264 = vmatprep.subr.mxu0 0.0
    %265 = vmatpush1.msra.mxu0 0.0
    %266 = vmatprep.subr.mxu0 0.0
    %267 = vmatpush1.msra.mxu0 0.0
    %268 = vmatprep.subr.mxu0 0.0
    %269 = vmatpush1.msra.mxu0 0.0
    %270 = vmatprep.subr.mxu0 0.0
    %271 = vmatpush1.msra.mxu0 0.0
    %272 = vmatprep.subr.mxu0 0.0
    %273 = vmatpush1.msra.mxu0 0.0
    %274 = vmatprep.subr.mxu0 0.0
    %275 = vmatpush1.msra.mxu0 0.0
    %276 = vmatprep.subr.mxu0 0.0
    %277 = vmatpush1.msra.mxu0 0.0
    %278 = vmatprep.subr.mxu0 0.0
    %279 = vmatpush1.msra.mxu0 0.0
    %280 = vmatprep.subr.mxu0 0.0
    %281 = vmatpush1.msra.mxu0 0.0
    %282 = vmatprep.subr.mxu0 0.0
    %283 = vmatpush1.msra.mxu0 0.0
    %284 = vmatprep.subr.mxu0 0.0
    %285 = vmatpush1.msra.mxu0 0.0
    %286 = vmatprep.subr.mxu0 0.0
    %287 = vmatpush1.msra.mxu0 0.0
    %288 = vmatprep.subr.mxu0 0.0
    %289 = vmatpush1.msra.mxu0 0.0
    %290 = vmatprep.subr.mxu0 0.0
    %291 = vmatpush1.msra.mxu0 0.0
    %292 = vmatprep.subr.mxu0 0.0
    %293 = vmatpush1.msra.mxu0 0.0
    %294 = vmatprep.subr.mxu0 0.0
    %295 = vmatpush1.msra.mxu0 0.0
    %296 = vmatprep.subr.mxu0 0.0
    %297 = vmatpush1.msra.mxu0 0.0
    %298 = vmatprep.mubr.f32.mxu0 0.0
    %299 = vmatmul.mubr.f32.gmra.mrb[0].mxu0 %v66
    %v300 = vpop.f32.mrb[0].mxu0
    %v301 = vadd.f32 %v232, %v300
    %v302 = vpop.f32.mrb[0].mxu0
    %303 = vdwg.mxu0
    %vm304 = vcmask 64512
    %v306 = vsel %vm304, %v135, 0
    %v309 = vsel %vm304, %v218, 0
    %311 = vmatprep.subr.mxu0 0.0
    %312 = vmatpush1.xpose.msra.mxu0 %v309
    %313 = vmatprep.subr.mxu0 0.0
    %314 = vmatpush1.xpose.msra.mxu0 0.0
    %315 = vmatprep.subr.mxu0 0.0
    %316 = vmatpush1.xpose.msra.mxu0 0.0
    %317 = vmatprep.subr.mxu0 0.0
    %318 = vmatpush1.xpose.msra.mxu0 0.0
    %319 = vmatprep.subr.mxu0 0.0
    %320 = vmatpush1.xpose.msra.mxu0 0.0
    %321 = vmatprep.subr.mxu0 0.0
    %322 = vmatpush1.xpose.msra.mxu0 0.0
    %323 = vmatprep.subr.mxu0 0.0
    %324 = vmatpush1.xpose.msra.mxu0 0.0
    %325 = vmatprep.subr.mxu0 0.0
    %326 = vmatpush1.xpose.msra.mxu0 0.0
    %327 = vmatprep.subr.mxu0 0.0
    %328 = vmatpush1.xpose.msra.mxu0 0.0
    %329 = vmatprep.subr.mxu0 0.0
    %330 = vmatpush1.xpose.msra.mxu0 0.0
    %331 = vmatprep.subr.mxu0 0.0
    %332 = vmatpush1.xpose.msra.mxu0 0.0
    %333 = vmatprep.subr.mxu0 0.0
    %334 = vmatpush1.xpose.msra.mxu0 0.0
    %335 = vmatprep.subr.mxu0 0.0
    %336 = vmatpush1.xpose.msra.mxu0 0.0
    %337 = vmatprep.subr.mxu0 0.0
    %338 = vmatpush1.xpose.msra.mxu0 0.0
    %339 = vmatprep.subr.mxu0 0.0
    %340 = vmatpush1.xpose.msra.mxu0 0.0
    %341 = vmatprep.subr.mxu0 0.0
    %342 = vmatpush1.xpose.msra.mxu0 0.0
    %343 = vmatprep.subr.mxu0 0.0
    %344 = vmatpush1.xpose.msra.mxu0 0.0
    %345 = vmatprep.subr.mxu0 0.0
    %346 = vmatpush1.xpose.msra.mxu0 0.0
    %347 = vmatprep.subr.mxu0 0.0
    %348 = vmatpush1.xpose.msra.mxu0 0.0
    %349 = vmatprep.subr.mxu0 0.0
    %350 = vmatpush1.xpose.msra.mxu0 0.0
    %351 = vmatprep.subr.mxu0 0.0
    %352 = vmatpush1.xpose.msra.mxu0 0.0
    %353 = vmatprep.subr.mxu0 0.0
    %354 = vmatpush1.xpose.msra.mxu0 0.0
    %355 = vmatprep.subr.mxu0 0.0
    %356 = vmatpush1.xpose.msra.mxu0 0.0
    %357 = vmatprep.subr.mxu0 0.0
    %358 = vmatpush1.xpose.msra.mxu0 0.0
    %359 = vmatprep.subr.mxu0 0.0
    %360 = vmatpush1.xpose.msra.mxu0 0.0
    %361 = vmatprep.subr.mxu0 0.0
    %362 = vmatpush1.xpose.msra.mxu0 0.0
    %363 = vmatprep.subr.mxu0 0.0
    %364 = vmatpush1.xpose.msra.mxu0 0.0
    %365 = vmatprep.subr.mxu0 0.0
    %366 = vmatpush1.xpose.msra.mxu0 0.0
    %367 = vmatprep.subr.mxu0 0.0
    %368 = vmatpush1.xpose.msra.mxu0 0.0
    %369 = vmatprep.subr.mxu0 0.0
    %370 = vmatpush1.xpose.msra.mxu0 0.0
    %371 = vmatprep.subr.mxu0 0.0
    %372 = vmatpush1.xpose.msra.mxu0 0.0
    %373 = vmatprep.subr.mxu0 0.0
    %374 = vmatpush1.xpose.msra.mxu0 0.0
    %375 = vmatprep.mubr.f32.mxu0 0.0
    %376 = vmatmul.mubr.f32.gmra.mrb[0].mxu0 %v306
    %v377 = vpop.f32.mrb[0].mxu0
    %v378 = vadd.f32 0.0, %v377
    %v379 = vpop.f32.mrb[0].mxu0
    %380 = vdwg.mxu0
    %v381 = vmul.f32 %v378, 0.35355338
    %v382 = vadd.f32 %v381, %v52
    %v383 = vsel %vm304, %v382, -inf
    %384 = vmax.xlane.f32.xlu0 %v383
    %v385 = vpop.xlane.xlu0 %384
    %v386 = vsub.f32 %v382, %v385
    %v387 = vmul.f32 %v386, 1.442695
    %v388 = vpow.pop %v387
    %v389 = vsel %vm304, %v388, 0.0
    %390 = vadd.xlane.f32.xlu0 %v389
    %v391 = vpop.xlane.xlu0 %390
    %v392 = vrcp.pop %v391
    %v393 = vmul.f32 %v388, %v392
    %v395 = vsel %vm304, %v393, 0
    %397 = vmatprep.subr.mxu0 0.0
    %398 = vmatpush1.msra.mxu0 %v301
    %399 = vmatprep.subr.mxu0 0.0
    %400 = vmatpush1.msra.mxu0 0.0
    %401 = vmatprep.subr.mxu0 0.0
    %402 = vmatpush1.msra.mxu0 0.0
    %403 = vmatprep.subr.mxu0 0.0
    %404 = vmatpush1.msra.mxu0 0.0
    %405 = vmatprep.subr.mxu0 0.0
    %406 = vmatpush1.msra.mxu0 0.0
    %407 = vmatprep.subr.mxu0 0.0
    %408 = vmatpush1.msra.mxu0 0.0
    %409 = vmatprep.subr.mxu0 0.0
    %410 = vmatpush1.msra.mxu0 0.0
    %411 = vmatprep.subr.mxu0 0.0
    %412 = vmatpush1.msra.mxu0 0.0
    %413 = vmatprep.subr.mxu0 0.0
    %414 = vmatpush1.msra.mxu0 0.0
    %415 = vmatprep.subr.mxu0 0.0
    %416 = vmatpush1.msra.mxu0 0.0
    %417 = vmatprep.subr.mxu0 0.0
    %418 = vmatpush1.msra.mxu0 0.0
    %419 = vmatprep.subr.mxu0 0.0
    %420 = vmatpush1.msra.mxu0 0.0
    %421 = vmatprep.subr.mxu0 0.0
    %422 = vmatpush1.msra.mxu0 0.0
    %423 = vmatprep.subr.mxu0 0.0
    %424 = vmatpush1.msra.mxu0 0.0
    %425 = vmatprep.subr.mxu0 0.0
    %426 = vmatpush1.msra.mxu0 0.0
    %427 = vmatprep.subr.mxu0 0.0
    %428 = vmatpush1.msra.mxu0 0.0
    %429 = vmatprep.subr.mxu0 0.0
    %430 = vmatpush1.msra.mxu0 0.0
    %431 = vmatprep.subr.mxu0 0.0
    %432 = vmatpush1.msra.mxu0 0.0
    %433 = vmatprep.subr.mxu0 0.0
    %434 = vmatpush1.msra.mxu0 0.0
    %435 = vmatprep.subr.mxu0 0.0
    %436 = vmatpush1.msra.mxu0 0.0
    %437 = vmatprep.subr.mxu0 0.0
    %438 = vmatpush1.msra.mxu0 0.0
    %439 = vmatprep.subr.mxu0 0.0
    %440 = vmatpush1.msra.mxu0 0.0
    %441 = vmatprep.subr.mxu0 0.0
    %442 = vmatpush1.msra.mxu0 0.0
    %443 = vmatprep.subr.mxu0 0.0
    %444 = vmatpush1.msra.mxu0 0.0
    %445 = vmatprep.subr.mxu0 0.0
    %446 = vmatpush1.msra.mxu0 0.0
    %447 = vmatprep.subr.mxu0 0.0
    %448 = vmatpush1.msra.mxu0 0.0
    %449 = vmatprep.subr.mxu0 0.0
    %450 = vmatpush1.msra.mxu0 0.0
    %451 = vmatprep.subr.mxu0 0.0
    %452 = vmatpush1.msra.mxu0 0.0
    %453 = vmatprep.subr.mxu0 0.0
    %454 = vmatpush1.msra.mxu0 0.0
    %455 = vmatprep.subr.mxu0 0.0
    %456 = vmatpush1.msra.mxu0 0.0
    %457 = vmatprep.subr.mxu0 0.0
    %458 = vmatpush1.msra.mxu0 0.0
    %459 = vmatprep.subr.mxu0 0.0
    %460 = vmatpush1.msra.mxu0 0.0
    %461 = vmatprep.mubr.f32.mxu0 0.0
    %462 = vmatmul.mubr.f32.gmra.mrb[0].mxu0 %v395
    %v463 = vpop.f32.mrb[0].mxu0
    %v464 = vadd.f32 0.0, %v463
    %v465 = vpop.f32.mrb[0].mxu0
    %466 = vdwg.mxu0
    %v467 = vld [vmem:[%s4] sm:$0xff]
    %s468 = scalar_lea.vmem %s2, 96
    %v469 = vld [vmem:[%s468] sm:$0xff]
    %v470 = vld [vmem:[%s468 + $0x8] sm:$0xff]
    %v471 = vld [vmem:[%s468 + $0x10] sm:$0xff]
    %v472 = vld [vmem:[%s468 + $0x18] sm:$0xff]
    %s473 = scalar_lea.vmem %s3, 3
    %v474 = vld [vmem:[%s473] sm:$0x1]
    %v476 = vlaneseq
    %v477 = vshrl.u32 %v476, 7
    %v478 = vsub.s32 0, %v477
    %v479 = vrot.slane %v474, %v478
    %481 = vmatprep.subr.mxu0 0.0
    %482 = vmatpush1.msra.mxu0 %v469
    %483 = vmatprep.subr.mxu0 0.0
    %484 = vmatpush1.msra.mxu0 %v470
    %485 = vmatprep.subr.mxu0 0.0
    %486 = vmatpush1.msra.mxu0 %v471
    %487 = vmatprep.subr.mxu0 0.0
    %488 = vmatpush1.msra.mxu0 %v472
    %489 = vmatprep.subr.mxu0 0.0
    %490 = vmatpush1.msra.mxu0 0.0
    %491 = vmatprep.subr.mxu0 0.0
    %492 = vmatpush1.msra.mxu0 0.0
    %493 = vmatprep.subr.mxu0 0.0
    %494 = vmatpush1.msra.mxu0 0.0
    %495 = vmatprep.subr.mxu0 0.0
    %496 = vmatpush1.msra.mxu0 0.0
    %497 = vmatprep.subr.mxu0 0.0
    %498 = vmatpush1.msra.mxu0 0.0
    %499 = vmatprep.subr.mxu0 0.0
    %500 = vmatpush1.msra.mxu0 0.0
    %501 = vmatprep.subr.mxu0 0.0
    %502 = vmatpush1.msra.mxu0 0.0
    %503 = vmatprep.subr.mxu0 0.0
    %504 = vmatpush1.msra.mxu0 0.0
    %505 = vmatprep.subr.mxu0 0.0
    %506 = vmatpush1.msra.mxu0 0.0
    %507 = vmatprep.subr.mxu0 0.0
    %508 = vmatpush1.msra.mxu0 0.0
    %509 = vmatprep.subr.mxu0 0.0
    %510 = vmatpush1.msra.mxu0 0.0
    %511 = vmatprep.subr.mxu0 0.0
    %512 = vmatpush1.msra.mxu0 0.0
    %513 = vmatprep.subr.mxu0 0.0
    %514 = vmatpush1.msra.mxu0 0.0
    %515 = vmatprep.subr.mxu0 0.0
    %516 = vmatpush1.msra.mxu0 0.0
    %517 = vmatprep.subr.mxu0 0.0
    %518 = vmatpush1.msra.mxu0 0.0
    %519 = vmatprep.subr.mxu0 0.0
    %520 = vmatpush1.msra.mxu0 0.0
    %521 = vmatprep.subr.mxu0 0.0
    %522 = vmatpush1.msra.mxu0 0.0
    %523 = vmatprep.subr.mxu0 0.0
    %524 = vmatpush1.msra.mxu0 0.0
    %525 = vmatprep.subr.mxu0 0.0
    %526 = vmatpush1.msra.mxu0 0.0
    %527 = vmatprep.subr.mxu0 0.0
    %528 = vmatpush1.msra.mxu0 0.0
    %529 = vmatprep.subr.mxu0 0.0
    %530 = vmatpush1.msra.mxu0 0.0
    %531 = vmatprep.subr.mxu0 0.0
    %532 = vmatpush1.msra.mxu0 0.0
    %533 = vmatprep.subr.mxu0 0.0
    %534 = vmatpush1.msra.mxu0 0.0
    %535 = vmatprep.subr.mxu0 0.0
    %536 = vmatpush1.msra.mxu0 0.0
    %537 = vmatprep.subr.mxu0 0.0
    %538 = vmatpush1.msra.mxu0 0.0
    %539 = vmatprep.subr.mxu0 0.0
    %540 = vmatpush1.msra.mxu0 0.0
    %541 = vmatprep.subr.mxu0 0.0
    %542 = vmatpush1.msra.mxu0 0.0
    %543 = vmatprep.subr.mxu0 0.0
    %544 = vmatpush1.msra.mxu0 0.0
    %545 = vmatprep.mubr.f32.mxu0 0.0
    %546 = vmatmul.mubr.f32.gmra.mrb[0].mxu0 %v66
    %v547 = vpop.f32.mrb[0].mxu0
    %v548 = vadd.f32 %v479, %v547
    %v549 = vpop.f32.mrb[0].mxu0
    %550 = vdwg.mxu0
    %s551 = scalar_lea.vmem %s2, 128
    %v552 = vld [vmem:[%s551] sm:$0xff]
    %v553 = vld [vmem:[%s551 + $0x8] sm:$0xff]
    %v554 = vld [vmem:[%s551 + $0x10] sm:$0xff]
    %v555 = vld [vmem:[%s551 + $0x18] sm:$0xff]
    %s556 = scalar_lea.vmem %s3, 4
    %v557 = vld [vmem:[%s556] sm:$0x1]
    %v559 = vlaneseq
    %v560 = vshrl.u32 %v559, 7
    %v561 = vsub.s32 0, %v560
    %v562 = vrot.slane %v557, %v561
    %564 = vmatprep.subr.mxu0 0.0
    %565 = vmatpush1.msra.mxu0 %v552
    %566 = vmatprep.subr.mxu0 0.0
    %567 = vmatpush1.msra.mxu0 %v553
    %568 = vmatprep.subr.mxu0 0.0
    %569 = vmatpush1.msra.mxu0 %v554
    %570 = vmatprep.subr.mxu0 0.0
    %571 = vmatpush1.msra.mxu0 %v555
    %572 = vmatprep.subr.mxu0 0.0
    %573 = vmatpush1.msra.mxu0 0.0
    %574 = vmatprep.subr.mxu0 0.0
    %575 = vmatpush1.msra.mxu0 0.0
    %576 = vmatprep.subr.mxu0 0.0
    %577 = vmatpush1.msra.mxu0 0.0
    %578 = vmatprep.subr.mxu0 0.0
    %579 = vmatpush1.msra.mxu0 0.0
    %580 = vmatprep.subr.mxu0 0.0
    %581 = vmatpush1.msra.mxu0 0.0
    %582 = vmatprep.subr.mxu0 0.0
    %583 = vmatpush1.msra.mxu0 0.0
    %584 = vmatprep.subr.mxu0 0.0
    %585 = vmatpush1.msra.mxu0 0.0
    %586 = vmatprep.subr.mxu0 0.0
    %587 = vmatpush1.msra.mxu0 0.0
    %588 = vmatprep.subr.mxu0 0.0
    %589 = vmatpush1.msra.mxu0 0.0
    %590 = vmatprep.subr.mxu0 0.0
    %591 = vmatpush1.msra.mxu0 0.0
    %592 = vmatprep.subr.mxu0 0.0
    %593 = vmatpush1.msra.mxu0 0.0
    %594 = vmatprep.subr.mxu0 0.0
    %595 = vmatpush1.msra.mxu0 0.0
    %596 = vmatprep.subr.mxu0 0.0
    %597 = vmatpush1.msra.mxu0 0.0
    %598 = vmatprep.subr.mxu0 0.0
    %599 = vmatpush1.msra.mxu0 0.0
    %600 = vmatprep.subr.mxu0 0.0
    %601 = vmatpush1.msra.mxu0 0.0
    %602 = vmatprep.subr.mxu0 0.0
    %603 = vmatpush1.msra.mxu0 0.0
    %604 = vmatprep.subr.mxu0 0.0
    %605 = vmatpush1.msra.mxu0 0.0
    %606 = vmatprep.subr.mxu0 0.0
    %607 = vmatpush1.msra.mxu0 0.0
    %608 = vmatprep.subr.mxu0 0.0
    %609 = vmatpush1.msra.mxu0 0.0
    %610 = vmatprep.subr.mxu0 0.0
    %611 = vmatpush1.msra.mxu0 0.0
    %612 = vmatprep.subr.mxu0 0.0
    %613 = vmatpush1.msra.mxu0 0.0
    %614 = vmatprep.subr.mxu0 0.0
    %615 = vmatpush1.msra.mxu0 0.0
    %616 = vmatprep.subr.mxu0 0.0
    %617 = vmatpush1.msra.mxu0 0.0
    %618 = vmatprep.subr.mxu0 0.0
    %619 = vmatpush1.msra.mxu0 0.0
    %620 = vmatprep.subr.mxu0 0.0
    %621 = vmatpush1.msra.mxu0 0.0
    %622 = vmatprep.subr.mxu0 0.0
    %623 = vmatpush1.msra.mxu0 0.0
    %624 = vmatprep.subr.mxu0 0.0
    %625 = vmatpush1.msra.mxu0 0.0
    %626 = vmatprep.subr.mxu0 0.0
    %627 = vmatpush1.msra.mxu0 0.0
    %628 = vmatprep.mubr.f32.mxu0 0.0
    %629 = vmatmul.mubr.f32.gmra.mrb[0].mxu0 %v66
    %v630 = vpop.f32.mrb[0].mxu0
    %v631 = vadd.f32 %v562, %v630
    %v632 = vpop.f32.mrb[0].mxu0
    %633 = vdwg.mxu0
    %s634 = scalar_lea.vmem %s2, 160
    %v635 = vld [vmem:[%s634] sm:$0xff]
    %v636 = vld [vmem:[%s634 + $0x8] sm:$0xff]
    %v637 = vld [vmem:[%s634 + $0x10] sm:$0xff]
    %v638 = vld [vmem:[%s634 + $0x18] sm:$0xff]
    %s639 = scalar_lea.vmem %s3, 5
    %v640 = vld [vmem:[%s639] sm:$0x1]
    %v642 = vlaneseq
    %v643 = vshrl.u32 %v642, 7
    %v644 = vsub.s32 0, %v643
    %v645 = vrot.slane %v640, %v644
    %647 = vmatprep.subr.mxu0 0.0
    %648 = vmatpush1.msra.mxu0 %v635
    %649 = vmatprep.subr.mxu0 0.0
    %650 = vmatpush1.msra.mxu0 %v636
    %651 = vmatprep.subr.mxu0 0.0
    %652 = vmatpush1.msra.mxu0 %v637
    %653 = vmatprep.subr.mxu0 0.0
    %654 = vmatpush1.msra.mxu0 %v638
    %655 = vmatprep.subr.mxu0 0.0
    %656 = vmatpush1.msra.mxu0 0.0
    %657 = vmatprep.subr.mxu0 0.0
    %658 = vmatpush1.msra.mxu0 0.0
    %659 = vmatprep.subr.mxu0 0.0
    %660 = vmatpush1.msra.mxu0 0.0
    %661 = vmatprep.subr.mxu0 0.0
    %662 = vmatpush1.msra.mxu0 0.0
    %663 = vmatprep.subr.mxu0 0.0
    %664 = vmatpush1.msra.mxu0 0.0
    %665 = vmatprep.subr.mxu0 0.0
    %666 = vmatpush1.msra.mxu0 0.0
    %667 = vmatprep.subr.mxu0 0.0
    %668 = vmatpush1.msra.mxu0 0.0
    %669 = vmatprep.subr.mxu0 0.0
    %670 = vmatpush1.msra.mxu0 0.0
    %671 = vmatprep.subr.mxu0 0.0
    %672 = vmatpush1.msra.mxu0 0.0
    %673 = vmatprep.subr.mxu0 0.0
    %674 = vmatpush1.msra.mxu0 0.0
    %675 = vmatprep.subr.mxu0 0.0
    %676 = vmatpush1.msra.mxu0 0.0
    %677 = vmatprep.subr.mxu0 0.0
    %678 = vmatpush1.msra.mxu0 0.0
    %679 = vmatprep.subr.mxu0 0.0
    %680 = vmatpush1.msra.mxu0 0.0
    %681 = vmatprep.subr.mxu0 0.0
    %682 = vmatpush1.msra.mxu0 0.0
    %683 = vmatprep.subr.mxu0 0.0
    %684 = vmatpush1.msra.mxu0 0.0
    %685 = vmatprep.subr.mxu0 0.0
    %686 = vmatpush1.msra.mxu0 0.0
    %687 = vmatprep.subr.mxu0 0.0
    %688 = vmatpush1.msra.mxu0 0.0
    %689 = vmatprep.subr.mxu0 0.0
    %690 = vmatpush1.msra.mxu0 0.0
    %691 = vmatprep.subr.mxu0 0.0
    %692 = vmatpush1.msra.mxu0 0.0
    %693 = vmatprep.subr.mxu0 0.0
    %694 = vmatpush1.msra.mxu0 0.0
    %695 = vmatprep.subr.mxu0 0.0
    %696 = vmatpush1.msra.mxu0 0.0
    %697 = vmatprep.subr.mxu0 0.0
    %698 = vmatpush1.msra.mxu0 0.0
    %699 = vmatprep.subr.mxu0 0.0
    %700 = vmatpush1.msra.mxu0 0.0
    %701 = vmatprep.subr.mxu0 0.0
    %702 = vmatpush1.msra.mxu0 0.0
    %703 = vmatprep.subr.mxu0 0.0
    %704 = vmatpush1.msra.mxu0 0.0
    %705 = vmatprep.subr.mxu0 0.0
    %706 = vmatpush1.msra.mxu0 0.0
    %707 = vmatprep.subr.mxu0 0.0
    %708 = vmatpush1.msra.mxu0 0.0
    %709 = vmatprep.subr.mxu0 0.0
    %710 = vmatpush1.msra.mxu0 0.0
    %711 = vmatprep.mubr.f32.mxu0 0.0
    %712 = vmatmul.mubr.f32.gmra.mrb[0].mxu0 %v66
    %v713 = vpop.f32.mrb[0].mxu0
    %v714 = vadd.f32 %v645, %v713
    %v715 = vpop.f32.mrb[0].mxu0
    %716 = vdwg.mxu0
    %v718 = vsel %vm304, %v548, 0
    %v721 = vsel %vm304, %v631, 0
    %723 = vmatprep.subr.mxu0 0.0
    %724 = vmatpush1.xpose.msra.mxu0 %v721
    %725 = vmatprep.subr.mxu0 0.0
    %726 = vmatpush1.xpose.msra.mxu0 0.0
    %727 = vmatprep.subr.mxu0 0.0
    %728 = vmatpush1.xpose.msra.mxu0 0.0
    %729 = vmatprep.subr.mxu0 0.0
    %730 = vmatpush1.xpose.msra.mxu0 0.0
    %731 = vmatprep.subr.mxu0 0.0
    %732 = vmatpush1.xpose.msra.mxu0 0.0
    %733 = vmatprep.subr.mxu0 0.0
    %734 = vmatpush1.xpose.msra.mxu0 0.0
    %735 = vmatprep.subr.mxu0 0.0
    %736 = vmatpush1.xpose.msra.mxu0 0.0
    %737 = vmatprep.subr.mxu0 0.0
    %738 = vmatpush1.xpose.msra.mxu0 0.0
    %739 = vmatprep.subr.mxu0 0.0
    %740 = vmatpush1.xpose.msra.mxu0 0.0
    %741 = vmatprep.subr.mxu0 0.0
    %742 = vmatpush1.xpose.msra.mxu0 0.0
    %743 = vmatprep.subr.mxu0 0.0
    %744 = vmatpush1.xpose.msra.mxu0 0.0
    %745 = vmatprep.subr.mxu0 0.0
    %746 = vmatpush1.xpose.msra.mxu0 0.0
    %747 = vmatprep.subr.mxu0 0.0
    %748 = vmatpush1.xpose.msra.mxu0 0.0
    %749 = vmatprep.subr.mxu0 0.0
    %750 = vmatpush1.xpose.msra.mxu0 0.0
    %751 = vmatprep.subr.mxu0 0.0
    %752 = vmatpush1.xpose.msra.mxu0 0.0
    %753 = vmatprep.subr.mxu0 0.0
    %754 = vmatpush1.xpose.msra.mxu0 0.0
    %755 = vmatprep.subr.mxu0 0.0
    %756 = vmatpush1.xpose.msra.mxu0 0.0
    %757 = vmatprep.subr.mxu0 0.0
    %758 = vmatpush1.xpose.msra.mxu0 0.0
    %759 = vmatprep.subr.mxu0 0.0
    %760 = vmatpush1.xpose.msra.mxu0 0.0
    %761 = vmatprep.subr.mxu0 0.0
    %762 = vmatpush1.xpose.msra.mxu0 0.0
    %763 = vmatprep.subr.mxu0 0.0
    %764 = vmatpush1.xpose.msra.mxu0 0.0
    %765 = vmatprep.subr.mxu0 0.0
    %766 = vmatpush1.xpose.msra.mxu0 0.0
    %767 = vmatprep.subr.mxu0 0.0
    %768 = vmatpush1.xpose.msra.mxu0 0.0
    %769 = vmatprep.subr.mxu0 0.0
    %770 = vmatpush1.xpose.msra.mxu0 0.0
    %771 = vmatprep.subr.mxu0 0.0
    %772 = vmatpush1.xpose.msra.mxu0 0.0
    %773 = vmatprep.subr.mxu0 0.0
    %774 = vmatpush1.xpose.msra.mxu0 0.0
    %775 = vmatprep.subr.mxu0 0.0
    %776 = vmatpush1.xpose.msra.mxu0 0.0
    %777 = vmatprep.subr.mxu0 0.0
    %778 = vmatpush1.xpose.msra.mxu0 0.0
    %779 = vmatprep.subr.mxu0 0.0
    %780 = vmatpush1.xpose.msra.mxu0 0.0
    %781 = vmatprep.subr.mxu0 0.0
    %782 = vmatpush1.xpose.msra.mxu0 0.0
    %783 = vmatprep.subr.mxu0 0.0
    %784 = vmatpush1.xpose.msra.mxu0 0.0
    %785 = vmatprep.subr.mxu0 0.0
    %786 = vmatpush1.xpose.msra.mxu0 0.0
    %787 = vmatprep.mubr.f32.mxu0 0.0
    %788 = vmatmul.mubr.f32.gmra.mrb[0].mxu0 %v718
    %v789 = vpop.f32.mrb[0].mxu0
    %v790 = vadd.f32 0.0, %v789
    %v791 = vpop.f32.mrb[0].mxu0
    %792 = vdwg.mxu0
    %v793 = vmul.f32 %v790, 0.35355338
    %v794 = vadd.f32 %v793, %v52
    %v795 = vsel %vm304, %v794, -inf
    %796 = vmax.xlane.f32.xlu0 %v795
    %v797 = vpop.xlane.xlu0 %796
    %v798 = vsub.f32 %v794, %v797
    %v799 = vmul.f32 %v798, 1.442695
    %v800 = vpow.pop %v799
    %v801 = vsel %vm304, %v800, 0.0
    %802 = vadd.xlane.f32.xlu0 %v801
    %v803 = vpop.xlane.xlu0 %802
    %v804 = vrcp.pop %v803
    %v805 = vmul.f32 %v800, %v804
    %v807 = vsel %vm304, %v805, 0
    %809 = vmatprep.subr.mxu0 0.0
    %810 = vmatpush1.msra.mxu0 %v714
    %811 = vmatprep.subr.mxu0 0.0
    %812 = vmatpush1.msra.mxu0 0.0
    %813 = vmatprep.subr.mxu0 0.0
    %814 = vmatpush1.msra.mxu0 0.0
    %815 = vmatprep.subr.mxu0 0.0
    %816 = vmatpush1.msra.mxu0 0.0
    %817 = vmatprep.subr.mxu0 0.0
    %818 = vmatpush1.msra.mxu0 0.0
    %819 = vmatprep.subr.mxu0 0.0
    %820 = vmatpush1.msra.mxu0 0.0
    %821 = vmatprep.subr.mxu0 0.0
    %822 = vmatpush1.msra.mxu0 0.0
    %823 = vmatprep.subr.mxu0 0.0
    %824 = vmatpush1.msra.mxu0 0.0
    %825 = vmatprep.subr.mxu0 0.0
    %826 = vmatpush1.msra.mxu0 0.0
    %827 = vmatprep.subr.mxu0 0.0
    %828 = vmatpush1.msra.mxu0 0.0
    %829 = vmatprep.subr.mxu0 0.0
    %830 = vmatpush1.msra.mxu0 0.0
    %831 = vmatprep.subr.mxu0 0.0
    %832 = vmatpush1.msra.mxu0 0.0
    %833 = vmatprep.subr.mxu0 0.0
    %834 = vmatpush1.msra.mxu0 0.0
    %835 = vmatprep.subr.mxu0 0.0
    %836 = vmatpush1.msra.mxu0 0.0
    %837 = vmatprep.subr.mxu0 0.0
    %838 = vmatpush1.msra.mxu0 0.0
    %839 = vmatprep.subr.mxu0 0.0
    %840 = vmatpush1.msra.mxu0 0.0
    %841 = vmatprep.subr.mxu0 0.0
    %842 = vmatpush1.msra.mxu0 0.0
    %843 = vmatprep.subr.mxu0 0.0
    %844 = vmatpush1.msra.mxu0 0.0
    %845 = vmatprep.subr.mxu0 0.0
    %846 = vmatpush1.msra.mxu0 0.0
    %847 = vmatprep.subr.mxu0 0.0
    %848 = vmatpush1.msra.mxu0 0.0
    %849 = vmatprep.subr.mxu0 0.0
    %850 = vmatpush1.msra.mxu0 0.0
    %851 = vmatprep.subr.mxu0 0.0
    %852 = vmatpush1.msra.mxu0 0.0
    %853 = vmatprep.subr.mxu0 0.0
    %854 = vmatpush1.msra.mxu0 0.0
    %855 = vmatprep.subr.mxu0 0.0
    %856 = vmatpush1.msra.mxu0 0.0
    %857 = vmatprep.subr.mxu0 0.0
    %858 = vmatpush1.msra.mxu0 0.0
    %859 = vmatprep.subr.mxu0 0.0
    %860 = vmatpush1.msra.mxu0 0.0
    %861 = vmatprep.subr.mxu0 0.0
    %862 = vmatpush1.msra.mxu0 0.0
    %863 = vmatprep.subr.mxu0 0.0
    %864 = vmatpush1.msra.mxu0 0.0
    %865 = vmatprep.subr.mxu0 0.0
    %866 = vmatpush1.msra.mxu0 0.0
    %867 = vmatprep.subr.mxu0 0.0
    %868 = vmatpush1.msra.mxu0 0.0
    %869 = vmatprep.subr.mxu0 0.0
    %870 = vmatpush1.msra.mxu0 0.0
    %871 = vmatprep.subr.mxu0 0.0
    %872 = vmatpush1.msra.mxu0 0.0
    %873 = vmatprep.mubr.f32.mxu0 0.0
    %874 = vmatmul.mubr.f32.gmra.mrb[0].mxu0 %v807
    %v875 = vpop.f32.mrb[0].mxu0
    %v876 = vadd.f32 0.0, %v875
    %v877 = vpop.f32.mrb[0].mxu0
    %878 = vdwg.mxu0
    %s879 = scalar_lea.vmem %s4, 8
    %v880 = vld [vmem:[%s879] sm:$0xff]
    %v882 = vsel %vm304, %v876, 0
    %884 = vmatprep.subr.mxu0 0.0
    %885 = vmatpush1.msra.mxu0 %v880
    %886 = vmatprep.subr.mxu0 0.0
    %887 = vmatpush1.msra.mxu0 0.0
    %888 = vmatprep.subr.mxu0 0.0
    %889 = vmatpush1.msra.mxu0 0.0
    %890 = vmatprep.subr.mxu0 0.0
    %891 = vmatpush1.msra.mxu0 0.0
    %892 = vmatprep.subr.mxu0 0.0
    %893 = vmatpush1.msra.mxu0 0.0
    %894 = vmatprep.subr.mxu0 0.0
    %895 = vmatpush1.msra.mxu0 0.0
    %896 = vmatprep.subr.mxu0 0.0
    %897 = vmatpush1.msra.mxu0 0.0
    %898 = vmatprep.subr.mxu0 0.0
    %899 = vmatpush1.msra.mxu0 0.0
    %900 = vmatprep.subr.mxu0 0.0
    %901 = vmatpush1.msra.mxu0 0.0
    %902 = vmatprep.subr.mxu0 0.0
    %903 = vmatpush1.msra.mxu0 0.0
    %904 = vmatprep.subr.mxu0 0.0
    %905 = vmatpush1.msra.mxu0 0.0
    %906 = vmatprep.subr.mxu0 0.0
    %907 = vmatpush1.msra.mxu0 0.0
    %908 = vmatprep.subr.mxu0 0.0
    %909 = vmatpush1.msra.mxu0 0.0
    %910 = vmatprep.subr.mxu0 0.0
    %911 = vmatpush1.msra.mxu0 0.0
    %912 = vmatprep.subr.mxu0 0.0
    %913 = vmatpush1.msra.mxu0 0.0
    %914 = vmatprep.subr.mxu0 0.0
    %915 = vmatpush1.msra.mxu0 0.0
    %916 = vmatprep.subr.mxu0 0.0
    %917 = vmatpush1.msra.mxu0 0.0
    %918 = vmatprep.subr.mxu0 0.0
    %919 = vmatpush1.msra.mxu0 0.0
    %920 = vmatprep.subr.mxu0 0.0
    %921 = vmatpush1.msra.mxu0 0.0
    %922 = vmatprep.subr.mxu0 0.0
    %923 = vmatpush1.msra.mxu0 0.0
    %924 = vmatprep.subr.mxu0 0.0
    %925 = vmatpush1.msra.mxu0 0.0
    %926 = vmatprep.subr.mxu0 0.0
    %927 = vmatpush1.msra.mxu0 0.0
    %928 = vmatprep.subr.mxu0 0.0
    %929 = vmatpush1.msra.mxu0 0.0
    %930 = vmatprep.subr.mxu0 0.0
    %931 = vmatpush1.msra.mxu0 0.0
    %932 = vmatprep.subr.mxu0 0.0
    %933 = vmatpush1.msra.mxu0 0.0
    %934 = vmatprep.subr.mxu0 0.0
    %935 = vmatpush1.msra.mxu0 0.0
    %936 = vmatprep.subr.mxu0 0.0
    %937 = vmatpush1.msra.mxu0 0.0
    %938 = vmatprep.subr.mxu0 0.0
    %939 = vmatpush1.msra.mxu0 0.0
    %940 = vmatprep.subr.mxu0 0.0
    %941 = vmatpush1.msra.mxu0 0.0
    %942 = vmatprep.subr.mxu0 0.0
    %943 = vmatpush1.msra.mxu0 0.0
    %944 = vmatprep.subr.mxu0 0.0
    %945 = vmatpush1.msra.mxu0 0.0
    %946 = vmatprep.subr.mxu0 0.0
    %947 = vmatpush1.msra.mxu0 0.0
    %948 = vmatprep.mubr.f32.mxu0 0.0
    %949 = vmatmul.mubr.f32.gmra.mrb[0].mxu0 %v882
    %v950 = vpop.f32.mrb[0].mxu0
    %v951 = vadd.f32 0.0, %v950
    %v952 = vpop.f32.mrb[0].mxu0
    %953 = vdwg.mxu0
    %v955 = vsel %vm304, %v464, 0
    %957 = vmatprep.subr.mxu0 0.0
    %958 = vmatpush1.msra.mxu0 %v467
    %959 = vmatprep.subr.mxu0 0.0
    %960 = vmatpush1.msra.mxu0 0.0
    %961 = vmatprep.subr.mxu0 0.0
    %962 = vmatpush1.msra.mxu0 0.0
    %963 = vmatprep.subr.mxu0 0.0
    %964 = vmatpush1.msra.mxu0 0.0
    %965 = vmatprep.subr.mxu0 0.0
    %966 = vmatpush1.msra.mxu0 0.0
    %967 = vmatprep.subr.mxu0 0.0
    %968 = vmatpush1.msra.mxu0 0.0
    %969 = vmatprep.subr.mxu0 0.0
    %970 = vmatpush1.msra.mxu0 0.0
    %971 = vmatprep.subr.mxu0 0.0
    %972 = vmatpush1.msra.mxu0 0.0
    %973 = vmatprep.subr.mxu0 0.0
    %974 = vmatpush1.msra.mxu0 0.0
    %975 = vmatprep.subr.mxu0 0.0
    %976 = vmatpush1.msra.mxu0 0.0
    %977 = vmatprep.subr.mxu0 0.0
    %978 = vmatpush1.msra.mxu0 0.0
    %979 = vmatprep.subr.mxu0 0.0
    %980 = vmatpush1.msra.mxu0 0.0
    %981 = vmatprep.subr.mxu0 0.0
    %982 = vmatpush1.msra.mxu0 0.0
    %983 = vmatprep.subr.mxu0 0.0
    %984 = vmatpush1.msra.mxu0 0.0
    %985 = vmatprep.subr.mxu0 0.0
    %986 = vmatpush1.msra.mxu0 0.0
    %987 = vmatprep.subr.mxu0 0.0
    %988 = vmatpush1.msra.mxu0 0.0
    %989 = vmatprep.subr.mxu0 0.0
    %990 = vmatpush1.msra.mxu0 0.0
    %991 = vmatprep.subr.mxu0 0.0
    %992 = vmatpush1.msra.mxu0 0.0
    %993 = vmatprep.subr.mxu0 0.0
    %994 = vmatpush1.msra.mxu0 0.0
    %995 = vmatprep.subr.mxu0 0.0
    %996 = vmatpush1.msra.mxu0 0.0
    %997 = vmatprep.subr.mxu0 0.0
    %998 = vmatpush1.msra.mxu0 0.0
    %999 = vmatprep.subr.mxu0 0.0
    %1000 = vmatpush1.msra.mxu0 0.0
    %1001 = vmatprep.subr.mxu0 0.0
    %1002 = vmatpush1.msra.mxu0 0.0
    %1003 = vmatprep.subr.mxu0 0.0
    %1004 = vmatpush1.msra.mxu0 0.0
    %1005 = vmatprep.subr.mxu0 0.0
    %1006 = vmatpush1.msra.mxu0 0.0
    %1007 = vmatprep.subr.mxu0 0.0
    %1008 = vmatpush1.msra.mxu0 0.0
    %1009 = vmatprep.subr.mxu0 0.0
    %1010 = vmatpush1.msra.mxu0 0.0
    %1011 = vmatprep.subr.mxu0 0.0
    %1012 = vmatpush1.msra.mxu0 0.0
    %1013 = vmatprep.subr.mxu0 0.0
    %1014 = vmatpush1.msra.mxu0 0.0
    %1015 = vmatprep.subr.mxu0 0.0
    %1016 = vmatpush1.msra.mxu0 0.0
    %1017 = vmatprep.subr.mxu0 0.0
    %1018 = vmatpush1.msra.mxu0 0.0
    %1019 = vmatprep.subr.mxu0 0.0
    %1020 = vmatpush1.msra.mxu0 0.0
    %1021 = vmatprep.mubr.f32.mxu0 0.0
    %1022 = vmatmul.mubr.f32.gmra.mrb[0].mxu0 %v955
    %v1023 = vpop.f32.mrb[0].mxu0
    %v1024 = vadd.f32 %v951, %v1023
    %v1025 = vpop.f32.mrb[0].mxu0
    %1026 = vdwg.mxu0
    %s1027 = scalar_lea.vmem %s2, 192
    %v1028 = vld [vmem:[%s1027] sm:$0xff]
    %v1029 = vld [vmem:[%s1027 + $0x8] sm:$0xff]
    %v1030 = vld [vmem:[%s1027 + $0x10] sm:$0xff]
    %v1031 = vld [vmem:[%s1027 + $0x18] sm:$0xff]
    %s1032 = scalar_lea.vmem %s3, 6
    %v1033 = vld [vmem:[%s1032] sm:$0x1]
    %v1035 = vlaneseq
    %v1036 = vshrl.u32 %v1035, 7
    %v1037 = vsub.s32 0, %v1036
    %v1038 = vrot.slane %v1033, %v1037
    %1040 = vmatprep.subr.mxu0 0.0
    %1041 = vmatpush1.msra.mxu0 %v1028
    %1042 = vmatprep.subr.mxu0 0.0
    %1043 = vmatpush1.msra.mxu0 %v1029
    %1044 = vmatprep.subr.mxu0 0.0
    %1045 = vmatpush1.msra.mxu0 %v1030
    %1046 = vmatprep.subr.mxu0 0.0
    %1047 = vmatpush1.msra.mxu0 %v1031
    %1048 = vmatprep.subr.mxu0 0.0
    %1049 = vmatpush1.msra.mxu0 0.0
    %1050 = vmatprep.subr.mxu0 0.0
    %1051 = vmatpush1.msra.mxu0 0.0
    %1052 = vmatprep.subr.mxu0 0.0
    %1053 = vmatpush1.msra.mxu0 0.0
    %1054 = vmatprep.subr.mxu0 0.0
    %1055 = vmatpush1.msra.mxu0 0.0
    %1056 = vmatprep.subr.mxu0 0.0
    %1057 = vmatpush1.msra.mxu0 0.0
    %1058 = vmatprep.subr.mxu0 0.0
    %1059 = vmatpush1.msra.mxu0 0.0
    %1060 = vmatprep.subr.mxu0 0.0
    %1061 = vmatpush1.msra.mxu0 0.0
    %1062 = vmatprep.subr.mxu0 0.0
    %1063 = vmatpush1.msra.mxu0 0.0
    %1064 = vmatprep.subr.mxu0 0.0
    %1065 = vmatpush1.msra.mxu0 0.0
    %1066 = vmatprep.subr.mxu0 0.0
    %1067 = vmatpush1.msra.mxu0 0.0
    %1068 = vmatprep.subr.mxu0 0.0
    %1069 = vmatpush1.msra.mxu0 0.0
    %1070 = vmatprep.subr.mxu0 0.0
    %1071 = vmatpush1.msra.mxu0 0.0
    %1072 = vmatprep.subr.mxu0 0.0
    %1073 = vmatpush1.msra.mxu0 0.0
    %1074 = vmatprep.subr.mxu0 0.0
    %1075 = vmatpush1.msra.mxu0 0.0
    %1076 = vmatprep.subr.mxu0 0.0
    %1077 = vmatpush1.msra.mxu0 0.0
    %1078 = vmatprep.subr.mxu0 0.0
    %1079 = vmatpush1.msra.mxu0 0.0
    %1080 = vmatprep.subr.mxu0 0.0
    %1081 = vmatpush1.msra.mxu0 0.0
    %1082 = vmatprep.subr.mxu0 0.0
    %1083 = vmatpush1.msra.mxu0 0.0
    %1084 = vmatprep.subr.mxu0 0.0
    %1085 = vmatpush1.msra.mxu0 0.0
    %1086 = vmatprep.subr.mxu0 0.0
    %1087 = vmatpush1.msra.mxu0 0.0
    %1088 = vmatprep.subr.mxu0 0.0
    %1089 = vmatpush1.msra.mxu0 0.0
    %1090 = vmatprep.subr.mxu0 0.0
    %1091 = vmatpush1.msra.mxu0 0.0
    %1092 = vmatprep.subr.mxu0 0.0
    %1093 = vmatpush1.msra.mxu0 0.0
    %1094 = vmatprep.subr.mxu0 0.0
    %1095 = vmatpush1.msra.mxu0 0.0
    %1096 = vmatprep.subr.mxu0 0.0
    %1097 = vmatpush1.msra.mxu0 0.0
    %1098 = vmatprep.subr.mxu0 0.0
    %1099 = vmatpush1.msra.mxu0 0.0
    %1100 = vmatprep.subr.mxu0 0.0
    %1101 = vmatpush1.msra.mxu0 0.0
    %1102 = vmatprep.subr.mxu0 0.0
    %1103 = vmatpush1.msra.mxu0 0.0
    %1104 = vmatprep.mubr.f32.mxu0 0.0
    %1105 = vmatmul.mubr.f32.gmra.mrb[0].mxu0 %v66
    %v1106 = vpop.f32.mrb[0].mxu0
    %v1107 = vadd.f32 %v1038, %v1106
    %v1108 = vpop.f32.mrb[0].mxu0
    %1109 = vdwg.mxu0
    %s1110 = scalar_lea.vmem %s2, 224
    %v1111 = vld [vmem:[%s1110] sm:$0xff]
    %v1112 = vld [vmem:[%s1110 + $0x8] sm:$0xff]
    %v1113 = vld [vmem:[%s1110 + $0x10] sm:$0xff]
    %v1114 = vld [vmem:[%s1110 + $0x18] sm:$0xff]
    %s1115 = scalar_lea.vmem %s3, 7
    %v1116 = vld [vmem:[%s1115] sm:$0x1]
    %v1118 = vlaneseq
    %v1119 = vshrl.u32 %v1118, 7
    %v1120 = vsub.s32 0, %v1119
    %v1121 = vrot.slane %v1116, %v1120
    %1123 = vmatprep.subr.mxu0 0.0
    %1124 = vmatpush1.msra.mxu0 %v1111
    %1125 = vmatprep.subr.mxu0 0.0
    %1126 = vmatpush1.msra.mxu0 %v1112
    %1127 = vmatprep.subr.mxu0 0.0
    %1128 = vmatpush1.msra.mxu0 %v1113
    %1129 = vmatprep.subr.mxu0 0.0
    %1130 = vmatpush1.msra.mxu0 %v1114
    %1131 = vmatprep.subr.mxu0 0.0
    %1132 = vmatpush1.msra.mxu0 0.0
    %1133 = vmatprep.subr.mxu0 0.0
    %1134 = vmatpush1.msra.mxu0 0.0
    %1135 = vmatprep.subr.mxu0 0.0
    %1136 = vmatpush1.msra.mxu0 0.0
    %1137 = vmatprep.subr.mxu0 0.0
    %1138 = vmatpush1.msra.mxu0 0.0
    %1139 = vmatprep.subr.mxu0 0.0
    %1140 = vmatpush1.msra.mxu0 0.0
    %1141 = vmatprep.subr.mxu0 0.0
    %1142 = vmatpush1.msra.mxu0 0.0
    %1143 = vmatprep.subr.mxu0 0.0
    %1144 = vmatpush1.msra.mxu0 0.0
    %1145 = vmatprep.subr.mxu0 0.0
    %1146 = vmatpush1.msra.mxu0 0.0
    %1147 = vmatprep.subr.mxu0 0.0
    %1148 = vmatpush1.msra.mxu0 0.0
    %1149 = vmatprep.subr.mxu0 0.0
    %1150 = vmatpush1.msra.mxu0 0.0
    %1151 = vmatprep.subr.mxu0 0.0
    %1152 = vmatpush1.msra.mxu0 0.0
    %1153 = vmatprep.subr.mxu0 0.0
    %1154 = vmatpush1.msra.mxu0 0.0
    %1155 = vmatprep.subr.mxu0 0.0
    %1156 = vmatpush1.msra.mxu0 0.0
    %1157 = vmatprep.subr.mxu0 0.0
    %1158 = vmatpush1.msra.mxu0 0.0
    %1159 = vmatprep.subr.mxu0 0.0
    %1160 = vmatpush1.msra.mxu0 0.0
    %1161 = vmatprep.subr.mxu0 0.0
    %1162 = vmatpush1.msra.mxu0 0.0
    %1163 = vmatprep.subr.mxu0 0.0
    %1164 = vmatpush1.msra.mxu0 0.0
    %1165 = vmatprep.subr.mxu0 0.0
    %1166 = vmatpush1.msra.mxu0 0.0
    %1167 = vmatprep.subr.mxu0 0.0
    %1168 = vmatpush1.msra.mxu0 0.0
    %1169 = vmatprep.subr.mxu0 0.0
    %1170 = vmatpush1.msra.mxu0 0.0
    %1171 = vmatprep.subr.mxu0 0.0
    %1172 = vmatpush1.msra.mxu0 0.0
    %1173 = vmatprep.subr.mxu0 0.0
    %1174 = vmatpush1.msra.mxu0 0.0
    %1175 = vmatprep.subr.mxu0 0.0
    %1176 = vmatpush1.msra.mxu0 0.0
    %1177 = vmatprep.subr.mxu0 0.0
    %1178 = vmatpush1.msra.mxu0 0.0
    %1179 = vmatprep.subr.mxu0 0.0
    %1180 = vmatpush1.msra.mxu0 0.0
    %1181 = vmatprep.subr.mxu0 0.0
    %1182 = vmatpush1.msra.mxu0 0.0
    %1183 = vmatprep.subr.mxu0 0.0
    %1184 = vmatpush1.msra.mxu0 0.0
    %1185 = vmatprep.subr.mxu0 0.0
    %1186 = vmatpush1.msra.mxu0 0.0
    %1187 = vmatprep.mubr.f32.mxu0 0.0
    %1188 = vmatmul.mubr.f32.gmra.mrb[0].mxu0 %v66
    %v1189 = vpop.f32.mrb[0].mxu0
    %v1190 = vadd.f32 %v1121, %v1189
    %v1191 = vpop.f32.mrb[0].mxu0
    %1192 = vdwg.mxu0
    %s1193 = scalar_lea.vmem %s2, 256
    %v1194 = vld [vmem:[%s1193] sm:$0xff]
    %v1195 = vld [vmem:[%s1193 + $0x8] sm:$0xff]
    %v1196 = vld [vmem:[%s1193 + $0x10] sm:$0xff]
    %v1197 = vld [vmem:[%s1193 + $0x18] sm:$0xff]
    %s1198 = scalar_lea.vmem %s3, 8
    %v1199 = vld [vmem:[%s1198] sm:$0x1]
    %v1201 = vlaneseq
    %v1202 = vshrl.u32 %v1201, 7
    %v1203 = vsub.s32 0, %v1202
    %v1204 = vrot.slane %v1199, %v1203
    %1206 = vmatprep.subr.mxu0 0.0
    %1207 = vmatpush1.msra.mxu0 %v1194
    %1208 = vmatprep.subr.mxu0 0.0
    %1209 = vmatpush1.msra.mxu0 %v1195
    %1210 = vmatprep.subr.mxu0 0.0
    %1211 = vmatpush1.msra.mxu0 %v1196
    %1212 = vmatprep.subr.mxu0 0.0
    %1213 = vmatpush1.msra.mxu0 %v1197
    %1214 = vmatprep.subr.mxu0 0.0
    %1215 = vmatpush1.msra.mxu0 0.0
    %1216 = vmatprep.subr.mxu0 0.0
    %1217 = vmatpush1.msra.mxu0 0.0
    %1218 = vmatprep.subr.mxu0 0.0
    %1219 = vmatpush1.msra.mxu0 0.0
    %1220 = vmatprep.subr.mxu0 0.0
    %1221 = vmatpush1.msra.mxu0 0.0
    %1222 = vmatprep.subr.mxu0 0.0
    %1223 = vmatpush1.msra.mxu0 0.0
    %1224 = vmatprep.subr.mxu0 0.0
    %1225 = vmatpush1.msra.mxu0 0.0
    %1226 = vmatprep.subr.mxu0 0.0
    %1227 = vmatpush1.msra.mxu0 0.0
    %1228 = vmatprep.subr.mxu0 0.0
    %1229 = vmatpush1.msra.mxu0 0.0
    %1230 = vmatprep.subr.mxu0 0.0
    %1231 = vmatpush1.msra.mxu0 0.0
    %1232 = vmatprep.subr.mxu0 0.0
    %1233 = vmatpush1.msra.mxu0 0.0
    %1234 = vmatprep.subr.mxu0 0.0
    %1235 = vmatpush1.msra.mxu0 0.0
    %1236 = vmatprep.subr.mxu0 0.0
    %1237 = vmatpush1.msra.mxu0 0.0
    %1238 = vmatprep.subr.mxu0 0.0
    %1239 = vmatpush1.msra.mxu0 0.0
    %1240 = vmatprep.subr.mxu0 0.0
    %1241 = vmatpush1.msra.mxu0 0.0
    %1242 = vmatprep.subr.mxu0 0.0
    %1243 = vmatpush1.msra.mxu0 0.0
    %1244 = vmatprep.subr.mxu0 0.0
    %1245 = vmatpush1.msra.mxu0 0.0
    %1246 = vmatprep.subr.mxu0 0.0
    %1247 = vmatpush1.msra.mxu0 0.0
    %1248 = vmatprep.subr.mxu0 0.0
    %1249 = vmatpush1.msra.mxu0 0.0
    %1250 = vmatprep.subr.mxu0 0.0
    %1251 = vmatpush1.msra.mxu0 0.0
    %1252 = vmatprep.subr.mxu0 0.0
    %1253 = vmatpush1.msra.mxu0 0.0
    %1254 = vmatprep.subr.mxu0 0.0
    %1255 = vmatpush1.msra.mxu0 0.0
    %1256 = vmatprep.subr.mxu0 0.0
    %1257 = vmatpush1.msra.mxu0 0.0
    %1258 = vmatprep.subr.mxu0 0.0
    %1259 = vmatpush1.msra.mxu0 0.0
    %1260 = vmatprep.subr.mxu0 0.0
    %1261 = vmatpush1.msra.mxu0 0.0
    %1262 = vmatprep.subr.mxu0 0.0
    %1263 = vmatpush1.msra.mxu0 0.0
    %1264 = vmatprep.subr.mxu0 0.0
    %1265 = vmatpush1.msra.mxu0 0.0
    %1266 = vmatprep.subr.mxu0 0.0
    %1267 = vmatpush1.msra.mxu0 0.0
    %1268 = vmatprep.subr.mxu0 0.0
    %1269 = vmatpush1.msra.mxu0 0.0
    %1270 = vmatprep.mubr.f32.mxu0 0.0
    %1271 = vmatmul.mubr.f32.gmra.mrb[0].mxu0 %v66
    %v1272 = vpop.f32.mrb[0].mxu0
    %v1273 = vadd.f32 %v1204, %v1272
    %v1274 = vpop.f32.mrb[0].mxu0
    %1275 = vdwg.mxu0
    %v1277 = vsel %vm304, %v1107, 0
    %v1280 = vsel %vm304, %v1190, 0
    %1282 = vmatprep.subr.mxu0 0.0
    %1283 = vmatpush1.xpose.msra.mxu0 %v1280
    %1284 = vmatprep.subr.mxu0 0.0
    %1285 = vmatpush1.xpose.msra.mxu0 0.0
    %1286 = vmatprep.subr.mxu0 0.0
    %1287 = vmatpush1.xpose.msra.mxu0 0.0
    %1288 = vmatprep.subr.mxu0 0.0
    %1289 = vmatpush1.xpose.msra.mxu0 0.0
    %1290 = vmatprep.subr.mxu0 0.0
    %1291 = vmatpush1.xpose.msra.mxu0 0.0
    %1292 = vmatprep.subr.mxu0 0.0
    %1293 = vmatpush1.xpose.msra.mxu0 0.0
    %1294 = vmatprep.subr.mxu0 0.0
    %1295 = vmatpush1.xpose.msra.mxu0 0.0
    %1296 = vmatprep.subr.mxu0 0.0
    %1297 = vmatpush1.xpose.msra.mxu0 0.0
    %1298 = vmatprep.subr.mxu0 0.0
    %1299 = vmatpush1.xpose.msra.mxu0 0.0
    %1300 = vmatprep.subr.mxu0 0.0
    %1301 = vmatpush1.xpose.msra.mxu0 0.0
    %1302 = vmatprep.subr.mxu0 0.0
    %1303 = vmatpush1.xpose.msra.mxu0 0.0
    %1304 = vmatprep.subr.mxu0 0.0
    %1305 = vmatpush1.xpose.msra.mxu0 0.0
    %1306 = vmatprep.subr.mxu0 0.0
    %1307 = vmatpush1.xpose.msra.mxu0 0.0
    %1308 = vmatprep.subr.mxu0 0.0
    %1309 = vmatpush1.xpose.msra.mxu0 0.0
    %1310 = vmatprep.subr.mxu0 0.0
    %1311 = vmatpush1.xpose.msra.mxu0 0.0
    %1312 = vmatprep.subr.mxu0 0.0
    %1313 = vmatpush1.xpose.msra.mxu0 0.0
    %1314 = vmatprep.subr.mxu0 0.0
    %1315 = vmatpush1.xpose.msra.mxu0 0.0
    %1316 = vmatprep.subr.mxu0 0.0
    %1317 = vmatpush1.xpose.msra.mxu0 0.0
    %1318 = vmatprep.subr.mxu0 0.0
    %1319 = vmatpush1.xpose.msra.mxu0 0.0
    %1320 = vmatprep.subr.mxu0 0.0
    %1321 = vmatpush1.xpose.msra.mxu0 0.0
    %1322 = vmatprep.subr.mxu0 0.0
    %1323 = vmatpush1.xpose.msra.mxu0 0.0
    %1324 = vmatprep.subr.mxu0 0.0
    %1325 = vmatpush1.xpose.msra.mxu0 0.0
    %1326 = vmatprep.subr.mxu0 0.0
    %1327 = vmatpush1.xpose.msra.mxu0 0.0
    %1328 = vmatprep.subr.mxu0 0.0
    %1329 = vmatpush1.xpose.msra.mxu0 0.0
    %1330 = vmatprep.subr.mxu0 0.0
    %1331 = vmatpush1.xpose.msra.mxu0 0.0
    %1332 = vmatprep.subr.mxu0 0.0
    %1333 = vmatpush1.xpose.msra.mxu0 0.0
    %1334 = vmatprep.subr.mxu0 0.0
    %1335 = vmatpush1.xpose.msra.mxu0 0.0
    %1336 = vmatprep.subr.mxu0 0.0
    %1337 = vmatpush1.xpose.msra.mxu0 0.0
    %1338 = vmatprep.subr.mxu0 0.0
    %1339 = vmatpush1.xpose.msra.mxu0 0.0
    %1340 = vmatprep.subr.mxu0 0.0
    %1341 = vmatpush1.xpose.msra.mxu0 0.0
    %1342 = vmatprep.subr.mxu0 0.0
    %1343 = vmatpush1.xpose.msra.mxu0 0.0
    %1344 = vmatprep.subr.mxu0 0.0
    %1345 = vmatpush1.xpose.msra.mxu0 0.0
    %1346 = vmatprep.mubr.f32.mxu0 0.0
    %1347 = vmatmul.mubr.f32.gmra.mrb[0].mxu0 %v1277
    %v1348 = vpop.f32.mrb[0].mxu0
    %v1349 = vadd.f32 0.0, %v1348
    %v1350 = vpop.f32.mrb[0].mxu0
    %1351 = vdwg.mxu0
    %v1352 = vmul.f32 %v1349, 0.35355338
    %v1353 = vadd.f32 %v1352, %v52
    %v1354 = vsel %vm304, %v1353, -inf
    %1355 = vmax.xlane.f32.xlu0 %v1354
    %v1356 = vpop.xlane.xlu0 %1355
    %v1357 = vsub.f32 %v1353, %v1356
    %v1358 = vmul.f32 %v1357, 1.442695
    %v1359 = vpow.pop %v1358
    %v1360 = vsel %vm304, %v1359, 0.0
    %1361 = vadd.xlane.f32.xlu0 %v1360
    %v1362 = vpop.xlane.xlu0 %1361
    %v1363 = vrcp.pop %v1362
    %v1364 = vmul.f32 %v1359, %v1363
    %v1366 = vsel %vm304, %v1364, 0
    %1368 = vmatprep.subr.mxu0 0.0
    %1369 = vmatpush1.msra.mxu0 %v1273
    %1370 = vmatprep.subr.mxu0 0.0
    %1371 = vmatpush1.msra.mxu0 0.0
    %1372 = vmatprep.subr.mxu0 0.0
    %1373 = vmatpush1.msra.mxu0 0.0
    %1374 = vmatprep.subr.mxu0 0.0
    %1375 = vmatpush1.msra.mxu0 0.0
    %1376 = vmatprep.subr.mxu0 0.0
    %1377 = vmatpush1.msra.mxu0 0.0
    %1378 = vmatprep.subr.mxu0 0.0
    %1379 = vmatpush1.msra.mxu0 0.0
    %1380 = vmatprep.subr.mxu0 0.0
    %1381 = vmatpush1.msra.mxu0 0.0
    %1382 = vmatprep.subr.mxu0 0.0
    %1383 = vmatpush1.msra.mxu0 0.0
    %1384 = vmatprep.subr.mxu0 0.0
    %1385 = vmatpush1.msra.mxu0 0.0
    %1386 = vmatprep.subr.mxu0 0.0
    %1387 = vmatpush1.msra.mxu0 0.0
    %1388 = vmatprep.subr.mxu0 0.0
    %1389 = vmatpush1.msra.mxu0 0.0
    %1390 = vmatprep.subr.mxu0 0.0
    %1391 = vmatpush1.msra.mxu0 0.0
    %1392 = vmatprep.subr.mxu0 0.0
    %1393 = vmatpush1.msra.mxu0 0.0
    %1394 = vmatprep.subr.mxu0 0.0
    %1395 = vmatpush1.msra.mxu0 0.0
    %1396 = vmatprep.subr.mxu0 0.0
    %1397 = vmatpush1.msra.mxu0 0.0
    %1398 = vmatprep.subr.mxu0 0.0
    %1399 = vmatpush1.msra.mxu0 0.0
    %1400 = vmatprep.subr.mxu0 0.0
    %1401 = vmatpush1.msra.mxu0 0.0
    %1402 = vmatprep.subr.mxu0 0.0
    %1403 = vmatpush1.msra.mxu0 0.0
    %1404 = vmatprep.subr.mxu0 0.0
    %1405 = vmatpush1.msra.mxu0 0.0
    %1406 = vmatprep.subr.mxu0 0.0
    %1407 = vmatpush1.msra.mxu0 0.0
    %1408 = vmatprep.subr.mxu0 0.0
    %1409 = vmatpush1.msra.mxu0 0.0
    %1410 = vmatprep.subr.mxu0 0.0
    %1411 = vmatpush1.msra.mxu0 0.0
    %1412 = vmatprep.subr.mxu0 0.0
    %1413 = vmatpush1.msra.mxu0 0.0
    %1414 = vmatprep.subr.mxu0 0.0
    %1415 = vmatpush1.msra.mxu0 0.0
    %1416 = vmatprep.subr.mxu0 0.0
    %1417 = vmatpush1.msra.mxu0 0.0
    %1418 = vmatprep.subr.mxu0 0.0
    %1419 = vmatpush1.msra.mxu0 0.0
    %1420 = vmatprep.subr.mxu0 0.0
    %1421 = vmatpush1.msra.mxu0 0.0
    %1422 = vmatprep.subr.mxu0 0.0
    %1423 = vmatpush1.msra.mxu0 0.0
    %1424 = vmatprep.subr.mxu0 0.0
    %1425 = vmatpush1.msra.mxu0 0.0
    %1426 = vmatprep.subr.mxu0 0.0
    %1427 = vmatpush1.msra.mxu0 0.0
    %1428 = vmatprep.subr.mxu0 0.0
    %1429 = vmatpush1.msra.mxu0 0.0
    %1430 = vmatprep.subr.mxu0 0.0
    %1431 = vmatpush1.msra.mxu0 0.0
    %1432 = vmatprep.mubr.f32.mxu0 0.0
    %1433 = vmatmul.mubr.f32.gmra.mrb[0].mxu0 %v1366
    %v1434 = vpop.f32.mrb[0].mxu0
    %v1435 = vadd.f32 0.0, %v1434
    %v1436 = vpop.f32.mrb[0].mxu0
    %1437 = vdwg.mxu0
    %s1438 = scalar_lea.vmem %s4, 16
    %v1439 = vld [vmem:[%s1438] sm:$0xff]
    %v1441 = vsel %vm304, %v1435, 0
    %1443 = vmatprep.subr.mxu0 0.0
    %1444 = vmatpush1.msra.mxu0 %v1439
    %1445 = vmatprep.subr.mxu0 0.0
    %1446 = vmatpush1.msra.mxu0 0.0
    %1447 = vmatprep.subr.mxu0 0.0
    %1448 = vmatpush1.msra.mxu0 0.0
    %1449 = vmatprep.subr.mxu0 0.0
    %1450 = vmatpush1.msra.mxu0 0.0
    %1451 = vmatprep.subr.mxu0 0.0
    %1452 = vmatpush1.msra.mxu0 0.0
    %1453 = vmatprep.subr.mxu0 0.0
    %1454 = vmatpush1.msra.mxu0 0.0
    %1455 = vmatprep.subr.mxu0 0.0
    %1456 = vmatpush1.msra.mxu0 0.0
    %1457 = vmatprep.subr.mxu0 0.0
    %1458 = vmatpush1.msra.mxu0 0.0
    %1459 = vmatprep.subr.mxu0 0.0
    %1460 = vmatpush1.msra.mxu0 0.0
    %1461 = vmatprep.subr.mxu0 0.0
    %1462 = vmatpush1.msra.mxu0 0.0
    %1463 = vmatprep.subr.mxu0 0.0
    %1464 = vmatpush1.msra.mxu0 0.0
    %1465 = vmatprep.subr.mxu0 0.0
    %1466 = vmatpush1.msra.mxu0 0.0
    %1467 = vmatprep.subr.mxu0 0.0
    %1468 = vmatpush1.msra.mxu0 0.0
    %1469 = vmatprep.subr.mxu0 0.0
    %1470 = vmatpush1.msra.mxu0 0.0
    %1471 = vmatprep.subr.mxu0 0.0
    %1472 = vmatpush1.msra.mxu0 0.0
    %1473 = vmatprep.subr.mxu0 0.0
    %1474 = vmatpush1.msra.mxu0 0.0
    %1475 = vmatprep.subr.mxu0 0.0
    %1476 = vmatpush1.msra.mxu0 0.0
    %1477 = vmatprep.subr.mxu0 0.0
    %1478 = vmatpush1.msra.mxu0 0.0
    %1479 = vmatprep.subr.mxu0 0.0
    %1480 = vmatpush1.msra.mxu0 0.0
    %1481 = vmatprep.subr.mxu0 0.0
    %1482 = vmatpush1.msra.mxu0 0.0
    %1483 = vmatprep.subr.mxu0 0.0
    %1484 = vmatpush1.msra.mxu0 0.0
    %1485 = vmatprep.subr.mxu0 0.0
    %1486 = vmatpush1.msra.mxu0 0.0
    %1487 = vmatprep.subr.mxu0 0.0
    %1488 = vmatpush1.msra.mxu0 0.0
    %1489 = vmatprep.subr.mxu0 0.0
    %1490 = vmatpush1.msra.mxu0 0.0
    %1491 = vmatprep.subr.mxu0 0.0
    %1492 = vmatpush1.msra.mxu0 0.0
    %1493 = vmatprep.subr.mxu0 0.0
    %1494 = vmatpush1.msra.mxu0 0.0
    %1495 = vmatprep.subr.mxu0 0.0
    %1496 = vmatpush1.msra.mxu0 0.0
    %1497 = vmatprep.subr.mxu0 0.0
    %1498 = vmatpush1.msra.mxu0 0.0
    %1499 = vmatprep.subr.mxu0 0.0
    %1500 = vmatpush1.msra.mxu0 0.0
    %1501 = vmatprep.subr.mxu0 0.0
    %1502 = vmatpush1.msra.mxu0 0.0
    %1503 = vmatprep.subr.mxu0 0.0
    %1504 = vmatpush1.msra.mxu0 0.0
    %1505 = vmatprep.subr.mxu0 0.0
    %1506 = vmatpush1.msra.mxu0 0.0
    %1507 = vmatprep.mubr.f32.mxu0 0.0
    %1508 = vmatmul.mubr.f32.gmra.mrb[0].mxu0 %v1441
    %v1509 = vpop.f32.mrb[0].mxu0
    %v1510 = vadd.f32 0.0, %v1509
    %v1511 = vpop.f32.mrb[0].mxu0
    %1512 = vdwg.mxu0
    %v1513 = vadd.f32 %v1024, %v1510
    %s1514 = scalar_lea.vmem %s2, 288
    %v1515 = vld [vmem:[%s1514] sm:$0xff]
    %v1516 = vld [vmem:[%s1514 + $0x8] sm:$0xff]
    %v1517 = vld [vmem:[%s1514 + $0x10] sm:$0xff]
    %v1518 = vld [vmem:[%s1514 + $0x18] sm:$0xff]
    %s1519 = scalar_lea.vmem %s3, 9
    %v1520 = vld [vmem:[%s1519] sm:$0x1]
    %v1522 = vlaneseq
    %v1523 = vshrl.u32 %v1522, 7
    %v1524 = vsub.s32 0, %v1523
    %v1525 = vrot.slane %v1520, %v1524
    %1527 = vmatprep.subr.mxu0 0.0
    %1528 = vmatpush1.msra.mxu0 %v1515
    %1529 = vmatprep.subr.mxu0 0.0
    %1530 = vmatpush1.msra.mxu0 %v1516
    %1531 = vmatprep.subr.mxu0 0.0
    %1532 = vmatpush1.msra.mxu0 %v1517
    %1533 = vmatprep.subr.mxu0 0.0
    %1534 = vmatpush1.msra.mxu0 %v1518
    %1535 = vmatprep.subr.mxu0 0.0
    %1536 = vmatpush1.msra.mxu0 0.0
    %1537 = vmatprep.subr.mxu0 0.0
    %1538 = vmatpush1.msra.mxu0 0.0
    %1539 = vmatprep.subr.mxu0 0.0
    %1540 = vmatpush1.msra.mxu0 0.0
    %1541 = vmatprep.subr.mxu0 0.0
    %1542 = vmatpush1.msra.mxu0 0.0
    %1543 = vmatprep.subr.mxu0 0.0
    %1544 = vmatpush1.msra.mxu0 0.0
    %1545 = vmatprep.subr.mxu0 0.0
    %1546 = vmatpush1.msra.mxu0 0.0
    %1547 = vmatprep.subr.mxu0 0.0
    %1548 = vmatpush1.msra.mxu0 0.0
    %1549 = vmatprep.subr.mxu0 0.0
    %1550 = vmatpush1.msra.mxu0 0.0
    %1551 = vmatprep.subr.mxu0 0.0
    %1552 = vmatpush1.msra.mxu0 0.0
    %1553 = vmatprep.subr.mxu0 0.0
    %1554 = vmatpush1.msra.mxu0 0.0
    %1555 = vmatprep.subr.mxu0 0.0
    %1556 = vmatpush1.msra.mxu0 0.0
    %1557 = vmatprep.subr.mxu0 0.0
    %1558 = vmatpush1.msra.mxu0 0.0
    %1559 = vmatprep.subr.mxu0 0.0
    %1560 = vmatpush1.msra.mxu0 0.0
    %1561 = vmatprep.subr.mxu0 0.0
    %1562 = vmatpush1.msra.mxu0 0.0
    %1563 = vmatprep.subr.mxu0 0.0
    %1564 = vmatpush1.msra.mxu0 0.0
    %1565 = vmatprep.subr.mxu0 0.0
    %1566 = vmatpush1.msra.mxu0 0.0
    %1567 = vmatprep.subr.mxu0 0.0
    %1568 = vmatpush1.msra.mxu0 0.0
    %1569 = vmatprep.subr.mxu0 0.0
    %1570 = vmatpush1.msra.mxu0 0.0
    %1571 = vmatprep.subr.mxu0 0.0
    %1572 = vmatpush1.msra.mxu0 0.0
    %1573 = vmatprep.subr.mxu0 0.0
    %1574 = vmatpush1.msra.mxu0 0.0
    %1575 = vmatprep.subr.mxu0 0.0
    %1576 = vmatpush1.msra.mxu0 0.0
    %1577 = vmatprep.subr.mxu0 0.0
    %1578 = vmatpush1.msra.mxu0 0.0
    %1579 = vmatprep.subr.mxu0 0.0
    %1580 = vmatpush1.msra.mxu0 0.0
    %1581 = vmatprep.subr.mxu0 0.0
    %1582 = vmatpush1.msra.mxu0 0.0
    %1583 = vmatprep.subr.mxu0 0.0
    %1584 = vmatpush1.msra.mxu0 0.0
    %1585 = vmatprep.subr.mxu0 0.0
    %1586 = vmatpush1.msra.mxu0 0.0
    %1587 = vmatprep.subr.mxu0 0.0
    %1588 = vmatpush1.msra.mxu0 0.0
    %1589 = vmatprep.subr.mxu0 0.0
    %1590 = vmatpush1.msra.mxu0 0.0
    %1591 = vmatprep.mubr.f32.mxu0 0.0
    %1592 = vmatmul.mubr.f32.gmra.mrb[0].mxu0 %v66
    %v1593 = vpop.f32.mrb[0].mxu0
    %v1594 = vadd.f32 %v1525, %v1593
    %v1595 = vpop.f32.mrb[0].mxu0
    %1596 = vdwg.mxu0
    %s1597 = scalar_lea.vmem %s2, 320
    %v1598 = vld [vmem:[%s1597] sm:$0xff]
    %v1599 = vld [vmem:[%s1597 + $0x8] sm:$0xff]
    %v1600 = vld [vmem:[%s1597 + $0x10] sm:$0xff]
    %v1601 = vld [vmem:[%s1597 + $0x18] sm:$0xff]
    %s1602 = scalar_lea.vmem %s3, 10
    %v1603 = vld [vmem:[%s1602] sm:$0x1]
    %v1605 = vlaneseq
    %v1606 = vshrl.u32 %v1605, 7
    %v1607 = vsub.s32 0, %v1606
    %v1608 = vrot.slane %v1603, %v1607
    %1610 = vmatprep.subr.mxu0 0.0
    %1611 = vmatpush1.msra.mxu0 %v1598
    %1612 = vmatprep.subr.mxu0 0.0
    %1613 = vmatpush1.msra.mxu0 %v1599
    %1614 = vmatprep.subr.mxu0 0.0
    %1615 = vmatpush1.msra.mxu0 %v1600
    %1616 = vmatprep.subr.mxu0 0.0
    %1617 = vmatpush1.msra.mxu0 %v1601
    %1618 = vmatprep.subr.mxu0 0.0
    %1619 = vmatpush1.msra.mxu0 0.0
    %1620 = vmatprep.subr.mxu0 0.0
    %1621 = vmatpush1.msra.mxu0 0.0
    %1622 = vmatprep.subr.mxu0 0.0
    %1623 = vmatpush1.msra.mxu0 0.0
    %1624 = vmatprep.subr.mxu0 0.0
    %1625 = vmatpush1.msra.mxu0 0.0
    %1626 = vmatprep.subr.mxu0 0.0
    %1627 = vmatpush1.msra.mxu0 0.0
    %1628 = vmatprep.subr.mxu0 0.0
    %1629 = vmatpush1.msra.mxu0 0.0
    %1630 = vmatprep.subr.mxu0 0.0
    %1631 = vmatpush1.msra.mxu0 0.0
    %1632 = vmatprep.subr.mxu0 0.0
    %1633 = vmatpush1.msra.mxu0 0.0
    %1634 = vmatprep.subr.mxu0 0.0
    %1635 = vmatpush1.msra.mxu0 0.0
    %1636 = vmatprep.subr.mxu0 0.0
    %1637 = vmatpush1.msra.mxu0 0.0
    %1638 = vmatprep.subr.mxu0 0.0
    %1639 = vmatpush1.msra.mxu0 0.0
    %1640 = vmatprep.subr.mxu0 0.0
    %1641 = vmatpush1.msra.mxu0 0.0
    %1642 = vmatprep.subr.mxu0 0.0
    %1643 = vmatpush1.msra.mxu0 0.0
    %1644 = vmatprep.subr.mxu0 0.0
    %1645 = vmatpush1.msra.mxu0 0.0
    %1646 = vmatprep.subr.mxu0 0.0
    %1647 = vmatpush1.msra.mxu0 0.0
    %1648 = vmatprep.subr.mxu0 0.0
    %1649 = vmatpush1.msra.mxu0 0.0
    %1650 = vmatprep.subr.mxu0 0.0
    %1651 = vmatpush1.msra.mxu0 0.0
    %1652 = vmatprep.subr.mxu0 0.0
    %1653 = vmatpush1.msra.mxu0 0.0
    %1654 = vmatprep.subr.mxu0 0.0
    %1655 = vmatpush1.msra.mxu0 0.0
    %1656 = vmatprep.subr.mxu0 0.0
    %1657 = vmatpush1.msra.mxu0 0.0
    %1658 = vmatprep.subr.mxu0 0.0
    %1659 = vmatpush1.msra.mxu0 0.0
    %1660 = vmatprep.subr.mxu0 0.0
    %1661 = vmatpush1.msra.mxu0 0.0
    %1662 = vmatprep.subr.mxu0 0.0
    %1663 = vmatpush1.msra.mxu0 0.0
    %1664 = vmatprep.subr.mxu0 0.0
    %1665 = vmatpush1.msra.mxu0 0.0
    %1666 = vmatprep.subr.mxu0 0.0
    %1667 = vmatpush1.msra.mxu0 0.0
    %1668 = vmatprep.subr.mxu0 0.0
    %1669 = vmatpush1.msra.mxu0 0.0
    %1670 = vmatprep.subr.mxu0 0.0
    %1671 = vmatpush1.msra.mxu0 0.0
    %1672 = vmatprep.subr.mxu0 0.0
    %1673 = vmatpush1.msra.mxu0 0.0
    %1674 = vmatprep.mubr.f32.mxu0 0.0
    %1675 = vmatmul.mubr.f32.gmra.mrb[0].mxu0 %v66
    %v1676 = vpop.f32.mrb[0].mxu0
    %v1677 = vadd.f32 %v1608, %v1676
    %v1678 = vpop.f32.mrb[0].mxu0
    %1679 = vdwg.mxu0
    %s1680 = scalar_lea.vmem %s2, 352
    %v1681 = vld [vmem:[%s1680] sm:$0xff]
    %v1682 = vld [vmem:[%s1680 + $0x8] sm:$0xff]
    %v1683 = vld [vmem:[%s1680 + $0x10] sm:$0xff]
    %v1684 = vld [vmem:[%s1680 + $0x18] sm:$0xff]
    %s1685 = scalar_lea.vmem %s3, 11
    %v1686 = vld [vmem:[%s1685] sm:$0x1]
    %v1688 = vlaneseq
    %v1689 = vshrl.u32 %v1688, 7
    %v1690 = vsub.s32 0, %v1689
    %v1691 = vrot.slane %v1686, %v1690
    %1693 = vmatprep.subr.mxu0 0.0
    %1694 = vmatpush1.msra.mxu0 %v1681
    %1695 = vmatprep.subr.mxu0 0.0
    %1696 = vmatpush1.msra.mxu0 %v1682
    %1697 = vmatprep.subr.mxu0 0.0
    %1698 = vmatpush1.msra.mxu0 %v1683
    %1699 = vmatprep.subr.mxu0 0.0
    %1700 = vmatpush1.msra.mxu0 %v1684
    %1701 = vmatprep.subr.mxu0 0.0
    %1702 = vmatpush1.msra.mxu0 0.0
    %1703 = vmatprep.subr.mxu0 0.0
    %1704 = vmatpush1.msra.mxu0 0.0
    %1705 = vmatprep.subr.mxu0 0.0
    %1706 = vmatpush1.msra.mxu0 0.0
    %1707 = vmatprep.subr.mxu0 0.0
    %1708 = vmatpush1.msra.mxu0 0.0
    %1709 = vmatprep.subr.mxu0 0.0
    %1710 = vmatpush1.msra.mxu0 0.0
    %1711 = vmatprep.subr.mxu0 0.0
    %1712 = vmatpush1.msra.mxu0 0.0
    %1713 = vmatprep.subr.mxu0 0.0
    %1714 = vmatpush1.msra.mxu0 0.0
    %1715 = vmatprep.subr.mxu0 0.0
    %1716 = vmatpush1.msra.mxu0 0.0
    %1717 = vmatprep.subr.mxu0 0.0
    %1718 = vmatpush1.msra.mxu0 0.0
    %1719 = vmatprep.subr.mxu0 0.0
    %1720 = vmatpush1.msra.mxu0 0.0
    %1721 = vmatprep.subr.mxu0 0.0
    %1722 = vmatpush1.msra.mxu0 0.0
    %1723 = vmatprep.subr.mxu0 0.0
    %1724 = vmatpush1.msra.mxu0 0.0
    %1725 = vmatprep.subr.mxu0 0.0
    %1726 = vmatpush1.msra.mxu0 0.0
    %1727 = vmatprep.subr.mxu0 0.0
    %1728 = vmatpush1.msra.mxu0 0.0
    %1729 = vmatprep.subr.mxu0 0.0
    %1730 = vmatpush1.msra.mxu0 0.0
    %1731 = vmatprep.subr.mxu0 0.0
    %1732 = vmatpush1.msra.mxu0 0.0
    %1733 = vmatprep.subr.mxu0 0.0
    %1734 = vmatpush1.msra.mxu0 0.0
    %1735 = vmatprep.subr.mxu0 0.0
    %1736 = vmatpush1.msra.mxu0 0.0
    %1737 = vmatprep.subr.mxu0 0.0
    %1738 = vmatpush1.msra.mxu0 0.0
    %1739 = vmatprep.subr.mxu0 0.0
    %1740 = vmatpush1.msra.mxu0 0.0
    %1741 = vmatprep.subr.mxu0 0.0
    %1742 = vmatpush1.msra.mxu0 0.0
    %1743 = vmatprep.subr.mxu0 0.0
    %1744 = vmatpush1.msra.mxu0 0.0
    %1745 = vmatprep.subr.mxu0 0.0
    %1746 = vmatpush1.msra.mxu0 0.0
    %1747 = vmatprep.subr.mxu0 0.0
    %1748 = vmatpush1.msra.mxu0 0.0
    %1749 = vmatprep.subr.mxu0 0.0
    %1750 = vmatpush1.msra.mxu0 0.0
    %1751 = vmatprep.subr.mxu0 0.0
    %1752 = vmatpush1.msra.mxu0 0.0
    %1753 = vmatprep.subr.mxu0 0.0
    %1754 = vmatpush1.msra.mxu0 0.0
    %1755 = vmatprep.subr.mxu0 0.0
    %1756 = vmatpush1.msra.mxu0 0.0
    %1757 = vmatprep.mubr.f32.mxu0 0.0
    %1758 = vmatmul.mubr.f32.gmra.mrb[0].mxu0 %v66
    %v1759 = vpop.f32.mrb[0].mxu0
    %v1760 = vadd.f32 %v1691, %v1759
    %v1761 = vpop.f32.mrb[0].mxu0
    %1762 = vdwg.mxu0
    %v1764 = vsel %vm304, %v1594, 0
    %v1767 = vsel %vm304, %v1677, 0
    %1769 = vmatprep.subr.mxu0 0.0
    %1770 = vmatpush1.xpose.msra.mxu0 %v1767
    %1771 = vmatprep.subr.mxu0 0.0
    %1772 = vmatpush1.xpose.msra.mxu0 0.0
    %1773 = vmatprep.subr.mxu0 0.0
    %1774 = vmatpush1.xpose.msra.mxu0 0.0
    %1775 = vmatprep.subr.mxu0 0.0
    %1776 = vmatpush1.xpose.msra.mxu0 0.0
    %1777 = vmatprep.subr.mxu0 0.0
    %1778 = vmatpush1.xpose.msra.mxu0 0.0
    %1779 = vmatprep.subr.mxu0 0.0
    %1780 = vmatpush1.xpose.msra.mxu0 0.0
    %1781 = vmatprep.subr.mxu0 0.0
    %1782 = vmatpush1.xpose.msra.mxu0 0.0
    %1783 = vmatprep.subr.mxu0 0.0
    %1784 = vmatpush1.xpose.msra.mxu0 0.0
    %1785 = vmatprep.subr.mxu0 0.0
    %1786 = vmatpush1.xpose.msra.mxu0 0.0
    %1787 = vmatprep.subr.mxu0 0.0
    %1788 = vmatpush1.xpose.msra.mxu0 0.0
    %1789 = vmatprep.subr.mxu0 0.0
    %1790 = vmatpush1.xpose.msra.mxu0 0.0
    %1791 = vmatprep.subr.mxu0 0.0
    %1792 = vmatpush1.xpose.msra.mxu0 0.0
    %1793 = vmatprep.subr.mxu0 0.0
    %1794 = vmatpush1.xpose.msra.mxu0 0.0
    %1795 = vmatprep.subr.mxu0 0.0
    %1796 = vmatpush1.xpose.msra.mxu0 0.0
    %1797 = vmatprep.subr.mxu0 0.0
    %1798 = vmatpush1.xpose.msra.mxu0 0.0
    %1799 = vmatprep.subr.mxu0 0.0
    %1800 = vmatpush1.xpose.msra.mxu0 0.0
    %1801 = vmatprep.subr.mxu0 0.0
    %1802 = vmatpush1.xpose.msra.mxu0 0.0
    %1803 = vmatprep.subr.mxu0 0.0
    %1804 = vmatpush1.xpose.msra.mxu0 0.0
    %1805 = vmatprep.subr.mxu0 0.0
    %1806 = vmatpush1.xpose.msra.mxu0 0.0
    %1807 = vmatprep.subr.mxu0 0.0
    %1808 = vmatpush1.xpose.msra.mxu0 0.0
    %1809 = vmatprep.subr.mxu0 0.0
    %1810 = vmatpush1.xpose.msra.mxu0 0.0
    %1811 = vmatprep.subr.mxu0 0.0
    %1812 = vmatpush1.xpose.msra.mxu0 0.0
    %1813 = vmatprep.subr.mxu0 0.0
    %1814 = vmatpush1.xpose.msra.mxu0 0.0
    %1815 = vmatprep.subr.mxu0 0.0
    %1816 = vmatpush1.xpose.msra.mxu0 0.0
    %1817 = vmatprep.subr.mxu0 0.0
    %1818 = vmatpush1.xpose.msra.mxu0 0.0
    %1819 = vmatprep.subr.mxu0 0.0
    %1820 = vmatpush1.xpose.msra.mxu0 0.0
    %1821 = vmatprep.subr.mxu0 0.0
    %1822 = vmatpush1.xpose.msra.mxu0 0.0
    %1823 = vmatprep.subr.mxu0 0.0
    %1824 = vmatpush1.xpose.msra.mxu0 0.0
    %1825 = vmatprep.subr.mxu0 0.0
    %1826 = vmatpush1.xpose.msra.mxu0 0.0
    %1827 = vmatprep.subr.mxu0 0.0
    %1828 = vmatpush1.xpose.msra.mxu0 0.0
    %1829 = vmatprep.subr.mxu0 0.0
    %1830 = vmatpush1.xpose.msra.mxu0 0.0
    %1831 = vmatprep.subr.mxu0 0.0
    %1832 = vmatpush1.xpose.msra.mxu0 0.0
    %1833 = vmatprep.mubr.f32.mxu0 0.0
    %1834 = vmatmul.mubr.f32.gmra.mrb[0].mxu0 %v1764
    %v1835 = vpop.f32.mrb[0].mxu0
    %v1836 = vadd.f32 0.0, %v1835
    %v1837 = vpop.f32.mrb[0].mxu0
    %1838 = vdwg.mxu0
    %v1839 = vmul.f32 %v1836, 0.35355338
    %v1840 = vadd.f32 %v1839, %v52
    %v1841 = vsel %vm304, %v1840, -inf
    %1842 = vmax.xlane.f32.xlu0 %v1841
    %v1843 = vpop.xlane.xlu0 %1842
    %v1844 = vsub.f32 %v1840, %v1843
    %v1845 = vmul.f32 %v1844, 1.442695
    %v1846 = vpow.pop %v1845
    %v1847 = vsel %vm304, %v1846, 0.0
    %1848 = vadd.xlane.f32.xlu0 %v1847
    %v1849 = vpop.xlane.xlu0 %1848
    %v1850 = vrcp.pop %v1849
    %v1851 = vmul.f32 %v1846, %v1850
    %v1853 = vsel %vm304, %v1851, 0
    %1855 = vmatprep.subr.mxu0 0.0
    %1856 = vmatpush1.msra.mxu0 %v1760
    %1857 = vmatprep.subr.mxu0 0.0
    %1858 = vmatpush1.msra.mxu0 0.0
    %1859 = vmatprep.subr.mxu0 0.0
    %1860 = vmatpush1.msra.mxu0 0.0
    %1861 = vmatprep.subr.mxu0 0.0
    %1862 = vmatpush1.msra.mxu0 0.0
    %1863 = vmatprep.subr.mxu0 0.0
    %1864 = vmatpush1.msra.mxu0 0.0
    %1865 = vmatprep.subr.mxu0 0.0
    %1866 = vmatpush1.msra.mxu0 0.0
    %1867 = vmatprep.subr.mxu0 0.0
    %1868 = vmatpush1.msra.mxu0 0.0
    %1869 = vmatprep.subr.mxu0 0.0
    %1870 = vmatpush1.msra.mxu0 0.0
    %1871 = vmatprep.subr.mxu0 0.0
    %1872 = vmatpush1.msra.mxu0 0.0
    %1873 = vmatprep.subr.mxu0 0.0
    %1874 = vmatpush1.msra.mxu0 0.0
    %1875 = vmatprep.subr.mxu0 0.0
    %1876 = vmatpush1.msra.mxu0 0.0
    %1877 = vmatprep.subr.mxu0 0.0
    %1878 = vmatpush1.msra.mxu0 0.0
    %1879 = vmatprep.subr.mxu0 0.0
    %1880 = vmatpush1.msra.mxu0 0.0
    %1881 = vmatprep.subr.mxu0 0.0
    %1882 = vmatpush1.msra.mxu0 0.0
    %1883 = vmatprep.subr.mxu0 0.0
    %1884 = vmatpush1.msra.mxu0 0.0
    %1885 = vmatprep.subr.mxu0 0.0
    %1886 = vmatpush1.msra.mxu0 0.0
    %1887 = vmatprep.subr.mxu0 0.0
    %1888 = vmatpush1.msra.mxu0 0.0
    %1889 = vmatprep.subr.mxu0 0.0
    %1890 = vmatpush1.msra.mxu0 0.0
    %1891 = vmatprep.subr.mxu0 0.0
    %1892 = vmatpush1.msra.mxu0 0.0
    %1893 = vmatprep.subr.mxu0 0.0
    %1894 = vmatpush1.msra.mxu0 0.0
    %1895 = vmatprep.subr.mxu0 0.0
    %1896 = vmatpush1.msra.mxu0 0.0
    %1897 = vmatprep.subr.mxu0 0.0
    %1898 = vmatpush1.msra.mxu0 0.0
    %1899 = vmatprep.subr.mxu0 0.0
    %1900 = vmatpush1.msra.mxu0 0.0
    %1901 = vmatprep.subr.mxu0 0.0
    %1902 = vmatpush1.msra.mxu0 0.0
    %1903 = vmatprep.subr.mxu0 0.0
    %1904 = vmatpush1.msra.mxu0 0.0
    %1905 = vmatprep.subr.mxu0 0.0
    %1906 = vmatpush1.msra.mxu0 0.0
    %1907 = vmatprep.subr.mxu0 0.0
    %1908 = vmatpush1.msra.mxu0 0.0
    %1909 = vmatprep.subr.mxu0 0.0
    %1910 = vmatpush1.msra.mxu0 0.0
    %1911 = vmatprep.subr.mxu0 0.0
    %1912 = vmatpush1.msra.mxu0 0.0
    %1913 = vmatprep.subr.mxu0 0.0
    %1914 = vmatpush1.msra.mxu0 0.0
    %1915 = vmatprep.subr.mxu0 0.0
    %1916 = vmatpush1.msra.mxu0 0.0
    %1917 = vmatprep.subr.mxu0 0.0
    %1918 = vmatpush1.msra.mxu0 0.0
    %1919 = vmatprep.mubr.f32.mxu0 0.0
    %1920 = vmatmul.mubr.f32.gmra.mrb[0].mxu0 %v1853
    %v1921 = vpop.f32.mrb[0].mxu0
    %v1922 = vadd.f32 0.0, %v1921
    %v1923 = vpop.f32.mrb[0].mxu0
    %1924 = vdwg.mxu0
    %s1925 = scalar_lea.vmem %s4, 24
    %v1926 = vld [vmem:[%s1925] sm:$0xff]
    %v1928 = vsel %vm304, %v1922, 0
    %1930 = vmatprep.subr.mxu0 0.0
    %1931 = vmatpush1.msra.mxu0 %v1926
    %1932 = vmatprep.subr.mxu0 0.0
    %1933 = vmatpush1.msra.mxu0 0.0
    %1934 = vmatprep.subr.mxu0 0.0
    %1935 = vmatpush1.msra.mxu0 0.0
    %1936 = vmatprep.subr.mxu0 0.0
    %1937 = vmatpush1.msra.mxu0 0.0
    %1938 = vmatprep.subr.mxu0 0.0
    %1939 = vmatpush1.msra.mxu0 0.0
    %1940 = vmatprep.subr.mxu0 0.0
    %1941 = vmatpush1.msra.mxu0 0.0
    %1942 = vmatprep.subr.mxu0 0.0
    %1943 = vmatpush1.msra.mxu0 0.0
    %1944 = vmatprep.subr.mxu0 0.0
    %1945 = vmatpush1.msra.mxu0 0.0
    %1946 = vmatprep.subr.mxu0 0.0
    %1947 = vmatpush1.msra.mxu0 0.0
    %1948 = vmatprep.subr.mxu0 0.0
    %1949 = vmatpush1.msra.mxu0 0.0
    %1950 = vmatprep.subr.mxu0 0.0
    %1951 = vmatpush1.msra.mxu0 0.0
    %1952 = vmatprep.subr.mxu0 0.0
    %1953 = vmatpush1.msra.mxu0 0.0
    %1954 = vmatprep.subr.mxu0 0.0
    %1955 = vmatpush1.msra.mxu0 0.0
    %1956 = vmatprep.subr.mxu0 0.0
    %1957 = vmatpush1.msra.mxu0 0.0
    %1958 = vmatprep.subr.mxu0 0.0
    %1959 = vmatpush1.msra.mxu0 0.0
    %1960 = vmatprep.subr.mxu0 0.0
    %1961 = vmatpush1.msra.mxu0 0.0
    %1962 = vmatprep.subr.mxu0 0.0
    %1963 = vmatpush1.msra.mxu0 0.0
    %1964 = vmatprep.subr.mxu0 0.0
    %1965 = vmatpush1.msra.mxu0 0.0
    %1966 = vmatprep.subr.mxu0 0.0
    %1967 = vmatpush1.msra.mxu0 0.0
    %1968 = vmatprep.subr.mxu0 0.0
    %1969 = vmatpush1.msra.mxu0 0.0
    %1970 = vmatprep.subr.mxu0 0.0
    %1971 = vmatpush1.msra.mxu0 0.0
    %1972 = vmatprep.subr.mxu0 0.0
    %1973 = vmatpush1.msra.mxu0 0.0
    %1974 = vmatprep.subr.mxu0 0.0
    %1975 = vmatpush1.msra.mxu0 0.0
    %1976 = vmatprep.subr.mxu0 0.0
    %1977 = vmatpush1.msra.mxu0 0.0
    %1978 = vmatprep.subr.mxu0 0.0
    %1979 = vmatpush1.msra.mxu0 0.0
    %1980 = vmatprep.subr.mxu0 0.0
    %1981 = vmatpush1.msra.mxu0 0.0
    %1982 = vmatprep.subr.mxu0 0.0
    %1983 = vmatpush1.msra.mxu0 0.0
    %1984 = vmatprep.subr.mxu0 0.0
    %1985 = vmatpush1.msra.mxu0 0.0
    %1986 = vmatprep.subr.mxu0 0.0
    %1987 = vmatpush1.msra.mxu0 0.0
    %1988 = vmatprep.subr.mxu0 0.0
    %1989 = vmatpush1.msra.mxu0 0.0
    %1990 = vmatprep.subr.mxu0 0.0
    %1991 = vmatpush1.msra.mxu0 0.0
    %1992 = vmatprep.subr.mxu0 0.0
    %1993 = vmatpush1.msra.mxu0 0.0
    %1994 = vmatprep.mubr.f32.mxu0 0.0
    %1995 = vmatmul.mubr.f32.gmra.mrb[0].mxu0 %v1928
    %v1996 = vpop.f32.mrb[0].mxu0
    %v1997 = vadd.f32 0.0, %v1996
    %v1998 = vpop.f32.mrb[0].mxu0
    %1999 = vdwg.mxu0
    %v2000 = vadd.f32 %v1513, %v1997
    %s2001 = scalar_lea.vmem %s1, 8
    %v2002 = vld [vmem:[%s2001] sm:$0xff]
    %v2004 = vsel %vm64, %v51, 0
    %2006 = vmatprep.subr.mxu0 0.0
    %2007 = vmatpush1.msra.mxu0 %v53
    %2008 = vmatprep.subr.mxu0 0.0
    %2009 = vmatpush1.msra.mxu0 %v54
    %2010 = vmatprep.subr.mxu0 0.0
    %2011 = vmatpush1.msra.mxu0 %v55
    %2012 = vmatprep.subr.mxu0 0.0
    %2013 = vmatpush1.msra.mxu0 %v56
    %2014 = vmatprep.subr.mxu0 0.0
    %2015 = vmatpush1.msra.mxu0 0.0
    %2016 = vmatprep.subr.mxu0 0.0
    %2017 = vmatpush1.msra.mxu0 0.0
    %2018 = vmatprep.subr.mxu0 0.0
    %2019 = vmatpush1.msra.mxu0 0.0
    %2020 = vmatprep.subr.mxu0 0.0
    %2021 = vmatpush1.msra.mxu0 0.0
    %2022 = vmatprep.subr.mxu0 0.0
    %2023 = vmatpush1.msra.mxu0 0.0
    %2024 = vmatprep.subr.mxu0 0.0
    %2025 = vmatpush1.msra.mxu0 0.0
    %2026 = vmatprep.subr.mxu0 0.0
    %2027 = vmatpush1.msra.mxu0 0.0
    %2028 = vmatprep.subr.mxu0 0.0
    %2029 = vmatpush1.msra.mxu0 0.0
    %2030 = vmatprep.subr.mxu0 0.0
    %2031 = vmatpush1.msra.mxu0 0.0
    %2032 = vmatprep.subr.mxu0 0.0
    %2033 = vmatpush1.msra.mxu0 0.0
    %2034 = vmatprep.subr.mxu0 0.0
    %2035 = vmatpush1.msra.mxu0 0.0
    %2036 = vmatprep.subr.mxu0 0.0
    %2037 = vmatpush1.msra.mxu0 0.0
    %2038 = vmatprep.subr.mxu0 0.0
    %2039 = vmatpush1.msra.mxu0 0.0
    %2040 = vmatprep.subr.mxu0 0.0
    %2041 = vmatpush1.msra.mxu0 0.0
    %2042 = vmatprep.subr.mxu0 0.0
    %2043 = vmatpush1.msra.mxu0 0.0
    %2044 = vmatprep.subr.mxu0 0.0
    %2045 = vmatpush1.msra.mxu0 0.0
    %2046 = vmatprep.subr.mxu0 0.0
    %2047 = vmatpush1.msra.mxu0 0.0
    %2048 = vmatprep.subr.mxu0 0.0
    %2049 = vmatpush1.msra.mxu0 0.0
    %2050 = vmatprep.subr.mxu0 0.0
    %2051 = vmatpush1.msra.mxu0 0.0
    %2052 = vmatprep.subr.mxu0 0.0
    %2053 = vmatpush1.msra.mxu0 0.0
    %2054 = vmatprep.subr.mxu0 0.0
    %2055 = vmatpush1.msra.mxu0 0.0
    %2056 = vmatprep.subr.mxu0 0.0
    %2057 = vmatpush1.msra.mxu0 0.0
    %2058 = vmatprep.subr.mxu0 0.0
    %2059 = vmatpush1.msra.mxu0 0.0
    %2060 = vmatprep.subr.mxu0 0.0
    %2061 = vmatpush1.msra.mxu0 0.0
    %2062 = vmatprep.subr.mxu0 0.0
    %2063 = vmatpush1.msra.mxu0 0.0
    %2064 = vmatprep.subr.mxu0 0.0
    %2065 = vmatpush1.msra.mxu0 0.0
    %2066 = vmatprep.subr.mxu0 0.0
    %2067 = vmatpush1.msra.mxu0 0.0
    %2068 = vmatprep.subr.mxu0 0.0
    %2069 = vmatpush1.msra.mxu0 0.0
    %2070 = vmatprep.mubr.f32.mxu0 0.0
    %2071 = vmatmul.mubr.f32.gmra.mrb[0].mxu0 %v2004
    %v2072 = vpop.f32.mrb[0].mxu0
    %v2073 = vadd.f32 %v62, %v2072
    %v2074 = vpop.f32.mrb[0].mxu0
    %2075 = vdwg.mxu0
    %2076 = vmatprep.subr.mxu0 0.0
    %2077 = vmatpush1.msra.mxu0 %v139
    %2078 = vmatprep.subr.mxu0 0.0
    %2079 = vmatpush1.msra.mxu0 %v140
    %2080 = vmatprep.subr.mxu0 0.0
    %2081 = vmatpush1.msra.mxu0 %v141
    %2082 = vmatprep.subr.mxu0 0.0
    %2083 = vmatpush1.msra.mxu0 %v142
    %2084 = vmatprep.subr.mxu0 0.0
    %2085 = vmatpush1.msra.mxu0 0.0
    %2086 = vmatprep.subr.mxu0 0.0
    %2087 = vmatpush1.msra.mxu0 0.0
    %2088 = vmatprep.subr.mxu0 0.0
    %2089 = vmatpush1.msra.mxu0 0.0
    %2090 = vmatprep.subr.mxu0 0.0
    %2091 = vmatpush1.msra.mxu0 0.0
    %2092 = vmatprep.subr.mxu0 0.0
    %2093 = vmatpush1.msra.mxu0 0.0
    %2094 = vmatprep.subr.mxu0 0.0
    %2095 = vmatpush1.msra.mxu0 0.0
    %2096 = vmatprep.subr.mxu0 0.0
    %2097 = vmatpush1.msra.mxu0 0.0
    %2098 = vmatprep.subr.mxu0 0.0
    %2099 = vmatpush1.msra.mxu0 0.0
    %2100 = vmatprep.subr.mxu0 0.0
    %2101 = vmatpush1.msra.mxu0 0.0
    %2102 = vmatprep.subr.mxu0 0.0
    %2103 = vmatpush1.msra.mxu0 0.0
    %2104 = vmatprep.subr.mxu0 0.0
    %2105 = vmatpush1.msra.mxu0 0.0
    %2106 = vmatprep.subr.mxu0 0.0
    %2107 = vmatpush1.msra.mxu0 0.0
    %2108 = vmatprep.subr.mxu0 0.0
    %2109 = vmatpush1.msra.mxu0 0.0
    %2110 = vmatprep.subr.mxu0 0.0
    %2111 = vmatpush1.msra.mxu0 0.0
    %2112 = vmatprep.subr.mxu0 0.0
    %2113 = vmatpush1.msra.mxu0 0.0
    %2114 = vmatprep.subr.mxu0 0.0
    %2115 = vmatpush1.msra.mxu0 0.0
    %2116 = vmatprep.subr.mxu0 0.0
    %2117 = vmatpush1.msra.mxu0 0.0
    %2118 = vmatprep.subr.mxu0 0.0
    %2119 = vmatpush1.msra.mxu0 0.0
    %2120 = vmatprep.subr.mxu0 0.0
    %2121 = vmatpush1.msra.mxu0 0.0
    %2122 = vmatprep.subr.mxu0 0.0
    %2123 = vmatpush1.msra.mxu0 0.0
    %2124 = vmatprep.subr.mxu0 0.0
    %2125 = vmatpush1.msra.mxu0 0.0
    %2126 = vmatprep.subr.mxu0 0.0
    %2127 = vmatpush1.msra.mxu0 0.0
    %2128 = vmatprep.subr.mxu0 0.0
    %2129 = vmatpush1.msra.mxu0 0.0
    %2130 = vmatprep.subr.mxu0 0.0
    %2131 = vmatpush1.msra.mxu0 0.0
    %2132 = vmatprep.subr.mxu0 0.0
    %2133 = vmatpush1.msra.mxu0 0.0
    %2134 = vmatprep.subr.mxu0 0.0
    %2135 = vmatpush1.msra.mxu0 0.0
    %2136 = vmatprep.subr.mxu0 0.0
    %2137 = vmatpush1.msra.mxu0 0.0
    %2138 = vmatprep.subr.mxu0 0.0
    %2139 = vmatpush1.msra.mxu0 0.0
    %2140 = vmatprep.mubr.f32.mxu0 0.0
    %2141 = vmatmul.mubr.f32.gmra.mrb[0].mxu0 %v2004
    %v2142 = vpop.f32.mrb[0].mxu0
    %v2143 = vadd.f32 %v149, %v2142
    %v2144 = vpop.f32.mrb[0].mxu0
    %2145 = vdwg.mxu0
    %2146 = vmatprep.subr.mxu0 0.0
    %2147 = vmatpush1.msra.mxu0 %v222
    %2148 = vmatprep.subr.mxu0 0.0
    %2149 = vmatpush1.msra.mxu0 %v223
    %2150 = vmatprep.subr.mxu0 0.0
    %2151 = vmatpush1.msra.mxu0 %v224
    %2152 = vmatprep.subr.mxu0 0.0
    %2153 = vmatpush1.msra.mxu0 %v225
    %2154 = vmatprep.subr.mxu0 0.0
    %2155 = vmatpush1.msra.mxu0 0.0
    %2156 = vmatprep.subr.mxu0 0.0
    %2157 = vmatpush1.msra.mxu0 0.0
    %2158 = vmatprep.subr.mxu0 0.0
    %2159 = vmatpush1.msra.mxu0 0.0
    %2160 = vmatprep.subr.mxu0 0.0
    %2161 = vmatpush1.msra.mxu0 0.0
    %2162 = vmatprep.subr.mxu0 0.0
    %2163 = vmatpush1.msra.mxu0 0.0
    %2164 = vmatprep.subr.mxu0 0.0
    %2165 = vmatpush1.msra.mxu0 0.0
    %2166 = vmatprep.subr.mxu0 0.0
    %2167 = vmatpush1.msra.mxu0 0.0
    %2168 = vmatprep.subr.mxu0 0.0
    %2169 = vmatpush1.msra.mxu0 0.0
    %2170 = vmatprep.subr.mxu0 0.0
    %2171 = vmatpush1.msra.mxu0 0.0
    %2172 = vmatprep.subr.mxu0 0.0
    %2173 = vmatpush1.msra.mxu0 0.0
    %2174 = vmatprep.subr.mxu0 0.0
    %2175 = vmatpush1.msra.mxu0 0.0
    %2176 = vmatprep.subr.mxu0 0.0
    %2177 = vmatpush1.msra.mxu0 0.0
    %2178 = vmatprep.subr.mxu0 0.0
    %2179 = vmatpush1.msra.mxu0 0.0
    %2180 = vmatprep.subr.mxu0 0.0
    %2181 = vmatpush1.msra.mxu0 0.0
    %2182 = vmatprep.subr.mxu0 0.0
    %2183 = vmatpush1.msra.mxu0 0.0
    %2184 = vmatprep.subr.mxu0 0.0
    %2185 = vmatpush1.msra.mxu0 0.0
    %2186 = vmatprep.subr.mxu0 0.0
    %2187 = vmatpush1.msra.mxu0 0.0
    %2188 = vmatprep.subr.mxu0 0.0
    %2189 = vmatpush1.msra.mxu0 0.0
    %2190 = vmatprep.subr.mxu0 0.0
    %2191 = vmatpush1.msra.mxu0 0.0
    %2192 = vmatprep.subr.mxu0 0.0
    %2193 = vmatpush1.msra.mxu0 0.0
    %2194 = vmatprep.subr.mxu0 0.0
    %2195 = vmatpush1.msra.mxu0 0.0
    %2196 = vmatprep.subr.mxu0 0.0
    %2197 = vmatpush1.msra.mxu0 0.0
    %2198 = vmatprep.subr.mxu0 0.0
    %2199 = vmatpush1.msra.mxu0 0.0
    %2200 = vmatprep.subr.mxu0 0.0
    %2201 = vmatpush1.msra.mxu0 0.0
    %2202 = vmatprep.subr.mxu0 0.0
    %2203 = vmatpush1.msra.mxu0 0.0
    %2204 = vmatprep.subr.mxu0 0.0
    %2205 = vmatpush1.msra.mxu0 0.0
    %2206 = vmatprep.subr.mxu0 0.0
    %2207 = vmatpush1.msra.mxu0 0.0
    %2208 = vmatprep.subr.mxu0 0.0
    %2209 = vmatpush1.msra.mxu0 0.0
    %2210 = vmatprep.mubr.f32.mxu0 0.0
    %2211 = vmatmul.mubr.f32.gmra.mrb[0].mxu0 %v2004
    %v2212 = vpop.f32.mrb[0].mxu0
    %v2213 = vadd.f32 %v232, %v2212
    %v2214 = vpop.f32.mrb[0].mxu0
    %2215 = vdwg.mxu0
    %v2217 = vsel %vm304, %v2073, 0
    %v2220 = vsel %vm304, %v2143, 0
    %2222 = vmatprep.subr.mxu0 0.0
    %2223 = vmatpush1.xpose.msra.mxu0 %v2220
    %2224 = vmatprep.subr.mxu0 0.0
    %2225 = vmatpush1.xpose.msra.mxu0 0.0
    %2226 = vmatprep.subr.mxu0 0.0
    %2227 = vmatpush1.xpose.msra.mxu0 0.0
    %2228 = vmatprep.subr.mxu0 0.0
    %2229 = vmatpush1.xpose.msra.mxu0 0.0
    %2230 = vmatprep.subr.mxu0 0.0
    %2231 = vmatpush1.xpose.msra.mxu0 0.0
    %2232 = vmatprep.subr.mxu0 0.0
    %2233 = vmatpush1.xpose.msra.mxu0 0.0
    %2234 = vmatprep.subr.mxu0 0.0
    %2235 = vmatpush1.xpose.msra.mxu0 0.0
    %2236 = vmatprep.subr.mxu0 0.0
    %2237 = vmatpush1.xpose.msra.mxu0 0.0
    %2238 = vmatprep.subr.mxu0 0.0
    %2239 = vmatpush1.xpose.msra.mxu0 0.0
    %2240 = vmatprep.subr.mxu0 0.0
    %2241 = vmatpush1.xpose.msra.mxu0 0.0
    %2242 = vmatprep.subr.mxu0 0.0
    %2243 = vmatpush1.xpose.msra.mxu0 0.0
    %2244 = vmatprep.subr.mxu0 0.0
    %2245 = vmatpush1.xpose.msra.mxu0 0.0
    %2246 = vmatprep.subr.mxu0 0.0
    %2247 = vmatpush1.xpose.msra.mxu0 0.0
    %2248 = vmatprep.subr.mxu0 0.0
    %2249 = vmatpush1.xpose.msra.mxu0 0.0
    %2250 = vmatprep.subr.mxu0 0.0
    %2251 = vmatpush1.xpose.msra.mxu0 0.0
    %2252 = vmatprep.subr.mxu0 0.0
    %2253 = vmatpush1.xpose.msra.mxu0 0.0
    %2254 = vmatprep.subr.mxu0 0.0
    %2255 = vmatpush1.xpose.msra.mxu0 0.0
    %2256 = vmatprep.subr.mxu0 0.0
    %2257 = vmatpush1.xpose.msra.mxu0 0.0
    %2258 = vmatprep.subr.mxu0 0.0
    %2259 = vmatpush1.xpose.msra.mxu0 0.0
    %2260 = vmatprep.subr.mxu0 0.0
    %2261 = vmatpush1.xpose.msra.mxu0 0.0
    %2262 = vmatprep.subr.mxu0 0.0
    %2263 = vmatpush1.xpose.msra.mxu0 0.0
    %2264 = vmatprep.subr.mxu0 0.0
    %2265 = vmatpush1.xpose.msra.mxu0 0.0
    %2266 = vmatprep.subr.mxu0 0.0
    %2267 = vmatpush1.xpose.msra.mxu0 0.0
    %2268 = vmatprep.subr.mxu0 0.0
    %2269 = vmatpush1.xpose.msra.mxu0 0.0
    %2270 = vmatprep.subr.mxu0 0.0
    %2271 = vmatpush1.xpose.msra.mxu0 0.0
    %2272 = vmatprep.subr.mxu0 0.0
    %2273 = vmatpush1.xpose.msra.mxu0 0.0
    %2274 = vmatprep.subr.mxu0 0.0
    %2275 = vmatpush1.xpose.msra.mxu0 0.0
    %2276 = vmatprep.subr.mxu0 0.0
    %2277 = vmatpush1.xpose.msra.mxu0 0.0
    %2278 = vmatprep.subr.mxu0 0.0
    %2279 = vmatpush1.xpose.msra.mxu0 0.0
    %2280 = vmatprep.subr.mxu0 0.0
    %2281 = vmatpush1.xpose.msra.mxu0 0.0
    %2282 = vmatprep.subr.mxu0 0.0
    %2283 = vmatpush1.xpose.msra.mxu0 0.0
    %2284 = vmatprep.subr.mxu0 0.0
    %2285 = vmatpush1.xpose.msra.mxu0 0.0
    %2286 = vmatprep.mubr.f32.mxu0 0.0
    %2287 = vmatmul.mubr.f32.gmra.mrb[0].mxu0 %v2217
    %v2288 = vpop.f32.mrb[0].mxu0
    %v2289 = vadd.f32 0.0, %v2288
    %v2290 = vpop.f32.mrb[0].mxu0
    %2291 = vdwg.mxu0
    %v2292 = vmul.f32 %v2289, 0.35355338
    %v2293 = vadd.f32 %v2292, %v2002
    %v2294 = vsel %vm304, %v2293, -inf
    %2295 = vmax.xlane.f32.xlu0 %v2294
    %v2296 = vpop.xlane.xlu0 %2295
    %v2297 = vsub.f32 %v2293, %v2296
    %v2298 = vmul.f32 %v2297, 1.442695
    %v2299 = vpow.pop %v2298
    %v2300 = vsel %vm304, %v2299, 0.0
    %2301 = vadd.xlane.f32.xlu0 %v2300
    %v2302 = vpop.xlane.xlu0 %2301
    %v2303 = vrcp.pop %v2302
    %v2304 = vmul.f32 %v2299, %v2303
    %v2306 = vsel %vm304, %v2304, 0
    %2308 = vmatprep.subr.mxu0 0.0
    %2309 = vmatpush1.msra.mxu0 %v2213
    %2310 = vmatprep.subr.mxu0 0.0
    %2311 = vmatpush1.msra.mxu0 0.0
    %2312 = vmatprep.subr.mxu0 0.0
    %2313 = vmatpush1.msra.mxu0 0.0
    %2314 = vmatprep.subr.mxu0 0.0
    %2315 = vmatpush1.msra.mxu0 0.0
    %2316 = vmatprep.subr.mxu0 0.0
    %2317 = vmatpush1.msra.mxu0 0.0
    %2318 = vmatprep.subr.mxu0 0.0
    %2319 = vmatpush1.msra.mxu0 0.0
    %2320 = vmatprep.subr.mxu0 0.0
    %2321 = vmatpush1.msra.mxu0 0.0
    %2322 = vmatprep.subr.mxu0 0.0
    %2323 = vmatpush1.msra.mxu0 0.0
    %2324 = vmatprep.subr.mxu0 0.0
    %2325 = vmatpush1.msra.mxu0 0.0
    %2326 = vmatprep.subr.mxu0 0.0
    %2327 = vmatpush1.msra.mxu0 0.0
    %2328 = vmatprep.subr.mxu0 0.0
    %2329 = vmatpush1.msra.mxu0 0.0
    %2330 = vmatprep.subr.mxu0 0.0
    %2331 = vmatpush1.msra.mxu0 0.0
    %2332 = vmatprep.subr.mxu0 0.0
    %2333 = vmatpush1.msra.mxu0 0.0
    %2334 = vmatprep.subr.mxu0 0.0
    %2335 = vmatpush1.msra.mxu0 0.0
    %2336 = vmatprep.subr.mxu0 0.0
    %2337 = vmatpush1.msra.mxu0 0.0
    %2338 = vmatprep.subr.mxu0 0.0
    %2339 = vmatpush1.msra.mxu0 0.0
    %2340 = vmatprep.subr.mxu0 0.0
    %2341 = vmatpush1.msra.mxu0 0.0
    %2342 = vmatprep.subr.mxu0 0.0
    %2343 = vmatpush1.msra.mxu0 0.0
    %2344 = vmatprep.subr.mxu0 0.0
    %2345 = vmatpush1.msra.mxu0 0.0
    %2346 = vmatprep.subr.mxu0 0.0
    %2347 = vmatpush1.msra.mxu0 0.0
    %2348 = vmatprep.subr.mxu0 0.0
    %2349 = vmatpush1.msra.mxu0 0.0
    %2350 = vmatprep.subr.mxu0 0.0
    %2351 = vmatpush1.msra.mxu0 0.0
    %2352 = vmatprep.subr.mxu0 0.0
    %2353 = vmatpush1.msra.mxu0 0.0
    %2354 = vmatprep.subr.mxu0 0.0
    %2355 = vmatpush1.msra.mxu0 0.0
    %2356 = vmatprep.subr.mxu0 0.0
    %2357 = vmatpush1.msra.mxu0 0.0
    %2358 = vmatprep.subr.mxu0 0.0
    %2359 = vmatpush1.msra.mxu0 0.0
    %2360 = vmatprep.subr.mxu0 0.0
    %2361 = vmatpush1.msra.mxu0 0.0
    %2362 = vmatprep.subr.mxu0 0.0
    %2363 = vmatpush1.msra.mxu0 0.0
    %2364 = vmatprep.subr.mxu0 0.0
    %2365 = vmatpush1.msra.mxu0 0.0
    %2366 = vmatprep.subr.mxu0 0.0
    %2367 = vmatpush1.msra.mxu0 0.0
    %2368 = vmatprep.subr.mxu0 0.0
    %2369 = vmatpush1.msra.mxu0 0.0
    %2370 = vmatprep.subr.mxu0 0.0
    %2371 = vmatpush1.msra.mxu0 0.0
    %2372 = vmatprep.mubr.f32.mxu0 0.0
    %2373 = vmatmul.mubr.f32.gmra.mrb[0].mxu0 %v2306
    %v2374 = vpop.f32.mrb[0].mxu0
    %v2375 = vadd.f32 0.0, %v2374
    %v2376 = vpop.f32.mrb[0].mxu0
    %2377 = vdwg.mxu0
    %2378 = vmatprep.subr.mxu0 0.0
    %2379 = vmatpush1.msra.mxu0 %v469
    %2380 = vmatprep.subr.mxu0 0.0
    %2381 = vmatpush1.msra.mxu0 %v470
    %2382 = vmatprep.subr.mxu0 0.0
    %2383 = vmatpush1.msra.mxu0 %v471
    %2384 = vmatprep.subr.mxu0 0.0
    %2385 = vmatpush1.msra.mxu0 %v472
    %2386 = vmatprep.subr.mxu0 0.0
    %2387 = vmatpush1.msra.mxu0 0.0
    %2388 = vmatprep.subr.mxu0 0.0
    %2389 = vmatpush1.msra.mxu0 0.0
    %2390 = vmatprep.subr.mxu0 0.0
    %2391 = vmatpush1.msra.mxu0 0.0
    %2392 = vmatprep.subr.mxu0 0.0
    %2393 = vmatpush1.msra.mxu0 0.0
    %2394 = vmatprep.subr.mxu0 0.0
    %2395 = vmatpush1.msra.mxu0 0.0
    %2396 = vmatprep.subr.mxu0 0.0
    %2397 = vmatpush1.msra.mxu0 0.0
    %2398 = vmatprep.subr.mxu0 0.0
    %2399 = vmatpush1.msra.mxu0 0.0
    %2400 = vmatprep.subr.mxu0 0.0
    %2401 = vmatpush1.msra.mxu0 0.0
    %2402 = vmatprep.subr.mxu0 0.0
    %2403 = vmatpush1.msra.mxu0 0.0
    %2404 = vmatprep.subr.mxu0 0.0
    %2405 = vmatpush1.msra.mxu0 0.0
    %2406 = vmatprep.subr.mxu0 0.0
    %2407 = vmatpush1.msra.mxu0 0.0
    %2408 = vmatprep.subr.mxu0 0.0
    %2409 = vmatpush1.msra.mxu0 0.0
    %2410 = vmatprep.subr.mxu0 0.0
    %2411 = vmatpush1.msra.mxu0 0.0
    %2412 = vmatprep.subr.mxu0 0.0
    %2413 = vmatpush1.msra.mxu0 0.0
    %2414 = vmatprep.subr.mxu0 0.0
    %2415 = vmatpush1.msra.mxu0 0.0
    %2416 = vmatprep.subr.mxu0 0.0
    %2417 = vmatpush1.msra.mxu0 0.0
    %2418 = vmatprep.subr.mxu0 0.0
    %2419 = vmatpush1.msra.mxu0 0.0
    %2420 = vmatprep.subr.mxu0 0.0
    %2421 = vmatpush1.msra.mxu0 0.0
    %2422 = vmatprep.subr.mxu0 0.0
    %2423 = vmatpush1.msra.mxu0 0.0
    %2424 = vmatprep.subr.mxu0 0.0
    %2425 = vmatpush1.msra.mxu0 0.0
    %2426 = vmatprep.subr.mxu0 0.0
    %2427 = vmatpush1.msra.mxu0 0.0
    %2428 = vmatprep.subr.mxu0 0.0
    %2429 = vmatpush1.msra.mxu0 0.0
    %2430 = vmatprep.subr.mxu0 0.0
    %2431 = vmatpush1.msra.mxu0 0.0
    %2432 = vmatprep.subr.mxu0 0.0
    %2433 = vmatpush1.msra.mxu0 0.0
    %2434 = vmatprep.subr.mxu0 0.0
    %2435 = vmatpush1.msra.mxu0 0.0
    %2436 = vmatprep.subr.mxu0 0.0
    %2437 = vmatpush1.msra.mxu0 0.0
    %2438 = vmatprep.subr.mxu0 0.0
    %2439 = vmatpush1.msra.mxu0 0.0
    %2440 = vmatprep.subr.mxu0 0.0
    %2441 = vmatpush1.msra.mxu0 0.0
    %2442 = vmatprep.mubr.f32.mxu0 0.0
    %2443 = vmatmul.mubr.f32.gmra.mrb[0].mxu0 %v2004
    %v2444 = vpop.f32.mrb[0].mxu0
    %v2445 = vadd.f32 %v479, %v2444
    %v2446 = vpop.f32.mrb[0].mxu0
    %2447 = vdwg.mxu0
    %2448 = vmatprep.subr.mxu0 0.0
    %2449 = vmatpush1.msra.mxu0 %v552
    %2450 = vmatprep.subr.mxu0 0.0
    %2451 = vmatpush1.msra.mxu0 %v553
    %2452 = vmatprep.subr.mxu0 0.0
    %2453 = vmatpush1.msra.mxu0 %v554
    %2454 = vmatprep.subr.mxu0 0.0
    %2455 = vmatpush1.msra.mxu0 %v555
    %2456 = vmatprep.subr.mxu0 0.0
    %2457 = vmatpush1.msra.mxu0 0.0
    %2458 = vmatprep.subr.mxu0 0.0
    %2459 = vmatpush1.msra.mxu0 0.0
    %2460 = vmatprep.subr.mxu0 0.0
    %2461 = vmatpush1.msra.mxu0 0.0
    %2462 = vmatprep.subr.mxu0 0.0
    %2463 = vmatpush1.msra.mxu0 0.0
    %2464 = vmatprep.subr.mxu0 0.0
    %2465 = vmatpush1.msra.mxu0 0.0
    %2466 = vmatprep.subr.mxu0 0.0
    %2467 = vmatpush1.msra.mxu0 0.0
    %2468 = vmatprep.subr.mxu0 0.0
    %2469 = vmatpush1.msra.mxu0 0.0
    %2470 = vmatprep.subr.mxu0 0.0
    %2471 = vmatpush1.msra.mxu0 0.0
    %2472 = vmatprep.subr.mxu0 0.0
    %2473 = vmatpush1.msra.mxu0 0.0
    %2474 = vmatprep.subr.mxu0 0.0
    %2475 = vmatpush1.msra.mxu0 0.0
    %2476 = vmatprep.subr.mxu0 0.0
    %2477 = vmatpush1.msra.mxu0 0.0
    %2478 = vmatprep.subr.mxu0 0.0
    %2479 = vmatpush1.msra.mxu0 0.0
    %2480 = vmatprep.subr.mxu0 0.0
    %2481 = vmatpush1.msra.mxu0 0.0
    %2482 = vmatprep.subr.mxu0 0.0
    %2483 = vmatpush1.msra.mxu0 0.0
    %2484 = vmatprep.subr.mxu0 0.0
    %2485 = vmatpush1.msra.mxu0 0.0
    %2486 = vmatprep.subr.mxu0 0.0
    %2487 = vmatpush1.msra.mxu0 0.0
    %2488 = vmatprep.subr.mxu0 0.0
    %2489 = vmatpush1.msra.mxu0 0.0
    %2490 = vmatprep.subr.mxu0 0.0
    %2491 = vmatpush1.msra.mxu0 0.0
    %2492 = vmatprep.subr.mxu0 0.0
    %2493 = vmatpush1.msra.mxu0 0.0
    %2494 = vmatprep.subr.mxu0 0.0
    %2495 = vmatpush1.msra.mxu0 0.0
    %2496 = vmatprep.subr.mxu0 0.0
    %2497 = vmatpush1.msra.mxu0 0.0
    %2498 = vmatprep.subr.mxu0 0.0
    %2499 = vmatpush1.msra.mxu0 0.0
    %2500 = vmatprep.subr.mxu0 0.0
    %2501 = vmatpush1.msra.mxu0 0.0
    %2502 = vmatprep.subr.mxu0 0.0
    %2503 = vmatpush1.msra.mxu0 0.0
    %2504 = vmatprep.subr.mxu0 0.0
    %2505 = vmatpush1.msra.mxu0 0.0
    %2506 = vmatprep.subr.mxu0 0.0
    %2507 = vmatpush1.msra.mxu0 0.0
    %2508 = vmatprep.subr.mxu0 0.0
    %2509 = vmatpush1.msra.mxu0 0.0
    %2510 = vmatprep.subr.mxu0 0.0
    %2511 = vmatpush1.msra.mxu0 0.0
    %2512 = vmatprep.mubr.f32.mxu0 0.0
    %2513 = vmatmul.mubr.f32.gmra.mrb[0].mxu0 %v2004
    %v2514 = vpop.f32.mrb[0].mxu0
    %v2515 = vadd.f32 %v562, %v2514
    %v2516 = vpop.f32.mrb[0].mxu0
    %2517 = vdwg.mxu0
    %2518 = vmatprep.subr.mxu0 0.0
    %2519 = vmatpush1.msra.mxu0 %v635
    %2520 = vmatprep.subr.mxu0 0.0
    %2521 = vmatpush1.msra.mxu0 %v636
    %2522 = vmatprep.subr.mxu0 0.0
    %2523 = vmatpush1.msra.mxu0 %v637
    %2524 = vmatprep.subr.mxu0 0.0
    %2525 = vmatpush1.msra.mxu0 %v638
    %2526 = vmatprep.subr.mxu0 0.0
    %2527 = vmatpush1.msra.mxu0 0.0
    %2528 = vmatprep.subr.mxu0 0.0
    %2529 = vmatpush1.msra.mxu0 0.0
    %2530 = vmatprep.subr.mxu0 0.0
    %2531 = vmatpush1.msra.mxu0 0.0
    %2532 = vmatprep.subr.mxu0 0.0
    %2533 = vmatpush1.msra.mxu0 0.0
    %2534 = vmatprep.subr.mxu0 0.0
    %2535 = vmatpush1.msra.mxu0 0.0
    %2536 = vmatprep.subr.mxu0 0.0
    %2537 = vmatpush1.msra.mxu0 0.0
    %2538 = vmatprep.subr.mxu0 0.0
    %2539 = vmatpush1.msra.mxu0 0.0
    %2540 = vmatprep.subr.mxu0 0.0
    %2541 = vmatpush1.msra.mxu0 0.0
    %2542 = vmatprep.subr.mxu0 0.0
    %2543 = vmatpush1.msra.mxu0 0.0
    %2544 = vmatprep.subr.mxu0 0.0
    %2545 = vmatpush1.msra.mxu0 0.0
    %2546 = vmatprep.subr.mxu0 0.0
    %2547 = vmatpush1.msra.mxu0 0.0
    %2548 = vmatprep.subr.mxu0 0.0
    %2549 = vmatpush1.msra.mxu0 0.0
    %2550 = vmatprep.subr.mxu0 0.0
    %2551 = vmatpush1.msra.mxu0 0.0
    %2552 = vmatprep.subr.mxu0 0.0
    %2553 = vmatpush1.msra.mxu0 0.0
    %2554 = vmatprep.subr.mxu0 0.0
    %2555 = vmatpush1.msra.mxu0 0.0
    %2556 = vmatprep.subr.mxu0 0.0
    %2557 = vmatpush1.msra.mxu0 0.0
    %2558 = vmatprep.subr.mxu0 0.0
    %2559 = vmatpush1.msra.mxu0 0.0
    %2560 = vmatprep.subr.mxu0 0.0
    %2561 = vmatpush1.msra.mxu0 0.0
    %2562 = vmatprep.subr.mxu0 0.0
    %2563 = vmatpush1.msra.mxu0 0.0
    %2564 = vmatprep.subr.mxu0 0.0
    %2565 = vmatpush1.msra.mxu0 0.0
    %2566 = vmatprep.subr.mxu0 0.0
    %2567 = vmatpush1.msra.mxu0 0.0
    %2568 = vmatprep.subr.mxu0 0.0
    %2569 = vmatpush1.msra.mxu0 0.0
    %2570 = vmatprep.subr.mxu0 0.0
    %2571 = vmatpush1.msra.mxu0 0.0
    %2572 = vmatprep.subr.mxu0 0.0
    %2573 = vmatpush1.msra.mxu0 0.0
    %2574 = vmatprep.subr.mxu0 0.0
    %2575 = vmatpush1.msra.mxu0 0.0
    %2576 = vmatprep.subr.mxu0 0.0
    %2577 = vmatpush1.msra.mxu0 0.0
    %2578 = vmatprep.subr.mxu0 0.0
    %2579 = vmatpush1.msra.mxu0 0.0
    %2580 = vmatprep.subr.mxu0 0.0
    %2581 = vmatpush1.msra.mxu0 0.0
    %2582 = vmatprep.mubr.f32.mxu0 0.0
    %2583 = vmatmul.mubr.f32.gmra.mrb[0].mxu0 %v2004
    %v2584 = vpop.f32.mrb[0].mxu0
    %v2585 = vadd.f32 %v645, %v2584
    %v2586 = vpop.f32.mrb[0].mxu0
    %2587 = vdwg.mxu0
    %v2589 = vsel %vm304, %v2445, 0
    %v2592 = vsel %vm304, %v2515, 0
    %2594 = vmatprep.subr.mxu0 0.0
    %2595 = vmatpush1.xpose.msra.mxu0 %v2592
    %2596 = vmatprep.subr.mxu0 0.0
    %2597 = vmatpush1.xpose.msra.mxu0 0.0
    %2598 = vmatprep.subr.mxu0 0.0
    %2599 = vmatpush1.xpose.msra.mxu0 0.0
    %2600 = vmatprep.subr.mxu0 0.0
    %2601 = vmatpush1.xpose.msra.mxu0 0.0
    %2602 = vmatprep.subr.mxu0 0.0
    %2603 = vmatpush1.xpose.msra.mxu0 0.0
    %2604 = vmatprep.subr.mxu0 0.0
    %2605 = vmatpush1.xpose.msra.mxu0 0.0
    %2606 = vmatprep.subr.mxu0 0.0
    %2607 = vmatpush1.xpose.msra.mxu0 0.0
    %2608 = vmatprep.subr.mxu0 0.0
    %2609 = vmatpush1.xpose.msra.mxu0 0.0
    %2610 = vmatprep.subr.mxu0 0.0
    %2611 = vmatpush1.xpose.msra.mxu0 0.0
    %2612 = vmatprep.subr.mxu0 0.0
    %2613 = vmatpush1.xpose.msra.mxu0 0.0
    %2614 = vmatprep.subr.mxu0 0.0
    %2615 = vmatpush1.xpose.msra.mxu0 0.0
    %2616 = vmatprep.subr.mxu0 0.0
    %2617 = vmatpush1.xpose.msra.mxu0 0.0
    %2618 = vmatprep.subr.mxu0 0.0
    %2619 = vmatpush1.xpose.msra.mxu0 0.0
    %2620 = vmatprep.subr.mxu0 0.0
    %2621 = vmatpush1.xpose.msra.mxu0 0.0
    %2622 = vmatprep.subr.mxu0 0.0
    %2623 = vmatpush1.xpose.msra.mxu0 0.0
    %2624 = vmatprep.subr.mxu0 0.0
    %2625 = vmatpush1.xpose.msra.mxu0 0.0
    %2626 = vmatprep.subr.mxu0 0.0
    %2627 = vmatpush1.xpose.msra.mxu0 0.0
    %2628 = vmatprep.subr.mxu0 0.0
    %2629 = vmatpush1.xpose.msra.mxu0 0.0
    %2630 = vmatprep.subr.mxu0 0.0
    %2631 = vmatpush1.xpose.msra.mxu0 0.0
    %2632 = vmatprep.subr.mxu0 0.0
    %2633 = vmatpush1.xpose.msra.mxu0 0.0
    %2634 = vmatprep.subr.mxu0 0.0
    %2635 = vmatpush1.xpose.msra.mxu0 0.0
    %2636 = vmatprep.subr.mxu0 0.0
    %2637 = vmatpush1.xpose.msra.mxu0 0.0
    %2638 = vmatprep.subr.mxu0 0.0
    %2639 = vmatpush1.xpose.msra.mxu0 0.0
    %2640 = vmatprep.subr.mxu0 0.0
    %2641 = vmatpush1.xpose.msra.mxu0 0.0
    %2642 = vmatprep.subr.mxu0 0.0
    %2643 = vmatpush1.xpose.msra.mxu0 0.0
    %2644 = vmatprep.subr.mxu0 0.0
    %2645 = vmatpush1.xpose.msra.mxu0 0.0
    %2646 = vmatprep.subr.mxu0 0.0
    %2647 = vmatpush1.xpose.msra.mxu0 0.0
    %2648 = vmatprep.subr.mxu0 0.0
    %2649 = vmatpush1.xpose.msra.mxu0 0.0
    %2650 = vmatprep.subr.mxu0 0.0
    %2651 = vmatpush1.xpose.msra.mxu0 0.0
    %2652 = vmatprep.subr.mxu0 0.0
    %2653 = vmatpush1.xpose.msra.mxu0 0.0
    %2654 = vmatprep.subr.mxu0 0.0
    %2655 = vmatpush1.xpose.msra.mxu0 0.0
    %2656 = vmatprep.subr.mxu0 0.0
    %2657 = vmatpush1.xpose.msra.mxu0 0.0
    %2658 = vmatprep.mubr.f32.mxu0 0.0
    %2659 = vmatmul.mubr.f32.gmra.mrb[0].mxu0 %v2589
    %v2660 = vpop.f32.mrb[0].mxu0
    %v2661 = vadd.f32 0.0, %v2660
    %v2662 = vpop.f32.mrb[0].mxu0
    %2663 = vdwg.mxu0
    %v2664 = vmul.f32 %v2661, 0.35355338
    %v2665 = vadd.f32 %v2664, %v2002
    %v2666 = vsel %vm304, %v2665, -inf
    %2667 = vmax.xlane.f32.xlu0 %v2666
    %v2668 = vpop.xlane.xlu0 %2667
    %v2669 = vsub.f32 %v2665, %v2668
    %v2670 = vmul.f32 %v2669, 1.442695
    %v2671 = vpow.pop %v2670
    %v2672 = vsel %vm304, %v2671, 0.0
    %2673 = vadd.xlane.f32.xlu0 %v2672
    %v2674 = vpop.xlane.xlu0 %2673
    %v2675 = vrcp.pop %v2674
    %v2676 = vmul.f32 %v2671, %v2675
    %v2678 = vsel %vm304, %v2676, 0
    %2680 = vmatprep.subr.mxu0 0.0
    %2681 = vmatpush1.msra.mxu0 %v2585
    %2682 = vmatprep.subr.mxu0 0.0
    %2683 = vmatpush1.msra.mxu0 0.0
    %2684 = vmatprep.subr.mxu0 0.0
    %2685 = vmatpush1.msra.mxu0 0.0
    %2686 = vmatprep.subr.mxu0 0.0
    %2687 = vmatpush1.msra.mxu0 0.0
    %2688 = vmatprep.subr.mxu0 0.0
    %2689 = vmatpush1.msra.mxu0 0.0
    %2690 = vmatprep.subr.mxu0 0.0
    %2691 = vmatpush1.msra.mxu0 0.0
    %2692 = vmatprep.subr.mxu0 0.0
    %2693 = vmatpush1.msra.mxu0 0.0
    %2694 = vmatprep.subr.mxu0 0.0
    %2695 = vmatpush1.msra.mxu0 0.0
    %2696 = vmatprep.subr.mxu0 0.0
    %2697 = vmatpush1.msra.mxu0 0.0
    %2698 = vmatprep.subr.mxu0 0.0
    %2699 = vmatpush1.msra.mxu0 0.0
    %2700 = vmatprep.subr.mxu0 0.0
    %2701 = vmatpush1.msra.mxu0 0.0
    %2702 = vmatprep.subr.mxu0 0.0
    %2703 = vmatpush1.msra.mxu0 0.0
    %2704 = vmatprep.subr.mxu0 0.0
    %2705 = vmatpush1.msra.mxu0 0.0
    %2706 = vmatprep.subr.mxu0 0.0
    %2707 = vmatpush1.msra.mxu0 0.0
    %2708 = vmatprep.subr.mxu0 0.0
    %2709 = vmatpush1.msra.mxu0 0.0
    %2710 = vmatprep.subr.mxu0 0.0
    %2711 = vmatpush1.msra.mxu0 0.0
    %2712 = vmatprep.subr.mxu0 0.0
    %2713 = vmatpush1.msra.mxu0 0.0
    %2714 = vmatprep.subr.mxu0 0.0
    %2715 = vmatpush1.msra.mxu0 0.0
    %2716 = vmatprep.subr.mxu0 0.0
    %2717 = vmatpush1.msra.mxu0 0.0
    %2718 = vmatprep.subr.mxu0 0.0
    %2719 = vmatpush1.msra.mxu0 0.0
    %2720 = vmatprep.subr.mxu0 0.0
    %2721 = vmatpush1.msra.mxu0 0.0
    %2722 = vmatprep.subr.mxu0 0.0
    %2723 = vmatpush1.msra.mxu0 0.0
    %2724 = vmatprep.subr.mxu0 0.0
    %2725 = vmatpush1.msra.mxu0 0.0
    %2726 = vmatprep.subr.mxu0 0.0
    %2727 = vmatpush1.msra.mxu0 0.0
    %2728 = vmatprep.subr.mxu0 0.0
    %2729 = vmatpush1.msra.mxu0 0.0
    %2730 = vmatprep.subr.mxu0 0.0
    %2731 = vmatpush1.msra.mxu0 0.0
    %2732 = vmatprep.subr.mxu0 0.0
    %2733 = vmatpush1.msra.mxu0 0.0
    %2734 = vmatprep.subr.mxu0 0.0
    %2735 = vmatpush1.msra.mxu0 0.0
    %2736 = vmatprep.subr.mxu0 0.0
    %2737 = vmatpush1.msra.mxu0 0.0
    %2738 = vmatprep.subr.mxu0 0.0
    %2739 = vmatpush1.msra.mxu0 0.0
    %2740 = vmatprep.subr.mxu0 0.0
    %2741 = vmatpush1.msra.mxu0 0.0
    %2742 = vmatprep.subr.mxu0 0.0
    %2743 = vmatpush1.msra.mxu0 0.0
    %2744 = vmatprep.mubr.f32.mxu0 0.0
    %2745 = vmatmul.mubr.f32.gmra.mrb[0].mxu0 %v2678
    %v2746 = vpop.f32.mrb[0].mxu0
    %v2747 = vadd.f32 0.0, %v2746
    %v2748 = vpop.f32.mrb[0].mxu0
    %2749 = vdwg.mxu0
    %v2751 = vsel %vm304, %v2747, 0
    %2753 = vmatprep.subr.mxu0 0.0
    %2754 = vmatpush1.msra.mxu0 %v880
    %2755 = vmatprep.subr.mxu0 0.0
    %2756 = vmatpush1.msra.mxu0 0.0
    %2757 = vmatprep.subr.mxu0 0.0
    %2758 = vmatpush1.msra.mxu0 0.0
    %2759 = vmatprep.subr.mxu0 0.0
    %2760 = vmatpush1.msra.mxu0 0.0
    %2761 = vmatprep.subr.mxu0 0.0
    %2762 = vmatpush1.msra.mxu0 0.0
    %2763 = vmatprep.subr.mxu0 0.0
    %2764 = vmatpush1.msra.mxu0 0.0
    %2765 = vmatprep.subr.mxu0 0.0
    %2766 = vmatpush1.msra.mxu0 0.0
    %2767 = vmatprep.subr.mxu0 0.0
    %2768 = vmatpush1.msra.mxu0 0.0
    %2769 = vmatprep.subr.mxu0 0.0
    %2770 = vmatpush1.msra.mxu0 0.0
    %2771 = vmatprep.subr.mxu0 0.0
    %2772 = vmatpush1.msra.mxu0 0.0
    %2773 = vmatprep.subr.mxu0 0.0
    %2774 = vmatpush1.msra.mxu0 0.0
    %2775 = vmatprep.subr.mxu0 0.0
    %2776 = vmatpush1.msra.mxu0 0.0
    %2777 = vmatprep.subr.mxu0 0.0
    %2778 = vmatpush1.msra.mxu0 0.0
    %2779 = vmatprep.subr.mxu0 0.0
    %2780 = vmatpush1.msra.mxu0 0.0
    %2781 = vmatprep.subr.mxu0 0.0
    %2782 = vmatpush1.msra.mxu0 0.0
    %2783 = vmatprep.subr.mxu0 0.0
    %2784 = vmatpush1.msra.mxu0 0.0
    %2785 = vmatprep.subr.mxu0 0.0
    %2786 = vmatpush1.msra.mxu0 0.0
    %2787 = vmatprep.subr.mxu0 0.0
    %2788 = vmatpush1.msra.mxu0 0.0
    %2789 = vmatprep.subr.mxu0 0.0
    %2790 = vmatpush1.msra.mxu0 0.0
    %2791 = vmatprep.subr.mxu0 0.0
    %2792 = vmatpush1.msra.mxu0 0.0
    %2793 = vmatprep.subr.mxu0 0.0
    %2794 = vmatpush1.msra.mxu0 0.0
    %2795 = vmatprep.subr.mxu0 0.0
    %2796 = vmatpush1.msra.mxu0 0.0
    %2797 = vmatprep.subr.mxu0 0.0
    %2798 = vmatpush1.msra.mxu0 0.0
    %2799 = vmatprep.subr.mxu0 0.0
    %2800 = vmatpush1.msra.mxu0 0.0
    %2801 = vmatprep.subr.mxu0 0.0
    %2802 = vmatpush1.msra.mxu0 0.0
    %2803 = vmatprep.subr.mxu0 0.0
    %2804 = vmatpush1.msra.mxu0 0.0
    %2805 = vmatprep.subr.mxu0 0.0
    %2806 = vmatpush1.msra.mxu0 0.0
    %2807 = vmatprep.subr.mxu0 0.0
    %2808 = vmatpush1.msra.mxu0 0.0
    %2809 = vmatprep.subr.mxu0 0.0
    %2810 = vmatpush1.msra.mxu0 0.0
    %2811 = vmatprep.subr.mxu0 0.0
    %2812 = vmatpush1.msra.mxu0 0.0
    %2813 = vmatprep.subr.mxu0 0.0
    %2814 = vmatpush1.msra.mxu0 0.0
    %2815 = vmatprep.subr.mxu0 0.0
    %2816 = vmatpush1.msra.mxu0 0.0
    %2817 = vmatprep.mubr.f32.mxu0 0.0
    %2818 = vmatmul.mubr.f32.gmra.mrb[0].mxu0 %v2751
    %v2819 = vpop.f32.mrb[0].mxu0
    %v2820 = vadd.f32 0.0, %v2819
    %v2821 = vpop.f32.mrb[0].mxu0
    %2822 = vdwg.mxu0
    %v2824 = vsel %vm304, %v2375, 0
    %2826 = vmatprep.subr.mxu0 0.0
    %2827 = vmatpush1.msra.mxu0 %v467
    %2828 = vmatprep.subr.mxu0 0.0
    %2829 = vmatpush1.msra.mxu0 0.0
    %2830 = vmatprep.subr.mxu0 0.0
    %2831 = vmatpush1.msra.mxu0 0.0
    %2832 = vmatprep.subr.mxu0 0.0
    %2833 = vmatpush1.msra.mxu0 0.0
    %2834 = vmatprep.subr.mxu0 0.0
    %2835 = vmatpush1.msra.mxu0 0.0
    %2836 = vmatprep.subr.mxu0 0.0
    %2837 = vmatpush1.msra.mxu0 0.0
    %2838 = vmatprep.subr.mxu0 0.0
    %2839 = vmatpush1.msra.mxu0 0.0
    %2840 = vmatprep.subr.mxu0 0.0
    %2841 = vmatpush1.msra.mxu0 0.0
    %2842 = vmatprep.subr.mxu0 0.0
    %2843 = vmatpush1.msra.mxu0 0.0
    %2844 = vmatprep.subr.mxu0 0.0
    %2845 = vmatpush1.msra.mxu0 0.0
    %2846 = vmatprep.subr.mxu0 0.0
    %2847 = vmatpush1.msra.mxu0 0.0
    %2848 = vmatprep.subr.mxu0 0.0
    %2849 = vmatpush1.msra.mxu0 0.0
    %2850 = vmatprep.subr.mxu0 0.0
    %2851 = vmatpush1.msra.mxu0 0.0
    %2852 = vmatprep.subr.mxu0 0.0
    %2853 = vmatpush1.msra.mxu0 0.0
    %2854 = vmatprep.subr.mxu0 0.0
    %2855 = vmatpush1.msra.mxu0 0.0
    %2856 = vmatprep.subr.mxu0 0.0
    %2857 = vmatpush1.msra.mxu0 0.0
    %2858 = vmatprep.subr.mxu0 0.0
    %2859 = vmatpush1.msra.mxu0 0.0
    %2860 = vmatprep.subr.mxu0 0.0
    %2861 = vmatpush1.msra.mxu0 0.0
    %2862 = vmatprep.subr.mxu0 0.0
    %2863 = vmatpush1.msra.mxu0 0.0
    %2864 = vmatprep.subr.mxu0 0.0
    %2865 = vmatpush1.msra.mxu0 0.0
    %2866 = vmatprep.subr.mxu0 0.0
    %2867 = vmatpush1.msra.mxu0 0.0
    %2868 = vmatprep.subr.mxu0 0.0
    %2869 = vmatpush1.msra.mxu0 0.0
    %2870 = vmatprep.subr.mxu0 0.0
    %2871 = vmatpush1.msra.mxu0 0.0
    %2872 = vmatprep.subr.mxu0 0.0
    %2873 = vmatpush1.msra.mxu0 0.0
    %2874 = vmatprep.subr.mxu0 0.0
    %2875 = vmatpush1.msra.mxu0 0.0
    %2876 = vmatprep.subr.mxu0 0.0
    %2877 = vmatpush1.msra.mxu0 0.0
    %2878 = vmatprep.subr.mxu0 0.0
    %2879 = vmatpush1.msra.mxu0 0.0
    %2880 = vmatprep.subr.mxu0 0.0
    %2881 = vmatpush1.msra.mxu0 0.0
    %2882 = vmatprep.subr.mxu0 0.0
    %2883 = vmatpush1.msra.mxu0 0.0
    %2884 = vmatprep.subr.mxu0 0.0
    %2885 = vmatpush1.msra.mxu0 0.0
    %2886 = vmatprep.subr.mxu0 0.0
    %2887 = vmatpush1.msra.mxu0 0.0
    %2888 = vmatprep.subr.mxu0 0.0
    %2889 = vmatpush1.msra.mxu0 0.0
    %2890 = vmatprep.mubr.f32.mxu0 0.0
    %2891 = vmatmul.mubr.f32.gmra.mrb[0].mxu0 %v2824
    %v2892 = vpop.f32.mrb[0].mxu0
    %v2893 = vadd.f32 %v2820, %v2892
    %v2894 = vpop.f32.mrb[0].mxu0
    %2895 = vdwg.mxu0
    %2896 = vmatprep.subr.mxu0 0.0
    %2897 = vmatpush1.msra.mxu0 %v1028
    %2898 = vmatprep.subr.mxu0 0.0
    %2899 = vmatpush1.msra.mxu0 %v1029
    %2900 = vmatprep.subr.mxu0 0.0
    %2901 = vmatpush1.msra.mxu0 %v1030
    %2902 = vmatprep.subr.mxu0 0.0
    %2903 = vmatpush1.msra.mxu0 %v1031
    %2904 = vmatprep.subr.mxu0 0.0
    %2905 = vmatpush1.msra.mxu0 0.0
    %2906 = vmatprep.subr.mxu0 0.0
    %2907 = vmatpush1.msra.mxu0 0.0
    %2908 = vmatprep.subr.mxu0 0.0
    %2909 = vmatpush1.msra.mxu0 0.0
    %2910 = vmatprep.subr.mxu0 0.0
    %2911 = vmatpush1.msra.mxu0 0.0
    %2912 = vmatprep.subr.mxu0 0.0
    %2913 = vmatpush1.msra.mxu0 0.0
    %2914 = vmatprep.subr.mxu0 0.0
    %2915 = vmatpush1.msra.mxu0 0.0
    %2916 = vmatprep.subr.mxu0 0.0
    %2917 = vmatpush1.msra.mxu0 0.0
    %2918 = vmatprep.subr.mxu0 0.0
    %2919 = vmatpush1.msra.mxu0 0.0
    %2920 = vmatprep.subr.mxu0 0.0
    %2921 = vmatpush1.msra.mxu0 0.0
    %2922 = vmatprep.subr.mxu0 0.0
    %2923 = vmatpush1.msra.mxu0 0.0
    %2924 = vmatprep.subr.mxu0 0.0
    %2925 = vmatpush1.msra.mxu0 0.0
    %2926 = vmatprep.subr.mxu0 0.0
    %2927 = vmatpush1.msra.mxu0 0.0
    %2928 = vmatprep.subr.mxu0 0.0
    %2929 = vmatpush1.msra.mxu0 0.0
    %2930 = vmatprep.subr.mxu0 0.0
    %2931 = vmatpush1.msra.mxu0 0.0
    %2932 = vmatprep.subr.mxu0 0.0
    %2933 = vmatpush1.msra.mxu0 0.0
    %2934 = vmatprep.subr.mxu0 0.0
    %2935 = vmatpush1.msra.mxu0 0.0
    %2936 = vmatprep.subr.mxu0 0.0
    %2937 = vmatpush1.msra.mxu0 0.0
    %2938 = vmatprep.subr.mxu0 0.0
    %2939 = vmatpush1.msra.mxu0 0.0
    %2940 = vmatprep.subr.mxu0 0.0
    %2941 = vmatpush1.msra.mxu0 0.0
    %2942 = vmatprep.subr.mxu0 0.0
    %2943 = vmatpush1.msra.mxu0 0.0
    %2944 = vmatprep.subr.mxu0 0.0
    %2945 = vmatpush1.msra.mxu0 0.0
    %2946 = vmatprep.subr.mxu0 0.0
    %2947 = vmatpush1.msra.mxu0 0.0
    %2948 = vmatprep.subr.mxu0 0.0
    %2949 = vmatpush1.msra.mxu0 0.0
    %2950 = vmatprep.subr.mxu0 0.0
    %2951 = vmatpush1.msra.mxu0 0.0
    %2952 = vmatprep.subr.mxu0 0.0
    %2953 = vmatpush1.msra.mxu0 0.0
    %2954 = vmatprep.subr.mxu0 0.0
    %2955 = vmatpush1.msra.mxu0 0.0
    %2956 = vmatprep.subr.mxu0 0.0
    %2957 = vmatpush1.msra.mxu0 0.0
    %2958 = vmatprep.subr.mxu0 0.0
    %2959 = vmatpush1.msra.mxu0 0.0
    %2960 = vmatprep.mubr.f32.mxu0 0.0
    %2961 = vmatmul.mubr.f32.gmra.mrb[0].mxu0 %v2004
    %v2962 = vpop.f32.mrb[0].mxu0
    %v2963 = vadd.f32 %v1038, %v2962
    %v2964 = vpop.f32.mrb[0].mxu0
    %2965 = vdwg.mxu0
    %2966 = vmatprep.subr.mxu0 0.0
    %2967 = vmatpush1.msra.mxu0 %v1111
    %2968 = vmatprep.subr.mxu0 0.0
    %2969 = vmatpush1.msra.mxu0 %v1112
    %2970 = vmatprep.subr.mxu0 0.0
    %2971 = vmatpush1.msra.mxu0 %v1113
    %2972 = vmatprep.subr.mxu0 0.0
    %2973 = vmatpush1.msra.mxu0 %v1114
    %2974 = vmatprep.subr.mxu0 0.0
    %2975 = vmatpush1.msra.mxu0 0.0
    %2976 = vmatprep.subr.mxu0 0.0
    %2977 = vmatpush1.msra.mxu0 0.0
    %2978 = vmatprep.subr.mxu0 0.0
    %2979 = vmatpush1.msra.mxu0 0.0
    %2980 = vmatprep.subr.mxu0 0.0
    %2981 = vmatpush1.msra.mxu0 0.0
    %2982 = vmatprep.subr.mxu0 0.0
    %2983 = vmatpush1.msra.mxu0 0.0
    %2984 = vmatprep.subr.mxu0 0.0
    %2985 = vmatpush1.msra.mxu0 0.0
    %2986 = vmatprep.subr.mxu0 0.0
    %2987 = vmatpush1.msra.mxu0 0.0
    %2988 = vmatprep.subr.mxu0 0.0
    %2989 = vmatpush1.msra.mxu0 0.0
    %2990 = vmatprep.subr.mxu0 0.0
    %2991 = vmatpush1.msra.mxu0 0.0
    %2992 = vmatprep.subr.mxu0 0.0
    %2993 = vmatpush1.msra.mxu0 0.0
    %2994 = vmatprep.subr.mxu0 0.0
    %2995 = vmatpush1.msra.mxu0 0.0
    %2996 = vmatprep.subr.mxu0 0.0
    %2997 = vmatpush1.msra.mxu0 0.0
    %2998 = vmatprep.subr.mxu0 0.0
    %2999 = vmatpush1.msra.mxu0 0.0
    %3000 = vmatprep.subr.mxu0 0.0
    %3001 = vmatpush1.msra.mxu0 0.0
    %3002 = vmatprep.subr.mxu0 0.0
    %3003 = vmatpush1.msra.mxu0 0.0
    %3004 = vmatprep.subr.mxu0 0.0
    %3005 = vmatpush1.msra.mxu0 0.0
    %3006 = vmatprep.subr.mxu0 0.0
    %3007 = vmatpush1.msra.mxu0 0.0
    %3008 = vmatprep.subr.mxu0 0.0
    %3009 = vmatpush1.msra.mxu0 0.0
    %3010 = vmatprep.subr.mxu0 0.0
    %3011 = vmatpush1.msra.mxu0 0.0
    %3012 = vmatprep.subr.mxu0 0.0
    %3013 = vmatpush1.msra.mxu0 0.0
    %3014 = vmatprep.subr.mxu0 0.0
    %3015 = vmatpush1.msra.mxu0 0.0
    %3016 = vmatprep.subr.mxu0 0.0
    %3017 = vmatpush1.msra.mxu0 0.0
    %3018 = vmatprep.subr.mxu0 0.0
    %3019 = vmatpush1.msra.mxu0 0.0
    %3020 = vmatprep.subr.mxu0 0.0
    %3021 = vmatpush1.msra.mxu0 0.0
    %3022 = vmatprep.subr.mxu0 0.0
    %3023 = vmatpush1.msra.mxu0 0.0
    %3024 = vmatprep.subr.mxu0 0.0
    %3025 = vmatpush1.msra.mxu0 0.0
    %3026 = vmatprep.subr.mxu0 0.0
    %3027 = vmatpush1.msra.mxu0 0.0
    %3028 = vmatprep.subr.mxu0 0.0
    %3029 = vmatpush1.msra.mxu0 0.0
    %3030 = vmatprep.mubr.f32.mxu0 0.0
    %3031 = vmatmul.mubr.f32.gmra.mrb[0].mxu0 %v2004
    %v3032 = vpop.f32.mrb[0].mxu0
    %v3033 = vadd.f32 %v1121, %v3032
    %v3034 = vpop.f32.mrb[0].mxu0
    %3035 = vdwg.mxu0
    %3036 = vmatprep.subr.mxu0 0.0
    %3037 = vmatpush1.msra.mxu0 %v1194
    %3038 = vmatprep.subr.mxu0 0.0
    %3039 = vmatpush1.msra.mxu0 %v1195
    %3040 = vmatprep.subr.mxu0 0.0
    %3041 = vmatpush1.msra.mxu0 %v1196
    %3042 = vmatprep.subr.mxu0 0.0
    %3043 = vmatpush1.msra.mxu0 %v1197
    %3044 = vmatprep.subr.mxu0 0.0
    %3045 = vmatpush1.msra.mxu0 0.0
    %3046 = vmatprep.subr.mxu0 0.0
    %3047 = vmatpush1.msra.mxu0 0.0
    %3048 = vmatprep.subr.mxu0 0.0
    %3049 = vmatpush1.msra.mxu0 0.0
    %3050 = vmatprep.subr.mxu0 0.0
    %3051 = vmatpush1.msra.mxu0 0.0
    %3052 = vmatprep.subr.mxu0 0.0
    %3053 = vmatpush1.msra.mxu0 0.0
    %3054 = vmatprep.subr.mxu0 0.0
    %3055 = vmatpush1.msra.mxu0 0.0
    %3056 = vmatprep.subr.mxu0 0.0
    %3057 = vmatpush1.msra.mxu0 0.0
    %3058 = vmatprep.subr.mxu0 0.0
    %3059 = vmatpush1.msra.mxu0 0.0
    %3060 = vmatprep.subr.mxu0 0.0
    %3061 = vmatpush1.msra.mxu0 0.0
    %3062 = vmatprep.subr.mxu0 0.0
    %3063 = vmatpush1.msra.mxu0 0.0
    %3064 = vmatprep.subr.mxu0 0.0
    %3065 = vmatpush1.msra.mxu0 0.0
    %3066 = vmatprep.subr.mxu0 0.0
    %3067 = vmatpush1.msra.mxu0 0.0
    %3068 = vmatprep.subr.mxu0 0.0
    %3069 = vmatpush1.msra.mxu0 0.0
    %3070 = vmatprep.subr.mxu0 0.0
    %3071 = vmatpush1.msra.mxu0 0.0
    %3072 = vmatprep.subr.mxu0 0.0
    %3073 = vmatpush1.msra.mxu0 0.0
    %3074 = vmatprep.subr.mxu0 0.0
    %3075 = vmatpush1.msra.mxu0 0.0
    %3076 = vmatprep.subr.mxu0 0.0
    %3077 = vmatpush1.msra.mxu0 0.0
    %3078 = vmatprep.subr.mxu0 0.0
    %3079 = vmatpush1.msra.mxu0 0.0
    %3080 = vmatprep.subr.mxu0 0.0
    %3081 = vmatpush1.msra.mxu0 0.0
    %3082 = vmatprep.subr.mxu0 0.0
    %3083 = vmatpush1.msra.mxu0 0.0
    %3084 = vmatprep.subr.mxu0 0.0
    %3085 = vmatpush1.msra.mxu0 0.0
    %3086 = vmatprep.subr.mxu0 0.0
    %3087 = vmatpush1.msra.mxu0 0.0
    %3088 = vmatprep.subr.mxu0 0.0
    %3089 = vmatpush1.msra.mxu0 0.0
    %3090 = vmatprep.subr.mxu0 0.0
    %3091 = vmatpush1.msra.mxu0 0.0
    %3092 = vmatprep.subr.mxu0 0.0
    %3093 = vmatpush1.msra.mxu0 0.0
    %3094 = vmatprep.subr.mxu0 0.0
    %3095 = vmatpush1.msra.mxu0 0.0
    %3096 = vmatprep.subr.mxu0 0.0
    %3097 = vmatpush1.msra.mxu0 0.0
    %3098 = vmatprep.subr.mxu0 0.0
    %3099 = vmatpush1.msra.mxu0 0.0
    %3100 = vmatprep.mubr.f32.mxu0 0.0
    %3101 = vmatmul.mubr.f32.gmra.mrb[0].mxu0 %v2004
    %v3102 = vpop.f32.mrb[0].mxu0
    %v3103 = vadd.f32 %v1204, %v3102
    %v3104 = vpop.f32.mrb[0].mxu0
    %3105 = vdwg.mxu0
    %v3107 = vsel %vm304, %v2963, 0
    %v3110 = vsel %vm304, %v3033, 0
    %3112 = vmatprep.subr.mxu0 0.0
    %3113 = vmatpush1.xpose.msra.mxu0 %v3110
    %3114 = vmatprep.subr.mxu0 0.0
    %3115 = vmatpush1.xpose.msra.mxu0 0.0
    %3116 = vmatprep.subr.mxu0 0.0
    %3117 = vmatpush1.xpose.msra.mxu0 0.0
    %3118 = vmatprep.subr.mxu0 0.0
    %3119 = vmatpush1.xpose.msra.mxu0 0.0
    %3120 = vmatprep.subr.mxu0 0.0
    %3121 = vmatpush1.xpose.msra.mxu0 0.0
    %3122 = vmatprep.subr.mxu0 0.0
    %3123 = vmatpush1.xpose.msra.mxu0 0.0
    %3124 = vmatprep.subr.mxu0 0.0
    %3125 = vmatpush1.xpose.msra.mxu0 0.0
    %3126 = vmatprep.subr.mxu0 0.0
    %3127 = vmatpush1.xpose.msra.mxu0 0.0
    %3128 = vmatprep.subr.mxu0 0.0
    %3129 = vmatpush1.xpose.msra.mxu0 0.0
    %3130 = vmatprep.subr.mxu0 0.0
    %3131 = vmatpush1.xpose.msra.mxu0 0.0
    %3132 = vmatprep.subr.mxu0 0.0
    %3133 = vmatpush1.xpose.msra.mxu0 0.0
    %3134 = vmatprep.subr.mxu0 0.0
    %3135 = vmatpush1.xpose.msra.mxu0 0.0
    %3136 = vmatprep.subr.mxu0 0.0
    %3137 = vmatpush1.xpose.msra.mxu0 0.0
    %3138 = vmatprep.subr.mxu0 0.0
    %3139 = vmatpush1.xpose.msra.mxu0 0.0
    %3140 = vmatprep.subr.mxu0 0.0
    %3141 = vmatpush1.xpose.msra.mxu0 0.0
    %3142 = vmatprep.subr.mxu0 0.0
    %3143 = vmatpush1.xpose.msra.mxu0 0.0
    %3144 = vmatprep.subr.mxu0 0.0
    %3145 = vmatpush1.xpose.msra.mxu0 0.0
    %3146 = vmatprep.subr.mxu0 0.0
    %3147 = vmatpush1.xpose.msra.mxu0 0.0
    %3148 = vmatprep.subr.mxu0 0.0
    %3149 = vmatpush1.xpose.msra.mxu0 0.0
    %3150 = vmatprep.subr.mxu0 0.0
    %3151 = vmatpush1.xpose.msra.mxu0 0.0
    %3152 = vmatprep.subr.mxu0 0.0
    %3153 = vmatpush1.xpose.msra.mxu0 0.0
    %3154 = vmatprep.subr.mxu0 0.0
    %3155 = vmatpush1.xpose.msra.mxu0 0.0
    %3156 = vmatprep.subr.mxu0 0.0
    %3157 = vmatpush1.xpose.msra.mxu0 0.0
    %3158 = vmatprep.subr.mxu0 0.0
    %3159 = vmatpush1.xpose.msra.mxu0 0.0
    %3160 = vmatprep.subr.mxu0 0.0
    %3161 = vmatpush1.xpose.msra.mxu0 0.0
    %3162 = vmatprep.subr.mxu0 0.0
    %3163 = vmatpush1.xpose.msra.mxu0 0.0
    %3164 = vmatprep.subr.mxu0 0.0
    %3165 = vmatpush1.xpose.msra.mxu0 0.0
    %3166 = vmatprep.subr.mxu0 0.0
    %3167 = vmatpush1.xpose.msra.mxu0 0.0
    %3168 = vmatprep.subr.mxu0 0.0
    %3169 = vmatpush1.xpose.msra.mxu0 0.0
    %3170 = vmatprep.subr.mxu0 0.0
    %3171 = vmatpush1.xpose.msra.mxu0 0.0
    %3172 = vmatprep.subr.mxu0 0.0
    %3173 = vmatpush1.xpose.msra.mxu0 0.0
    %3174 = vmatprep.subr.mxu0 0.0
    %3175 = vmatpush1.xpose.msra.mxu0 0.0
    %3176 = vmatprep.mubr.f32.mxu0 0.0
    %3177 = vmatmul.mubr.f32.gmra.mrb[0].mxu0 %v3107
    %v3178 = vpop.f32.mrb[0].mxu0
    %v3179 = vadd.f32 0.0, %v3178
    %v3180 = vpop.f32.mrb[0].mxu0
    %3181 = vdwg.mxu0
    %v3182 = vmul.f32 %v3179, 0.35355338
    %v3183 = vadd.f32 %v3182, %v2002
    %v3184 = vsel %vm304, %v3183, -inf
    %3185 = vmax.xlane.f32.xlu0 %v3184
    %v3186 = vpop.xlane.xlu0 %3185
    %v3187 = vsub.f32 %v3183, %v3186
    %v3188 = vmul.f32 %v3187, 1.442695
    %v3189 = vpow.pop %v3188
    %v3190 = vsel %vm304, %v3189, 0.0
    %3191 = vadd.xlane.f32.xlu0 %v3190
    %v3192 = vpop.xlane.xlu0 %3191
    %v3193 = vrcp.pop %v3192
    %v3194 = vmul.f32 %v3189, %v3193
    %v3196 = vsel %vm304, %v3194, 0
    %3198 = vmatprep.subr.mxu0 0.0
    %3199 = vmatpush1.msra.mxu0 %v3103
    %3200 = vmatprep.subr.mxu0 0.0
    %3201 = vmatpush1.msra.mxu0 0.0
    %3202 = vmatprep.subr.mxu0 0.0
    %3203 = vmatpush1.msra.mxu0 0.0
    %3204 = vmatprep.subr.mxu0 0.0
    %3205 = vmatpush1.msra.mxu0 0.0
    %3206 = vmatprep.subr.mxu0 0.0
    %3207 = vmatpush1.msra.mxu0 0.0
    %3208 = vmatprep.subr.mxu0 0.0
    %3209 = vmatpush1.msra.mxu0 0.0
    %3210 = vmatprep.subr.mxu0 0.0
    %3211 = vmatpush1.msra.mxu0 0.0
    %3212 = vmatprep.subr.mxu0 0.0
    %3213 = vmatpush1.msra.mxu0 0.0
    %3214 = vmatprep.subr.mxu0 0.0
    %3215 = vmatpush1.msra.mxu0 0.0
    %3216 = vmatprep.subr.mxu0 0.0
    %3217 = vmatpush1.msra.mxu0 0.0
    %3218 = vmatprep.subr.mxu0 0.0
    %3219 = vmatpush1.msra.mxu0 0.0
    %3220 = vmatprep.subr.mxu0 0.0
    %3221 = vmatpush1.msra.mxu0 0.0
    %3222 = vmatprep.subr.mxu0 0.0
    %3223 = vmatpush1.msra.mxu0 0.0
    %3224 = vmatprep.subr.mxu0 0.0
    %3225 = vmatpush1.msra.mxu0 0.0
    %3226 = vmatprep.subr.mxu0 0.0
    %3227 = vmatpush1.msra.mxu0 0.0
    %3228 = vmatprep.subr.mxu0 0.0
    %3229 = vmatpush1.msra.mxu0 0.0
    %3230 = vmatprep.subr.mxu0 0.0
    %3231 = vmatpush1.msra.mxu0 0.0
    %3232 = vmatprep.subr.mxu0 0.0
    %3233 = vmatpush1.msra.mxu0 0.0
    %3234 = vmatprep.subr.mxu0 0.0
    %3235 = vmatpush1.msra.mxu0 0.0
    %3236 = vmatprep.subr.mxu0 0.0
    %3237 = vmatpush1.msra.mxu0 0.0
    %3238 = vmatprep.subr.mxu0 0.0
    %3239 = vmatpush1.msra.mxu0 0.0
    %3240 = vmatprep.subr.mxu0 0.0
    %3241 = vmatpush1.msra.mxu0 0.0
    %3242 = vmatprep.subr.mxu0 0.0
    %3243 = vmatpush1.msra.mxu0 0.0
    %3244 = vmatprep.subr.mxu0 0.0
    %3245 = vmatpush1.msra.mxu0 0.0
    %3246 = vmatprep.subr.mxu0 0.0
    %3247 = vmatpush1.msra.mxu0 0.0
    %3248 = vmatprep.subr.mxu0 0.0
    %3249 = vmatpush1.msra.mxu0 0.0
    %3250 = vmatprep.subr.mxu0 0.0
    %3251 = vmatpush1.msra.mxu0 0.0
    %3252 = vmatprep.subr.mxu0 0.0
    %3253 = vmatpush1.msra.mxu0 0.0
    %3254 = vmatprep.subr.mxu0 0.0
    %3255 = vmatpush1.msra.mxu0 0.0
    %3256 = vmatprep.subr.mxu0 0.0
    %3257 = vmatpush1.msra.mxu0 0.0
    %3258 = vmatprep.subr.mxu0 0.0
    %3259 = vmatpush1.msra.mxu0 0.0
    %3260 = vmatprep.subr.mxu0 0.0
    %3261 = vmatpush1.msra.mxu0 0.0
    %3262 = vmatprep.mubr.f32.mxu0 0.0
    %3263 = vmatmul.mubr.f32.gmra.mrb[0].mxu0 %v3196
    %v3264 = vpop.f32.mrb[0].mxu0
    %v3265 = vadd.f32 0.0, %v3264
    %v3266 = vpop.f32.mrb[0].mxu0
    %3267 = vdwg.mxu0
    %v3269 = vsel %vm304, %v3265, 0
    %3271 = vmatprep.subr.mxu0 0.0
    %3272 = vmatpush1.msra.mxu0 %v1439
    %3273 = vmatprep.subr.mxu0 0.0
    %3274 = vmatpush1.msra.mxu0 0.0
    %3275 = vmatprep.subr.mxu0 0.0
    %3276 = vmatpush1.msra.mxu0 0.0
    %3277 = vmatprep.subr.mxu0 0.0
    %3278 = vmatpush1.msra.mxu0 0.0
    %3279 = vmatprep.subr.mxu0 0.0
    %3280 = vmatpush1.msra.mxu0 0.0
    %3281 = vmatprep.subr.mxu0 0.0
    %3282 = vmatpush1.msra.mxu0 0.0
    %3283 = vmatprep.subr.mxu0 0.0
    %3284 = vmatpush1.msra.mxu0 0.0
    %3285 = vmatprep.subr.mxu0 0.0
    %3286 = vmatpush1.msra.mxu0 0.0
    %3287 = vmatprep.subr.mxu0 0.0
    %3288 = vmatpush1.msra.mxu0 0.0
    %3289 = vmatprep.subr.mxu0 0.0
    %3290 = vmatpush1.msra.mxu0 0.0
    %3291 = vmatprep.subr.mxu0 0.0
    %3292 = vmatpush1.msra.mxu0 0.0
    %3293 = vmatprep.subr.mxu0 0.0
    %3294 = vmatpush1.msra.mxu0 0.0
    %3295 = vmatprep.subr.mxu0 0.0
    %3296 = vmatpush1.msra.mxu0 0.0
    %3297 = vmatprep.subr.mxu0 0.0
    %3298 = vmatpush1.msra.mxu0 0.0
    %3299 = vmatprep.subr.mxu0 0.0
    %3300 = vmatpush1.msra.mxu0 0.0
    %3301 = vmatprep.subr.mxu0 0.0
    %3302 = vmatpush1.msra.mxu0 0.0
    %3303 = vmatprep.subr.mxu0 0.0
    %3304 = vmatpush1.msra.mxu0 0.0
    %3305 = vmatprep.subr.mxu0 0.0
    %3306 = vmatpush1.msra.mxu0 0.0
    %3307 = vmatprep.subr.mxu0 0.0
    %3308 = vmatpush1.msra.mxu0 0.0
    %3309 = vmatprep.subr.mxu0 0.0
    %3310 = vmatpush1.msra.mxu0 0.0
    %3311 = vmatprep.subr.mxu0 0.0
    %3312 = vmatpush1.msra.mxu0 0.0
    %3313 = vmatprep.subr.mxu0 0.0
    %3314 = vmatpush1.msra.mxu0 0.0
    %3315 = vmatprep.subr.mxu0 0.0
    %3316 = vmatpush1.msra.mxu0 0.0
    %3317 = vmatprep.subr.mxu0 0.0
    %3318 = vmatpush1.msra.mxu0 0.0
    %3319 = vmatprep.subr.mxu0 0.0
    %3320 = vmatpush1.msra.mxu0 0.0
    %3321 = vmatprep.subr.mxu0 0.0
    %3322 = vmatpush1.msra.mxu0 0.0
    %3323 = vmatprep.subr.mxu0 0.0
    %3324 = vmatpush1.msra.mxu0 0.0
    %3325 = vmatprep.subr.mxu0 0.0
    %3326 = vmatpush1.msra.mxu0 0.0
    %3327 = vmatprep.subr.mxu0 0.0
    %3328 = vmatpush1.msra.mxu0 0.0
    %3329 = vmatprep.subr.mxu0 0.0
    %3330 = vmatpush1.msra.mxu0 0.0
    %3331 = vmatprep.subr.mxu0 0.0
    %3332 = vmatpush1.msra.mxu0 0.0
    %3333 = vmatprep.subr.mxu0 0.0
    %3334 = vmatpush1.msra.mxu0 0.0
    %3335 = vmatprep.mubr.f32.mxu0 0.0
    %3336 = vmatmul.mubr.f32.gmra.mrb[0].mxu0 %v3269
    %v3337 = vpop.f32.mrb[0].mxu0
    %v3338 = vadd.f32 0.0, %v3337
    %v3339 = vpop.f32.mrb[0].mxu0
    %3340 = vdwg.mxu0
    %v3341 = vadd.f32 %v2893, %v3338
    %3342 = vmatprep.subr.mxu0 0.0
    %3343 = vmatpush1.msra.mxu0 %v1515
    %3344 = vmatprep.subr.mxu0 0.0
    %3345 = vmatpush1.msra.mxu0 %v1516
    %3346 = vmatprep.subr.mxu0 0.0
    %3347 = vmatpush1.msra.mxu0 %v1517
    %3348 = vmatprep.subr.mxu0 0.0
    %3349 = vmatpush1.msra.mxu0 %v1518
    %3350 = vmatprep.subr.mxu0 0.0
    %3351 = vmatpush1.msra.mxu0 0.0
    %3352 = vmatprep.subr.mxu0 0.0
    %3353 = vmatpush1.msra.mxu0 0.0
    %3354 = vmatprep.subr.mxu0 0.0
    %3355 = vmatpush1.msra.mxu0 0.0
    %3356 = vmatprep.subr.mxu0 0.0
    %3357 = vmatpush1.msra.mxu0 0.0
    %3358 = vmatprep.subr.mxu0 0.0
    %3359 = vmatpush1.msra.mxu0 0.0
    %3360 = vmatprep.subr.mxu0 0.0
    %3361 = vmatpush1.msra.mxu0 0.0
    %3362 = vmatprep.subr.mxu0 0.0
    %3363 = vmatpush1.msra.mxu0 0.0
    %3364 = vmatprep.subr.mxu0 0.0
    %3365 = vmatpush1.msra.mxu0 0.0
    %3366 = vmatprep.subr.mxu0 0.0
    %3367 = vmatpush1.msra.mxu0 0.0
    %3368 = vmatprep.subr.mxu0 0.0
    %3369 = vmatpush1.msra.mxu0 0.0
    %3370 = vmatprep.subr.mxu0 0.0
    %3371 = vmatpush1.msra.mxu0 0.0
    %3372 = vmatprep.subr.mxu0 0.0
    %3373 = vmatpush1.msra.mxu0 0.0
    %3374 = vmatprep.subr.mxu0 0.0
    %3375 = vmatpush1.msra.mxu0 0.0
    %3376 = vmatprep.subr.mxu0 0.0
    %3377 = vmatpush1.msra.mxu0 0.0
    %3378 = vmatprep.subr.mxu0 0.0
    %3379 = vmatpush1.msra.mxu0 0.0
    %3380 = vmatprep.subr.mxu0 0.0
    %3381 = vmatpush1.msra.mxu0 0.0
    %3382 = vmatprep.subr.mxu0 0.0
    %3383 = vmatpush1.msra.mxu0 0.0
    %3384 = vmatprep.subr.mxu0 0.0
    %3385 = vmatpush1.msra.mxu0 0.0
    %3386 = vmatprep.subr.mxu0 0.0
    %3387 = vmatpush1.msra.mxu0 0.0
    %3388 = vmatprep.subr.mxu0 0.0
    %3389 = vmatpush1.msra.mxu0 0.0
    %3390 = vmatprep.subr.mxu0 0.0
    %3391 = vmatpush1.msra.mxu0 0.0
    %3392 = vmatprep.subr.mxu0 0.0
    %3393 = vmatpush1.msra.mxu0 0.0
    %3394 = vmatprep.subr.mxu0 0.0
    %3395 = vmatpush1.msra.mxu0 0.0
    %3396 = vmatprep.subr.mxu0 0.0
    %3397 = vmatpush1.msra.mxu0 0.0
    %3398 = vmatprep.subr.mxu0 0.0
    %3399 = vmatpush1.msra.mxu0 0.0
    %3400 = vmatprep.subr.mxu0 0.0
    %3401 = vmatpush1.msra.mxu0 0.0
    %3402 = vmatprep.subr.mxu0 0.0
    %3403 = vmatpush1.msra.mxu0 0.0
    %3404 = vmatprep.subr.mxu0 0.0
    %3405 = vmatpush1.msra.mxu0 0.0
    %3406 = vmatprep.mubr.f32.mxu0 0.0
    %3407 = vmatmul.mubr.f32.gmra.mrb[0].mxu0 %v2004
    %v3408 = vpop.f32.mrb[0].mxu0
    %v3409 = vadd.f32 %v1525, %v3408
    %v3410 = vpop.f32.mrb[0].mxu0
    %3411 = vdwg.mxu0
    %3412 = vmatprep.subr.mxu0 0.0
    %3413 = vmatpush1.msra.mxu0 %v1598
    %3414 = vmatprep.subr.mxu0 0.0
    %3415 = vmatpush1.msra.mxu0 %v1599
    %3416 = vmatprep.subr.mxu0 0.0
    %3417 = vmatpush1.msra.mxu0 %v1600
    %3418 = vmatprep.subr.mxu0 0.0
    %3419 = vmatpush1.msra.mxu0 %v1601
    %3420 = vmatprep.subr.mxu0 0.0
    %3421 = vmatpush1.msra.mxu0 0.0
    %3422 = vmatprep.subr.mxu0 0.0
    %3423 = vmatpush1.msra.mxu0 0.0
    %3424 = vmatprep.subr.mxu0 0.0
    %3425 = vmatpush1.msra.mxu0 0.0
    %3426 = vmatprep.subr.mxu0 0.0
    %3427 = vmatpush1.msra.mxu0 0.0
    %3428 = vmatprep.subr.mxu0 0.0
    %3429 = vmatpush1.msra.mxu0 0.0
    %3430 = vmatprep.subr.mxu0 0.0
    %3431 = vmatpush1.msra.mxu0 0.0
    %3432 = vmatprep.subr.mxu0 0.0
    %3433 = vmatpush1.msra.mxu0 0.0
    %3434 = vmatprep.subr.mxu0 0.0
    %3435 = vmatpush1.msra.mxu0 0.0
    %3436 = vmatprep.subr.mxu0 0.0
    %3437 = vmatpush1.msra.mxu0 0.0
    %3438 = vmatprep.subr.mxu0 0.0
    %3439 = vmatpush1.msra.mxu0 0.0
    %3440 = vmatprep.subr.mxu0 0.0
    %3441 = vmatpush1.msra.mxu0 0.0
    %3442 = vmatprep.subr.mxu0 0.0
    %3443 = vmatpush1.msra.mxu0 0.0
    %3444 = vmatprep.subr.mxu0 0.0
    %3445 = vmatpush1.msra.mxu0 0.0
    %3446 = vmatprep.subr.mxu0 0.0
    %3447 = vmatpush1.msra.mxu0 0.0
    %3448 = vmatprep.subr.mxu0 0.0
    %3449 = vmatpush1.msra.mxu0 0.0
    %3450 = vmatprep.subr.mxu0 0.0
    %3451 = vmatpush1.msra.mxu0 0.0
    %3452 = vmatprep.subr.mxu0 0.0
    %3453 = vmatpush1.msra.mxu0 0.0
    %3454 = vmatprep.subr.mxu0 0.0
    %3455 = vmatpush1.msra.mxu0 0.0
    %3456 = vmatprep.subr.mxu0 0.0
    %3457 = vmatpush1.msra.mxu0 0.0
    %3458 = vmatprep.subr.mxu0 0.0
    %3459 = vmatpush1.msra.mxu0 0.0
    %3460 = vmatprep.subr.mxu0 0.0
    %3461 = vmatpush1.msra.mxu0 0.0
    %3462 = vmatprep.subr.mxu0 0.0
    %3463 = vmatpush1.msra.mxu0 0.0
    %3464 = vmatprep.subr.mxu0 0.0
    %3465 = vmatpush1.msra.mxu0 0.0
    %3466 = vmatprep.subr.mxu0 0.0
    %3467 = vmatpush1.msra.mxu0 0.0
    %3468 = vmatprep.subr.mxu0 0.0
    %3469 = vmatpush1.msra.mxu0 0.0
    %3470 = vmatprep.subr.mxu0 0.0
    %3471 = vmatpush1.msra.mxu0 0.0
    %3472 = vmatprep.subr.mxu0 0.0
    %3473 = vmatpush1.msra.mxu0 0.0
    %3474 = vmatprep.subr.mxu0 0.0
    %3475 = vmatpush1.msra.mxu0 0.0
    %3476 = vmatprep.mubr.f32.mxu0 0.0
    %3477 = vmatmul.mubr.f32.gmra.mrb[0].mxu0 %v2004
    %v3478 = vpop.f32.mrb[0].mxu0
    %v3479 = vadd.f32 %v1608, %v3478
    %v3480 = vpop.f32.mrb[0].mxu0
    %3481 = vdwg.mxu0
    %3482 = vmatprep.subr.mxu0 0.0
    %3483 = vmatpush1.msra.mxu0 %v1681
    %3484 = vmatprep.subr.mxu0 0.0
    %3485 = vmatpush1.msra.mxu0 %v1682
    %3486 = vmatprep.subr.mxu0 0.0
    %3487 = vmatpush1.msra.mxu0 %v1683
    %3488 = vmatprep.subr.mxu0 0.0
    %3489 = vmatpush1.msra.mxu0 %v1684
    %3490 = vmatprep.subr.mxu0 0.0
    %3491 = vmatpush1.msra.mxu0 0.0
    %3492 = vmatprep.subr.mxu0 0.0
    %3493 = vmatpush1.msra.mxu0 0.0
    %3494 = vmatprep.subr.mxu0 0.0
    %3495 = vmatpush1.msra.mxu0 0.0
    %3496 = vmatprep.subr.mxu0 0.0
    %3497 = vmatpush1.msra.mxu0 0.0
    %3498 = vmatprep.subr.mxu0 0.0
    %3499 = vmatpush1.msra.mxu0 0.0
    %3500 = vmatprep.subr.mxu0 0.0
    %3501 = vmatpush1.msra.mxu0 0.0
    %3502 = vmatprep.subr.mxu0 0.0
    %3503 = vmatpush1.msra.mxu0 0.0
    %3504 = vmatprep.subr.mxu0 0.0
    %3505 = vmatpush1.msra.mxu0 0.0
    %3506 = vmatprep.subr.mxu0 0.0
    %3507 = vmatpush1.msra.mxu0 0.0
    %3508 = vmatprep.subr.mxu0 0.0
    %3509 = vmatpush1.msra.mxu0 0.0
    %3510 = vmatprep.subr.mxu0 0.0
    %3511 = vmatpush1.msra.mxu0 0.0
    %3512 = vmatprep.subr.mxu0 0.0
    %3513 = vmatpush1.msra.mxu0 0.0
    %3514 = vmatprep.subr.mxu0 0.0
    %3515 = vmatpush1.msra.mxu0 0.0
    %3516 = vmatprep.subr.mxu0 0.0
    %3517 = vmatpush1.msra.mxu0 0.0
    %3518 = vmatprep.subr.mxu0 0.0
    %3519 = vmatpush1.msra.mxu0 0.0
    %3520 = vmatprep.subr.mxu0 0.0
    %3521 = vmatpush1.msra.mxu0 0.0
    %3522 = vmatprep.subr.mxu0 0.0
    %3523 = vmatpush1.msra.mxu0 0.0
    %3524 = vmatprep.subr.mxu0 0.0
    %3525 = vmatpush1.msra.mxu0 0.0
    %3526 = vmatprep.subr.mxu0 0.0
    %3527 = vmatpush1.msra.mxu0 0.0
    %3528 = vmatprep.subr.mxu0 0.0
    %3529 = vmatpush1.msra.mxu0 0.0
    %3530 = vmatprep.subr.mxu0 0.0
    %3531 = vmatpush1.msra.mxu0 0.0
    %3532 = vmatprep.subr.mxu0 0.0
    %3533 = vmatpush1.msra.mxu0 0.0
    %3534 = vmatprep.subr.mxu0 0.0
    %3535 = vmatpush1.msra.mxu0 0.0
    %3536 = vmatprep.subr.mxu0 0.0
    %3537 = vmatpush1.msra.mxu0 0.0
    %3538 = vmatprep.subr.mxu0 0.0
    %3539 = vmatpush1.msra.mxu0 0.0
    %3540 = vmatprep.subr.mxu0 0.0
    %3541 = vmatpush1.msra.mxu0 0.0
    %3542 = vmatprep.subr.mxu0 0.0
    %3543 = vmatpush1.msra.mxu0 0.0
    %3544 = vmatprep.subr.mxu0 0.0
    %3545 = vmatpush1.msra.mxu0 0.0
    %3546 = vmatprep.mubr.f32.mxu0 0.0
    %3547 = vmatmul.mubr.f32.gmra.mrb[0].mxu0 %v2004
    %v3548 = vpop.f32.mrb[0].mxu0
    %v3549 = vadd.f32 %v1691, %v3548
    %v3550 = vpop.f32.mrb[0].mxu0
    %3551 = vdwg.mxu0
    %v3553 = vsel %vm304, %v3409, 0
    %v3556 = vsel %vm304, %v3479, 0
    %3558 = vmatprep.subr.mxu0 0.0
    %3559 = vmatpush1.xpose.msra.mxu0 %v3556
    %3560 = vmatprep.subr.mxu0 0.0
    %3561 = vmatpush1.xpose.msra.mxu0 0.0
    %3562 = vmatprep.subr.mxu0 0.0
    %3563 = vmatpush1.xpose.msra.mxu0 0.0
    %3564 = vmatprep.subr.mxu0 0.0
    %3565 = vmatpush1.xpose.msra.mxu0 0.0
    %3566 = vmatprep.subr.mxu0 0.0
    %3567 = vmatpush1.xpose.msra.mxu0 0.0
    %3568 = vmatprep.subr.mxu0 0.0
    %3569 = vmatpush1.xpose.msra.mxu0 0.0
    %3570 = vmatprep.subr.mxu0 0.0
    %3571 = vmatpush1.xpose.msra.mxu0 0.0
    %3572 = vmatprep.subr.mxu0 0.0
    %3573 = vmatpush1.xpose.msra.mxu0 0.0
    %3574 = vmatprep.subr.mxu0 0.0
    %3575 = vmatpush1.xpose.msra.mxu0 0.0
    %3576 = vmatprep.subr.mxu0 0.0
    %3577 = vmatpush1.xpose.msra.mxu0 0.0
    %3578 = vmatprep.subr.mxu0 0.0
    %3579 = vmatpush1.xpose.msra.mxu0 0.0
    %3580 = vmatprep.subr.mxu0 0.0
    %3581 = vmatpush1.xpose.msra.mxu0 0.0
    %3582 = vmatprep.subr.mxu0 0.0
    %3583 = vmatpush1.xpose.msra.mxu0 0.0
    %3584 = vmatprep.subr.mxu0 0.0
    %3585 = vmatpush1.xpose.msra.mxu0 0.0
    %3586 = vmatprep.subr.mxu0 0.0
    %3587 = vmatpush1.xpose.msra.mxu0 0.0
    %3588 = vmatprep.subr.mxu0 0.0
    %3589 = vmatpush1.xpose.msra.mxu0 0.0
    %3590 = vmatprep.subr.mxu0 0.0
    %3591 = vmatpush1.xpose.msra.mxu0 0.0
    %3592 = vmatprep.subr.mxu0 0.0
    %3593 = vmatpush1.xpose.msra.mxu0 0.0
    %3594 = vmatprep.subr.mxu0 0.0
    %3595 = vmatpush1.xpose.msra.mxu0 0.0
    %3596 = vmatprep.subr.mxu0 0.0
    %3597 = vmatpush1.xpose.msra.mxu0 0.0
    %3598 = vmatprep.subr.mxu0 0.0
    %3599 = vmatpush1.xpose.msra.mxu0 0.0
    %3600 = vmatprep.subr.mxu0 0.0
    %3601 = vmatpush1.xpose.msra.mxu0 0.0
    %3602 = vmatprep.subr.mxu0 0.0
    %3603 = vmatpush1.xpose.msra.mxu0 0.0
    %3604 = vmatprep.subr.mxu0 0.0
    %3605 = vmatpush1.xpose.msra.mxu0 0.0
    %3606 = vmatprep.subr.mxu0 0.0
    %3607 = vmatpush1.xpose.msra.mxu0 0.0
    %3608 = vmatprep.subr.mxu0 0.0
    %3609 = vmatpush1.xpose.msra.mxu0 0.0
    %3610 = vmatprep.subr.mxu0 0.0
    %3611 = vmatpush1.xpose.msra.mxu0 0.0
    %3612 = vmatprep.subr.mxu0 0.0
    %3613 = vmatpush1.xpose.msra.mxu0 0.0
    %3614 = vmatprep.subr.mxu0 0.0
    %3615 = vmatpush1.xpose.msra.mxu0 0.0
    %3616 = vmatprep.subr.mxu0 0.0
    %3617 = vmatpush1.xpose.msra.mxu0 0.0
    %3618 = vmatprep.subr.mxu0 0.0
    %3619 = vmatpush1.xpose.msra.mxu0 0.0
    %3620 = vmatprep.subr.mxu0 0.0
    %3621 = vmatpush1.xpose.msra.mxu0 0.0
    %3622 = vmatprep.mubr.f32.mxu0 0.0
    %3623 = vmatmul.mubr.f32.gmra.mrb[0].mxu0 %v3553
    %v3624 = vpop.f32.mrb[0].mxu0
    %v3625 = vadd.f32 0.0, %v3624
    %v3626 = vpop.f32.mrb[0].mxu0
    %3627 = vdwg.mxu0
    %v3628 = vmul.f32 %v3625, 0.35355338
    %v3629 = vadd.f32 %v3628, %v2002
    %v3630 = vsel %vm304, %v3629, -inf
    %3631 = vmax.xlane.f32.xlu0 %v3630
    %v3632 = vpop.xlane.xlu0 %3631
    %v3633 = vsub.f32 %v3629, %v3632
    %v3634 = vmul.f32 %v3633, 1.442695
    %v3635 = vpow.pop %v3634
    %v3636 = vsel %vm304, %v3635, 0.0
    %3637 = vadd.xlane.f32.xlu0 %v3636
    %v3638 = vpop.xlane.xlu0 %3637
    %v3639 = vrcp.pop %v3638
    %v3640 = vmul.f32 %v3635, %v3639
    %v3642 = vsel %vm304, %v3640, 0
    %3644 = vmatprep.subr.mxu0 0.0
    %3645 = vmatpush1.msra.mxu0 %v3549
    %3646 = vmatprep.subr.mxu0 0.0
    %3647 = vmatpush1.msra.mxu0 0.0
    %3648 = vmatprep.subr.mxu0 0.0
    %3649 = vmatpush1.msra.mxu0 0.0
    %3650 = vmatprep.subr.mxu0 0.0
    %3651 = vmatpush1.msra.mxu0 0.0
    %3652 = vmatprep.subr.mxu0 0.0
    %3653 = vmatpush1.msra.mxu0 0.0
    %3654 = vmatprep.subr.mxu0 0.0
    %3655 = vmatpush1.msra.mxu0 0.0
    %3656 = vmatprep.subr.mxu0 0.0
    %3657 = vmatpush1.msra.mxu0 0.0
    %3658 = vmatprep.subr.mxu0 0.0
    %3659 = vmatpush1.msra.mxu0 0.0
    %3660 = vmatprep.subr.mxu0 0.0
    %3661 = vmatpush1.msra.mxu0 0.0
    %3662 = vmatprep.subr.mxu0 0.0
    %3663 = vmatpush1.msra.mxu0 0.0
    %3664 = vmatprep.subr.mxu0 0.0
    %3665 = vmatpush1.msra.mxu0 0.0
    %3666 = vmatprep.subr.mxu0 0.0
    %3667 = vmatpush1.msra.mxu0 0.0
    %3668 = vmatprep.subr.mxu0 0.0
    %3669 = vmatpush1.msra.mxu0 0.0
    %3670 = vmatprep.subr.mxu0 0.0
    %3671 = vmatpush1.msra.mxu0 0.0
    %3672 = vmatprep.subr.mxu0 0.0
    %3673 = vmatpush1.msra.mxu0 0.0
    %3674 = vmatprep.subr.mxu0 0.0
    %3675 = vmatpush1.msra.mxu0 0.0
    %3676 = vmatprep.subr.mxu0 0.0
    %3677 = vmatpush1.msra.mxu0 0.0
    %3678 = vmatprep.subr.mxu0 0.0
    %3679 = vmatpush1.msra.mxu0 0.0
    %3680 = vmatprep.subr.mxu0 0.0
    %3681 = vmatpush1.msra.mxu0 0.0
    %3682 = vmatprep.subr.mxu0 0.0
    %3683 = vmatpush1.msra.mxu0 0.0
    %3684 = vmatprep.subr.mxu0 0.0
    %3685 = vmatpush1.msra.mxu0 0.0
    %3686 = vmatprep.subr.mxu0 0.0
    %3687 = vmatpush1.msra.mxu0 0.0
    %3688 = vmatprep.subr.mxu0 0.0
    %3689 = vmatpush1.msra.mxu0 0.0
    %3690 = vmatprep.subr.mxu0 0.0
    %3691 = vmatpush1.msra.mxu0 0.0
    %3692 = vmatprep.subr.mxu0 0.0
    %3693 = vmatpush1.msra.mxu0 0.0
    %3694 = vmatprep.subr.mxu0 0.0
    %3695 = vmatpush1.msra.mxu0 0.0
    %3696 = vmatprep.subr.mxu0 0.0
    %3697 = vmatpush1.msra.mxu0 0.0
    %3698 = vmatprep.subr.mxu0 0.0
    %3699 = vmatpush1.msra.mxu0 0.0
    %3700 = vmatprep.subr.mxu0 0.0
    %3701 = vmatpush1.msra.mxu0 0.0
    %3702 = vmatprep.subr.mxu0 0.0
    %3703 = vmatpush1.msra.mxu0 0.0
    %3704 = vmatprep.subr.mxu0 0.0
    %3705 = vmatpush1.msra.mxu0 0.0
    %3706 = vmatprep.subr.mxu0 0.0
    %3707 = vmatpush1.msra.mxu0 0.0
    %3708 = vmatprep.mubr.f32.mxu0 0.0
    %3709 = vmatmul.mubr.f32.gmra.mrb[0].mxu0 %v3642
    %v3710 = vpop.f32.mrb[0].mxu0
    %v3711 = vadd.f32 0.0, %v3710
    %v3712 = vpop.f32.mrb[0].mxu0
    %3713 = vdwg.mxu0
    %v3715 = vsel %vm304, %v3711, 0
    %3717 = vmatprep.subr.mxu0 0.0
    %3718 = vmatpush1.msra.mxu0 %v1926
    %3719 = vmatprep.subr.mxu0 0.0
    %3720 = vmatpush1.msra.mxu0 0.0
    %3721 = vmatprep.subr.mxu0 0.0
    %3722 = vmatpush1.msra.mxu0 0.0
    %3723 = vmatprep.subr.mxu0 0.0
    %3724 = vmatpush1.msra.mxu0 0.0
    %3725 = vmatprep.subr.mxu0 0.0
    %3726 = vmatpush1.msra.mxu0 0.0
    %3727 = vmatprep.subr.mxu0 0.0
    %3728 = vmatpush1.msra.mxu0 0.0
    %3729 = vmatprep.subr.mxu0 0.0
    %3730 = vmatpush1.msra.mxu0 0.0
    %3731 = vmatprep.subr.mxu0 0.0
    %3732 = vmatpush1.msra.mxu0 0.0
    %3733 = vmatprep.subr.mxu0 0.0
    %3734 = vmatpush1.msra.mxu0 0.0
    %3735 = vmatprep.subr.mxu0 0.0
    %3736 = vmatpush1.msra.mxu0 0.0
    %3737 = vmatprep.subr.mxu0 0.0
    %3738 = vmatpush1.msra.mxu0 0.0
    %3739 = vmatprep.subr.mxu0 0.0
    %3740 = vmatpush1.msra.mxu0 0.0
    %3741 = vmatprep.subr.mxu0 0.0
    %3742 = vmatpush1.msra.mxu0 0.0
    %3743 = vmatprep.subr.mxu0 0.0
    %3744 = vmatpush1.msra.mxu0 0.0
    %3745 = vmatprep.subr.mxu0 0.0
    %3746 = vmatpush1.msra.mxu0 0.0
    %3747 = vmatprep.subr.mxu0 0.0
    %3748 = vmatpush1.msra.mxu0 0.0
    %3749 = vmatprep.subr.mxu0 0.0
    %3750 = vmatpush1.msra.mxu0 0.0
    %3751 = vmatprep.subr.mxu0 0.0
    %3752 = vmatpush1.msra.mxu0 0.0
    %3753 = vmatprep.subr.mxu0 0.0
    %3754 = vmatpush1.msra.mxu0 0.0
    %3755 = vmatprep.subr.mxu0 0.0
    %3756 = vmatpush1.msra.mxu0 0.0
    %3757 = vmatprep.subr.mxu0 0.0
    %3758 = vmatpush1.msra.mxu0 0.0
    %3759 = vmatprep.subr.mxu0 0.0
    %3760 = vmatpush1.msra.mxu0 0.0
    %3761 = vmatprep.subr.mxu0 0.0
    %3762 = vmatpush1.msra.mxu0 0.0
    %3763 = vmatprep.subr.mxu0 0.0
    %3764 = vmatpush1.msra.mxu0 0.0
    %3765 = vmatprep.subr.mxu0 0.0
    %3766 = vmatpush1.msra.mxu0 0.0
    %3767 = vmatprep.subr.mxu0 0.0
    %3768 = vmatpush1.msra.mxu0 0.0
    %3769 = vmatprep.subr.mxu0 0.0
    %3770 = vmatpush1.msra.mxu0 0.0
    %3771 = vmatprep.subr.mxu0 0.0
    %3772 = vmatpush1.msra.mxu0 0.0
    %3773 = vmatprep.subr.mxu0 0.0
    %3774 = vmatpush1.msra.mxu0 0.0
    %3775 = vmatprep.subr.mxu0 0.0
    %3776 = vmatpush1.msra.mxu0 0.0
    %3777 = vmatprep.subr.mxu0 0.0
    %3778 = vmatpush1.msra.mxu0 0.0
    %3779 = vmatprep.subr.mxu0 0.0
    %3780 = vmatpush1.msra.mxu0 0.0
    %3781 = vmatprep.mubr.f32.mxu0 0.0
    %3782 = vmatmul.mubr.f32.gmra.mrb[0].mxu0 %v3715
    %v3783 = vpop.f32.mrb[0].mxu0
    %v3784 = vadd.f32 0.0, %v3783
    %v3785 = vpop.f32.mrb[0].mxu0
    %3786 = vdwg.mxu0
    %v3787 = vadd.f32 %v3341, %v3784
    %v3788 = vld [vmem:[%s5] sm:$0x1]
    %v3790 = vlaneseq
    %v3791 = vshrl.u32 %v3790, 7
    %v3792 = vsub.s32 0, %v3791
    %v3793 = vrot.slane %v3788, %v3792
    %v3795 = vadd.f32 %v2000, %v3793
    %v3796 = vadd.f32 %v3787, %v3793
    %v3797 = vadd.f32 %v50, %v3795
    %v3798 = vadd.f32 %v51, %v3796
    %v3799 = vld [vmem:[%s6] sm:$0x1]
    %v3800 = vld [vmem:[%s7] sm:$0x1]
    %v3801 = vsel %vm64, %v3797, 0.0
    %3802 = vadd.xlane.f32.xlu0 %v3801
    %v3803 = vpop.xlane.xlu0 %3802
    %v3804 = vsel %vm64, %v3798, 0.0
    %3805 = vadd.xlane.f32.xlu0 %v3804
    %v3806 = vpop.xlane.xlu0 %3805
    %v3807 = vrcp.pop 32.0
    %v3808 = vmul.f32 %v3803, %v3807
    %v3809 = vmul.f32 %v3806, %v3807
    %v3810 = vsub.f32 %v3797, %v3808
    %v3811 = vsub.f32 %v3798, %v3809
    %v3812 = vmul.f32 %v3810, %v3810
    %v3813 = vmul.f32 %v3811, %v3811
    %v3814 = vsel %vm64, %v3812, 0.0
    %3815 = vadd.xlane.f32.xlu0 %v3814
    %v3816 = vpop.xlane.xlu0 %3815
    %v3817 = vsel %vm64, %v3813, 0.0
    %3818 = vadd.xlane.f32.xlu0 %v3817
    %v3819 = vpop.xlane.xlu0 %3818
    %v3820 = vmul.f32 %v3816, %v3807
    %v3821 = vmul.f32 %v3819, %v3807
    %v3822 = vadd.f32 %v3820, 1e-05
    %v3823 = vadd.f32 %v3821, 1e-05
    %v3824 = vrsqrt.pop %v3822
    %v3825 = vrsqrt.pop %v3823
    %v3826 = vmul.f32 %v3810, %v3824
    %v3827 = vmul.f32 %v3811, %v3825
    %v3829 = vlaneseq
    %v3830 = vshrl.u32 %v3829, 7
    %v3831 = vsub.s32 0, %v3830
    %v3832 = vrot.slane %v3799, %v3831
    %v3834 = vmul.f32 %v3826, %v3832
    %v3835 = vmul.f32 %v3827, %v3832
    %v3837 = vlaneseq
    %v3838 = vshrl.u32 %v3837, 7
    %v3839 = vsub.s32 0, %v3838
    %v3840 = vrot.slane %v3800, %v3839
    %v3842 = vadd.f32 %v3834, %v3840
    %v3843 = vadd.f32 %v3835, %v3840
    %v3844 = vld [vmem:[%s8] sm:$0xff]
    %v3845 = vld [vmem:[%s8 + $0x8] sm:$0xff]
    %v3846 = vld [vmem:[%s8 + $0x10] sm:$0xff]
    %v3847 = vld [vmem:[%s8 + $0x18] sm:$0xff]
    %v3848 = vld [vmem:[%s9] sm:$0x1]
    %v3850 = vlaneseq
    %v3851 = vshrl.u32 %v3850, 7
    %v3852 = vsub.s32 0, %v3851
    %v3853 = vrot.slane %v3848, %v3852
    %v3856 = vsel %vm64, %v3842, 0
    %v3859 = vsel %vm64, %v3843, 0
    %3861 = vmatprep.subr.mxu0 0.0
    %3862 = vmatpush1.msra.mxu0 %v3844
    %3863 = vmatprep.subr.mxu0 0.0
    %3864 = vmatpush1.msra.mxu0 %v3845
    %3865 = vmatprep.subr.mxu0 0.0
    %3866 = vmatpush1.msra.mxu0 %v3846
    %3867 = vmatprep.subr.mxu0 0.0
    %3868 = vmatpush1.msra.mxu0 %v3847
    %3869 = vmatprep.subr.mxu0 0.0
    %3870 = vmatpush1.msra.mxu0 0.0
    %3871 = vmatprep.subr.mxu0 0.0
    %3872 = vmatpush1.msra.mxu0 0.0
    %3873 = vmatprep.subr.mxu0 0.0
    %3874 = vmatpush1.msra.mxu0 0.0
    %3875 = vmatprep.subr.mxu0 0.0
    %3876 = vmatpush1.msra.mxu0 0.0
    %3877 = vmatprep.subr.mxu0 0.0
    %3878 = vmatpush1.msra.mxu0 0.0
    %3879 = vmatprep.subr.mxu0 0.0
    %3880 = vmatpush1.msra.mxu0 0.0
    %3881 = vmatprep.subr.mxu0 0.0
    %3882 = vmatpush1.msra.mxu0 0.0
    %3883 = vmatprep.subr.mxu0 0.0
    %3884 = vmatpush1.msra.mxu0 0.0
    %3885 = vmatprep.subr.mxu0 0.0
    %3886 = vmatpush1.msra.mxu0 0.0
    %3887 = vmatprep.subr.mxu0 0.0
    %3888 = vmatpush1.msra.mxu0 0.0
    %3889 = vmatprep.subr.mxu0 0.0
    %3890 = vmatpush1.msra.mxu0 0.0
    %3891 = vmatprep.subr.mxu0 0.0
    %3892 = vmatpush1.msra.mxu0 0.0
    %3893 = vmatprep.subr.mxu0 0.0
    %3894 = vmatpush1.msra.mxu0 0.0
    %3895 = vmatprep.subr.mxu0 0.0
    %3896 = vmatpush1.msra.mxu0 0.0
    %3897 = vmatprep.subr.mxu0 0.0
    %3898 = vmatpush1.msra.mxu0 0.0
    %3899 = vmatprep.subr.mxu0 0.0
    %3900 = vmatpush1.msra.mxu0 0.0
    %3901 = vmatprep.subr.mxu0 0.0
    %3902 = vmatpush1.msra.mxu0 0.0
    %3903 = vmatprep.subr.mxu0 0.0
    %3904 = vmatpush1.msra.mxu0 0.0
    %3905 = vmatprep.subr.mxu0 0.0
    %3906 = vmatpush1.msra.mxu0 0.0
    %3907 = vmatprep.subr.mxu0 0.0
    %3908 = vmatpush1.msra.mxu0 0.0
    %3909 = vmatprep.subr.mxu0 0.0
    %3910 = vmatpush1.msra.mxu0 0.0
    %3911 = vmatprep.subr.mxu0 0.0
    %3912 = vmatpush1.msra.mxu0 0.0
    %3913 = vmatprep.subr.mxu0 0.0
    %3914 = vmatpush1.msra.mxu0 0.0
    %3915 = vmatprep.subr.mxu0 0.0
    %3916 = vmatpush1.msra.mxu0 0.0
    %3917 = vmatprep.subr.mxu0 0.0
    %3918 = vmatpush1.msra.mxu0 0.0
    %3919 = vmatprep.subr.mxu0 0.0
    %3920 = vmatpush1.msra.mxu0 0.0
    %3921 = vmatprep.subr.mxu0 0.0
    %3922 = vmatpush1.msra.mxu0 0.0
    %3923 = vmatprep.subr.mxu0 0.0
    %3924 = vmatpush1.msra.mxu0 0.0
    %3925 = vmatprep.mubr.f32.mxu0 0.0
    %3926 = vmatmul.mubr.f32.gmra.mrb[0].mxu0 %v3856
    %v3927 = vpop.f32.mrb[0].mxu0
    %v3928 = vadd.f32 %v3853, %v3927
    %v3929 = vpop.f32.mrb[0].mxu0
    %3930 = vmatprep.mubr.f32.mxu0 0.0
    %3931 = vmatmul.mubr.f32.gmra.mrb[0].mxu0 %v3859
    %v3932 = vpop.f32.mrb[0].mxu0
    %v3933 = vadd.f32 %v3853, %v3932
    %v3934 = vpop.f32.mrb[0].mxu0
    %3935 = vdwg.mxu0
    %v3936 = vmax.f32 %v3928, 0.0
    %v3937 = vmax.f32 %v3933, 0.0
    %v3938 = vld [vmem:[%s10] sm:$0xff]
    %v3939 = vld [vmem:[%s10 + $0x8] sm:$0xff]
    %v3940 = vld [vmem:[%s10 + $0x10] sm:$0xff]
    %v3941 = vld [vmem:[%s10 + $0x18] sm:$0xff]
    %v3942 = vld [vmem:[%s10 + $0x20] sm:$0xff]
    %v3943 = vld [vmem:[%s10 + $0x28] sm:$0xff]
    %v3944 = vld [vmem:[%s10 + $0x30] sm:$0xff]
    %v3945 = vld [vmem:[%s10 + $0x38] sm:$0xff]
    %v3946 = vld [vmem:[%s11] sm:$0x1]
    %v3948 = vlaneseq
    %v3949 = vshrl.u32 %v3948, 7
    %v3950 = vsub.s32 0, %v3949
    %v3951 = vrot.slane %v3946, %v3950
    %vm3953 = vcmask 523264
    %v3955 = vsel %vm3953, %v3936, 0
    %v3958 = vsel %vm3953, %v3937, 0
    %3960 = vmatprep.subr.mxu0 0.0
    %3961 = vmatpush1.msra.mxu0 %v3938
    %3962 = vmatprep.subr.mxu0 0.0
    %3963 = vmatpush1.msra.mxu0 %v3939
    %3964 = vmatprep.subr.mxu0 0.0
    %3965 = vmatpush1.msra.mxu0 %v3940
    %3966 = vmatprep.subr.mxu0 0.0
    %3967 = vmatpush1.msra.mxu0 %v3941
    %3968 = vmatprep.subr.mxu0 0.0
    %3969 = vmatpush1.msra.mxu0 %v3942
    %3970 = vmatprep.subr.mxu0 0.0
    %3971 = vmatpush1.msra.mxu0 %v3943
    %3972 = vmatprep.subr.mxu0 0.0
    %3973 = vmatpush1.msra.mxu0 %v3944
    %3974 = vmatprep.subr.mxu0 0.0
    %3975 = vmatpush1.msra.mxu0 %v3945
    %3976 = vmatprep.subr.mxu0 0.0
    %3977 = vmatpush1.msra.mxu0 0.0
    %3978 = vmatprep.subr.mxu0 0.0
    %3979 = vmatpush1.msra.mxu0 0.0
    %3980 = vmatprep.subr.mxu0 0.0
    %3981 = vmatpush1.msra.mxu0 0.0
    %3982 = vmatprep.subr.mxu0 0.0
    %3983 = vmatpush1.msra.mxu0 0.0
    %3984 = vmatprep.subr.mxu0 0.0
    %3985 = vmatpush1.msra.mxu0 0.0
    %3986 = vmatprep.subr.mxu0 0.0
    %3987 = vmatpush1.msra.mxu0 0.0
    %3988 = vmatprep.subr.mxu0 0.0
    %3989 = vmatpush1.msra.mxu0 0.0
    %3990 = vmatprep.subr.mxu0 0.0
    %3991 = vmatpush1.msra.mxu0 0.0
    %3992 = vmatprep.subr.mxu0 0.0
    %3993 = vmatpush1.msra.mxu0 0.0
    %3994 = vmatprep.subr.mxu0 0.0
    %3995 = vmatpush1.msra.mxu0 0.0
    %3996 = vmatprep.subr.mxu0 0.0
    %3997 = vmatpush1.msra.mxu0 0.0
    %3998 = vmatprep.subr.mxu0 0.0
    %3999 = vmatpush1.msra.mxu0 0.0
    %4000 = vmatprep.subr.mxu0 0.0
    %4001 = vmatpush1.msra.mxu0 0.0
    %4002 = vmatprep.subr.mxu0 0.0
    %4003 = vmatpush1.msra.mxu0 0.0
    %4004 = vmatprep.subr.mxu0 0.0
    %4005 = vmatpush1.msra.mxu0 0.0
    %4006 = vmatprep.subr.mxu0 0.0
    %4007 = vmatpush1.msra.mxu0 0.0
    %4008 = vmatprep.subr.mxu0 0.0
    %4009 = vmatpush1.msra.mxu0 0.0
    %4010 = vmatprep.subr.mxu0 0.0
    %4011 = vmatpush1.msra.mxu0 0.0
    %4012 = vmatprep.subr.mxu0 0.0
    %4013 = vmatpush1.msra.mxu0 0.0
    %4014 = vmatprep.subr.mxu0 0.0
    %4015 = vmatpush1.msra.mxu0 0.0
    %4016 = vmatprep.subr.mxu0 0.0
    %4017 = vmatpush1.msra.mxu0 0.0
    %4018 = vmatprep.subr.mxu0 0.0
    %4019 = vmatpush1.msra.mxu0 0.0
    %4020 = vmatprep.subr.mxu0 0.0
    %4021 = vmatpush1.msra.mxu0 0.0
    %4022 = vmatprep.subr.mxu0 0.0
    %4023 = vmatpush1.msra.mxu0 0.0
    %4024 = vmatprep.mubr.f32.mxu0 0.0
    %4025 = vmatmul.mubr.f32.gmra.mrb[0].mxu0 %v3955
    %v4026 = vpop.f32.mrb[0].mxu0
    %v4027 = vadd.f32 %v3951, %v4026
    %v4028 = vpop.f32.mrb[0].mxu0
    %4029 = vmatprep.mubr.f32.mxu0 0.0
    %4030 = vmatmul.mubr.f32.gmra.mrb[0].mxu0 %v3958
    %v4031 = vpop.f32.mrb[0].mxu0
    %v4032 = vadd.f32 %v3951, %v4031
    %v4033 = vpop.f32.mrb[0].mxu0
    %4034 = vdwg.mxu0
    %v4035 = vadd.f32 %v3842, %v4027
    %v4036 = vadd.f32 %v3843, %v4032
    %v4037 = vld [vmem:[%s12] sm:$0x1]
    %v4038 = vld [vmem:[%s13] sm:$0x1]
    %v4039 = vsel %vm64, %v4035, 0.0
    %4040 = vadd.xlane.f32.xlu0 %v4039
    %v4041 = vpop.xlane.xlu0 %4040
    %v4042 = vsel %vm64, %v4036, 0.0
    %4043 = vadd.xlane.f32.xlu0 %v4042
    %v4044 = vpop.xlane.xlu0 %4043
    %v4045 = vmul.f32 %v4041, %v3807
    %v4046 = vmul.f32 %v4044, %v3807
    %v4047 = vsub.f32 %v4035, %v4045
    %v4048 = vsub.f32 %v4036, %v4046
    %v4049 = vmul.f32 %v4047, %v4047
    %v4050 = vmul.f32 %v4048, %v4048
    %v4051 = vsel %vm64, %v4049, 0.0
    %4052 = vadd.xlane.f32.xlu0 %v4051
    %v4053 = vpop.xlane.xlu0 %4052
    %v4054 = vsel %vm64, %v4050, 0.0
    %4055 = vadd.xlane.f32.xlu0 %v4054
    %v4056 = vpop.xlane.xlu0 %4055
    %v4057 = vmul.f32 %v4053, %v3807
    %v4058 = vmul.f32 %v4056, %v3807
    %v4059 = vadd.f32 %v4057, 1e-05
    %v4060 = vadd.f32 %v4058, 1e-05
    %v4061 = vrsqrt.pop %v4059
    %v4062 = vrsqrt.pop %v4060
    %v4063 = vmul.f32 %v4047, %v4061
    %v4064 = vmul.f32 %v4048, %v4062
    %v4066 = vlaneseq
    %v4067 = vshrl.u32 %v4066, 7
    %v4068 = vsub.s32 0, %v4067
    %v4069 = vrot.slane %v4037, %v4068
    %v4071 = vmul.f32 %v4063, %v4069
    %v4072 = vmul.f32 %v4064, %v4069
    %v4074 = vlaneseq
    %v4075 = vshrl.u32 %v4074, 7
    %v4076 = vsub.s32 0, %v4075
    %v4077 = vrot.slane %v4038, %v4076
    %v4079 = vadd.f32 %v4071, %v4077
    %v4080 = vadd.f32 %v4072, %v4077
    %s4081 = scalar_lea.vmem %s2, 384
    %v4082 = vld [vmem:[%s4081] sm:$0xff]
    %v4083 = vld [vmem:[%s4081 + $0x8] sm:$0xff]
    %v4084 = vld [vmem:[%s4081 + $0x10] sm:$0xff]
    %v4085 = vld [vmem:[%s4081 + $0x18] sm:$0xff]
    %s4086 = scalar_lea.vmem %s3, 12
    %v4087 = vld [vmem:[%s4086] sm:$0x1]
    %v4089 = vlaneseq
    %v4090 = vshrl.u32 %v4089, 7
    %v4091 = vsub.s32 0, %v4090
    %v4092 = vrot.slane %v4087, %v4091
    %v4095 = vsel %vm64, %v4079, 0
    %4097 = vmatprep.subr.mxu0 0.0
    %4098 = vmatpush1.msra.mxu0 %v4082
    %4099 = vmatprep.subr.mxu0 0.0
    %4100 = vmatpush1.msra.mxu0 %v4083
    %4101 = vmatprep.subr.mxu0 0.0
    %4102 = vmatpush1.msra.mxu0 %v4084
    %4103 = vmatprep.subr.mxu0 0.0
    %4104 = vmatpush1.msra.mxu0 %v4085
    %4105 = vmatprep.subr.mxu0 0.0
    %4106 = vmatpush1.msra.mxu0 0.0
    %4107 = vmatprep.subr.mxu0 0.0
    %4108 = vmatpush1.msra.mxu0 0.0
    %4109 = vmatprep.subr.mxu0 0.0
    %4110 = vmatpush1.msra.mxu0 0.0
    %4111 = vmatprep.subr.mxu0 0.0
    %4112 = vmatpush1.msra.mxu0 0.0
    %4113 = vmatprep.subr.mxu0 0.0
    %4114 = vmatpush1.msra.mxu0 0.0
    %4115 = vmatprep.subr.mxu0 0.0
    %4116 = vmatpush1.msra.mxu0 0.0
    %4117 = vmatprep.subr.mxu0 0.0
    %4118 = vmatpush1.msra.mxu0 0.0
    %4119 = vmatprep.subr.mxu0 0.0
    %4120 = vmatpush1.msra.mxu0 0.0
    %4121 = vmatprep.subr.mxu0 0.0
    %4122 = vmatpush1.msra.mxu0 0.0
    %4123 = vmatprep.subr.mxu0 0.0
    %4124 = vmatpush1.msra.mxu0 0.0
    %4125 = vmatprep.subr.mxu0 0.0
    %4126 = vmatpush1.msra.mxu0 0.0
    %4127 = vmatprep.subr.mxu0 0.0
    %4128 = vmatpush1.msra.mxu0 0.0
    %4129 = vmatprep.subr.mxu0 0.0
    %4130 = vmatpush1.msra.mxu0 0.0
    %4131 = vmatprep.subr.mxu0 0.0
    %4132 = vmatpush1.msra.mxu0 0.0
    %4133 = vmatprep.subr.mxu0 0.0
    %4134 = vmatpush1.msra.mxu0 0.0
    %4135 = vmatprep.subr.mxu0 0.0
    %4136 = vmatpush1.msra.mxu0 0.0
    %4137 = vmatprep.subr.mxu0 0.0
    %4138 = vmatpush1.msra.mxu0 0.0
    %4139 = vmatprep.subr.mxu0 0.0
    %4140 = vmatpush1.msra.mxu0 0.0
    %4141 = vmatprep.subr.mxu0 0.0
    %4142 = vmatpush1.msra.mxu0 0.0
    %4143 = vmatprep.subr.mxu0 0.0
    %4144 = vmatpush1.msra.mxu0 0.0
    %4145 = vmatprep.subr.mxu0 0.0
    %4146 = vmatpush1.msra.mxu0 0.0
    %4147 = vmatprep.subr.mxu0 0.0
    %4148 = vmatpush1.msra.mxu0 0.0
    %4149 = vmatprep.subr.mxu0 0.0
    %4150 = vmatpush1.msra.mxu0 0.0
    %4151 = vmatprep.subr.mxu0 0.0
    %4152 = vmatpush1.msra.mxu0 0.0
    %4153 = vmatprep.subr.mxu0 0.0
    %4154 = vmatpush1.msra.mxu0 0.0
    %4155 = vmatprep.subr.mxu0 0.0
    %4156 = vmatpush1.msra.mxu0 0.0
    %4157 = vmatprep.subr.mxu0 0.0
    %4158 = vmatpush1.msra.mxu0 0.0
    %4159 = vmatprep.subr.mxu0 0.0
    %4160 = vmatpush1.msra.mxu0 0.0
    %4161 = vmatprep.mubr.f32.mxu0 0.0
    %4162 = vmatmul.mubr.f32.gmra.mrb[0].mxu0 %v4095
    %v4163 = vpop.f32.mrb[0].mxu0
    %v4164 = vadd.f32 %v4092, %v4163
    %v4165 = vpop.f32.mrb[0].mxu0
    %4166 = vdwg.mxu0
    %s4167 = scalar_lea.vmem %s2, 416
    %v4168 = vld [vmem:[%s4167] sm:$0xff]
    %v4169 = vld [vmem:[%s4167 + $0x8] sm:$0xff]
    %v4170 = vld [vmem:[%s4167 + $0x10] sm:$0xff]
    %v4171 = vld [vmem:[%s4167 + $0x18] sm:$0xff]
    %s4172 = scalar_lea.vmem %s3, 13
    %v4173 = vld [vmem:[%s4172] sm:$0x1]
    %v4175 = vlaneseq
    %v4176 = vshrl.u32 %v4175, 7
    %v4177 = vsub.s32 0, %v4176
    %v4178 = vrot.slane %v4173, %v4177
    %4180 = vmatprep.subr.mxu0 0.0
    %4181 = vmatpush1.msra.mxu0 %v4168
    %4182 = vmatprep.subr.mxu0 0.0
    %4183 = vmatpush1.msra.mxu0 %v4169
    %4184 = vmatprep.subr.mxu0 0.0
    %4185 = vmatpush1.msra.mxu0 %v4170
    %4186 = vmatprep.subr.mxu0 0.0
    %4187 = vmatpush1.msra.mxu0 %v4171
    %4188 = vmatprep.subr.mxu0 0.0
    %4189 = vmatpush1.msra.mxu0 0.0
    %4190 = vmatprep.subr.mxu0 0.0
    %4191 = vmatpush1.msra.mxu0 0.0
    %4192 = vmatprep.subr.mxu0 0.0
    %4193 = vmatpush1.msra.mxu0 0.0
    %4194 = vmatprep.subr.mxu0 0.0
    %4195 = vmatpush1.msra.mxu0 0.0
    %4196 = vmatprep.subr.mxu0 0.0
    %4197 = vmatpush1.msra.mxu0 0.0
    %4198 = vmatprep.subr.mxu0 0.0
    %4199 = vmatpush1.msra.mxu0 0.0
    %4200 = vmatprep.subr.mxu0 0.0
    %4201 = vmatpush1.msra.mxu0 0.0
    %4202 = vmatprep.subr.mxu0 0.0
    %4203 = vmatpush1.msra.mxu0 0.0
    %4204 = vmatprep.subr.mxu0 0.0
    %4205 = vmatpush1.msra.mxu0 0.0
    %4206 = vmatprep.subr.mxu0 0.0
    %4207 = vmatpush1.msra.mxu0 0.0
    %4208 = vmatprep.subr.mxu0 0.0
    %4209 = vmatpush1.msra.mxu0 0.0
    %4210 = vmatprep.subr.mxu0 0.0
    %4211 = vmatpush1.msra.mxu0 0.0
    %4212 = vmatprep.subr.mxu0 0.0
    %4213 = vmatpush1.msra.mxu0 0.0
    %4214 = vmatprep.subr.mxu0 0.0
    %4215 = vmatpush1.msra.mxu0 0.0
    %4216 = vmatprep.subr.mxu0 0.0
    %4217 = vmatpush1.msra.mxu0 0.0
    %4218 = vmatprep.subr.mxu0 0.0
    %4219 = vmatpush1.msra.mxu0 0.0
    %4220 = vmatprep.subr.mxu0 0.0
    %4221 = vmatpush1.msra.mxu0 0.0
    %4222 = vmatprep.subr.mxu0 0.0
    %4223 = vmatpush1.msra.mxu0 0.0
    %4224 = vmatprep.subr.mxu0 0.0
    %4225 = vmatpush1.msra.mxu0 0.0
    %4226 = vmatprep.subr.mxu0 0.0
    %4227 = vmatpush1.msra.mxu0 0.0
    %4228 = vmatprep.subr.mxu0 0.0
    %4229 = vmatpush1.msra.mxu0 0.0
    %4230 = vmatprep.subr.mxu0 0.0
    %4231 = vmatpush1.msra.mxu0 0.0
    %4232 = vmatprep.subr.mxu0 0.0
    %4233 = vmatpush1.msra.mxu0 0.0
    %4234 = vmatprep.subr.mxu0 0.0
    %4235 = vmatpush1.msra.mxu0 0.0
    %4236 = vmatprep.subr.mxu0 0.0
    %4237 = vmatpush1.msra.mxu0 0.0
    %4238 = vmatprep.subr.mxu0 0.0
    %4239 = vmatpush1.msra.mxu0 0.0
    %4240 = vmatprep.subr.mxu0 0.0
    %4241 = vmatpush1.msra.mxu0 0.0
    %4242 = vmatprep.subr.mxu0 0.0
    %4243 = vmatpush1.msra.mxu0 0.0
    %4244 = vmatprep.mubr.f32.mxu0 0.0
    %4245 = vmatmul.mubr.f32.gmra.mrb[0].mxu0 %v4095
    %v4246 = vpop.f32.mrb[0].mxu0
    %v4247 = vadd.f32 %v4178, %v4246
    %v4248 = vpop.f32.mrb[0].mxu0
    %4249 = vdwg.mxu0
    %s4250 = scalar_lea.vmem %s2, 448
    %v4251 = vld [vmem:[%s4250] sm:$0xff]
    %v4252 = vld [vmem:[%s4250 + $0x8] sm:$0xff]
    %v4253 = vld [vmem:[%s4250 + $0x10] sm:$0xff]
    %v4254 = vld [vmem:[%s4250 + $0x18] sm:$0xff]
    %s4255 = scalar_lea.vmem %s3, 14
    %v4256 = vld [vmem:[%s4255] sm:$0x1]
    %v4258 = vlaneseq
    %v4259 = vshrl.u32 %v4258, 7
    %v4260 = vsub.s32 0, %v4259
    %v4261 = vrot.slane %v4256, %v4260
    %4263 = vmatprep.subr.mxu0 0.0
    %4264 = vmatpush1.msra.mxu0 %v4251
    %4265 = vmatprep.subr.mxu0 0.0
    %4266 = vmatpush1.msra.mxu0 %v4252
    %4267 = vmatprep.subr.mxu0 0.0
    %4268 = vmatpush1.msra.mxu0 %v4253
    %4269 = vmatprep.subr.mxu0 0.0
    %4270 = vmatpush1.msra.mxu0 %v4254
    %4271 = vmatprep.subr.mxu0 0.0
    %4272 = vmatpush1.msra.mxu0 0.0
    %4273 = vmatprep.subr.mxu0 0.0
    %4274 = vmatpush1.msra.mxu0 0.0
    %4275 = vmatprep.subr.mxu0 0.0
    %4276 = vmatpush1.msra.mxu0 0.0
    %4277 = vmatprep.subr.mxu0 0.0
    %4278 = vmatpush1.msra.mxu0 0.0
    %4279 = vmatprep.subr.mxu0 0.0
    %4280 = vmatpush1.msra.mxu0 0.0
    %4281 = vmatprep.subr.mxu0 0.0
    %4282 = vmatpush1.msra.mxu0 0.0
    %4283 = vmatprep.subr.mxu0 0.0
    %4284 = vmatpush1.msra.mxu0 0.0
    %4285 = vmatprep.subr.mxu0 0.0
    %4286 = vmatpush1.msra.mxu0 0.0
    %4287 = vmatprep.subr.mxu0 0.0
    %4288 = vmatpush1.msra.mxu0 0.0
    %4289 = vmatprep.subr.mxu0 0.0
    %4290 = vmatpush1.msra.mxu0 0.0
    %4291 = vmatprep.subr.mxu0 0.0
    %4292 = vmatpush1.msra.mxu0 0.0
    %4293 = vmatprep.subr.mxu0 0.0
    %4294 = vmatpush1.msra.mxu0 0.0
    %4295 = vmatprep.subr.mxu0 0.0
    %4296 = vmatpush1.msra.mxu0 0.0
    %4297 = vmatprep.subr.mxu0 0.0
    %4298 = vmatpush1.msra.mxu0 0.0
    %4299 = vmatprep.subr.mxu0 0.0
    %4300 = vmatpush1.msra.mxu0 0.0
    %4301 = vmatprep.subr.mxu0 0.0
    %4302 = vmatpush1.msra.mxu0 0.0
    %4303 = vmatprep.subr.mxu0 0.0
    %4304 = vmatpush1.msra.mxu0 0.0
    %4305 = vmatprep.subr.mxu0 0.0
    %4306 = vmatpush1.msra.mxu0 0.0
    %4307 = vmatprep.subr.mxu0 0.0
    %4308 = vmatpush1.msra.mxu0 0.0
    %4309 = vmatprep.subr.mxu0 0.0
    %4310 = vmatpush1.msra.mxu0 0.0
    %4311 = vmatprep.subr.mxu0 0.0
    %4312 = vmatpush1.msra.mxu0 0.0
    %4313 = vmatprep.subr.mxu0 0.0
    %4314 = vmatpush1.msra.mxu0 0.0
    %4315 = vmatprep.subr.mxu0 0.0
    %4316 = vmatpush1.msra.mxu0 0.0
    %4317 = vmatprep.subr.mxu0 0.0
    %4318 = vmatpush1.msra.mxu0 0.0
    %4319 = vmatprep.subr.mxu0 0.0
    %4320 = vmatpush1.msra.mxu0 0.0
    %4321 = vmatprep.subr.mxu0 0.0
    %4322 = vmatpush1.msra.mxu0 0.0
    %4323 = vmatprep.subr.mxu0 0.0
    %4324 = vmatpush1.msra.mxu0 0.0
    %4325 = vmatprep.subr.mxu0 0.0
    %4326 = vmatpush1.msra.mxu0 0.0
    %4327 = vmatprep.mubr.f32.mxu0 0.0
    %4328 = vmatmul.mubr.f32.gmra.mrb[0].mxu0 %v4095
    %v4329 = vpop.f32.mrb[0].mxu0
    %v4330 = vadd.f32 %v4261, %v4329
    %v4331 = vpop.f32.mrb[0].mxu0
    %4332 = vdwg.mxu0
    %v4334 = vsel %vm304, %v4164, 0
    %v4337 = vsel %vm304, %v4247, 0
    %4339 = vmatprep.subr.mxu0 0.0
    %4340 = vmatpush1.xpose.msra.mxu0 %v4337
    %4341 = vmatprep.subr.mxu0 0.0
    %4342 = vmatpush1.xpose.msra.mxu0 0.0
    %4343 = vmatprep.subr.mxu0 0.0
    %4344 = vmatpush1.xpose.msra.mxu0 0.0
    %4345 = vmatprep.subr.mxu0 0.0
    %4346 = vmatpush1.xpose.msra.mxu0 0.0
    %4347 = vmatprep.subr.mxu0 0.0
    %4348 = vmatpush1.xpose.msra.mxu0 0.0
    %4349 = vmatprep.subr.mxu0 0.0
    %4350 = vmatpush1.xpose.msra.mxu0 0.0
    %4351 = vmatprep.subr.mxu0 0.0
    %4352 = vmatpush1.xpose.msra.mxu0 0.0
    %4353 = vmatprep.subr.mxu0 0.0
    %4354 = vmatpush1.xpose.msra.mxu0 0.0
    %4355 = vmatprep.subr.mxu0 0.0
    %4356 = vmatpush1.xpose.msra.mxu0 0.0
    %4357 = vmatprep.subr.mxu0 0.0
    %4358 = vmatpush1.xpose.msra.mxu0 0.0
    %4359 = vmatprep.subr.mxu0 0.0
    %4360 = vmatpush1.xpose.msra.mxu0 0.0
    %4361 = vmatprep.subr.mxu0 0.0
    %4362 = vmatpush1.xpose.msra.mxu0 0.0
    %4363 = vmatprep.subr.mxu0 0.0
    %4364 = vmatpush1.xpose.msra.mxu0 0.0
    %4365 = vmatprep.subr.mxu0 0.0
    %4366 = vmatpush1.xpose.msra.mxu0 0.0
    %4367 = vmatprep.subr.mxu0 0.0
    %4368 = vmatpush1.xpose.msra.mxu0 0.0
    %4369 = vmatprep.subr.mxu0 0.0
    %4370 = vmatpush1.xpose.msra.mxu0 0.0
    %4371 = vmatprep.subr.mxu0 0.0
    %4372 = vmatpush1.xpose.msra.mxu0 0.0
    %4373 = vmatprep.subr.mxu0 0.0
    %4374 = vmatpush1.xpose.msra.mxu0 0.0
    %4375 = vmatprep.subr.mxu0 0.0
    %4376 = vmatpush1.xpose.msra.mxu0 0.0
    %4377 = vmatprep.subr.mxu0 0.0
    %4378 = vmatpush1.xpose.msra.mxu0 0.0
    %4379 = vmatprep.subr.mxu0 0.0
    %4380 = vmatpush1.xpose.msra.mxu0 0.0
    %4381 = vmatprep.subr.mxu0 0.0
    %4382 = vmatpush1.xpose.msra.mxu0 0.0
    %4383 = vmatprep.subr.mxu0 0.0
    %4384 = vmatpush1.xpose.msra.mxu0 0.0
    %4385 = vmatprep.subr.mxu0 0.0
    %4386 = vmatpush1.xpose.msra.mxu0 0.0
    %4387 = vmatprep.subr.mxu0 0.0
    %4388 = vmatpush1.xpose.msra.mxu0 0.0
    %4389 = vmatprep.subr.mxu0 0.0
    %4390 = vmatpush1.xpose.msra.mxu0 0.0
    %4391 = vmatprep.subr.mxu0 0.0
    %4392 = vmatpush1.xpose.msra.mxu0 0.0
    %4393 = vmatprep.subr.mxu0 0.0
    %4394 = vmatpush1.xpose.msra.mxu0 0.0
    %4395 = vmatprep.subr.mxu0 0.0
    %4396 = vmatpush1.xpose.msra.mxu0 0.0
    %4397 = vmatprep.subr.mxu0 0.0
    %4398 = vmatpush1.xpose.msra.mxu0 0.0
    %4399 = vmatprep.subr.mxu0 0.0
    %4400 = vmatpush1.xpose.msra.mxu0 0.0
    %4401 = vmatprep.subr.mxu0 0.0
    %4402 = vmatpush1.xpose.msra.mxu0 0.0
    %4403 = vmatprep.mubr.f32.mxu0 0.0
    %4404 = vmatmul.mubr.f32.gmra.mrb[0].mxu0 %v4334
    %v4405 = vpop.f32.mrb[0].mxu0
    %v4406 = vadd.f32 0.0, %v4405
    %v4407 = vpop.f32.mrb[0].mxu0
    %4408 = vdwg.mxu0
    %v4409 = vmul.f32 %v4406, 0.35355338
    %v4410 = vadd.f32 %v4409, %v52
    %v4411 = vsel %vm304, %v4410, -inf
    %4412 = vmax.xlane.f32.xlu0 %v4411
    %v4413 = vpop.xlane.xlu0 %4412
    %v4414 = vsub.f32 %v4410, %v4413
    %v4415 = vmul.f32 %v4414, 1.442695
    %v4416 = vpow.pop %v4415
    %v4417 = vsel %vm304, %v4416, 0.0
    %4418 = vadd.xlane.f32.xlu0 %v4417
    %v4419 = vpop.xlane.xlu0 %4418
    %v4420 = vrcp.pop %v4419
    %v4421 = vmul.f32 %v4416, %v4420
    %v4423 = vsel %vm304, %v4421, 0
    %4425 = vmatprep.subr.mxu0 0.0
    %4426 = vmatpush1.msra.mxu0 %v4330
    %4427 = vmatprep.subr.mxu0 0.0
    %4428 = vmatpush1.msra.mxu0 0.0
    %4429 = vmatprep.subr.mxu0 0.0
    %4430 = vmatpush1.msra.mxu0 0.0
    %4431 = vmatprep.subr.mxu0 0.0
    %4432 = vmatpush1.msra.mxu0 0.0
    %4433 = vmatprep.subr.mxu0 0.0
    %4434 = vmatpush1.msra.mxu0 0.0
    %4435 = vmatprep.subr.mxu0 0.0
    %4436 = vmatpush1.msra.mxu0 0.0
    %4437 = vmatprep.subr.mxu0 0.0
    %4438 = vmatpush1.msra.mxu0 0.0
    %4439 = vmatprep.subr.mxu0 0.0
    %4440 = vmatpush1.msra.mxu0 0.0
    %4441 = vmatprep.subr.mxu0 0.0
    %4442 = vmatpush1.msra.mxu0 0.0
    %4443 = vmatprep.subr.mxu0 0.0
    %4444 = vmatpush1.msra.mxu0 0.0
    %4445 = vmatprep.subr.mxu0 0.0
    %4446 = vmatpush1.msra.mxu0 0.0
    %4447 = vmatprep.subr.mxu0 0.0
    %4448 = vmatpush1.msra.mxu0 0.0
    %4449 = vmatprep.subr.mxu0 0.0
    %4450 = vmatpush1.msra.mxu0 0.0
    %4451 = vmatprep.subr.mxu0 0.0
    %4452 = vmatpush1.msra.mxu0 0.0
    %4453 = vmatprep.subr.mxu0 0.0
    %4454 = vmatpush1.msra.mxu0 0.0
    %4455 = vmatprep.subr.mxu0 0.0
    %4456 = vmatpush1.msra.mxu0 0.0
    %4457 = vmatprep.subr.mxu0 0.0
    %4458 = vmatpush1.msra.mxu0 0.0
    %4459 = vmatprep.subr.mxu0 0.0
    %4460 = vmatpush1.msra.mxu0 0.0
    %4461 = vmatprep.subr.mxu0 0.0
    %4462 = vmatpush1.msra.mxu0 0.0
    %4463 = vmatprep.subr.mxu0 0.0
    %4464 = vmatpush1.msra.mxu0 0.0
    %4465 = vmatprep.subr.mxu0 0.0
    %4466 = vmatpush1.msra.mxu0 0.0
    %4467 = vmatprep.subr.mxu0 0.0
    %4468 = vmatpush1.msra.mxu0 0.0
    %4469 = vmatprep.subr.mxu0 0.0
    %4470 = vmatpush1.msra.mxu0 0.0
    %4471 = vmatprep.subr.mxu0 0.0
    %4472 = vmatpush1.msra.mxu0 0.0
    %4473 = vmatprep.subr.mxu0 0.0
    %4474 = vmatpush1.msra.mxu0 0.0
    %4475 = vmatprep.subr.mxu0 0.0
    %4476 = vmatpush1.msra.mxu0 0.0
    %4477 = vmatprep.subr.mxu0 0.0
    %4478 = vmatpush1.msra.mxu0 0.0
    %4479 = vmatprep.subr.mxu0 0.0
    %4480 = vmatpush1.msra.mxu0 0.0
    %4481 = vmatprep.subr.mxu0 0.0
    %4482 = vmatpush1.msra.mxu0 0.0
    %4483 = vmatprep.subr.mxu0 0.0
    %4484 = vmatpush1.msra.mxu0 0.0
    %4485 = vmatprep.subr.mxu0 0.0
    %4486 = vmatpush1.msra.mxu0 0.0
    %4487 = vmatprep.subr.mxu0 0.0
    %4488 = vmatpush1.msra.mxu0 0.0
    %4489 = vmatprep.mubr.f32.mxu0 0.0
    %4490 = vmatmul.mubr.f32.gmra.mrb[0].mxu0 %v4423
    %v4491 = vpop.f32.mrb[0].mxu0
    %v4492 = vadd.f32 0.0, %v4491
    %v4493 = vpop.f32.mrb[0].mxu0
    %4494 = vdwg.mxu0
    %s4495 = scalar_lea.vmem %s4, 32
    %v4496 = vld [vmem:[%s4495] sm:$0xff]
    %s4497 = scalar_lea.vmem %s2, 480
    %v4498 = vld [vmem:[%s4497] sm:$0xff]
    %v4499 = vld [vmem:[%s4497 + $0x8] sm:$0xff]
    %v4500 = vld [vmem:[%s4497 + $0x10] sm:$0xff]
    %v4501 = vld [vmem:[%s4497 + $0x18] sm:$0xff]
    %s4502 = scalar_lea.vmem %s3, 15
    %v4503 = vld [vmem:[%s4502] sm:$0x1]
    %v4505 = vlaneseq
    %v4506 = vshrl.u32 %v4505, 7
    %v4507 = vsub.s32 0, %v4506
    %v4508 = vrot.slane %v4503, %v4507
    %4510 = vmatprep.subr.mxu0 0.0
    %4511 = vmatpush1.msra.mxu0 %v4498
    %4512 = vmatprep.subr.mxu0 0.0
    %4513 = vmatpush1.msra.mxu0 %v4499
    %4514 = vmatprep.subr.mxu0 0.0
    %4515 = vmatpush1.msra.mxu0 %v4500
    %4516 = vmatprep.subr.mxu0 0.0
    %4517 = vmatpush1.msra.mxu0 %v4501
    %4518 = vmatprep.subr.mxu0 0.0
    %4519 = vmatpush1.msra.mxu0 0.0
    %4520 = vmatprep.subr.mxu0 0.0
    %4521 = vmatpush1.msra.mxu0 0.0
    %4522 = vmatprep.subr.mxu0 0.0
    %4523 = vmatpush1.msra.mxu0 0.0
    %4524 = vmatprep.subr.mxu0 0.0
    %4525 = vmatpush1.msra.mxu0 0.0
    %4526 = vmatprep.subr.mxu0 0.0
    %4527 = vmatpush1.msra.mxu0 0.0
    %4528 = vmatprep.subr.mxu0 0.0
    %4529 = vmatpush1.msra.mxu0 0.0
    %4530 = vmatprep.subr.mxu0 0.0
    %4531 = vmatpush1.msra.mxu0 0.0
    %4532 = vmatprep.subr.mxu0 0.0
    %4533 = vmatpush1.msra.mxu0 0.0
    %4534 = vmatprep.subr.mxu0 0.0
    %4535 = vmatpush1.msra.mxu0 0.0
    %4536 = vmatprep.subr.mxu0 0.0
    %4537 = vmatpush1.msra.mxu0 0.0
    %4538 = vmatprep.subr.mxu0 0.0
    %4539 = vmatpush1.msra.mxu0 0.0
    %4540 = vmatprep.subr.mxu0 0.0
    %4541 = vmatpush1.msra.mxu0 0.0
    %4542 = vmatprep.subr.mxu0 0.0
    %4543 = vmatpush1.msra.mxu0 0.0
    %4544 = vmatprep.subr.mxu0 0.0
    %4545 = vmatpush1.msra.mxu0 0.0
    %4546 = vmatprep.subr.mxu0 0.0
    %4547 = vmatpush1.msra.mxu0 0.0
    %4548 = vmatprep.subr.mxu0 0.0
    %4549 = vmatpush1.msra.mxu0 0.0
    %4550 = vmatprep.subr.mxu0 0.0
    %4551 = vmatpush1.msra.mxu0 0.0
    %4552 = vmatprep.subr.mxu0 0.0
    %4553 = vmatpush1.msra.mxu0 0.0
    %4554 = vmatprep.subr.mxu0 0.0
    %4555 = vmatpush1.msra.mxu0 0.0
    %4556 = vmatprep.subr.mxu0 0.0
    %4557 = vmatpush1.msra.mxu0 0.0
    %4558 = vmatprep.subr.mxu0 0.0
    %4559 = vmatpush1.msra.mxu0 0.0
    %4560 = vmatprep.subr.mxu0 0.0
    %4561 = vmatpush1.msra.mxu0 0.0
    %4562 = vmatprep.subr.mxu0 0.0
    %4563 = vmatpush1.msra.mxu0 0.0
    %4564 = vmatprep.subr.mxu0 0.0
    %4565 = vmatpush1.msra.mxu0 0.0
    %4566 = vmatprep.subr.mxu0 0.0
    %4567 = vmatpush1.msra.mxu0 0.0
    %4568 = vmatprep.subr.mxu0 0.0
    %4569 = vmatpush1.msra.mxu0 0.0
    %4570 = vmatprep.subr.mxu0 0.0
    %4571 = vmatpush1.msra.mxu0 0.0
    %4572 = vmatprep.subr.mxu0 0.0
    %4573 = vmatpush1.msra.mxu0 0.0
    %4574 = vmatprep.mubr.f32.mxu0 0.0
    %4575 = vmatmul.mubr.f32.gmra.mrb[0].mxu0 %v4095
    %v4576 = vpop.f32.mrb[0].mxu0
    %v4577 = vadd.f32 %v4508, %v4576
    %v4578 = vpop.f32.mrb[0].mxu0
    %4579 = vdwg.mxu0
    %s4580 = scalar_lea.vmem %s2, 512
    %v4581 = vld [vmem:[%s4580] sm:$0xff]
    %v4582 = vld [vmem:[%s4580 + $0x8] sm:$0xff]
    %v4583 = vld [vmem:[%s4580 + $0x10] sm:$0xff]
    %v4584 = vld [vmem:[%s4580 + $0x18] sm:$0xff]
    %s4585 = scalar_lea.vmem %s3, 16
    %v4586 = vld [vmem:[%s4585] sm:$0x1]
    %v4588 = vlaneseq
    %v4589 = vshrl.u32 %v4588, 7
    %v4590 = vsub.s32 0, %v4589
    %v4591 = vrot.slane %v4586, %v4590
    %4593 = vmatprep.subr.mxu0 0.0
    %4594 = vmatpush1.msra.mxu0 %v4581
    %4595 = vmatprep.subr.mxu0 0.0
    %4596 = vmatpush1.msra.mxu0 %v4582
    %4597 = vmatprep.subr.mxu0 0.0
    %4598 = vmatpush1.msra.mxu0 %v4583
    %4599 = vmatprep.subr.mxu0 0.0
    %4600 = vmatpush1.msra.mxu0 %v4584
    %4601 = vmatprep.subr.mxu0 0.0
    %4602 = vmatpush1.msra.mxu0 0.0
    %4603 = vmatprep.subr.mxu0 0.0
    %4604 = vmatpush1.msra.mxu0 0.0
    %4605 = vmatprep.subr.mxu0 0.0
    %4606 = vmatpush1.msra.mxu0 0.0
    %4607 = vmatprep.subr.mxu0 0.0
    %4608 = vmatpush1.msra.mxu0 0.0
    %4609 = vmatprep.subr.mxu0 0.0
    %4610 = vmatpush1.msra.mxu0 0.0
    %4611 = vmatprep.subr.mxu0 0.0
    %4612 = vmatpush1.msra.mxu0 0.0
    %4613 = vmatprep.subr.mxu0 0.0
    %4614 = vmatpush1.msra.mxu0 0.0
    %4615 = vmatprep.subr.mxu0 0.0
    %4616 = vmatpush1.msra.mxu0 0.0
    %4617 = vmatprep.subr.mxu0 0.0
    %4618 = vmatpush1.msra.mxu0 0.0
    %4619 = vmatprep.subr.mxu0 0.0
    %4620 = vmatpush1.msra.mxu0 0.0
    %4621 = vmatprep.subr.mxu0 0.0
    %4622 = vmatpush1.msra.mxu0 0.0
    %4623 = vmatprep.subr.mxu0 0.0
    %4624 = vmatpush1.msra.mxu0 0.0
    %4625 = vmatprep.subr.mxu0 0.0
    %4626 = vmatpush1.msra.mxu0 0.0
    %4627 = vmatprep.subr.mxu0 0.0
    %4628 = vmatpush1.msra.mxu0 0.0
    %4629 = vmatprep.subr.mxu0 0.0
    %4630 = vmatpush1.msra.mxu0 0.0
    %4631 = vmatprep.subr.mxu0 0.0
    %4632 = vmatpush1.msra.mxu0 0.0
    %4633 = vmatprep.subr.mxu0 0.0
    %4634 = vmatpush1.msra.mxu0 0.0
    %4635 = vmatprep.subr.mxu0 0.0
    %4636 = vmatpush1.msra.mxu0 0.0
    %4637 = vmatprep.subr.mxu0 0.0
    %4638 = vmatpush1.msra.mxu0 0.0
    %4639 = vmatprep.subr.mxu0 0.0
    %4640 = vmatpush1.msra.mxu0 0.0
    %4641 = vmatprep.subr.mxu0 0.0
    %4642 = vmatpush1.msra.mxu0 0.0
    %4643 = vmatprep.subr.mxu0 0.0
    %4644 = vmatpush1.msra.mxu0 0.0
    %4645 = vmatprep.subr.mxu0 0.0
    %4646 = vmatpush1.msra.mxu0 0.0
    %4647 = vmatprep.subr.mxu0 0.0
    %4648 = vmatpush1.msra.mxu0 0.0
    %4649 = vmatprep.subr.mxu0 0.0
    %4650 = vmatpush1.msra.mxu0 0.0
    %4651 = vmatprep.subr.mxu0 0.0
    %4652 = vmatpush1.msra.mxu0 0.0
    %4653 = vmatprep.subr.mxu0 0.0
    %4654 = vmatpush1.msra.mxu0 0.0
    %4655 = vmatprep.subr.mxu0 0.0
    %4656 = vmatpush1.msra.mxu0 0.0
    %4657 = vmatprep.mubr.f32.mxu0 0.0
    %4658 = vmatmul.mubr.f32.gmra.mrb[0].mxu0 %v4095
    %v4659 = vpop.f32.mrb[0].mxu0
    %v4660 = vadd.f32 %v4591, %v4659
    %v4661 = vpop.f32.mrb[0].mxu0
    %4662 = vdwg.mxu0
    %s4663 = scalar_lea.vmem %s2, 544
    %v4664 = vld [vmem:[%s4663] sm:$0xff]
    %v4665 = vld [vmem:[%s4663 + $0x8] sm:$0xff]
    %v4666 = vld [vmem:[%s4663 + $0x10] sm:$0xff]
    %v4667 = vld [vmem:[%s4663 + $0x18] sm:$0xff]
    %s4668 = scalar_lea.vmem %s3, 17
    %v4669 = vld [vmem:[%s4668] sm:$0x1]
    %v4671 = vlaneseq
    %v4672 = vshrl.u32 %v4671, 7
    %v4673 = vsub.s32 0, %v4672
    %v4674 = vrot.slane %v4669, %v4673
    %4676 = vmatprep.subr.mxu0 0.0
    %4677 = vmatpush1.msra.mxu0 %v4664
    %4678 = vmatprep.subr.mxu0 0.0
    %4679 = vmatpush1.msra.mxu0 %v4665
    %4680 = vmatprep.subr.mxu0 0.0
    %4681 = vmatpush1.msra.mxu0 %v4666
    %4682 = vmatprep.subr.mxu0 0.0
    %4683 = vmatpush1.msra.mxu0 %v4667
    %4684 = vmatprep.subr.mxu0 0.0
    %4685 = vmatpush1.msra.mxu0 0.0
    %4686 = vmatprep.subr.mxu0 0.0
    %4687 = vmatpush1.msra.mxu0 0.0
    %4688 = vmatprep.subr.mxu0 0.0
    %4689 = vmatpush1.msra.mxu0 0.0
    %4690 = vmatprep.subr.mxu0 0.0
    %4691 = vmatpush1.msra.mxu0 0.0
    %4692 = vmatprep.subr.mxu0 0.0
    %4693 = vmatpush1.msra.mxu0 0.0
    %4694 = vmatprep.subr.mxu0 0.0
    %4695 = vmatpush1.msra.mxu0 0.0
    %4696 = vmatprep.subr.mxu0 0.0
    %4697 = vmatpush1.msra.mxu0 0.0
    %4698 = vmatprep.subr.mxu0 0.0
    %4699 = vmatpush1.msra.mxu0 0.0
    %4700 = vmatprep.subr.mxu0 0.0
    %4701 = vmatpush1.msra.mxu0 0.0
    %4702 = vmatprep.subr.mxu0 0.0
    %4703 = vmatpush1.msra.mxu0 0.0
    %4704 = vmatprep.subr.mxu0 0.0
    %4705 = vmatpush1.msra.mxu0 0.0
    %4706 = vmatprep.subr.mxu0 0.0
    %4707 = vmatpush1.msra.mxu0 0.0
    %4708 = vmatprep.subr.mxu0 0.0
    %4709 = vmatpush1.msra.mxu0 0.0
    %4710 = vmatprep.subr.mxu0 0.0
    %4711 = vmatpush1.msra.mxu0 0.0
    %4712 = vmatprep.subr.mxu0 0.0
    %4713 = vmatpush1.msra.mxu0 0.0
    %4714 = vmatprep.subr.mxu0 0.0
    %4715 = vmatpush1.msra.mxu0 0.0
    %4716 = vmatprep.subr.mxu0 0.0
    %4717 = vmatpush1.msra.mxu0 0.0
    %4718 = vmatprep.subr.mxu0 0.0
    %4719 = vmatpush1.msra.mxu0 0.0
    %4720 = vmatprep.subr.mxu0 0.0
    %4721 = vmatpush1.msra.mxu0 0.0
    %4722 = vmatprep.subr.mxu0 0.0
    %4723 = vmatpush1.msra.mxu0 0.0
    %4724 = vmatprep.subr.mxu0 0.0
    %4725 = vmatpush1.msra.mxu0 0.0
    %4726 = vmatprep.subr.mxu0 0.0
    %4727 = vmatpush1.msra.mxu0 0.0
    %4728 = vmatprep.subr.mxu0 0.0
    %4729 = vmatpush1.msra.mxu0 0.0
    %4730 = vmatprep.subr.mxu0 0.0
    %4731 = vmatpush1.msra.mxu0 0.0
    %4732 = vmatprep.subr.mxu0 0.0
    %4733 = vmatpush1.msra.mxu0 0.0
    %4734 = vmatprep.subr.mxu0 0.0
    %4735 = vmatpush1.msra.mxu0 0.0
    %4736 = vmatprep.subr.mxu0 0.0
    %4737 = vmatpush1.msra.mxu0 0.0
    %4738 = vmatprep.subr.mxu0 0.0
    %4739 = vmatpush1.msra.mxu0 0.0
    %4740 = vmatprep.mubr.f32.mxu0 0.0
    %4741 = vmatmul.mubr.f32.gmra.mrb[0].mxu0 %v4095
    %v4742 = vpop.f32.mrb[0].mxu0
    %v4743 = vadd.f32 %v4674, %v4742
    %v4744 = vpop.f32.mrb[0].mxu0
    %4745 = vdwg.mxu0
    %v4747 = vsel %vm304, %v4577, 0
    %v4750 = vsel %vm304, %v4660, 0
    %4752 = vmatprep.subr.mxu0 0.0
    %4753 = vmatpush1.xpose.msra.mxu0 %v4750
    %4754 = vmatprep.subr.mxu0 0.0
    %4755 = vmatpush1.xpose.msra.mxu0 0.0
    %4756 = vmatprep.subr.mxu0 0.0
    %4757 = vmatpush1.xpose.msra.mxu0 0.0
    %4758 = vmatprep.subr.mxu0 0.0
    %4759 = vmatpush1.xpose.msra.mxu0 0.0
    %4760 = vmatprep.subr.mxu0 0.0
    %4761 = vmatpush1.xpose.msra.mxu0 0.0
    %4762 = vmatprep.subr.mxu0 0.0
    %4763 = vmatpush1.xpose.msra.mxu0 0.0
    %4764 = vmatprep.subr.mxu0 0.0
    %4765 = vmatpush1.xpose.msra.mxu0 0.0
    %4766 = vmatprep.subr.mxu0 0.0
    %4767 = vmatpush1.xpose.msra.mxu0 0.0
    %4768 = vmatprep.subr.mxu0 0.0
    %4769 = vmatpush1.xpose.msra.mxu0 0.0
    %4770 = vmatprep.subr.mxu0 0.0
    %4771 = vmatpush1.xpose.msra.mxu0 0.0
    %4772 = vmatprep.subr.mxu0 0.0
    %4773 = vmatpush1.xpose.msra.mxu0 0.0
    %4774 = vmatprep.subr.mxu0 0.0
    %4775 = vmatpush1.xpose.msra.mxu0 0.0
    %4776 = vmatprep.subr.mxu0 0.0
    %4777 = vmatpush1.xpose.msra.mxu0 0.0
    %4778 = vmatprep.subr.mxu0 0.0
    %4779 = vmatpush1.xpose.msra.mxu0 0.0
    %4780 = vmatprep.subr.mxu0 0.0
    %4781 = vmatpush1.xpose.msra.mxu0 0.0
    %4782 = vmatprep.subr.mxu0 0.0
    %4783 = vmatpush1.xpose.msra.mxu0 0.0
    %4784 = vmatprep.subr.mxu0 0.0
    %4785 = vmatpush1.xpose.msra.mxu0 0.0
    %4786 = vmatprep.subr.mxu0 0.0
    %4787 = vmatpush1.xpose.msra.mxu0 0.0
    %4788 = vmatprep.subr.mxu0 0.0
    %4789 = vmatpush1.xpose.msra.mxu0 0.0
    %4790 = vmatprep.subr.mxu0 0.0
    %4791 = vmatpush1.xpose.msra.mxu0 0.0
    %4792 = vmatprep.subr.mxu0 0.0
    %4793 = vmatpush1.xpose.msra.mxu0 0.0
    %4794 = vmatprep.subr.mxu0 0.0
    %4795 = vmatpush1.xpose.msra.mxu0 0.0
    %4796 = vmatprep.subr.mxu0 0.0
    %4797 = vmatpush1.xpose.msra.mxu0 0.0
    %4798 = vmatprep.subr.mxu0 0.0
    %4799 = vmatpush1.xpose.msra.mxu0 0.0
    %4800 = vmatprep.subr.mxu0 0.0
    %4801 = vmatpush1.xpose.msra.mxu0 0.0
    %4802 = vmatprep.subr.mxu0 0.0
    %4803 = vmatpush1.xpose.msra.mxu0 0.0
    %4804 = vmatprep.subr.mxu0 0.0
    %4805 = vmatpush1.xpose.msra.mxu0 0.0
    %4806 = vmatprep.subr.mxu0 0.0
    %4807 = vmatpush1.xpose.msra.mxu0 0.0
    %4808 = vmatprep.subr.mxu0 0.0
    %4809 = vmatpush1.xpose.msra.mxu0 0.0
    %4810 = vmatprep.subr.mxu0 0.0
    %4811 = vmatpush1.xpose.msra.mxu0 0.0
    %4812 = vmatprep.subr.mxu0 0.0
    %4813 = vmatpush1.xpose.msra.mxu0 0.0
    %4814 = vmatprep.subr.mxu0 0.0
    %4815 = vmatpush1.xpose.msra.mxu0 0.0
    %4816 = vmatprep.mubr.f32.mxu0 0.0
    %4817 = vmatmul.mubr.f32.gmra.mrb[0].mxu0 %v4747
    %v4818 = vpop.f32.mrb[0].mxu0
    %v4819 = vadd.f32 0.0, %v4818
    %v4820 = vpop.f32.mrb[0].mxu0
    %4821 = vdwg.mxu0
    %v4822 = vmul.f32 %v4819, 0.35355338
    %v4823 = vadd.f32 %v4822, %v52
    %v4824 = vsel %vm304, %v4823, -inf
    %4825 = vmax.xlane.f32.xlu0 %v4824
    %v4826 = vpop.xlane.xlu0 %4825
    %v4827 = vsub.f32 %v4823, %v4826
    %v4828 = vmul.f32 %v4827, 1.442695
    %v4829 = vpow.pop %v4828
    %v4830 = vsel %vm304, %v4829, 0.0
    %4831 = vadd.xlane.f32.xlu0 %v4830
    %v4832 = vpop.xlane.xlu0 %4831
    %v4833 = vrcp.pop %v4832
    %v4834 = vmul.f32 %v4829, %v4833
    %v4836 = vsel %vm304, %v4834, 0
    %4838 = vmatprep.subr.mxu0 0.0
    %4839 = vmatpush1.msra.mxu0 %v4743
    %4840 = vmatprep.subr.mxu0 0.0
    %4841 = vmatpush1.msra.mxu0 0.0
    %4842 = vmatprep.subr.mxu0 0.0
    %4843 = vmatpush1.msra.mxu0 0.0
    %4844 = vmatprep.subr.mxu0 0.0
    %4845 = vmatpush1.msra.mxu0 0.0
    %4846 = vmatprep.subr.mxu0 0.0
    %4847 = vmatpush1.msra.mxu0 0.0
    %4848 = vmatprep.subr.mxu0 0.0
    %4849 = vmatpush1.msra.mxu0 0.0
    %4850 = vmatprep.subr.mxu0 0.0
    %4851 = vmatpush1.msra.mxu0 0.0
    %4852 = vmatprep.subr.mxu0 0.0
    %4853 = vmatpush1.msra.mxu0 0.0
    %4854 = vmatprep.subr.mxu0 0.0
    %4855 = vmatpush1.msra.mxu0 0.0
    %4856 = vmatprep.subr.mxu0 0.0
    %4857 = vmatpush1.msra.mxu0 0.0
    %4858 = vmatprep.subr.mxu0 0.0
    %4859 = vmatpush1.msra.mxu0 0.0
    %4860 = vmatprep.subr.mxu0 0.0
    %4861 = vmatpush1.msra.mxu0 0.0
    %4862 = vmatprep.subr.mxu0 0.0
    %4863 = vmatpush1.msra.mxu0 0.0
    %4864 = vmatprep.subr.mxu0 0.0
    %4865 = vmatpush1.msra.mxu0 0.0
    %4866 = vmatprep.subr.mxu0 0.0
    %4867 = vmatpush1.msra.mxu0 0.0
    %4868 = vmatprep.subr.mxu0 0.0
    %4869 = vmatpush1.msra.mxu0 0.0
    %4870 = vmatprep.subr.mxu0 0.0
    %4871 = vmatpush1.msra.mxu0 0.0
    %4872 = vmatprep.subr.mxu0 0.0
    %4873 = vmatpush1.msra.mxu0 0.0
    %4874 = vmatprep.subr.mxu0 0.0
    %4875 = vmatpush1.msra.mxu0 0.0
    %4876 = vmatprep.subr.mxu0 0.0
    %4877 = vmatpush1.msra.mxu0 0.0
    %4878 = vmatprep.subr.mxu0 0.0
    %4879 = vmatpush1.msra.mxu0 0.0
    %4880 = vmatprep.subr.mxu0 0.0
    %4881 = vmatpush1.msra.mxu0 0.0
    %4882 = vmatprep.subr.mxu0 0.0
    %4883 = vmatpush1.msra.mxu0 0.0
    %4884 = vmatprep.subr.mxu0 0.0
    %4885 = vmatpush1.msra.mxu0 0.0
    %4886 = vmatprep.subr.mxu0 0.0
    %4887 = vmatpush1.msra.mxu0 0.0
    %4888 = vmatprep.subr.mxu0 0.0
    %4889 = vmatpush1.msra.mxu0 0.0
    %4890 = vmatprep.subr.mxu0 0.0
    %4891 = vmatpush1.msra.mxu0 0.0
    %4892 = vmatprep.subr.mxu0 0.0
    %4893 = vmatpush1.msra.mxu0 0.0
    %4894 = vmatprep.subr.mxu0 0.0
    %4895 = vmatpush1.msra.mxu0 0.0
    %4896 = vmatprep.subr.mxu0 0.0
    %4897 = vmatpush1.msra.mxu0 0.0
    %4898 = vmatprep.subr.mxu0 0.0
    %4899 = vmatpush1.msra.mxu0 0.0
    %4900 = vmatprep.subr.mxu0 0.0
    %4901 = vmatpush1.msra.mxu0 0.0
    %4902 = vmatprep.mubr.f32.mxu0 0.0
    %4903 = vmatmul.mubr.f32.gmra.mrb[0].mxu0 %v4836
    %v4904 = vpop.f32.mrb[0].mxu0
    %v4905 = vadd.f32 0.0, %v4904
    %v4906 = vpop.f32.mrb[0].mxu0
    %4907 = vdwg.mxu0
    %s4908 = scalar_lea.vmem %s4, 40
    %v4909 = vld [vmem:[%s4908] sm:$0xff]
    %v4911 = vsel %vm304, %v4905, 0
    %4913 = vmatprep.subr.mxu0 0.0
    %4914 = vmatpush1.msra.mxu0 %v4909
    %4915 = vmatprep.subr.mxu0 0.0
    %4916 = vmatpush1.msra.mxu0 0.0
    %4917 = vmatprep.subr.mxu0 0.0
    %4918 = vmatpush1.msra.mxu0 0.0
    %4919 = vmatprep.subr.mxu0 0.0
    %4920 = vmatpush1.msra.mxu0 0.0
    %4921 = vmatprep.subr.mxu0 0.0
    %4922 = vmatpush1.msra.mxu0 0.0
    %4923 = vmatprep.subr.mxu0 0.0
    %4924 = vmatpush1.msra.mxu0 0.0
    %4925 = vmatprep.subr.mxu0 0.0
    %4926 = vmatpush1.msra.mxu0 0.0
    %4927 = vmatprep.subr.mxu0 0.0
    %4928 = vmatpush1.msra.mxu0 0.0
    %4929 = vmatprep.subr.mxu0 0.0
    %4930 = vmatpush1.msra.mxu0 0.0
    %4931 = vmatprep.subr.mxu0 0.0
    %4932 = vmatpush1.msra.mxu0 0.0
    %4933 = vmatprep.subr.mxu0 0.0
    %4934 = vmatpush1.msra.mxu0 0.0
    %4935 = vmatprep.subr.mxu0 0.0
    %4936 = vmatpush1.msra.mxu0 0.0
    %4937 = vmatprep.subr.mxu0 0.0
    %4938 = vmatpush1.msra.mxu0 0.0
    %4939 = vmatprep.subr.mxu0 0.0
    %4940 = vmatpush1.msra.mxu0 0.0
    %4941 = vmatprep.subr.mxu0 0.0
    %4942 = vmatpush1.msra.mxu0 0.0
    %4943 = vmatprep.subr.mxu0 0.0
    %4944 = vmatpush1.msra.mxu0 0.0
    %4945 = vmatprep.subr.mxu0 0.0
    %4946 = vmatpush1.msra.mxu0 0.0
    %4947 = vmatprep.subr.mxu0 0.0
    %4948 = vmatpush1.msra.mxu0 0.0
    %4949 = vmatprep.subr.mxu0 0.0
    %4950 = vmatpush1.msra.mxu0 0.0
    %4951 = vmatprep.subr.mxu0 0.0
    %4952 = vmatpush1.msra.mxu0 0.0
    %4953 = vmatprep.subr.mxu0 0.0
    %4954 = vmatpush1.msra.mxu0 0.0
    %4955 = vmatprep.subr.mxu0 0.0
    %4956 = vmatpush1.msra.mxu0 0.0
    %4957 = vmatprep.subr.mxu0 0.0
    %4958 = vmatpush1.msra.mxu0 0.0
    %4959 = vmatprep.subr.mxu0 0.0
    %4960 = vmatpush1.msra.mxu0 0.0
    %4961 = vmatprep.subr.mxu0 0.0
    %4962 = vmatpush1.msra.mxu0 0.0
    %4963 = vmatprep.subr.mxu0 0.0
    %4964 = vmatpush1.msra.mxu0 0.0
    %4965 = vmatprep.subr.mxu0 0.0
    %4966 = vmatpush1.msra.mxu0 0.0
    %4967 = vmatprep.subr.mxu0 0.0
    %4968 = vmatpush1.msra.mxu0 0.0
    %4969 = vmatprep.subr.mxu0 0.0
    %4970 = vmatpush1.msra.mxu0 0.0
    %4971 = vmatprep.subr.mxu0 0.0
    %4972 = vmatpush1.msra.mxu0 0.0
    %4973 = vmatprep.subr.mxu0 0.0
    %4974 = vmatpush1.msra.mxu0 0.0
    %4975 = vmatprep.subr.mxu0 0.0
    %4976 = vmatpush1.msra.mxu0 0.0
    %4977 = vmatprep.mubr.f32.mxu0 0.0
    %4978 = vmatmul.mubr.f32.gmra.mrb[0].mxu0 %v4911
    %v4979 = vpop.f32.mrb[0].mxu0
    %v4980 = vadd.f32 0.0, %v4979
    %v4981 = vpop.f32.mrb[0].mxu0
    %4982 = vdwg.mxu0
    %v4984 = vsel %vm304, %v4492, 0
    %4986 = vmatprep.subr.mxu0 0.0
    %4987 = vmatpush1.msra.mxu0 %v4496
    %4988 = vmatprep.subr.mxu0 0.0
    %4989 = vmatpush1.msra.mxu0 0.0
    %4990 = vmatprep.subr.mxu0 0.0
    %4991 = vmatpush1.msra.mxu0 0.0
    %4992 = vmatprep.subr.mxu0 0.0
    %4993 = vmatpush1.msra.mxu0 0.0
    %4994 = vmatprep.subr.mxu0 0.0
    %4995 = vmatpush1.msra.mxu0 0.0
    %4996 = vmatprep.subr.mxu0 0.0
    %4997 = vmatpush1.msra.mxu0 0.0
    %4998 = vmatprep.subr.mxu0 0.0
    %4999 = vmatpush1.msra.mxu0 0.0
    %5000 = vmatprep.subr.mxu0 0.0
    %5001 = vmatpush1.msra.mxu0 0.0
    %5002 = vmatprep.subr.mxu0 0.0
    %5003 = vmatpush1.msra.mxu0 0.0
    %5004 = vmatprep.subr.mxu0 0.0
    %5005 = vmatpush1.msra.mxu0 0.0
    %5006 = vmatprep.subr.mxu0 0.0
    %5007 = vmatpush1.msra.mxu0 0.0
    %5008 = vmatprep.subr.mxu0 0.0
    %5009 = vmatpush1.msra.mxu0 0.0
    %5010 = vmatprep.subr.mxu0 0.0
    %5011 = vmatpush1.msra.mxu0 0.0
    %5012 = vmatprep.subr.mxu0 0.0
    %5013 = vmatpush1.msra.mxu0 0.0
    %5014 = vmatprep.subr.mxu0 0.0
    %5015 = vmatpush1.msra.mxu0 0.0
    %5016 = vmatprep.subr.mxu0 0.0
    %5017 = vmatpush1.msra.mxu0 0.0
    %5018 = vmatprep.subr.mxu0 0.0
    %5019 = vmatpush1.msra.mxu0 0.0
    %5020 = vmatprep.subr.mxu0 0.0
    %5021 = vmatpush1.msra.mxu0 0.0
    %5022 = vmatprep.subr.mxu0 0.0
    %5023 = vmatpush1.msra.mxu0 0.0
    %5024 = vmatprep.subr.mxu0 0.0
    %5025 = vmatpush1.msra.mxu0 0.0
    %5026 = vmatprep.subr.mxu0 0.0
    %5027 = vmatpush1.msra.mxu0 0.0
    %5028 = vmatprep.subr.mxu0 0.0
    %5029 = vmatpush1.msra.mxu0 0.0
    %5030 = vmatprep.subr.mxu0 0.0
    %5031 = vmatpush1.msra.mxu0 0.0
    %5032 = vmatprep.subr.mxu0 0.0
    %5033 = vmatpush1.msra.mxu0 0.0
    %5034 = vmatprep.subr.mxu0 0.0
    %5035 = vmatpush1.msra.mxu0 0.0
    %5036 = vmatprep.subr.mxu0 0.0
    %5037 = vmatpush1.msra.mxu0 0.0
    %5038 = vmatprep.subr.mxu0 0.0
    %5039 = vmatpush1.msra.mxu0 0.0
    %5040 = vmatprep.subr.mxu0 0.0
    %5041 = vmatpush1.msra.mxu0 0.0
    %5042 = vmatprep.subr.mxu0 0.0
    %5043 = vmatpush1.msra.mxu0 0.0
    %5044 = vmatprep.subr.mxu0 0.0
    %5045 = vmatpush1.msra.mxu0 0.0
    %5046 = vmatprep.subr.mxu0 0.0
    %5047 = vmatpush1.msra.mxu0 0.0
    %5048 = vmatprep.subr.mxu0 0.0
    %5049 = vmatpush1.msra.mxu0 0.0
    %5050 = vmatprep.mubr.f32.mxu0 0.0
    %5051 = vmatmul.mubr.f32.gmra.mrb[0].mxu0 %v4984
    %v5052 = vpop.f32.mrb[0].mxu0
    %v5053 = vadd.f32 %v4980, %v5052
    %v5054 = vpop.f32.mrb[0].mxu0
    %5055 = vdwg.mxu0
    %s5056 = scalar_lea.vmem %s2, 576
    %v5057 = vld [vmem:[%s5056] sm:$0xff]
    %v5058 = vld [vmem:[%s5056 + $0x8] sm:$0xff]
    %v5059 = vld [vmem:[%s5056 + $0x10] sm:$0xff]
    %v5060 = vld [vmem:[%s5056 + $0x18] sm:$0xff]
    %s5061 = scalar_lea.vmem %s3, 18
    %v5062 = vld [vmem:[%s5061] sm:$0x1]
    %v5064 = vlaneseq
    %v5065 = vshrl.u32 %v5064, 7
    %v5066 = vsub.s32 0, %v5065
    %v5067 = vrot.slane %v5062, %v5066
    %5069 = vmatprep.subr.mxu0 0.0
    %5070 = vmatpush1.msra.mxu0 %v5057
    %5071 = vmatprep.subr.mxu0 0.0
    %5072 = vmatpush1.msra.mxu0 %v5058
    %5073 = vmatprep.subr.mxu0 0.0
    %5074 = vmatpush1.msra.mxu0 %v5059
    %5075 = vmatprep.subr.mxu0 0.0
    %5076 = vmatpush1.msra.mxu0 %v5060
    %5077 = vmatprep.subr.mxu0 0.0
    %5078 = vmatpush1.msra.mxu0 0.0
    %5079 = vmatprep.subr.mxu0 0.0
    %5080 = vmatpush1.msra.mxu0 0.0
    %5081 = vmatprep.subr.mxu0 0.0
    %5082 = vmatpush1.msra.mxu0 0.0
    %5083 = vmatprep.subr.mxu0 0.0
    %5084 = vmatpush1.msra.mxu0 0.0
    %5085 = vmatprep.subr.mxu0 0.0
    %5086 = vmatpush1.msra.mxu0 0.0
    %5087 = vmatprep.subr.mxu0 0.0
    %5088 = vmatpush1.msra.mxu0 0.0
    %5089 = vmatprep.subr.mxu0 0.0
    %5090 = vmatpush1.msra.mxu0 0.0
    %5091 = vmatprep.subr.mxu0 0.0
    %5092 = vmatpush1.msra.mxu0 0.0
    %5093 = vmatprep.subr.mxu0 0.0
    %5094 = vmatpush1.msra.mxu0 0.0
    %5095 = vmatprep.subr.mxu0 0.0
    %5096 = vmatpush1.msra.mxu0 0.0
    %5097 = vmatprep.subr.mxu0 0.0
    %5098 = vmatpush1.msra.mxu0 0.0
    %5099 = vmatprep.subr.mxu0 0.0
    %5100 = vmatpush1.msra.mxu0 0.0
    %5101 = vmatprep.subr.mxu0 0.0
    %5102 = vmatpush1.msra.mxu0 0.0
    %5103 = vmatprep.subr.mxu0 0.0
    %5104 = vmatpush1.msra.mxu0 0.0
    %5105 = vmatprep.subr.mxu0 0.0
    %5106 = vmatpush1.msra.mxu0 0.0
    %5107 = vmatprep.subr.mxu0 0.0
    %5108 = vmatpush1.msra.mxu0 0.0
    %5109 = vmatprep.subr.mxu0 0.0
    %5110 = vmatpush1.msra.mxu0 0.0
    %5111 = vmatprep.subr.mxu0 0.0
    %5112 = vmatpush1.msra.mxu0 0.0
    %5113 = vmatprep.subr.mxu0 0.0
    %5114 = vmatpush1.msra.mxu0 0.0
    %5115 = vmatprep.subr.mxu0 0.0
    %5116 = vmatpush1.msra.mxu0 0.0
    %5117 = vmatprep.subr.mxu0 0.0
    %5118 = vmatpush1.msra.mxu0 0.0
    %5119 = vmatprep.subr.mxu0 0.0
    %5120 = vmatpush1.msra.mxu0 0.0
    %5121 = vmatprep.subr.mxu0 0.0
    %5122 = vmatpush1.msra.mxu0 0.0
    %5123 = vmatprep.subr.mxu0 0.0
    %5124 = vmatpush1.msra.mxu0 0.0
    %5125 = vmatprep.subr.mxu0 0.0
    %5126 = vmatpush1.msra.mxu0 0.0
    %5127 = vmatprep.subr.mxu0 0.0
    %5128 = vmatpush1.msra.mxu0 0.0
    %5129 = vmatprep.subr.mxu0 0.0
    %5130 = vmatpush1.msra.mxu0 0.0
    %5131 = vmatprep.subr.mxu0 0.0
    %5132 = vmatpush1.msra.mxu0 0.0
    %5133 = vmatprep.mubr.f32.mxu0 0.0
    %5134 = vmatmul.mubr.f32.gmra.mrb[0].mxu0 %v4095
    %v5135 = vpop.f32.mrb[0].mxu0
    %v5136 = vadd.f32 %v5067, %v5135
    %v5137 = vpop.f32.mrb[0].mxu0
    %5138 = vdwg.mxu0
    %s5139 = scalar_lea.vmem %s2, 608
    %v5140 = vld [vmem:[%s5139] sm:$0xff]
    %v5141 = vld [vmem:[%s5139 + $0x8] sm:$0xff]
    %v5142 = vld [vmem:[%s5139 + $0x10] sm:$0xff]
    %v5143 = vld [vmem:[%s5139 + $0x18] sm:$0xff]
    %s5144 = scalar_lea.vmem %s3, 19
    %v5145 = vld [vmem:[%s5144] sm:$0x1]
    %v5147 = vlaneseq
    %v5148 = vshrl.u32 %v5147, 7
    %v5149 = vsub.s32 0, %v5148
    %v5150 = vrot.slane %v5145, %v5149
    %5152 = vmatprep.subr.mxu0 0.0
    %5153 = vmatpush1.msra.mxu0 %v5140
    %5154 = vmatprep.subr.mxu0 0.0
    %5155 = vmatpush1.msra.mxu0 %v5141
    %5156 = vmatprep.subr.mxu0 0.0
    %5157 = vmatpush1.msra.mxu0 %v5142
    %5158 = vmatprep.subr.mxu0 0.0
    %5159 = vmatpush1.msra.mxu0 %v5143
    %5160 = vmatprep.subr.mxu0 0.0
    %5161 = vmatpush1.msra.mxu0 0.0
    %5162 = vmatprep.subr.mxu0 0.0
    %5163 = vmatpush1.msra.mxu0 0.0
    %5164 = vmatprep.subr.mxu0 0.0
    %5165 = vmatpush1.msra.mxu0 0.0
    %5166 = vmatprep.subr.mxu0 0.0
    %5167 = vmatpush1.msra.mxu0 0.0
    %5168 = vmatprep.subr.mxu0 0.0
    %5169 = vmatpush1.msra.mxu0 0.0
    %5170 = vmatprep.subr.mxu0 0.0
    %5171 = vmatpush1.msra.mxu0 0.0
    %5172 = vmatprep.subr.mxu0 0.0
    %5173 = vmatpush1.msra.mxu0 0.0
    %5174 = vmatprep.subr.mxu0 0.0
    %5175 = vmatpush1.msra.mxu0 0.0
    %5176 = vmatprep.subr.mxu0 0.0
    %5177 = vmatpush1.msra.mxu0 0.0
    %5178 = vmatprep.subr.mxu0 0.0
    %5179 = vmatpush1.msra.mxu0 0.0
    %5180 = vmatprep.subr.mxu0 0.0
    %5181 = vmatpush1.msra.mxu0 0.0
    %5182 = vmatprep.subr.mxu0 0.0
    %5183 = vmatpush1.msra.mxu0 0.0
    %5184 = vmatprep.subr.mxu0 0.0
    %5185 = vmatpush1.msra.mxu0 0.0
    %5186 = vmatprep.subr.mxu0 0.0
    %5187 = vmatpush1.msra.mxu0 0.0
    %5188 = vmatprep.subr.mxu0 0.0
    %5189 = vmatpush1.msra.mxu0 0.0
    %5190 = vmatprep.subr.mxu0 0.0
    %5191 = vmatpush1.msra.mxu0 0.0
    %5192 = vmatprep.subr.mxu0 0.0
    %5193 = vmatpush1.msra.mxu0 0.0
    %5194 = vmatprep.subr.mxu0 0.0
    %5195 = vmatpush1.msra.mxu0 0.0
    %5196 = vmatprep.subr.mxu0 0.0
    %5197 = vmatpush1.msra.mxu0 0.0
    %5198 = vmatprep.subr.mxu0 0.0
    %5199 = vmatpush1.msra.mxu0 0.0
    %5200 = vmatprep.subr.mxu0 0.0
    %5201 = vmatpush1.msra.mxu0 0.0
    %5202 = vmatprep.subr.mxu0 0.0
    %5203 = vmatpush1.msra.mxu0 0.0
    %5204 = vmatprep.subr.mxu0 0.0
    %5205 = vmatpush1.msra.mxu0 0.0
    %5206 = vmatprep.subr.mxu0 0.0
    %5207 = vmatpush1.msra.mxu0 0.0
    %5208 = vmatprep.subr.mxu0 0.0
    %5209 = vmatpush1.msra.mxu0 0.0
    %5210 = vmatprep.subr.mxu0 0.0
    %5211 = vmatpush1.msra.mxu0 0.0
    %5212 = vmatprep.subr.mxu0 0.0
    %5213 = vmatpush1.msra.mxu0 0.0
    %5214 = vmatprep.subr.mxu0 0.0
    %5215 = vmatpush1.msra.mxu0 0.0
    %5216 = vmatprep.mubr.f32.mxu0 0.0
    %5217 = vmatmul.mubr.f32.gmra.mrb[0].mxu0 %v4095
    %v5218 = vpop.f32.mrb[0].mxu0
    %v5219 = vadd.f32 %v5150, %v5218
    %v5220 = vpop.f32.mrb[0].mxu0
    %5221 = vdwg.mxu0
    %s5222 = scalar_lea.vmem %s2, 640
    %v5223 = vld [vmem:[%s5222] sm:$0xff]
    %v5224 = vld [vmem:[%s5222 + $0x8] sm:$0xff]
    %v5225 = vld [vmem:[%s5222 + $0x10] sm:$0xff]
    %v5226 = vld [vmem:[%s5222 + $0x18] sm:$0xff]
    %s5227 = scalar_lea.vmem %s3, 20
    %v5228 = vld [vmem:[%s5227] sm:$0x1]
    %v5230 = vlaneseq
    %v5231 = vshrl.u32 %v5230, 7
    %v5232 = vsub.s32 0, %v5231
    %v5233 = vrot.slane %v5228, %v5232
    %5235 = vmatprep.subr.mxu0 0.0
    %5236 = vmatpush1.msra.mxu0 %v5223
    %5237 = vmatprep.subr.mxu0 0.0
    %5238 = vmatpush1.msra.mxu0 %v5224
    %5239 = vmatprep.subr.mxu0 0.0
    %5240 = vmatpush1.msra.mxu0 %v5225
    %5241 = vmatprep.subr.mxu0 0.0
    %5242 = vmatpush1.msra.mxu0 %v5226
    %5243 = vmatprep.subr.mxu0 0.0
    %5244 = vmatpush1.msra.mxu0 0.0
    %5245 = vmatprep.subr.mxu0 0.0
    %5246 = vmatpush1.msra.mxu0 0.0
    %5247 = vmatprep.subr.mxu0 0.0
    %5248 = vmatpush1.msra.mxu0 0.0
    %5249 = vmatprep.subr.mxu0 0.0
    %5250 = vmatpush1.msra.mxu0 0.0
    %5251 = vmatprep.subr.mxu0 0.0
    %5252 = vmatpush1.msra.mxu0 0.0
    %5253 = vmatprep.subr.mxu0 0.0
    %5254 = vmatpush1.msra.mxu0 0.0
    %5255 = vmatprep.subr.mxu0 0.0
    %5256 = vmatpush1.msra.mxu0 0.0
    %5257 = vmatprep.subr.mxu0 0.0
    %5258 = vmatpush1.msra.mxu0 0.0
    %5259 = vmatprep.subr.mxu0 0.0
    %5260 = vmatpush1.msra.mxu0 0.0
    %5261 = vmatprep.subr.mxu0 0.0
    %5262 = vmatpush1.msra.mxu0 0.0
    %5263 = vmatprep.subr.mxu0 0.0
    %5264 = vmatpush1.msra.mxu0 0.0
    %5265 = vmatprep.subr.mxu0 0.0
    %5266 = vmatpush1.msra.mxu0 0.0
    %5267 = vmatprep.subr.mxu0 0.0
    %5268 = vmatpush1.msra.mxu0 0.0
    %5269 = vmatprep.subr.mxu0 0.0
    %5270 = vmatpush1.msra.mxu0 0.0
    %5271 = vmatprep.subr.mxu0 0.0
    %5272 = vmatpush1.msra.mxu0 0.0
    %5273 = vmatprep.subr.mxu0 0.0
    %5274 = vmatpush1.msra.mxu0 0.0
    %5275 = vmatprep.subr.mxu0 0.0
    %5276 = vmatpush1.msra.mxu0 0.0
    %5277 = vmatprep.subr.mxu0 0.0
    %5278 = vmatpush1.msra.mxu0 0.0
    %5279 = vmatprep.subr.mxu0 0.0
    %5280 = vmatpush1.msra.mxu0 0.0
    %5281 = vmatprep.subr.mxu0 0.0
    %5282 = vmatpush1.msra.mxu0 0.0
    %5283 = vmatprep.subr.mxu0 0.0
    %5284 = vmatpush1.msra.mxu0 0.0
    %5285 = vmatprep.subr.mxu0 0.0
    %5286 = vmatpush1.msra.mxu0 0.0
    %5287 = vmatprep.subr.mxu0 0.0
    %5288 = vmatpush1.msra.mxu0 0.0
    %5289 = vmatprep.subr.mxu0 0.0
    %5290 = vmatpush1.msra.mxu0 0.0
    %5291 = vmatprep.subr.mxu0 0.0
    %5292 = vmatpush1.msra.mxu0 0.0
    %5293 = vmatprep.subr.mxu0 0.0
    %5294 = vmatpush1.msra.mxu0 0.0
    %5295 = vmatprep.subr.mxu0 0.0
    %5296 = vmatpush1.msra.mxu0 0.0
    %5297 = vmatprep.subr.mxu0 0.0
    %5298 = vmatpush1.msra.mxu0 0.0
    %5299 = vmatprep.mubr.f32.mxu0 0.0
    %5300 = vmatmul.mubr.f32.gmra.mrb[0].mxu0 %v4095
    %v5301 = vpop.f32.mrb[0].mxu0
    %v5302 = vadd.f32 %v5233, %v5301
    %v5303 = vpop.f32.mrb[0].mxu0
    %5304 = vdwg.mxu0
    %v5306 = vsel %vm304, %v5136, 0
    %v5309 = vsel %vm304, %v5219, 0
    %5311 = vmatprep.subr.mxu0 0.0
    %5312 = vmatpush1.xpose.msra.mxu0 %v5309
    %5313 = vmatprep.subr.mxu0 0.0
    %5314 = vmatpush1.xpose.msra.mxu0 0.0
    %5315 = vmatprep.subr.mxu0 0.0
    %5316 = vmatpush1.xpose.msra.mxu0 0.0
    %5317 = vmatprep.subr.mxu0 0.0
    %5318 = vmatpush1.xpose.msra.mxu0 0.0
    %5319 = vmatprep.subr.mxu0 0.0
    %5320 = vmatpush1.xpose.msra.mxu0 0.0
    %5321 = vmatprep.subr.mxu0 0.0
    %5322 = vmatpush1.xpose.msra.mxu0 0.0
    %5323 = vmatprep.subr.mxu0 0.0
    %5324 = vmatpush1.xpose.msra.mxu0 0.0
    %5325 = vmatprep.subr.mxu0 0.0
    %5326 = vmatpush1.xpose.msra.mxu0 0.0
    %5327 = vmatprep.subr.mxu0 0.0
    %5328 = vmatpush1.xpose.msra.mxu0 0.0
    %5329 = vmatprep.subr.mxu0 0.0
    %5330 = vmatpush1.xpose.msra.mxu0 0.0
    %5331 = vmatprep.subr.mxu0 0.0
    %5332 = vmatpush1.xpose.msra.mxu0 0.0
    %5333 = vmatprep.subr.mxu0 0.0
    %5334 = vmatpush1.xpose.msra.mxu0 0.0
    %5335 = vmatprep.subr.mxu0 0.0
    %5336 = vmatpush1.xpose.msra.mxu0 0.0
    %5337 = vmatprep.subr.mxu0 0.0
    %5338 = vmatpush1.xpose.msra.mxu0 0.0
    %5339 = vmatprep.subr.mxu0 0.0
    %5340 = vmatpush1.xpose.msra.mxu0 0.0
    %5341 = vmatprep.subr.mxu0 0.0
    %5342 = vmatpush1.xpose.msra.mxu0 0.0
    %5343 = vmatprep.subr.mxu0 0.0
    %5344 = vmatpush1.xpose.msra.mxu0 0.0
    %5345 = vmatprep.subr.mxu0 0.0
    %5346 = vmatpush1.xpose.msra.mxu0 0.0
    %5347 = vmatprep.subr.mxu0 0.0
    %5348 = vmatpush1.xpose.msra.mxu0 0.0
    %5349 = vmatprep.subr.mxu0 0.0
    %5350 = vmatpush1.xpose.msra.mxu0 0.0
    %5351 = vmatprep.subr.mxu0 0.0
    %5352 = vmatpush1.xpose.msra.mxu0 0.0
    %5353 = vmatprep.subr.mxu0 0.0
    %5354 = vmatpush1.xpose.msra.mxu0 0.0
    %5355 = vmatprep.subr.mxu0 0.0
    %5356 = vmatpush1.xpose.msra.mxu0 0.0
    %5357 = vmatprep.subr.mxu0 0.0
    %5358 = vmatpush1.xpose.msra.mxu0 0.0
    %5359 = vmatprep.subr.mxu0 0.0
    %5360 = vmatpush1.xpose.msra.mxu0 0.0
    %5361 = vmatprep.subr.mxu0 0.0
    %5362 = vmatpush1.xpose.msra.mxu0 0.0
    %5363 = vmatprep.subr.mxu0 0.0
    %5364 = vmatpush1.xpose.msra.mxu0 0.0
    %5365 = vmatprep.subr.mxu0 0.0
    %5366 = vmatpush1.xpose.msra.mxu0 0.0
    %5367 = vmatprep.subr.mxu0 0.0
    %5368 = vmatpush1.xpose.msra.mxu0 0.0
    %5369 = vmatprep.subr.mxu0 0.0
    %5370 = vmatpush1.xpose.msra.mxu0 0.0
    %5371 = vmatprep.subr.mxu0 0.0
    %5372 = vmatpush1.xpose.msra.mxu0 0.0
    %5373 = vmatprep.subr.mxu0 0.0
    %5374 = vmatpush1.xpose.msra.mxu0 0.0
    %5375 = vmatprep.mubr.f32.mxu0 0.0
    %5376 = vmatmul.mubr.f32.gmra.mrb[0].mxu0 %v5306
    %v5377 = vpop.f32.mrb[0].mxu0
    %v5378 = vadd.f32 0.0, %v5377
    %v5379 = vpop.f32.mrb[0].mxu0
    %5380 = vdwg.mxu0
    %v5381 = vmul.f32 %v5378, 0.35355338
    %v5382 = vadd.f32 %v5381, %v52
    %v5383 = vsel %vm304, %v5382, -inf
    %5384 = vmax.xlane.f32.xlu0 %v5383
    %v5385 = vpop.xlane.xlu0 %5384
    %v5386 = vsub.f32 %v5382, %v5385
    %v5387 = vmul.f32 %v5386, 1.442695
    %v5388 = vpow.pop %v5387
    %v5389 = vsel %vm304, %v5388, 0.0
    %5390 = vadd.xlane.f32.xlu0 %v5389
    %v5391 = vpop.xlane.xlu0 %5390
    %v5392 = vrcp.pop %v5391
    %v5393 = vmul.f32 %v5388, %v5392
    %v5395 = vsel %vm304, %v5393, 0
    %5397 = vmatprep.subr.mxu0 0.0
    %5398 = vmatpush1.msra.mxu0 %v5302
    %5399 = vmatprep.subr.mxu0 0.0
    %5400 = vmatpush1.msra.mxu0 0.0
    %5401 = vmatprep.subr.mxu0 0.0
    %5402 = vmatpush1.msra.mxu0 0.0
    %5403 = vmatprep.subr.mxu0 0.0
    %5404 = vmatpush1.msra.mxu0 0.0
    %5405 = vmatprep.subr.mxu0 0.0
    %5406 = vmatpush1.msra.mxu0 0.0
    %5407 = vmatprep.subr.mxu0 0.0
    %5408 = vmatpush1.msra.mxu0 0.0
    %5409 = vmatprep.subr.mxu0 0.0
    %5410 = vmatpush1.msra.mxu0 0.0
    %5411 = vmatprep.subr.mxu0 0.0
    %5412 = vmatpush1.msra.mxu0 0.0
    %5413 = vmatprep.subr.mxu0 0.0
    %5414 = vmatpush1.msra.mxu0 0.0
    %5415 = vmatprep.subr.mxu0 0.0
    %5416 = vmatpush1.msra.mxu0 0.0
    %5417 = vmatprep.subr.mxu0 0.0
    %5418 = vmatpush1.msra.mxu0 0.0
    %5419 = vmatprep.subr.mxu0 0.0
    %5420 = vmatpush1.msra.mxu0 0.0
    %5421 = vmatprep.subr.mxu0 0.0
    %5422 = vmatpush1.msra.mxu0 0.0
    %5423 = vmatprep.subr.mxu0 0.0
    %5424 = vmatpush1.msra.mxu0 0.0
    %5425 = vmatprep.subr.mxu0 0.0
    %5426 = vmatpush1.msra.mxu0 0.0
    %5427 = vmatprep.subr.mxu0 0.0
    %5428 = vmatpush1.msra.mxu0 0.0
    %5429 = vmatprep.subr.mxu0 0.0
    %5430 = vmatpush1.msra.mxu0 0.0
    %5431 = vmatprep.subr.mxu0 0.0
    %5432 = vmatpush1.msra.mxu0 0.0
    %5433 = vmatprep.subr.mxu0 0.0
    %5434 = vmatpush1.msra.mxu0 0.0
    %5435 = vmatprep.subr.mxu0 0.0
    %5436 = vmatpush1.msra.mxu0 0.0
    %5437 = vmatprep.subr.mxu0 0.0
    %5438 = vmatpush1.msra.mxu0 0.0
    %5439 = vmatprep.subr.mxu0 0.0
    %5440 = vmatpush1.msra.mxu0 0.0
    %5441 = vmatprep.subr.mxu0 0.0
    %5442 = vmatpush1.msra.mxu0 0.0
    %5443 = vmatprep.subr.mxu0 0.0
    %5444 = vmatpush1.msra.mxu0 0.0
    %5445 = vmatprep.subr.mxu0 0.0
    %5446 = vmatpush1.msra.mxu0 0.0
    %5447 = vmatprep.subr.mxu0 0.0
    %5448 = vmatpush1.msra.mxu0 0.0
    %5449 = vmatprep.subr.mxu0 0.0
    %5450 = vmatpush1.msra.mxu0 0.0
    %5451 = vmatprep.subr.mxu0 0.0
    %5452 = vmatpush1.msra.mxu0 0.0
    %5453 = vmatprep.subr.mxu0 0.0
    %5454 = vmatpush1.msra.mxu0 0.0
    %5455 = vmatprep.subr.mxu0 0.0
    %5456 = vmatpush1.msra.mxu0 0.0
    %5457 = vmatprep.subr.mxu0 0.0
    %5458 = vmatpush1.msra.mxu0 0.0
    %5459 = vmatprep.subr.mxu0 0.0
    %5460 = vmatpush1.msra.mxu0 0.0
    %5461 = vmatprep.mubr.f32.mxu0 0.0
    %5462 = vmatmul.mubr.f32.gmra.mrb[0].mxu0 %v5395
    %v5463 = vpop.f32.mrb[0].mxu0
    %v5464 = vadd.f32 0.0, %v5463
    %v5465 = vpop.f32.mrb[0].mxu0
    %5466 = vdwg.mxu0
    %s5467 = scalar_lea.vmem %s4, 48
    %v5468 = vld [vmem:[%s5467] sm:$0xff]
    %v5470 = vsel %vm304, %v5464, 0
    %5472 = vmatprep.subr.mxu0 0.0
    %5473 = vmatpush1.msra.mxu0 %v5468
    %5474 = vmatprep.subr.mxu0 0.0
    %5475 = vmatpush1.msra.mxu0 0.0
    %5476 = vmatprep.subr.mxu0 0.0
    %5477 = vmatpush1.msra.mxu0 0.0
    %5478 = vmatprep.subr.mxu0 0.0
    %5479 = vmatpush1.msra.mxu0 0.0
    %5480 = vmatprep.subr.mxu0 0.0
    %5481 = vmatpush1.msra.mxu0 0.0
    %5482 = vmatprep.subr.mxu0 0.0
    %5483 = vmatpush1.msra.mxu0 0.0
    %5484 = vmatprep.subr.mxu0 0.0
    %5485 = vmatpush1.msra.mxu0 0.0
    %5486 = vmatprep.subr.mxu0 0.0
    %5487 = vmatpush1.msra.mxu0 0.0
    %5488 = vmatprep.subr.mxu0 0.0
    %5489 = vmatpush1.msra.mxu0 0.0
    %5490 = vmatprep.subr.mxu0 0.0
    %5491 = vmatpush1.msra.mxu0 0.0
    %5492 = vmatprep.subr.mxu0 0.0
    %5493 = vmatpush1.msra.mxu0 0.0
    %5494 = vmatprep.subr.mxu0 0.0
    %5495 = vmatpush1.msra.mxu0 0.0
    %5496 = vmatprep.subr.mxu0 0.0
    %5497 = vmatpush1.msra.mxu0 0.0
    %5498 = vmatprep.subr.mxu0 0.0
    %5499 = vmatpush1.msra.mxu0 0.0
    %5500 = vmatprep.subr.mxu0 0.0
    %5501 = vmatpush1.msra.mxu0 0.0
    %5502 = vmatprep.subr.mxu0 0.0
    %5503 = vmatpush1.msra.mxu0 0.0
    %5504 = vmatprep.subr.mxu0 0.0
    %5505 = vmatpush1.msra.mxu0 0.0
    %5506 = vmatprep.subr.mxu0 0.0
    %5507 = vmatpush1.msra.mxu0 0.0
    %5508 = vmatprep.subr.mxu0 0.0
    %5509 = vmatpush1.msra.mxu0 0.0
    %5510 = vmatprep.subr.mxu0 0.0
    %5511 = vmatpush1.msra.mxu0 0.0
    %5512 = vmatprep.subr.mxu0 0.0
    %5513 = vmatpush1.msra.mxu0 0.0
    %5514 = vmatprep.subr.mxu0 0.0
    %5515 = vmatpush1.msra.mxu0 0.0
    %5516 = vmatprep.subr.mxu0 0.0
    %5517 = vmatpush1.msra.mxu0 0.0
    %5518 = vmatprep.subr.mxu0 0.0
    %5519 = vmatpush1.msra.mxu0 0.0
    %5520 = vmatprep.subr.mxu0 0.0
    %5521 = vmatpush1.msra.mxu0 0.0
    %5522 = vmatprep.subr.mxu0 0.0
    %5523 = vmatpush1.msra.mxu0 0.0
    %5524 = vmatprep.subr.mxu0 0.0
    %5525 = vmatpush1.msra.mxu0 0.0
    %5526 = vmatprep.subr.mxu0 0.0
    %5527 = vmatpush1.msra.mxu0 0.0
    %5528 = vmatprep.subr.mxu0 0.0
    %5529 = vmatpush1.msra.mxu0 0.0
    %5530 = vmatprep.subr.mxu0 0.0
    %5531 = vmatpush1.msra.mxu0 0.0
    %5532 = vmatprep.subr.mxu0 0.0
    %5533 = vmatpush1.msra.mxu0 0.0
    %5534 = vmatprep.subr.mxu0 0.0
    %5535 = vmatpush1.msra.mxu0 0.0
    %5536 = vmatprep.mubr.f32.mxu0 0.0
    %5537 = vmatmul.mubr.f32.gmra.mrb[0].mxu0 %v5470
    %v5538 = vpop.f32.mrb[0].mxu0
    %v5539 = vadd.f32 0.0, %v5538
    %v5540 = vpop.f32.mrb[0].mxu0
    %5541 = vdwg.mxu0
    %v5542 = vadd.f32 %v5053, %v5539
    %s5543 = scalar_lea.vmem %s2, 672
    %v5544 = vld [vmem:[%s5543] sm:$0xff]
    %v5545 = vld [vmem:[%s5543 + $0x8] sm:$0xff]
    %v5546 = vld [vmem:[%s5543 + $0x10] sm:$0xff]
    %v5547 = vld [vmem:[%s5543 + $0x18] sm:$0xff]
    %s5548 = scalar_lea.vmem %s3, 21
    %v5549 = vld [vmem:[%s5548] sm:$0x1]
    %v5551 = vlaneseq
    %v5552 = vshrl.u32 %v5551, 7
    %v5553 = vsub.s32 0, %v5552
    %v5554 = vrot.slane %v5549, %v5553
    %5556 = vmatprep.subr.mxu0 0.0
    %5557 = vmatpush1.msra.mxu0 %v5544
    %5558 = vmatprep.subr.mxu0 0.0
    %5559 = vmatpush1.msra.mxu0 %v5545
    %5560 = vmatprep.subr.mxu0 0.0
    %5561 = vmatpush1.msra.mxu0 %v5546
    %5562 = vmatprep.subr.mxu0 0.0
    %5563 = vmatpush1.msra.mxu0 %v5547
    %5564 = vmatprep.subr.mxu0 0.0
    %5565 = vmatpush1.msra.mxu0 0.0
    %5566 = vmatprep.subr.mxu0 0.0
    %5567 = vmatpush1.msra.mxu0 0.0
    %5568 = vmatprep.subr.mxu0 0.0
    %5569 = vmatpush1.msra.mxu0 0.0
    %5570 = vmatprep.subr.mxu0 0.0
    %5571 = vmatpush1.msra.mxu0 0.0
    %5572 = vmatprep.subr.mxu0 0.0
    %5573 = vmatpush1.msra.mxu0 0.0
    %5574 = vmatprep.subr.mxu0 0.0
    %5575 = vmatpush1.msra.mxu0 0.0
    %5576 = vmatprep.subr.mxu0 0.0
    %5577 = vmatpush1.msra.mxu0 0.0
    %5578 = vmatprep.subr.mxu0 0.0
    %5579 = vmatpush1.msra.mxu0 0.0
    %5580 = vmatprep.subr.mxu0 0.0
    %5581 = vmatpush1.msra.mxu0 0.0
    %5582 = vmatprep.subr.mxu0 0.0
    %5583 = vmatpush1.msra.mxu0 0.0
    %5584 = vmatprep.subr.mxu0 0.0
    %5585 = vmatpush1.msra.mxu0 0.0
    %5586 = vmatprep.subr.mxu0 0.0
    %5587 = vmatpush1.msra.mxu0 0.0
    %5588 = vmatprep.subr.mxu0 0.0
    %5589 = vmatpush1.msra.mxu0 0.0
    %5590 = vmatprep.subr.mxu0 0.0
    %5591 = vmatpush1.msra.mxu0 0.0
    %5592 = vmatprep.subr.mxu0 0.0
    %5593 = vmatpush1.msra.mxu0 0.0
    %5594 = vmatprep.subr.mxu0 0.0
    %5595 = vmatpush1.msra.mxu0 0.0
    %5596 = vmatprep.subr.mxu0 0.0
    %5597 = vmatpush1.msra.mxu0 0.0
    %5598 = vmatprep.subr.mxu0 0.0
    %5599 = vmatpush1.msra.mxu0 0.0
    %5600 = vmatprep.subr.mxu0 0.0
    %5601 = vmatpush1.msra.mxu0 0.0
    %5602 = vmatprep.subr.mxu0 0.0
    %5603 = vmatpush1.msra.mxu0 0.0
    %5604 = vmatprep.subr.mxu0 0.0
    %5605 = vmatpush1.msra.mxu0 0.0
    %5606 = vmatprep.subr.mxu0 0.0
    %5607 = vmatpush1.msra.mxu0 0.0
    %5608 = vmatprep.subr.mxu0 0.0
    %5609 = vmatpush1.msra.mxu0 0.0
    %5610 = vmatprep.subr.mxu0 0.0
    %5611 = vmatpush1.msra.mxu0 0.0
    %5612 = vmatprep.subr.mxu0 0.0
    %5613 = vmatpush1.msra.mxu0 0.0
    %5614 = vmatprep.subr.mxu0 0.0
    %5615 = vmatpush1.msra.mxu0 0.0
    %5616 = vmatprep.subr.mxu0 0.0
    %5617 = vmatpush1.msra.mxu0 0.0
    %5618 = vmatprep.subr.mxu0 0.0
    %5619 = vmatpush1.msra.mxu0 0.0
    %5620 = vmatprep.mubr.f32.mxu0 0.0
    %5621 = vmatmul.mubr.f32.gmra.mrb[0].mxu0 %v4095
    %v5622 = vpop.f32.mrb[0].mxu0
    %v5623 = vadd.f32 %v5554, %v5622
    %v5624 = vpop.f32.mrb[0].mxu0
    %5625 = vdwg.mxu0
    %s5626 = scalar_lea.vmem %s2, 704
    %v5627 = vld [vmem:[%s5626] sm:$0xff]
    %v5628 = vld [vmem:[%s5626 + $0x8] sm:$0xff]
    %v5629 = vld [vmem:[%s5626 + $0x10] sm:$0xff]
    %v5630 = vld [vmem:[%s5626 + $0x18] sm:$0xff]
    %s5631 = scalar_lea.vmem %s3, 22
    %v5632 = vld [vmem:[%s5631] sm:$0x1]
    %v5634 = vlaneseq
    %v5635 = vshrl.u32 %v5634, 7
    %v5636 = vsub.s32 0, %v5635
    %v5637 = vrot.slane %v5632, %v5636
    %5639 = vmatprep.subr.mxu0 0.0
    %5640 = vmatpush1.msra.mxu0 %v5627
    %5641 = vmatprep.subr.mxu0 0.0
    %5642 = vmatpush1.msra.mxu0 %v5628
    %5643 = vmatprep.subr.mxu0 0.0
    %5644 = vmatpush1.msra.mxu0 %v5629
    %5645 = vmatprep.subr.mxu0 0.0
    %5646 = vmatpush1.msra.mxu0 %v5630
    %5647 = vmatprep.subr.mxu0 0.0
    %5648 = vmatpush1.msra.mxu0 0.0
    %5649 = vmatprep.subr.mxu0 0.0
    %5650 = vmatpush1.msra.mxu0 0.0
    %5651 = vmatprep.subr.mxu0 0.0
    %5652 = vmatpush1.msra.mxu0 0.0
    %5653 = vmatprep.subr.mxu0 0.0
    %5654 = vmatpush1.msra.mxu0 0.0
    %5655 = vmatprep.subr.mxu0 0.0
    %5656 = vmatpush1.msra.mxu0 0.0
    %5657 = vmatprep.subr.mxu0 0.0
    %5658 = vmatpush1.msra.mxu0 0.0
    %5659 = vmatprep.subr.mxu0 0.0
    %5660 = vmatpush1.msra.mxu0 0.0
    %5661 = vmatprep.subr.mxu0 0.0
    %5662 = vmatpush1.msra.mxu0 0.0
    %5663 = vmatprep.subr.mxu0 0.0
    %5664 = vmatpush1.msra.mxu0 0.0
    %5665 = vmatprep.subr.mxu0 0.0
    %5666 = vmatpush1.msra.mxu0 0.0
    %5667 = vmatprep.subr.mxu0 0.0
    %5668 = vmatpush1.msra.mxu0 0.0
    %5669 = vmatprep.subr.mxu0 0.0
    %5670 = vmatpush1.msra.mxu0 0.0
    %5671 = vmatprep.subr.mxu0 0.0
    %5672 = vmatpush1.msra.mxu0 0.0
    %5673 = vmatprep.subr.mxu0 0.0
    %5674 = vmatpush1.msra.mxu0 0.0
    %5675 = vmatprep.subr.mxu0 0.0
    %5676 = vmatpush1.msra.mxu0 0.0
    %5677 = vmatprep.subr.mxu0 0.0
    %5678 = vmatpush1.msra.mxu0 0.0
    %5679 = vmatprep.subr.mxu0 0.0
    %5680 = vmatpush1.msra.mxu0 0.0
    %5681 = vmatprep.subr.mxu0 0.0
    %5682 = vmatpush1.msra.mxu0 0.0
    %5683 = vmatprep.subr.mxu0 0.0
    %5684 = vmatpush1.msra.mxu0 0.0
    %5685 = vmatprep.subr.mxu0 0.0
    %5686 = vmatpush1.msra.mxu0 0.0
    %5687 = vmatprep.subr.mxu0 0.0
    %5688 = vmatpush1.msra.mxu0 0.0
    %5689 = vmatprep.subr.mxu0 0.0
    %5690 = vmatpush1.msra.mxu0 0.0
    %5691 = vmatprep.subr.mxu0 0.0
    %5692 = vmatpush1.msra.mxu0 0.0
    %5693 = vmatprep.subr.mxu0 0.0
    %5694 = vmatpush1.msra.mxu0 0.0
    %5695 = vmatprep.subr.mxu0 0.0
    %5696 = vmatpush1.msra.mxu0 0.0
    %5697 = vmatprep.subr.mxu0 0.0
    %5698 = vmatpush1.msra.mxu0 0.0
    %5699 = vmatprep.subr.mxu0 0.0
    %5700 = vmatpush1.msra.mxu0 0.0
    %5701 = vmatprep.subr.mxu0 0.0
    %5702 = vmatpush1.msra.mxu0 0.0
    %5703 = vmatprep.mubr.f32.mxu0 0.0
    %5704 = vmatmul.mubr.f32.gmra.mrb[0].mxu0 %v4095
    %v5705 = vpop.f32.mrb[0].mxu0
    %v5706 = vadd.f32 %v5637, %v5705
    %v5707 = vpop.f32.mrb[0].mxu0
    %5708 = vdwg.mxu0
    %s5709 = scalar_lea.vmem %s2, 736
    %v5710 = vld [vmem:[%s5709] sm:$0xff]
    %v5711 = vld [vmem:[%s5709 + $0x8] sm:$0xff]
    %v5712 = vld [vmem:[%s5709 + $0x10] sm:$0xff]
    %v5713 = vld [vmem:[%s5709 + $0x18] sm:$0xff]
    %s5714 = scalar_lea.vmem %s3, 23
    %v5715 = vld [vmem:[%s5714] sm:$0x1]
    %v5717 = vlaneseq
    %v5718 = vshrl.u32 %v5717, 7
    %v5719 = vsub.s32 0, %v5718
    %v5720 = vrot.slane %v5715, %v5719
    %5722 = vmatprep.subr.mxu0 0.0
    %5723 = vmatpush1.msra.mxu0 %v5710
    %5724 = vmatprep.subr.mxu0 0.0
    %5725 = vmatpush1.msra.mxu0 %v5711
    %5726 = vmatprep.subr.mxu0 0.0
    %5727 = vmatpush1.msra.mxu0 %v5712
    %5728 = vmatprep.subr.mxu0 0.0
    %5729 = vmatpush1.msra.mxu0 %v5713
    %5730 = vmatprep.subr.mxu0 0.0
    %5731 = vmatpush1.msra.mxu0 0.0
    %5732 = vmatprep.subr.mxu0 0.0
    %5733 = vmatpush1.msra.mxu0 0.0
    %5734 = vmatprep.subr.mxu0 0.0
    %5735 = vmatpush1.msra.mxu0 0.0
    %5736 = vmatprep.subr.mxu0 0.0
    %5737 = vmatpush1.msra.mxu0 0.0
    %5738 = vmatprep.subr.mxu0 0.0
    %5739 = vmatpush1.msra.mxu0 0.0
    %5740 = vmatprep.subr.mxu0 0.0
    %5741 = vmatpush1.msra.mxu0 0.0
    %5742 = vmatprep.subr.mxu0 0.0
    %5743 = vmatpush1.msra.mxu0 0.0
    %5744 = vmatprep.subr.mxu0 0.0
    %5745 = vmatpush1.msra.mxu0 0.0
    %5746 = vmatprep.subr.mxu0 0.0
    %5747 = vmatpush1.msra.mxu0 0.0
    %5748 = vmatprep.subr.mxu0 0.0
    %5749 = vmatpush1.msra.mxu0 0.0
    %5750 = vmatprep.subr.mxu0 0.0
    %5751 = vmatpush1.msra.mxu0 0.0
    %5752 = vmatprep.subr.mxu0 0.0
    %5753 = vmatpush1.msra.mxu0 0.0
    %5754 = vmatprep.subr.mxu0 0.0
    %5755 = vmatpush1.msra.mxu0 0.0
    %5756 = vmatprep.subr.mxu0 0.0
    %5757 = vmatpush1.msra.mxu0 0.0
    %5758 = vmatprep.subr.mxu0 0.0
    %5759 = vmatpush1.msra.mxu0 0.0
    %5760 = vmatprep.subr.mxu0 0.0
    %5761 = vmatpush1.msra.mxu0 0.0
    %5762 = vmatprep.subr.mxu0 0.0
    %5763 = vmatpush1.msra.mxu0 0.0
    %5764 = vmatprep.subr.mxu0 0.0
    %5765 = vmatpush1.msra.mxu0 0.0
    %5766 = vmatprep.subr.mxu0 0.0
    %5767 = vmatpush1.msra.mxu0 0.0
    %5768 = vmatprep.subr.mxu0 0.0
    %5769 = vmatpush1.msra.mxu0 0.0
    %5770 = vmatprep.subr.mxu0 0.0
    %5771 = vmatpush1.msra.mxu0 0.0
    %5772 = vmatprep.subr.mxu0 0.0
    %5773 = vmatpush1.msra.mxu0 0.0
    %5774 = vmatprep.subr.mxu0 0.0
    %5775 = vmatpush1.msra.mxu0 0.0
    %5776 = vmatprep.subr.mxu0 0.0
    %5777 = vmatpush1.msra.mxu0 0.0
    %5778 = vmatprep.subr.mxu0 0.0
    %5779 = vmatpush1.msra.mxu0 0.0
    %5780 = vmatprep.subr.mxu0 0.0
    %5781 = vmatpush1.msra.mxu0 0.0
    %5782 = vmatprep.subr.mxu0 0.0
    %5783 = vmatpush1.msra.mxu0 0.0
    %5784 = vmatprep.subr.mxu0 0.0
    %5785 = vmatpush1.msra.mxu0 0.0
    %5786 = vmatprep.mubr.f32.mxu0 0.0
    %5787 = vmatmul.mubr.f32.gmra.mrb[0].mxu0 %v4095
    %v5788 = vpop.f32.mrb[0].mxu0
    %v5789 = vadd.f32 %v5720, %v5788
    %v5790 = vpop.f32.mrb[0].mxu0
    %5791 = vdwg.mxu0
    %v5793 = vsel %vm304, %v5623, 0
    %v5796 = vsel %vm304, %v5706, 0
    %5798 = vmatprep.subr.mxu0 0.0
    %5799 = vmatpush1.xpose.msra.mxu0 %v5796
    %5800 = vmatprep.subr.mxu0 0.0
    %5801 = vmatpush1.xpose.msra.mxu0 0.0
    %5802 = vmatprep.subr.mxu0 0.0
    %5803 = vmatpush1.xpose.msra.mxu0 0.0
    %5804 = vmatprep.subr.mxu0 0.0
    %5805 = vmatpush1.xpose.msra.mxu0 0.0
    %5806 = vmatprep.subr.mxu0 0.0
    %5807 = vmatpush1.xpose.msra.mxu0 0.0
    %5808 = vmatprep.subr.mxu0 0.0
    %5809 = vmatpush1.xpose.msra.mxu0 0.0
    %5810 = vmatprep.subr.mxu0 0.0
    %5811 = vmatpush1.xpose.msra.mxu0 0.0
    %5812 = vmatprep.subr.mxu0 0.0
    %5813 = vmatpush1.xpose.msra.mxu0 0.0
    %5814 = vmatprep.subr.mxu0 0.0
    %5815 = vmatpush1.xpose.msra.mxu0 0.0
    %5816 = vmatprep.subr.mxu0 0.0
    %5817 = vmatpush1.xpose.msra.mxu0 0.0
    %5818 = vmatprep.subr.mxu0 0.0
    %5819 = vmatpush1.xpose.msra.mxu0 0.0
    %5820 = vmatprep.subr.mxu0 0.0
    %5821 = vmatpush1.xpose.msra.mxu0 0.0
    %5822 = vmatprep.subr.mxu0 0.0
    %5823 = vmatpush1.xpose.msra.mxu0 0.0
    %5824 = vmatprep.subr.mxu0 0.0
    %5825 = vmatpush1.xpose.msra.mxu0 0.0
    %5826 = vmatprep.subr.mxu0 0.0
    %5827 = vmatpush1.xpose.msra.mxu0 0.0
    %5828 = vmatprep.subr.mxu0 0.0
    %5829 = vmatpush1.xpose.msra.mxu0 0.0
    %5830 = vmatprep.subr.mxu0 0.0
    %5831 = vmatpush1.xpose.msra.mxu0 0.0
    %5832 = vmatprep.subr.mxu0 0.0
    %5833 = vmatpush1.xpose.msra.mxu0 0.0
    %5834 = vmatprep.subr.mxu0 0.0
    %5835 = vmatpush1.xpose.msra.mxu0 0.0
    %5836 = vmatprep.subr.mxu0 0.0
    %5837 = vmatpush1.xpose.msra.mxu0 0.0
    %5838 = vmatprep.subr.mxu0 0.0
    %5839 = vmatpush1.xpose.msra.mxu0 0.0
    %5840 = vmatprep.subr.mxu0 0.0
    %5841 = vmatpush1.xpose.msra.mxu0 0.0
    %5842 = vmatprep.subr.mxu0 0.0
    %5843 = vmatpush1.xpose.msra.mxu0 0.0
    %5844 = vmatprep.subr.mxu0 0.0
    %5845 = vmatpush1.xpose.msra.mxu0 0.0
    %5846 = vmatprep.subr.mxu0 0.0
    %5847 = vmatpush1.xpose.msra.mxu0 0.0
    %5848 = vmatprep.subr.mxu0 0.0
    %5849 = vmatpush1.xpose.msra.mxu0 0.0
    %5850 = vmatprep.subr.mxu0 0.0
    %5851 = vmatpush1.xpose.msra.mxu0 0.0
    %5852 = vmatprep.subr.mxu0 0.0
    %5853 = vmatpush1.xpose.msra.mxu0 0.0
    %5854 = vmatprep.subr.mxu0 0.0
    %5855 = vmatpush1.xpose.msra.mxu0 0.0
    %5856 = vmatprep.subr.mxu0 0.0
    %5857 = vmatpush1.xpose.msra.mxu0 0.0
    %5858 = vmatprep.subr.mxu0 0.0
    %5859 = vmatpush1.xpose.msra.mxu0 0.0
    %5860 = vmatprep.subr.mxu0 0.0
    %5861 = vmatpush1.xpose.msra.mxu0 0.0
    %5862 = vmatprep.mubr.f32.mxu0 0.0
    %5863 = vmatmul.mubr.f32.gmra.mrb[0].mxu0 %v5793
    %v5864 = vpop.f32.mrb[0].mxu0
    %v5865 = vadd.f32 0.0, %v5864
    %v5866 = vpop.f32.mrb[0].mxu0
    %5867 = vdwg.mxu0
    %v5868 = vmul.f32 %v5865, 0.35355338
    %v5869 = vadd.f32 %v5868, %v52
    %v5870 = vsel %vm304, %v5869, -inf
    %5871 = vmax.xlane.f32.xlu0 %v5870
    %v5872 = vpop.xlane.xlu0 %5871
    %v5873 = vsub.f32 %v5869, %v5872
    %v5874 = vmul.f32 %v5873, 1.442695
    %v5875 = vpow.pop %v5874
    %v5876 = vsel %vm304, %v5875, 0.0
    %5877 = vadd.xlane.f32.xlu0 %v5876
    %v5878 = vpop.xlane.xlu0 %5877
    %v5879 = vrcp.pop %v5878
    %v5880 = vmul.f32 %v5875, %v5879
    %v5882 = vsel %vm304, %v5880, 0
    %5884 = vmatprep.subr.mxu0 0.0
    %5885 = vmatpush1.msra.mxu0 %v5789
    %5886 = vmatprep.subr.mxu0 0.0
    %5887 = vmatpush1.msra.mxu0 0.0
    %5888 = vmatprep.subr.mxu0 0.0
    %5889 = vmatpush1.msra.mxu0 0.0
    %5890 = vmatprep.subr.mxu0 0.0
    %5891 = vmatpush1.msra.mxu0 0.0
    %5892 = vmatprep.subr.mxu0 0.0
    %5893 = vmatpush1.msra.mxu0 0.0
    %5894 = vmatprep.subr.mxu0 0.0
    %5895 = vmatpush1.msra.mxu0 0.0
    %5896 = vmatprep.subr.mxu0 0.0
    %5897 = vmatpush1.msra.mxu0 0.0
    %5898 = vmatprep.subr.mxu0 0.0
    %5899 = vmatpush1.msra.mxu0 0.0
    %5900 = vmatprep.subr.mxu0 0.0
    %5901 = vmatpush1.msra.mxu0 0.0
    %5902 = vmatprep.subr.mxu0 0.0
    %5903 = vmatpush1.msra.mxu0 0.0
    %5904 = vmatprep.subr.mxu0 0.0
    %5905 = vmatpush1.msra.mxu0 0.0
    %5906 = vmatprep.subr.mxu0 0.0
    %5907 = vmatpush1.msra.mxu0 0.0
    %5908 = vmatprep.subr.mxu0 0.0
    %5909 = vmatpush1.msra.mxu0 0.0
    %5910 = vmatprep.subr.mxu0 0.0
    %5911 = vmatpush1.msra.mxu0 0.0
    %5912 = vmatprep.subr.mxu0 0.0
    %5913 = vmatpush1.msra.mxu0 0.0
    %5914 = vmatprep.subr.mxu0 0.0
    %5915 = vmatpush1.msra.mxu0 0.0
    %5916 = vmatprep.subr.mxu0 0.0
    %5917 = vmatpush1.msra.mxu0 0.0
    %5918 = vmatprep.subr.mxu0 0.0
    %5919 = vmatpush1.msra.mxu0 0.0
    %5920 = vmatprep.subr.mxu0 0.0
    %5921 = vmatpush1.msra.mxu0 0.0
    %5922 = vmatprep.subr.mxu0 0.0
    %5923 = vmatpush1.msra.mxu0 0.0
    %5924 = vmatprep.subr.mxu0 0.0
    %5925 = vmatpush1.msra.mxu0 0.0
    %5926 = vmatprep.subr.mxu0 0.0
    %5927 = vmatpush1.msra.mxu0 0.0
    %5928 = vmatprep.subr.mxu0 0.0
    %5929 = vmatpush1.msra.mxu0 0.0
    %5930 = vmatprep.subr.mxu0 0.0
    %5931 = vmatpush1.msra.mxu0 0.0
    %5932 = vmatprep.subr.mxu0 0.0
    %5933 = vmatpush1.msra.mxu0 0.0
    %5934 = vmatprep.subr.mxu0 0.0
    %5935 = vmatpush1.msra.mxu0 0.0
    %5936 = vmatprep.subr.mxu0 0.0
    %5937 = vmatpush1.msra.mxu0 0.0
    %5938 = vmatprep.subr.mxu0 0.0
    %5939 = vmatpush1.msra.mxu0 0.0
    %5940 = vmatprep.subr.mxu0 0.0
    %5941 = vmatpush1.msra.mxu0 0.0
    %5942 = vmatprep.subr.mxu0 0.0
    %5943 = vmatpush1.msra.mxu0 0.0
    %5944 = vmatprep.subr.mxu0 0.0
    %5945 = vmatpush1.msra.mxu0 0.0
    %5946 = vmatprep.subr.mxu0 0.0
    %5947 = vmatpush1.msra.mxu0 0.0
    %5948 = vmatprep.mubr.f32.mxu0 0.0
    %5949 = vmatmul.mubr.f32.gmra.mrb[0].mxu0 %v5882
    %v5950 = vpop.f32.mrb[0].mxu0
    %v5951 = vadd.f32 0.0, %v5950
    %v5952 = vpop.f32.mrb[0].mxu0
    %5953 = vdwg.mxu0
    %s5954 = scalar_lea.vmem %s4, 56
    %v5955 = vld [vmem:[%s5954] sm:$0xff]
    %v5957 = vsel %vm304, %v5951, 0
    %5959 = vmatprep.subr.mxu0 0.0
    %5960 = vmatpush1.msra.mxu0 %v5955
    %5961 = vmatprep.subr.mxu0 0.0
    %5962 = vmatpush1.msra.mxu0 0.0
    %5963 = vmatprep.subr.mxu0 0.0
    %5964 = vmatpush1.msra.mxu0 0.0
    %5965 = vmatprep.subr.mxu0 0.0
    %5966 = vmatpush1.msra.mxu0 0.0
    %5967 = vmatprep.subr.mxu0 0.0
    %5968 = vmatpush1.msra.mxu0 0.0
    %5969 = vmatprep.subr.mxu0 0.0
    %5970 = vmatpush1.msra.mxu0 0.0
    %5971 = vmatprep.subr.mxu0 0.0
    %5972 = vmatpush1.msra.mxu0 0.0
    %5973 = vmatprep.subr.mxu0 0.0
    %5974 = vmatpush1.msra.mxu0 0.0
    %5975 = vmatprep.subr.mxu0 0.0
    %5976 = vmatpush1.msra.mxu0 0.0
    %5977 = vmatprep.subr.mxu0 0.0
    %5978 = vmatpush1.msra.mxu0 0.0
    %5979 = vmatprep.subr.mxu0 0.0
    %5980 = vmatpush1.msra.mxu0 0.0
    %5981 = vmatprep.subr.mxu0 0.0
    %5982 = vmatpush1.msra.mxu0 0.0
    %5983 = vmatprep.subr.mxu0 0.0
    %5984 = vmatpush1.msra.mxu0 0.0
    %5985 = vmatprep.subr.mxu0 0.0
    %5986 = vmatpush1.msra.mxu0 0.0
    %5987 = vmatprep.subr.mxu0 0.0
    %5988 = vmatpush1.msra.mxu0 0.0
    %5989 = vmatprep.subr.mxu0 0.0
    %5990 = vmatpush1.msra.mxu0 0.0
    %5991 = vmatprep.subr.mxu0 0.0
    %5992 = vmatpush1.msra.mxu0 0.0
    %5993 = vmatprep.subr.mxu0 0.0
    %5994 = vmatpush1.msra.mxu0 0.0
    %5995 = vmatprep.subr.mxu0 0.0
    %5996 = vmatpush1.msra.mxu0 0.0
    %5997 = vmatprep.subr.mxu0 0.0
    %5998 = vmatpush1.msra.mxu0 0.0
    %5999 = vmatprep.subr.mxu0 0.0
    %6000 = vmatpush1.msra.mxu0 0.0
    %6001 = vmatprep.subr.mxu0 0.0
    %6002 = vmatpush1.msra.mxu0 0.0
    %6003 = vmatprep.subr.mxu0 0.0
    %6004 = vmatpush1.msra.mxu0 0.0
    %6005 = vmatprep.subr.mxu0 0.0
    %6006 = vmatpush1.msra.mxu0 0.0
    %6007 = vmatprep.subr.mxu0 0.0
    %6008 = vmatpush1.msra.mxu0 0.0
    %6009 = vmatprep.subr.mxu0 0.0
    %6010 = vmatpush1.msra.mxu0 0.0
    %6011 = vmatprep.subr.mxu0 0.0
    %6012 = vmatpush1.msra.mxu0 0.0
    %6013 = vmatprep.subr.mxu0 0.0
    %6014 = vmatpush1.msra.mxu0 0.0
    %6015 = vmatprep.subr.mxu0 0.0
    %6016 = vmatpush1.msra.mxu0 0.0
    %6017 = vmatprep.subr.mxu0 0.0
    %6018 = vmatpush1.msra.mxu0 0.0
    %6019 = vmatprep.subr.mxu0 0.0
    %6020 = vmatpush1.msra.mxu0 0.0
    %6021 = vmatprep.subr.mxu0 0.0
    %6022 = vmatpush1.msra.mxu0 0.0
    %6023 = vmatprep.mubr.f32.mxu0 0.0
    %6024 = vmatmul.mubr.f32.gmra.mrb[0].mxu0 %v5957
    %v6025 = vpop.f32.mrb[0].mxu0
    %v6026 = vadd.f32 0.0, %v6025
    %v6027 = vpop.f32.mrb[0].mxu0
    %6028 = vdwg.mxu0
    %v6029 = vadd.f32 %v5542, %v6026
    %v6031 = vsel %vm64, %v4080, 0
    %6033 = vmatprep.subr.mxu0 0.0
    %6034 = vmatpush1.msra.mxu0 %v4082
    %6035 = vmatprep.subr.mxu0 0.0
    %6036 = vmatpush1.msra.mxu0 %v4083
    %6037 = vmatprep.subr.mxu0 0.0
    %6038 = vmatpush1.msra.mxu0 %v4084
    %6039 = vmatprep.subr.mxu0 0.0
    %6040 = vmatpush1.msra.mxu0 %v4085
    %6041 = vmatprep.subr.mxu0 0.0
    %6042 = vmatpush1.msra.mxu0 0.0
    %6043 = vmatprep.subr.mxu0 0.0
    %6044 = vmatpush1.msra.mxu0 0.0
    %6045 = vmatprep.subr.mxu0 0.0
    %6046 = vmatpush1.msra.mxu0 0.0
    %6047 = vmatprep.subr.mxu0 0.0
    %6048 = vmatpush1.msra.mxu0 0.0
    %6049 = vmatprep.subr.mxu0 0.0
    %6050 = vmatpush1.msra.mxu0 0.0
    %6051 = vmatprep.subr.mxu0 0.0
    %6052 = vmatpush1.msra.mxu0 0.0
    %6053 = vmatprep.subr.mxu0 0.0
    %6054 = vmatpush1.msra.mxu0 0.0
    %6055 = vmatprep.subr.mxu0 0.0
    %6056 = vmatpush1.msra.mxu0 0.0
    %6057 = vmatprep.subr.mxu0 0.0
    %6058 = vmatpush1.msra.mxu0 0.0
    %6059 = vmatprep.subr.mxu0 0.0
    %6060 = vmatpush1.msra.mxu0 0.0
    %6061 = vmatprep.subr.mxu0 0.0
    %6062 = vmatpush1.msra.mxu0 0.0
    %6063 = vmatprep.subr.mxu0 0.0
    %6064 = vmatpush1.msra.mxu0 0.0
    %6065 = vmatprep.subr.mxu0 0.0
    %6066 = vmatpush1.msra.mxu0 0.0
    %6067 = vmatprep.subr.mxu0 0.0
    %6068 = vmatpush1.msra.mxu0 0.0
    %6069 = vmatprep.subr.mxu0 0.0
    %6070 = vmatpush1.msra.mxu0 0.0
    %6071 = vmatprep.subr.mxu0 0.0
    %6072 = vmatpush1.msra.mxu0 0.0
    %6073 = vmatprep.subr.mxu0 0.0
    %6074 = vmatpush1.msra.mxu0 0.0
    %6075 = vmatprep.subr.mxu0 0.0
    %6076 = vmatpush1.msra.mxu0 0.0
    %6077 = vmatprep.subr.mxu0 0.0
    %6078 = vmatpush1.msra.mxu0 0.0
    %6079 = vmatprep.subr.mxu0 0.0
    %6080 = vmatpush1.msra.mxu0 0.0
    %6081 = vmatprep.subr.mxu0 0.0
    %6082 = vmatpush1.msra.mxu0 0.0
    %6083 = vmatprep.subr.mxu0 0.0
    %6084 = vmatpush1.msra.mxu0 0.0
    %6085 = vmatprep.subr.mxu0 0.0
    %6086 = vmatpush1.msra.mxu0 0.0
    %6087 = vmatprep.subr.mxu0 0.0
    %6088 = vmatpush1.msra.mxu0 0.0
    %6089 = vmatprep.subr.mxu0 0.0
    %6090 = vmatpush1.msra.mxu0 0.0
    %6091 = vmatprep.subr.mxu0 0.0
    %6092 = vmatpush1.msra.mxu0 0.0
    %6093 = vmatprep.subr.mxu0 0.0
    %6094 = vmatpush1.msra.mxu0 0.0
    %6095 = vmatprep.subr.mxu0 0.0
    %6096 = vmatpush1.msra.mxu0 0.0
    %6097 = vmatprep.mubr.f32.mxu0 0.0
    %6098 = vmatmul.mubr.f32.gmra.mrb[0].mxu0 %v6031
    %v6099 = vpop.f32.mrb[0].mxu0
    %v6100 = vadd.f32 %v4092, %v6099
    %v6101 = vpop.f32.mrb[0].mxu0
    %6102 = vdwg.mxu0
    %6103 = vmatprep.subr.mxu0 0.0
    %6104 = vmatpush1.msra.mxu0 %v4168
    %6105 = vmatprep.subr.mxu0 0.0
    %6106 = vmatpush1.msra.mxu0 %v4169
    %6107 = vmatprep.subr.mxu0 0.0
    %6108 = vmatpush1.msra.mxu0 %v4170
    %6109 = vmatprep.subr.mxu0 0.0
    %6110 = vmatpush1.msra.mxu0 %v4171
    %6111 = vmatprep.subr.mxu0 0.0
    %6112 = vmatpush1.msra.mxu0 0.0
    %6113 = vmatprep.subr.mxu0 0.0
    %6114 = vmatpush1.msra.mxu0 0.0
    %6115 = vmatprep.subr.mxu0 0.0
    %6116 = vmatpush1.msra.mxu0 0.0
    %6117 = vmatprep.subr.mxu0 0.0
    %6118 = vmatpush1.msra.mxu0 0.0
    %6119 = vmatprep.subr.mxu0 0.0
    %6120 = vmatpush1.msra.mxu0 0.0
    %6121 = vmatprep.subr.mxu0 0.0
    %6122 = vmatpush1.msra.mxu0 0.0
    %6123 = vmatprep.subr.mxu0 0.0
    %6124 = vmatpush1.msra.mxu0 0.0
    %6125 = vmatprep.subr.mxu0 0.0
    %6126 = vmatpush1.msra.mxu0 0.0
    %6127 = vmatprep.subr.mxu0 0.0
    %6128 = vmatpush1.msra.mxu0 0.0
    %6129 = vmatprep.subr.mxu0 0.0
    %6130 = vmatpush1.msra.mxu0 0.0
    %6131 = vmatprep.subr.mxu0 0.0
    %6132 = vmatpush1.msra.mxu0 0.0
    %6133 = vmatprep.subr.mxu0 0.0
    %6134 = vmatpush1.msra.mxu0 0.0
    %6135 = vmatprep.subr.mxu0 0.0
    %6136 = vmatpush1.msra.mxu0 0.0
    %6137 = vmatprep.subr.mxu0 0.0
    %6138 = vmatpush1.msra.mxu0 0.0
    %6139 = vmatprep.subr.mxu0 0.0
    %6140 = vmatpush1.msra.mxu0 0.0
    %6141 = vmatprep.subr.mxu0 0.0
    %6142 = vmatpush1.msra.mxu0 0.0
    %6143 = vmatprep.subr.mxu0 0.0
    %6144 = vmatpush1.msra.mxu0 0.0
    %6145 = vmatprep.subr.mxu0 0.0
    %6146 = vmatpush1.msra.mxu0 0.0
    %6147 = vmatprep.subr.mxu0 0.0
    %6148 = vmatpush1.msra.mxu0 0.0
    %6149 = vmatprep.subr.mxu0 0.0
    %6150 = vmatpush1.msra.mxu0 0.0
    %6151 = vmatprep.subr.mxu0 0.0
    %6152 = vmatpush1.msra.mxu0 0.0
    %6153 = vmatprep.subr.mxu0 0.0
    %6154 = vmatpush1.msra.mxu0 0.0
    %6155 = vmatprep.subr.mxu0 0.0
    %6156 = vmatpush1.msra.mxu0 0.0
    %6157 = vmatprep.subr.mxu0 0.0
    %6158 = vmatpush1.msra.mxu0 0.0
    %6159 = vmatprep.subr.mxu0 0.0
    %6160 = vmatpush1.msra.mxu0 0.0
    %6161 = vmatprep.subr.mxu0 0.0
    %6162 = vmatpush1.msra.mxu0 0.0
    %6163 = vmatprep.subr.mxu0 0.0
    %6164 = vmatpush1.msra.mxu0 0.0
    %6165 = vmatprep.subr.mxu0 0.0
    %6166 = vmatpush1.msra.mxu0 0.0
    %6167 = vmatprep.mubr.f32.mxu0 0.0
    %6168 = vmatmul.mubr.f32.gmra.mrb[0].mxu0 %v6031
    %v6169 = vpop.f32.mrb[0].mxu0
    %v6170 = vadd.f32 %v4178, %v6169
    %v6171 = vpop.f32.mrb[0].mxu0
    %6172 = vdwg.mxu0
    %6173 = vmatprep.subr.mxu0 0.0
    %6174 = vmatpush1.msra.mxu0 %v4251
    %6175 = vmatprep.subr.mxu0 0.0
    %6176 = vmatpush1.msra.mxu0 %v4252
    %6177 = vmatprep.subr.mxu0 0.0
    %6178 = vmatpush1.msra.mxu0 %v4253
    %6179 = vmatprep.subr.mxu0 0.0
    %6180 = vmatpush1.msra.mxu0 %v4254
    %6181 = vmatprep.subr.mxu0 0.0
    %6182 = vmatpush1.msra.mxu0 0.0
    %6183 = vmatprep.subr.mxu0 0.0
    %6184 = vmatpush1.msra.mxu0 0.0
    %6185 = vmatprep.subr.mxu0 0.0
    %6186 = vmatpush1.msra.mxu0 0.0
    %6187 = vmatprep.subr.mxu0 0.0
    %6188 = vmatpush1.msra.mxu0 0.0
    %6189 = vmatprep.subr.mxu0 0.0
    %6190 = vmatpush1.msra.mxu0 0.0
    %6191 = vmatprep.subr.mxu0 0.0
    %6192 = vmatpush1.msra.mxu0 0.0
    %6193 = vmatprep.subr.mxu0 0.0
    %6194 = vmatpush1.msra.mxu0 0.0
    %6195 = vmatprep.subr.mxu0 0.0
    %6196 = vmatpush1.msra.mxu0 0.0
    %6197 = vmatprep.subr.mxu0 0.0
    %6198 = vmatpush1.msra.mxu0 0.0
    %6199 = vmatprep.subr.mxu0 0.0
    %6200 = vmatpush1.msra.mxu0 0.0
    %6201 = vmatprep.subr.mxu0 0.0
    %6202 = vmatpush1.msra.mxu0 0.0
    %6203 = vmatprep.subr.mxu0 0.0
    %6204 = vmatpush1.msra.mxu0 0.0
    %6205 = vmatprep.subr.mxu0 0.0
    %6206 = vmatpush1.msra.mxu0 0.0
    %6207 = vmatprep.subr.mxu0 0.0
    %6208 = vmatpush1.msra.mxu0 0.0
    %6209 = vmatprep.subr.mxu0 0.0
    %6210 = vmatpush1.msra.mxu0 0.0
    %6211 = vmatprep.subr.mxu0 0.0
    %6212 = vmatpush1.msra.mxu0 0.0
    %6213 = vmatprep.subr.mxu0 0.0
    %6214 = vmatpush1.msra.mxu0 0.0
    %6215 = vmatprep.subr.mxu0 0.0
    %6216 = vmatpush1.msra.mxu0 0.0
    %6217 = vmatprep.subr.mxu0 0.0
    %6218 = vmatpush1.msra.mxu0 0.0
    %6219 = vmatprep.subr.mxu0 0.0
    %6220 = vmatpush1.msra.mxu0 0.0
    %6221 = vmatprep.subr.mxu0 0.0
    %6222 = vmatpush1.msra.mxu0 0.0
    %6223 = vmatprep.subr.mxu0 0.0
    %6224 = vmatpush1.msra.mxu0 0.0
    %6225 = vmatprep.subr.mxu0 0.0
    %6226 = vmatpush1.msra.mxu0 0.0
    %6227 = vmatprep.subr.mxu0 0.0
    %6228 = vmatpush1.msra.mxu0 0.0
    %6229 = vmatprep.subr.mxu0 0.0
    %6230 = vmatpush1.msra.mxu0 0.0
    %6231 = vmatprep.subr.mxu0 0.0
    %6232 = vmatpush1.msra.mxu0 0.0
    %6233 = vmatprep.subr.mxu0 0.0
    %6234 = vmatpush1.msra.mxu0 0.0
    %6235 = vmatprep.subr.mxu0 0.0
    %6236 = vmatpush1.msra.mxu0 0.0
    %6237 = vmatprep.mubr.f32.mxu0 0.0
    %6238 = vmatmul.mubr.f32.gmra.mrb[0].mxu0 %v6031
    %v6239 = vpop.f32.mrb[0].mxu0
    %v6240 = vadd.f32 %v4261, %v6239
    %v6241 = vpop.f32.mrb[0].mxu0
    %6242 = vdwg.mxu0
    %v6244 = vsel %vm304, %v6100, 0
    %v6247 = vsel %vm304, %v6170, 0
    %6249 = vmatprep.subr.mxu0 0.0
    %6250 = vmatpush1.xpose.msra.mxu0 %v6247
    %6251 = vmatprep.subr.mxu0 0.0
    %6252 = vmatpush1.xpose.msra.mxu0 0.0
    %6253 = vmatprep.subr.mxu0 0.0
    %6254 = vmatpush1.xpose.msra.mxu0 0.0
    %6255 = vmatprep.subr.mxu0 0.0
    %6256 = vmatpush1.xpose.msra.mxu0 0.0
    %6257 = vmatprep.subr.mxu0 0.0
    %6258 = vmatpush1.xpose.msra.mxu0 0.0
    %6259 = vmatprep.subr.mxu0 0.0
    %6260 = vmatpush1.xpose.msra.mxu0 0.0
    %6261 = vmatprep.subr.mxu0 0.0
    %6262 = vmatpush1.xpose.msra.mxu0 0.0
    %6263 = vmatprep.subr.mxu0 0.0
    %6264 = vmatpush1.xpose.msra.mxu0 0.0
    %6265 = vmatprep.subr.mxu0 0.0
    %6266 = vmatpush1.xpose.msra.mxu0 0.0
    %6267 = vmatprep.subr.mxu0 0.0
    %6268 = vmatpush1.xpose.msra.mxu0 0.0
    %6269 = vmatprep.subr.mxu0 0.0
    %6270 = vmatpush1.xpose.msra.mxu0 0.0
    %6271 = vmatprep.subr.mxu0 0.0
    %6272 = vmatpush1.xpose.msra.mxu0 0.0
    %6273 = vmatprep.subr.mxu0 0.0
    %6274 = vmatpush1.xpose.msra.mxu0 0.0
    %6275 = vmatprep.subr.mxu0 0.0
    %6276 = vmatpush1.xpose.msra.mxu0 0.0
    %6277 = vmatprep.subr.mxu0 0.0
    %6278 = vmatpush1.xpose.msra.mxu0 0.0
    %6279 = vmatprep.subr.mxu0 0.0
    %6280 = vmatpush1.xpose.msra.mxu0 0.0
    %6281 = vmatprep.subr.mxu0 0.0
    %6282 = vmatpush1.xpose.msra.mxu0 0.0
    %6283 = vmatprep.subr.mxu0 0.0
    %6284 = vmatpush1.xpose.msra.mxu0 0.0
    %6285 = vmatprep.subr.mxu0 0.0
    %6286 = vmatpush1.xpose.msra.mxu0 0.0
    %6287 = vmatprep.subr.mxu0 0.0
    %6288 = vmatpush1.xpose.msra.mxu0 0.0
    %6289 = vmatprep.subr.mxu0 0.0
    %6290 = vmatpush1.xpose.msra.mxu0 0.0
    %6291 = vmatprep.subr.mxu0 0.0
    %6292 = vmatpush1.xpose.msra.mxu0 0.0
    %6293 = vmatprep.subr.mxu0 0.0
    %6294 = vmatpush1.xpose.msra.mxu0 0.0
    %6295 = vmatprep.subr.mxu0 0.0
    %6296 = vmatpush1.xpose.msra.mxu0 0.0
    %6297 = vmatprep.subr.mxu0 0.0
    %6298 = vmatpush1.xpose.msra.mxu0 0.0
    %6299 = vmatprep.subr.mxu0 0.0
    %6300 = vmatpush1.xpose.msra.mxu0 0.0
    %6301 = vmatprep.subr.mxu0 0.0
    %6302 = vmatpush1.xpose.msra.mxu0 0.0
    %6303 = vmatprep.subr.mxu0 0.0
    %6304 = vmatpush1.xpose.msra.mxu0 0.0
    %6305 = vmatprep.subr.mxu0 0.0
    %6306 = vmatpush1.xpose.msra.mxu0 0.0
    %6307 = vmatprep.subr.mxu0 0.0
    %6308 = vmatpush1.xpose.msra.mxu0 0.0
    %6309 = vmatprep.subr.mxu0 0.0
    %6310 = vmatpush1.xpose.msra.mxu0 0.0
    %6311 = vmatprep.subr.mxu0 0.0
    %6312 = vmatpush1.xpose.msra.mxu0 0.0
    %6313 = vmatprep.mubr.f32.mxu0 0.0
    %6314 = vmatmul.mubr.f32.gmra.mrb[0].mxu0 %v6244
    %v6315 = vpop.f32.mrb[0].mxu0
    %v6316 = vadd.f32 0.0, %v6315
    %v6317 = vpop.f32.mrb[0].mxu0
    %6318 = vdwg.mxu0
    %v6319 = vmul.f32 %v6316, 0.35355338
    %v6320 = vadd.f32 %v6319, %v2002
    %v6321 = vsel %vm304, %v6320, -inf
    %6322 = vmax.xlane.f32.xlu0 %v6321
    %v6323 = vpop.xlane.xlu0 %6322
    %v6324 = vsub.f32 %v6320, %v6323
    %v6325 = vmul.f32 %v6324, 1.442695
    %v6326 = vpow.pop %v6325
    %v6327 = vsel %vm304, %v6326, 0.0
    %6328 = vadd.xlane.f32.xlu0 %v6327
    %v6329 = vpop.xlane.xlu0 %6328
    %v6330 = vrcp.pop %v6329
    %v6331 = vmul.f32 %v6326, %v6330
    %v6333 = vsel %vm304, %v6331, 0
    %6335 = vmatprep.subr.mxu0 0.0
    %6336 = vmatpush1.msra.mxu0 %v6240
    %6337 = vmatprep.subr.mxu0 0.0
    %6338 = vmatpush1.msra.mxu0 0.0
    %6339 = vmatprep.subr.mxu0 0.0
    %6340 = vmatpush1.msra.mxu0 0.0
    %6341 = vmatprep.subr.mxu0 0.0
    %6342 = vmatpush1.msra.mxu0 0.0
    %6343 = vmatprep.subr.mxu0 0.0
    %6344 = vmatpush1.msra.mxu0 0.0
    %6345 = vmatprep.subr.mxu0 0.0
    %6346 = vmatpush1.msra.mxu0 0.0
    %6347 = vmatprep.subr.mxu0 0.0
    %6348 = vmatpush1.msra.mxu0 0.0
    %6349 = vmatprep.subr.mxu0 0.0
    %6350 = vmatpush1.msra.mxu0 0.0
    %6351 = vmatprep.subr.mxu0 0.0
    %6352 = vmatpush1.msra.mxu0 0.0
    %6353 = vmatprep.subr.mxu0 0.0
    %6354 = vmatpush1.msra.mxu0 0.0
    %6355 = vmatprep.subr.mxu0 0.0
    %6356 = vmatpush1.msra.mxu0 0.0
    %6357 = vmatprep.subr.mxu0 0.0
    %6358 = vmatpush1.msra.mxu0 0.0
    %6359 = vmatprep.subr.mxu0 0.0
    %6360 = vmatpush1.msra.mxu0 0.0
    %6361 = vmatprep.subr.mxu0 0.0
    %6362 = vmatpush1.msra.mxu0 0.0
    %6363 = vmatprep.subr.mxu0 0.0
    %6364 = vmatpush1.msra.mxu0 0.0
    %6365 = vmatprep.subr.mxu0 0.0
    %6366 = vmatpush1.msra.mxu0 0.0
    %6367 = vmatprep.subr.mxu0 0.0
    %6368 = vmatpush1.msra.mxu0 0.0
    %6369 = vmatprep.subr.mxu0 0.0
    %6370 = vmatpush1.msra.mxu0 0.0
    %6371 = vmatprep.subr.mxu0 0.0
    %6372 = vmatpush1.msra.mxu0 0.0
    %6373 = vmatprep.subr.mxu0 0.0
    %6374 = vmatpush1.msra.mxu0 0.0
    %6375 = vmatprep.subr.mxu0 0.0
    %6376 = vmatpush1.msra.mxu0 0.0
    %6377 = vmatprep.subr.mxu0 0.0
    %6378 = vmatpush1.msra.mxu0 0.0
    %6379 = vmatprep.subr.mxu0 0.0
    %6380 = vmatpush1.msra.mxu0 0.0
    %6381 = vmatprep.subr.mxu0 0.0
    %6382 = vmatpush1.msra.mxu0 0.0
    %6383 = vmatprep.subr.mxu0 0.0
    %6384 = vmatpush1.msra.mxu0 0.0
    %6385 = vmatprep.subr.mxu0 0.0
    %6386 = vmatpush1.msra.mxu0 0.0
    %6387 = vmatprep.subr.mxu0 0.0
    %6388 = vmatpush1.msra.mxu0 0.0
    %6389 = vmatprep.subr.mxu0 0.0
    %6390 = vmatpush1.msra.mxu0 0.0
    %6391 = vmatprep.subr.mxu0 0.0
    %6392 = vmatpush1.msra.mxu0 0.0
    %6393 = vmatprep.subr.mxu0 0.0
    %6394 = vmatpush1.msra.mxu0 0.0
    %6395 = vmatprep.subr.mxu0 0.0
    %6396 = vmatpush1.msra.mxu0 0.0
    %6397 = vmatprep.subr.mxu0 0.0
    %6398 = vmatpush1.msra.mxu0 0.0
    %6399 = vmatprep.mubr.f32.mxu0 0.0
    %6400 = vmatmul.mubr.f32.gmra.mrb[0].mxu0 %v6333
    %v6401 = vpop.f32.mrb[0].mxu0
    %v6402 = vadd.f32 0.0, %v6401
    %v6403 = vpop.f32.mrb[0].mxu0
    %6404 = vdwg.mxu0
    %6405 = vmatprep.subr.mxu0 0.0
    %6406 = vmatpush1.msra.mxu0 %v4498
    %6407 = vmatprep.subr.mxu0 0.0
    %6408 = vmatpush1.msra.mxu0 %v4499
    %6409 = vmatprep.subr.mxu0 0.0
    %6410 = vmatpush1.msra.mxu0 %v4500
    %6411 = vmatprep.subr.mxu0 0.0
    %6412 = vmatpush1.msra.mxu0 %v4501
    %6413 = vmatprep.subr.mxu0 0.0
    %6414 = vmatpush1.msra.mxu0 0.0
    %6415 = vmatprep.subr.mxu0 0.0
    %6416 = vmatpush1.msra.mxu0 0.0
    %6417 = vmatprep.subr.mxu0 0.0
    %6418 = vmatpush1.msra.mxu0 0.0
    %6419 = vmatprep.subr.mxu0 0.0
    %6420 = vmatpush1.msra.mxu0 0.0
    %6421 = vmatprep.subr.mxu0 0.0
    %6422 = vmatpush1.msra.mxu0 0.0
    %6423 = vmatprep.subr.mxu0 0.0
    %6424 = vmatpush1.msra.mxu0 0.0
    %6425 = vmatprep.subr.mxu0 0.0
    %6426 = vmatpush1.msra.mxu0 0.0
    %6427 = vmatprep.subr.mxu0 0.0
    %6428 = vmatpush1.msra.mxu0 0.0
    %6429 = vmatprep.subr.mxu0 0.0
    %6430 = vmatpush1.msra.mxu0 0.0
    %6431 = vmatprep.subr.mxu0 0.0
    %6432 = vmatpush1.msra.mxu0 0.0
    %6433 = vmatprep.subr.mxu0 0.0
    %6434 = vmatpush1.msra.mxu0 0.0
    %6435 = vmatprep.subr.mxu0 0.0
    %6436 = vmatpush1.msra.mxu0 0.0
    %6437 = vmatprep.subr.mxu0 0.0
    %6438 = vmatpush1.msra.mxu0 0.0
    %6439 = vmatprep.subr.mxu0 0.0
    %6440 = vmatpush1.msra.mxu0 0.0
    %6441 = vmatprep.subr.mxu0 0.0
    %6442 = vmatpush1.msra.mxu0 0.0
    %6443 = vmatprep.subr.mxu0 0.0
    %6444 = vmatpush1.msra.mxu0 0.0
    %6445 = vmatprep.subr.mxu0 0.0
    %6446 = vmatpush1.msra.mxu0 0.0
    %6447 = vmatprep.subr.mxu0 0.0
    %6448 = vmatpush1.msra.mxu0 0.0
    %6449 = vmatprep.subr.mxu0 0.0
    %6450 = vmatpush1.msra.mxu0 0.0
    %6451 = vmatprep.subr.mxu0 0.0
    %6452 = vmatpush1.msra.mxu0 0.0
    %6453 = vmatprep.subr.mxu0 0.0
    %6454 = vmatpush1.msra.mxu0 0.0
    %6455 = vmatprep.subr.mxu0 0.0
    %6456 = vmatpush1.msra.mxu0 0.0
    %6457 = vmatprep.subr.mxu0 0.0
    %6458 = vmatpush1.msra.mxu0 0.0
    %6459 = vmatprep.subr.mxu0 0.0
    %6460 = vmatpush1.msra.mxu0 0.0
    %6461 = vmatprep.subr.mxu0 0.0
    %6462 = vmatpush1.msra.mxu0 0.0
    %6463 = vmatprep.subr.mxu0 0.0
    %6464 = vmatpush1.msra.mxu0 0.0
    %6465 = vmatprep.subr.mxu0 0.0
    %6466 = vmatpush1.msra.mxu0 0.0
    %6467 = vmatprep.subr.mxu0 0.0
    %6468 = vmatpush1.msra.mxu0 0.0
    %6469 = vmatprep.mubr.f32.mxu0 0.0
    %6470 = vmatmul.mubr.f32.gmra.mrb[0].mxu0 %v6031
    %v6471 = vpop.f32.mrb[0].mxu0
    %v6472 = vadd.f32 %v4508, %v6471
    %v6473 = vpop.f32.mrb[0].mxu0
    %6474 = vdwg.mxu0
    %6475 = vmatprep.subr.mxu0 0.0
    %6476 = vmatpush1.msra.mxu0 %v4581
    %6477 = vmatprep.subr.mxu0 0.0
    %6478 = vmatpush1.msra.mxu0 %v4582
    %6479 = vmatprep.subr.mxu0 0.0
    %6480 = vmatpush1.msra.mxu0 %v4583
    %6481 = vmatprep.subr.mxu0 0.0
    %6482 = vmatpush1.msra.mxu0 %v4584
    %6483 = vmatprep.subr.mxu0 0.0
    %6484 = vmatpush1.msra.mxu0 0.0
    %6485 = vmatprep.subr.mxu0 0.0
    %6486 = vmatpush1.msra.mxu0 0.0
    %6487 = vmatprep.subr.mxu0 0.0
    %6488 = vmatpush1.msra.mxu0 0.0
    %6489 = vmatprep.subr.mxu0 0.0
    %6490 = vmatpush1.msra.mxu0 0.0
    %6491 = vmatprep.subr.mxu0 0.0
    %6492 = vmatpush1.msra.mxu0 0.0
    %6493 = vmatprep.subr.mxu0 0.0
    %6494 = vmatpush1.msra.mxu0 0.0
    %6495 = vmatprep.subr.mxu0 0.0
    %6496 = vmatpush1.msra.mxu0 0.0
    %6497 = vmatprep.subr.mxu0 0.0
    %6498 = vmatpush1.msra.mxu0 0.0
    %6499 = vmatprep.subr.mxu0 0.0
    %6500 = vmatpush1.msra.mxu0 0.0
    %6501 = vmatprep.subr.mxu0 0.0
    %6502 = vmatpush1.msra.mxu0 0.0
    %6503 = vmatprep.subr.mxu0 0.0
    %6504 = vmatpush1.msra.mxu0 0.0
    %6505 = vmatprep.subr.mxu0 0.0
    %6506 = vmatpush1.msra.mxu0 0.0
    %6507 = vmatprep.subr.mxu0 0.0
    %6508 = vmatpush1.msra.mxu0 0.0
    %6509 = vmatprep.subr.mxu0 0.0
    %6510 = vmatpush1.msra.mxu0 0.0
    %6511 = vmatprep.subr.mxu0 0.0
    %6512 = vmatpush1.msra.mxu0 0.0
    %6513 = vmatprep.subr.mxu0 0.0
    %6514 = vmatpush1.msra.mxu0 0.0
    %6515 = vmatprep.subr.mxu0 0.0
    %6516 = vmatpush1.msra.mxu0 0.0
    %6517 = vmatprep.subr.mxu0 0.0
    %6518 = vmatpush1.msra.mxu0 0.0
    %6519 = vmatprep.subr.mxu0 0.0
    %6520 = vmatpush1.msra.mxu0 0.0
    %6521 = vmatprep.subr.mxu0 0.0
    %6522 = vmatpush1.msra.mxu0 0.0
    %6523 = vmatprep.subr.mxu0 0.0
    %6524 = vmatpush1.msra.mxu0 0.0
    %6525 = vmatprep.subr.mxu0 0.0
    %6526 = vmatpush1.msra.mxu0 0.0
    %6527 = vmatprep.subr.mxu0 0.0
    %6528 = vmatpush1.msra.mxu0 0.0
    %6529 = vmatprep.subr.mxu0 0.0
    %6530 = vmatpush1.msra.mxu0 0.0
    %6531 = vmatprep.subr.mxu0 0.0
    %6532 = vmatpush1.msra.mxu0 0.0
    %6533 = vmatprep.subr.mxu0 0.0
    %6534 = vmatpush1.msra.mxu0 0.0
    %6535 = vmatprep.subr.mxu0 0.0
    %6536 = vmatpush1.msra.mxu0 0.0
    %6537 = vmatprep.subr.mxu0 0.0
    %6538 = vmatpush1.msra.mxu0 0.0
    %6539 = vmatprep.mubr.f32.mxu0 0.0
    %6540 = vmatmul.mubr.f32.gmra.mrb[0].mxu0 %v6031
    %v6541 = vpop.f32.mrb[0].mxu0
    %v6542 = vadd.f32 %v4591, %v6541
    %v6543 = vpop.f32.mrb[0].mxu0
    %6544 = vdwg.mxu0
    %6545 = vmatprep.subr.mxu0 0.0
    %6546 = vmatpush1.msra.mxu0 %v4664
    %6547 = vmatprep.subr.mxu0 0.0
    %6548 = vmatpush1.msra.mxu0 %v4665
    %6549 = vmatprep.subr.mxu0 0.0
    %6550 = vmatpush1.msra.mxu0 %v4666
    %6551 = vmatprep.subr.mxu0 0.0
    %6552 = vmatpush1.msra.mxu0 %v4667
    %6553 = vmatprep.subr.mxu0 0.0
    %6554 = vmatpush1.msra.mxu0 0.0
    %6555 = vmatprep.subr.mxu0 0.0
    %6556 = vmatpush1.msra.mxu0 0.0
    %6557 = vmatprep.subr.mxu0 0.0
    %6558 = vmatpush1.msra.mxu0 0.0
    %6559 = vmatprep.subr.mxu0 0.0
    %6560 = vmatpush1.msra.mxu0 0.0
    %6561 = vmatprep.subr.mxu0 0.0
    %6562 = vmatpush1.msra.mxu0 0.0
    %6563 = vmatprep.subr.mxu0 0.0
    %6564 = vmatpush1.msra.mxu0 0.0
    %6565 = vmatprep.subr.mxu0 0.0
    %6566 = vmatpush1.msra.mxu0 0.0
    %6567 = vmatprep.subr.mxu0 0.0
    %6568 = vmatpush1.msra.mxu0 0.0
    %6569 = vmatprep.subr.mxu0 0.0
    %6570 = vmatpush1.msra.mxu0 0.0
    %6571 = vmatprep.subr.mxu0 0.0
    %6572 = vmatpush1.msra.mxu0 0.0
    %6573 = vmatprep.subr.mxu0 0.0
    %6574 = vmatpush1.msra.mxu0 0.0
    %6575 = vmatprep.subr.mxu0 0.0
    %6576 = vmatpush1.msra.mxu0 0.0
    %6577 = vmatprep.subr.mxu0 0.0
    %6578 = vmatpush1.msra.mxu0 0.0
    %6579 = vmatprep.subr.mxu0 0.0
    %6580 = vmatpush1.msra.mxu0 0.0
    %6581 = vmatprep.subr.mxu0 0.0
    %6582 = vmatpush1.msra.mxu0 0.0
    %6583 = vmatprep.subr.mxu0 0.0
    %6584 = vmatpush1.msra.mxu0 0.0
    %6585 = vmatprep.subr.mxu0 0.0
    %6586 = vmatpush1.msra.mxu0 0.0
    %6587 = vmatprep.subr.mxu0 0.0
    %6588 = vmatpush1.msra.mxu0 0.0
    %6589 = vmatprep.subr.mxu0 0.0
    %6590 = vmatpush1.msra.mxu0 0.0
    %6591 = vmatprep.subr.mxu0 0.0
    %6592 = vmatpush1.msra.mxu0 0.0
    %6593 = vmatprep.subr.mxu0 0.0
    %6594 = vmatpush1.msra.mxu0 0.0
    %6595 = vmatprep.subr.mxu0 0.0
    %6596 = vmatpush1.msra.mxu0 0.0
    %6597 = vmatprep.subr.mxu0 0.0
    %6598 = vmatpush1.msra.mxu0 0.0
    %6599 = vmatprep.subr.mxu0 0.0
    %6600 = vmatpush1.msra.mxu0 0.0
    %6601 = vmatprep.subr.mxu0 0.0
    %6602 = vmatpush1.msra.mxu0 0.0
    %6603 = vmatprep.subr.mxu0 0.0
    %6604 = vmatpush1.msra.mxu0 0.0
    %6605 = vmatprep.subr.mxu0 0.0
    %6606 = vmatpush1.msra.mxu0 0.0
    %6607 = vmatprep.subr.mxu0 0.0
    %6608 = vmatpush1.msra.mxu0 0.0
    %6609 = vmatprep.mubr.f32.mxu0 0.0
    %6610 = vmatmul.mubr.f32.gmra.mrb[0].mxu0 %v6031
    %v6611 = vpop.f32.mrb[0].mxu0
    %v6612 = vadd.f32 %v4674, %v6611
    %v6613 = vpop.f32.mrb[0].mxu0
    %6614 = vdwg.mxu0
    %v6616 = vsel %vm304, %v6472, 0
    %v6619 = vsel %vm304, %v6542, 0
    %6621 = vmatprep.subr.mxu0 0.0
    %6622 = vmatpush1.xpose.msra.mxu0 %v6619
    %6623 = vmatprep.subr.mxu0 0.0
    %6624 = vmatpush1.xpose.msra.mxu0 0.0
    %6625 = vmatprep.subr.mxu0 0.0
    %6626 = vmatpush1.xpose.msra.mxu0 0.0
    %6627 = vmatprep.subr.mxu0 0.0
    %6628 = vmatpush1.xpose.msra.mxu0 0.0
    %6629 = vmatprep.subr.mxu0 0.0
    %6630 = vmatpush1.xpose.msra.mxu0 0.0
    %6631 = vmatprep.subr.mxu0 0.0
    %6632 = vmatpush1.xpose.msra.mxu0 0.0
    %6633 = vmatprep.subr.mxu0 0.0
    %6634 = vmatpush1.xpose.msra.mxu0 0.0
    %6635 = vmatprep.subr.mxu0 0.0
    %6636 = vmatpush1.xpose.msra.mxu0 0.0
    %6637 = vmatprep.subr.mxu0 0.0
    %6638 = vmatpush1.xpose.msra.mxu0 0.0
    %6639 = vmatprep.subr.mxu0 0.0
    %6640 = vmatpush1.xpose.msra.mxu0 0.0
    %6641 = vmatprep.subr.mxu0 0.0
    %6642 = vmatpush1.xpose.msra.mxu0 0.0
    %6643 = vmatprep.subr.mxu0 0.0
    %6644 = vmatpush1.xpose.msra.mxu0 0.0
    %6645 = vmatprep.subr.mxu0 0.0
    %6646 = vmatpush1.xpose.msra.mxu0 0.0
    %6647 = vmatprep.subr.mxu0 0.0
    %6648 = vmatpush1.xpose.msra.mxu0 0.0
    %6649 = vmatprep.subr.mxu0 0.0
    %6650 = vmatpush1.xpose.msra.mxu0 0.0
    %6651 = vmatprep.subr.mxu0 0.0
    %6652 = vmatpush1.xpose.msra.mxu0 0.0
    %6653 = vmatprep.subr.mxu0 0.0
    %6654 = vmatpush1.xpose.msra.mxu0 0.0
    %6655 = vmatprep.subr.mxu0 0.0
    %6656 = vmatpush1.xpose.msra.mxu0 0.0
    %6657 = vmatprep.subr.mxu0 0.0
    %6658 = vmatpush1.xpose.msra.mxu0 0.0
    %6659 = vmatprep.subr.mxu0 0.0
    %6660 = vmatpush1.xpose.msra.mxu0 0.0
    %6661 = vmatprep.subr.mxu0 0.0
    %6662 = vmatpush1.xpose.msra.mxu0 0.0
    %6663 = vmatprep.subr.mxu0 0.0
    %6664 = vmatpush1.xpose.msra.mxu0 0.0
    %6665 = vmatprep.subr.mxu0 0.0
    %6666 = vmatpush1.xpose.msra.mxu0 0.0
    %6667 = vmatprep.subr.mxu0 0.0
    %6668 = vmatpush1.xpose.msra.mxu0 0.0
    %6669 = vmatprep.subr.mxu0 0.0
    %6670 = vmatpush1.xpose.msra.mxu0 0.0
    %6671 = vmatprep.subr.mxu0 0.0
    %6672 = vmatpush1.xpose.msra.mxu0 0.0
    %6673 = vmatprep.subr.mxu0 0.0
    %6674 = vmatpush1.xpose.msra.mxu0 0.0
    %6675 = vmatprep.subr.mxu0 0.0
    %6676 = vmatpush1.xpose.msra.mxu0 0.0
    %6677 = vmatprep.subr.mxu0 0.0
    %6678 = vmatpush1.xpose.msra.mxu0 0.0
    %6679 = vmatprep.subr.mxu0 0.0
    %6680 = vmatpush1.xpose.msra.mxu0 0.0
    %6681 = vmatprep.subr.mxu0 0.0
    %6682 = vmatpush1.xpose.msra.mxu0 0.0
    %6683 = vmatprep.subr.mxu0 0.0
    %6684 = vmatpush1.xpose.msra.mxu0 0.0
    %6685 = vmatprep.mubr.f32.mxu0 0.0
    %6686 = vmatmul.mubr.f32.gmra.mrb[0].mxu0 %v6616
    %v6687 = vpop.f32.mrb[0].mxu0
    %v6688 = vadd.f32 0.0, %v6687
    %v6689 = vpop.f32.mrb[0].mxu0
    %6690 = vdwg.mxu0
    %v6691 = vmul.f32 %v6688, 0.35355338
    %v6692 = vadd.f32 %v6691, %v2002
    %v6693 = vsel %vm304, %v6692, -inf
    %6694 = vmax.xlane.f32.xlu0 %v6693
    %v6695 = vpop.xlane.xlu0 %6694
    %v6696 = vsub.f32 %v6692, %v6695
    %v6697 = vmul.f32 %v6696, 1.442695
    %v6698 = vpow.pop %v6697
    %v6699 = vsel %vm304, %v6698, 0.0
    %6700 = vadd.xlane.f32.xlu0 %v6699
    %v6701 = vpop.xlane.xlu0 %6700
    %v6702 = vrcp.pop %v6701
    %v6703 = vmul.f32 %v6698, %v6702
    %v6705 = vsel %vm304, %v6703, 0
    %6707 = vmatprep.subr.mxu0 0.0
    %6708 = vmatpush1.msra.mxu0 %v6612
    %6709 = vmatprep.subr.mxu0 0.0
    %6710 = vmatpush1.msra.mxu0 0.0
    %6711 = vmatprep.subr.mxu0 0.0
    %6712 = vmatpush1.msra.mxu0 0.0
    %6713 = vmatprep.subr.mxu0 0.0
    %6714 = vmatpush1.msra.mxu0 0.0
    %6715 = vmatprep.subr.mxu0 0.0
    %6716 = vmatpush1.msra.mxu0 0.0
    %6717 = vmatprep.subr.mxu0 0.0
    %6718 = vmatpush1.msra.mxu0 0.0
    %6719 = vmatprep.subr.mxu0 0.0
    %6720 = vmatpush1.msra.mxu0 0.0
    %6721 = vmatprep.subr.mxu0 0.0
    %6722 = vmatpush1.msra.mxu0 0.0
    %6723 = vmatprep.subr.mxu0 0.0
    %6724 = vmatpush1.msra.mxu0 0.0
    %6725 = vmatprep.subr.mxu0 0.0
    %6726 = vmatpush1.msra.mxu0 0.0
    %6727 = vmatprep.subr.mxu0 0.0
    %6728 = vmatpush1.msra.mxu0 0.0
    %6729 = vmatprep.subr.mxu0 0.0
    %6730 = vmatpush1.msra.mxu0 0.0
    %6731 = vmatprep.subr.mxu0 0.0
    %6732 = vmatpush1.msra.mxu0 0.0
    %6733 = vmatprep.subr.mxu0 0.0
    %6734 = vmatpush1.msra.mxu0 0.0
    %6735 = vmatprep.subr.mxu0 0.0
    %6736 = vmatpush1.msra.mxu0 0.0
    %6737 = vmatprep.subr.mxu0 0.0
    %6738 = vmatpush1.msra.mxu0 0.0
    %6739 = vmatprep.subr.mxu0 0.0
    %6740 = vmatpush1.msra.mxu0 0.0
    %6741 = vmatprep.subr.mxu0 0.0
    %6742 = vmatpush1.msra.mxu0 0.0
    %6743 = vmatprep.subr.mxu0 0.0
    %6744 = vmatpush1.msra.mxu0 0.0
    %6745 = vmatprep.subr.mxu0 0.0
    %6746 = vmatpush1.msra.mxu0 0.0
    %6747 = vmatprep.subr.mxu0 0.0
    %6748 = vmatpush1.msra.mxu0 0.0
    %6749 = vmatprep.subr.mxu0 0.0
    %6750 = vmatpush1.msra.mxu0 0.0
    %6751 = vmatprep.subr.mxu0 0.0
    %6752 = vmatpush1.msra.mxu0 0.0
    %6753 = vmatprep.subr.mxu0 0.0
    %6754 = vmatpush1.msra.mxu0 0.0
    %6755 = vmatprep.subr.mxu0 0.0
    %6756 = vmatpush1.msra.mxu0 0.0
    %6757 = vmatprep.subr.mxu0 0.0
    %6758 = vmatpush1.msra.mxu0 0.0
    %6759 = vmatprep.subr.mxu0 0.0
    %6760 = vmatpush1.msra.mxu0 0.0
    %6761 = vmatprep.subr.mxu0 0.0
    %6762 = vmatpush1.msra.mxu0 0.0
    %6763 = vmatprep.subr.mxu0 0.0
    %6764 = vmatpush1.msra.mxu0 0.0
    %6765 = vmatprep.subr.mxu0 0.0
    %6766 = vmatpush1.msra.mxu0 0.0
    %6767 = vmatprep.subr.mxu0 0.0
    %6768 = vmatpush1.msra.mxu0 0.0
    %6769 = vmatprep.subr.mxu0 0.0
    %6770 = vmatpush1.msra.mxu0 0.0
    %6771 = vmatprep.mubr.f32.mxu0 0.0
    %6772 = vmatmul.mubr.f32.gmra.mrb[0].mxu0 %v6705
    %v6773 = vpop.f32.mrb[0].mxu0
    %v6774 = vadd.f32 0.0, %v6773
    %v6775 = vpop.f32.mrb[0].mxu0
    %6776 = vdwg.mxu0
    %v6778 = vsel %vm304, %v6774, 0
    %6780 = vmatprep.subr.mxu0 0.0
    %6781 = vmatpush1.msra.mxu0 %v4909
    %6782 = vmatprep.subr.mxu0 0.0
    %6783 = vmatpush1.msra.mxu0 0.0
    %6784 = vmatprep.subr.mxu0 0.0
    %6785 = vmatpush1.msra.mxu0 0.0
    %6786 = vmatprep.subr.mxu0 0.0
    %6787 = vmatpush1.msra.mxu0 0.0
    %6788 = vmatprep.subr.mxu0 0.0
    %6789 = vmatpush1.msra.mxu0 0.0
    %6790 = vmatprep.subr.mxu0 0.0
    %6791 = vmatpush1.msra.mxu0 0.0
    %6792 = vmatprep.subr.mxu0 0.0
    %6793 = vmatpush1.msra.mxu0 0.0
    %6794 = vmatprep.subr.mxu0 0.0
    %6795 = vmatpush1.msra.mxu0 0.0
    %6796 = vmatprep.subr.mxu0 0.0
    %6797 = vmatpush1.msra.mxu0 0.0
    %6798 = vmatprep.subr.mxu0 0.0
    %6799 = vmatpush1.msra.mxu0 0.0
    %6800 = vmatprep.subr.mxu0 0.0
    %6801 = vmatpush1.msra.mxu0 0.0
    %6802 = vmatprep.subr.mxu0 0.0
    %6803 = vmatpush1.msra.mxu0 0.0
    %6804 = vmatprep.subr.mxu0 0.0
    %6805 = vmatpush1.msra.mxu0 0.0
    %6806 = vmatprep.subr.mxu0 0.0
    %6807 = vmatpush1.msra.mxu0 0.0
    %6808 = vmatprep.subr.mxu0 0.0
    %6809 = vmatpush1.msra.mxu0 0.0
    %6810 = vmatprep.subr.mxu0 0.0
    %6811 = vmatpush1.msra.mxu0 0.0
    %6812 = vmatprep.subr.mxu0 0.0
    %6813 = vmatpush1.msra.mxu0 0.0
    %6814 = vmatprep.subr.mxu0 0.0
    %6815 = vmatpush1.msra.mxu0 0.0
    %6816 = vmatprep.subr.mxu0 0.0
    %6817 = vmatpush1.msra.mxu0 0.0
    %6818 = vmatprep.subr.mxu0 0.0
    %6819 = vmatpush1.msra.mxu0 0.0
    %6820 = vmatprep.subr.mxu0 0.0
    %6821 = vmatpush1.msra.mxu0 0.0
    %6822 = vmatprep.subr.mxu0 0.0
    %6823 = vmatpush1.msra.mxu0 0.0
    %6824 = vmatprep.subr.mxu0 0.0
    %6825 = vmatpush1.msra.mxu0 0.0
    %6826 = vmatprep.subr.mxu0 0.0
    %6827 = vmatpush1.msra.mxu0 0.0
    %6828 = vmatprep.subr.mxu0 0.0
    %6829 = vmatpush1.msra.mxu0 0.0
    %6830 = vmatprep.subr.mxu0 0.0
    %6831 = vmatpush1.msra.mxu0 0.0
    %6832 = vmatprep.subr.mxu0 0.0
    %6833 = vmatpush1.msra.mxu0 0.0
    %6834 = vmatprep.subr.mxu0 0.0
    %6835 = vmatpush1.msra.mxu0 0.0
    %6836 = vmatprep.subr.mxu0 0.0
    %6837 = vmatpush1.msra.mxu0 0.0
    %6838 = vmatprep.subr.mxu0 0.0
    %6839 = vmatpush1.msra.mxu0 0.0
    %6840 = vmatprep.subr.mxu0 0.0
    %6841 = vmatpush1.msra.mxu0 0.0
    %6842 = vmatprep.subr.mxu0 0.0
    %6843 = vmatpush1.msra.mxu0 0.0
    %6844 = vmatprep.mubr.f32.mxu0 0.0
    %6845 = vmatmul.mubr.f32.gmra.mrb[0].mxu0 %v6778
    %v6846 = vpop.f32.mrb[0].mxu0
    %v6847 = vadd.f32 0.0, %v6846
    %v6848 = vpop.f32.mrb[0].mxu0
    %6849 = vdwg.mxu0
    %v6851 = vsel %vm304, %v6402, 0
    %6853 = vmatprep.subr.mxu0 0.0
    %6854 = vmatpush1.msra.mxu0 %v4496
    %6855 = vmatprep.subr.mxu0 0.0
    %6856 = vmatpush1.msra.mxu0 0.0
    %6857 = vmatprep.subr.mxu0 0.0
    %6858 = vmatpush1.msra.mxu0 0.0
    %6859 = vmatprep.subr.mxu0 0.0
    %6860 = vmatpush1.msra.mxu0 0.0
    %6861 = vmatprep.subr.mxu0 0.0
    %6862 = vmatpush1.msra.mxu0 0.0
    %6863 = vmatprep.subr.mxu0 0.0
    %6864 = vmatpush1.msra.mxu0 0.0
    %6865 = vmatprep.subr.mxu0 0.0
    %6866 = vmatpush1.msra.mxu0 0.0
    %6867 = vmatprep.subr.mxu0 0.0
    %6868 = vmatpush1.msra.mxu0 0.0
    %6869 = vmatprep.subr.mxu0 0.0
    %6870 = vmatpush1.msra.mxu0 0.0
    %6871 = vmatprep.subr.mxu0 0.0
    %6872 = vmatpush1.msra.mxu0 0.0
    %6873 = vmatprep.subr.mxu0 0.0
    %6874 = vmatpush1.msra.mxu0 0.0
    %6875 = vmatprep.subr.mxu0 0.0
    %6876 = vmatpush1.msra.mxu0 0.0
    %6877 = vmatprep.subr.mxu0 0.0
    %6878 = vmatpush1.msra.mxu0 0.0
    %6879 = vmatprep.subr.mxu0 0.0
    %6880 = vmatpush1.msra.mxu0 0.0
    %6881 = vmatprep.subr.mxu0 0.0
    %6882 = vmatpush1.msra.mxu0 0.0
    %6883 = vmatprep.subr.mxu0 0.0
    %6884 = vmatpush1.msra.mxu0 0.0
    %6885 = vmatprep.subr.mxu0 0.0
    %6886 = vmatpush1.msra.mxu0 0.0
    %6887 = vmatprep.subr.mxu0 0.0
    %6888 = vmatpush1.msra.mxu0 0.0
    %6889 = vmatprep.subr.mxu0 0.0
    %6890 = vmatpush1.msra.mxu0 0.0
    %6891 = vmatprep.subr.mxu0 0.0
    %6892 = vmatpush1.msra.mxu0 0.0
    %6893 = vmatprep.subr.mxu0 0.0
    %6894 = vmatpush1.msra.mxu0 0.0
    %6895 = vmatprep.subr.mxu0 0.0
    %6896 = vmatpush1.msra.mxu0 0.0
    %6897 = vmatprep.subr.mxu0 0.0
    %6898 = vmatpush1.msra.mxu0 0.0
    %6899 = vmatprep.subr.mxu0 0.0
    %6900 = vmatpush1.msra.mxu0 0.0
    %6901 = vmatprep.subr.mxu0 0.0
    %6902 = vmatpush1.msra.mxu0 0.0
    %6903 = vmatprep.subr.mxu0 0.0
    %6904 = vmatpush1.msra.mxu0 0.0
    %6905 = vmatprep.subr.mxu0 0.0
    %6906 = vmatpush1.msra.mxu0 0.0
    %6907 = vmatprep.subr.mxu0 0.0
    %6908 = vmatpush1.msra.mxu0 0.0
    %6909 = vmatprep.subr.mxu0 0.0
    %6910 = vmatpush1.msra.mxu0 0.0
    %6911 = vmatprep.subr.mxu0 0.0
    %6912 = vmatpush1.msra.mxu0 0.0
    %6913 = vmatprep.subr.mxu0 0.0
    %6914 = vmatpush1.msra.mxu0 0.0
    %6915 = vmatprep.subr.mxu0 0.0
    %6916 = vmatpush1.msra.mxu0 0.0
    %6917 = vmatprep.mubr.f32.mxu0 0.0
    %6918 = vmatmul.mubr.f32.gmra.mrb[0].mxu0 %v6851
    %v6919 = vpop.f32.mrb[0].mxu0
    %v6920 = vadd.f32 %v6847, %v6919
    %v6921 = vpop.f32.mrb[0].mxu0
    %6922 = vdwg.mxu0
    %6923 = vmatprep.subr.mxu0 0.0
    %6924 = vmatpush1.msra.mxu0 %v5057
    %6925 = vmatprep.subr.mxu0 0.0
    %6926 = vmatpush1.msra.mxu0 %v5058
    %6927 = vmatprep.subr.mxu0 0.0
    %6928 = vmatpush1.msra.mxu0 %v5059
    %6929 = vmatprep.subr.mxu0 0.0
    %6930 = vmatpush1.msra.mxu0 %v5060
    %6931 = vmatprep.subr.mxu0 0.0
    %6932 = vmatpush1.msra.mxu0 0.0
    %6933 = vmatprep.subr.mxu0 0.0
    %6934 = vmatpush1.msra.mxu0 0.0
    %6935 = vmatprep.subr.mxu0 0.0
    %6936 = vmatpush1.msra.mxu0 0.0
    %6937 = vmatprep.subr.mxu0 0.0
    %6938 = vmatpush1.msra.mxu0 0.0
    %6939 = vmatprep.subr.mxu0 0.0
    %6940 = vmatpush1.msra.mxu0 0.0
    %6941 = vmatprep.subr.mxu0 0.0
    %6942 = vmatpush1.msra.mxu0 0.0
    %6943 = vmatprep.subr.mxu0 0.0
    %6944 = vmatpush1.msra.mxu0 0.0
    %6945 = vmatprep.subr.mxu0 0.0
    %6946 = vmatpush1.msra.mxu0 0.0
    %6947 = vmatprep.subr.mxu0 0.0
    %6948 = vmatpush1.msra.mxu0 0.0
    %6949 = vmatprep.subr.mxu0 0.0
    %6950 = vmatpush1.msra.mxu0 0.0
    %6951 = vmatprep.subr.mxu0 0.0
    %6952 = vmatpush1.msra.mxu0 0.0
    %6953 = vmatprep.subr.mxu0 0.0
    %6954 = vmatpush1.msra.mxu0 0.0
    %6955 = vmatprep.subr.mxu0 0.0
    %6956 = vmatpush1.msra.mxu0 0.0
    %6957 = vmatprep.subr.mxu0 0.0
    %6958 = vmatpush1.msra.mxu0 0.0
    %6959 = vmatprep.subr.mxu0 0.0
    %6960 = vmatpush1.msra.mxu0 0.0
    %6961 = vmatprep.subr.mxu0 0.0
    %6962 = vmatpush1.msra.mxu0 0.0
    %6963 = vmatprep.subr.mxu0 0.0
    %6964 = vmatpush1.msra.mxu0 0.0
    %6965 = vmatprep.subr.mxu0 0.0
    %6966 = vmatpush1.msra.mxu0 0.0
    %6967 = vmatprep.subr.mxu0 0.0
    %6968 = vmatpush1.msra.mxu0 0.0
    %6969 = vmatprep.subr.mxu0 0.0
    %6970 = vmatpush1.msra.mxu0 0.0
    %6971 = vmatprep.subr.mxu0 0.0
    %6972 = vmatpush1.msra.mxu0 0.0
    %6973 = vmatprep.subr.mxu0 0.0
    %6974 = vmatpush1.msra.mxu0 0.0
    %6975 = vmatprep.subr.mxu0 0.0
    %6976 = vmatpush1.msra.mxu0 0.0
    %6977 = vmatprep.subr.mxu0 0.0
    %6978 = vmatpush1.msra.mxu0 0.0
    %6979 = vmatprep.subr.mxu0 0.0
    %6980 = vmatpush1.msra.mxu0 0.0
    %6981 = vmatprep.subr.mxu0 0.0
    %6982 = vmatpush1.msra.mxu0 0.0
    %6983 = vmatprep.subr.mxu0 0.0
    %6984 = vmatpush1.msra.mxu0 0.0
    %6985 = vmatprep.subr.mxu0 0.0
    %6986 = vmatpush1.msra.mxu0 0.0
    %6987 = vmatprep.mubr.f32.mxu0 0.0
    %6988 = vmatmul.mubr.f32.gmra.mrb[0].mxu0 %v6031
    %v6989 = vpop.f32.mrb[0].mxu0
    %v6990 = vadd.f32 %v5067, %v6989
    %v6991 = vpop.f32.mrb[0].mxu0
    %6992 = vdwg.mxu0
    %6993 = vmatprep.subr.mxu0 0.0
    %6994 = vmatpush1.msra.mxu0 %v5140
    %6995 = vmatprep.subr.mxu0 0.0
    %6996 = vmatpush1.msra.mxu0 %v5141
    %6997 = vmatprep.subr.mxu0 0.0
    %6998 = vmatpush1.msra.mxu0 %v5142
    %6999 = vmatprep.subr.mxu0 0.0
    %7000 = vmatpush1.msra.mxu0 %v5143
    %7001 = vmatprep.subr.mxu0 0.0
    %7002 = vmatpush1.msra.mxu0 0.0
    %7003 = vmatprep.subr.mxu0 0.0
    %7004 = vmatpush1.msra.mxu0 0.0
    %7005 = vmatprep.subr.mxu0 0.0
    %7006 = vmatpush1.msra.mxu0 0.0
    %7007 = vmatprep.subr.mxu0 0.0
    %7008 = vmatpush1.msra.mxu0 0.0
    %7009 = vmatprep.subr.mxu0 0.0
    %7010 = vmatpush1.msra.mxu0 0.0
    %7011 = vmatprep.subr.mxu0 0.0
    %7012 = vmatpush1.msra.mxu0 0.0
    %7013 = vmatprep.subr.mxu0 0.0
    %7014 = vmatpush1.msra.mxu0 0.0
    %7015 = vmatprep.subr.mxu0 0.0
    %7016 = vmatpush1.msra.mxu0 0.0
    %7017 = vmatprep.subr.mxu0 0.0
    %7018 = vmatpush1.msra.mxu0 0.0
    %7019 = vmatprep.subr.mxu0 0.0
    %7020 = vmatpush1.msra.mxu0 0.0
    %7021 = vmatprep.subr.mxu0 0.0
    %7022 = vmatpush1.msra.mxu0 0.0
    %7023 = vmatprep.subr.mxu0 0.0
    %7024 = vmatpush1.msra.mxu0 0.0
    %7025 = vmatprep.subr.mxu0 0.0
    %7026 = vmatpush1.msra.mxu0 0.0
    %7027 = vmatprep.subr.mxu0 0.0
    %7028 = vmatpush1.msra.mxu0 0.0
    %7029 = vmatprep.subr.mxu0 0.0
    %7030 = vmatpush1.msra.mxu0 0.0
    %7031 = vmatprep.subr.mxu0 0.0
    %7032 = vmatpush1.msra.mxu0 0.0
    %7033 = vmatprep.subr.mxu0 0.0
    %7034 = vmatpush1.msra.mxu0 0.0
    %7035 = vmatprep.subr.mxu0 0.0
    %7036 = vmatpush1.msra.mxu0 0.0
    %7037 = vmatprep.subr.mxu0 0.0
    %7038 = vmatpush1.msra.mxu0 0.0
    %7039 = vmatprep.subr.mxu0 0.0
    %7040 = vmatpush1.msra.mxu0 0.0
    %7041 = vmatprep.subr.mxu0 0.0
    %7042 = vmatpush1.msra.mxu0 0.0
    %7043 = vmatprep.subr.mxu0 0.0
    %7044 = vmatpush1.msra.mxu0 0.0
    %7045 = vmatprep.subr.mxu0 0.0
    %7046 = vmatpush1.msra.mxu0 0.0
    %7047 = vmatprep.subr.mxu0 0.0
    %7048 = vmatpush1.msra.mxu0 0.0
    %7049 = vmatprep.subr.mxu0 0.0
    %7050 = vmatpush1.msra.mxu0 0.0
    %7051 = vmatprep.subr.mxu0 0.0
    %7052 = vmatpush1.msra.mxu0 0.0
    %7053 = vmatprep.subr.mxu0 0.0
    %7054 = vmatpush1.msra.mxu0 0.0
    %7055 = vmatprep.subr.mxu0 0.0
    %7056 = vmatpush1.msra.mxu0 0.0
    %7057 = vmatprep.mubr.f32.mxu0 0.0
    %7058 = vmatmul.mubr.f32.gmra.mrb[0].mxu0 %v6031
    %v7059 = vpop.f32.mrb[0].mxu0
    %v7060 = vadd.f32 %v5150, %v7059
    %v7061 = vpop.f32.mrb[0].mxu0
    %7062 = vdwg.mxu0
    %7063 = vmatprep.subr.mxu0 0.0
    %7064 = vmatpush1.msra.mxu0 %v5223
    %7065 = vmatprep.subr.mxu0 0.0
    %7066 = vmatpush1.msra.mxu0 %v5224
    %7067 = vmatprep.subr.mxu0 0.0
    %7068 = vmatpush1.msra.mxu0 %v5225
    %7069 = vmatprep.subr.mxu0 0.0
    %7070 = vmatpush1.msra.mxu0 %v5226
    %7071 = vmatprep.subr.mxu0 0.0
    %7072 = vmatpush1.msra.mxu0 0.0
    %7073 = vmatprep.subr.mxu0 0.0
    %7074 = vmatpush1.msra.mxu0 0.0
    %7075 = vmatprep.subr.mxu0 0.0
    %7076 = vmatpush1.msra.mxu0 0.0
    %7077 = vmatprep.subr.mxu0 0.0
    %7078 = vmatpush1.msra.mxu0 0.0
    %7079 = vmatprep.subr.mxu0 0.0
    %7080 = vmatpush1.msra.mxu0 0.0
    %7081 = vmatprep.subr.mxu0 0.0
    %7082 = vmatpush1.msra.mxu0 0.0
    %7083 = vmatprep.subr.mxu0 0.0
    %7084 = vmatpush1.msra.mxu0 0.0
    %7085 = vmatprep.subr.mxu0 0.0
    %7086 = vmatpush1.msra.mxu0 0.0
    %7087 = vmatprep.subr.mxu0 0.0
    %7088 = vmatpush1.msra.mxu0 0.0
    %7089 = vmatprep.subr.mxu0 0.0
    %7090 = vmatpush1.msra.mxu0 0.0
    %7091 = vmatprep.subr.mxu0 0.0
    %7092 = vmatpush1.msra.mxu0 0.0
    %7093 = vmatprep.subr.mxu0 0.0
    %7094 = vmatpush1.msra.mxu0 0.0
    %7095 = vmatprep.subr.mxu0 0.0
    %7096 = vmatpush1.msra.mxu0 0.0
    %7097 = vmatprep.subr.mxu0 0.0
    %7098 = vmatpush1.msra.mxu0 0.0
    %7099 = vmatprep.subr.mxu0 0.0
    %7100 = vmatpush1.msra.mxu0 0.0
    %7101 = vmatprep.subr.mxu0 0.0
    %7102 = vmatpush1.msra.mxu0 0.0
    %7103 = vmatprep.subr.mxu0 0.0
    %7104 = vmatpush1.msra.mxu0 0.0
    %7105 = vmatprep.subr.mxu0 0.0
    %7106 = vmatpush1.msra.mxu0 0.0
    %7107 = vmatprep.subr.mxu0 0.0
    %7108 = vmatpush1.msra.mxu0 0.0
    %7109 = vmatprep.subr.mxu0 0.0
    %7110 = vmatpush1.msra.mxu0 0.0
    %7111 = vmatprep.subr.mxu0 0.0
    %7112 = vmatpush1.msra.mxu0 0.0
    %7113 = vmatprep.subr.mxu0 0.0
    %7114 = vmatpush1.msra.mxu0 0.0
    %7115 = vmatprep.subr.mxu0 0.0
    %7116 = vmatpush1.msra.mxu0 0.0
    %7117 = vmatprep.subr.mxu0 0.0
    %7118 = vmatpush1.msra.mxu0 0.0
    %7119 = vmatprep.subr.mxu0 0.0
    %7120 = vmatpush1.msra.mxu0 0.0
    %7121 = vmatprep.subr.mxu0 0.0
    %7122 = vmatpush1.msra.mxu0 0.0
    %7123 = vmatprep.subr.mxu0 0.0
    %7124 = vmatpush1.msra.mxu0 0.0
    %7125 = vmatprep.subr.mxu0 0.0
    %7126 = vmatpush1.msra.mxu0 0.0
    %7127 = vmatprep.mubr.f32.mxu0 0.0
    %7128 = vmatmul.mubr.f32.gmra.mrb[0].mxu0 %v6031
    %v7129 = vpop.f32.mrb[0].mxu0
    %v7130 = vadd.f32 %v5233, %v7129
    %v7131 = vpop.f32.mrb[0].mxu0
    %7132 = vdwg.mxu0
    %v7134 = vsel %vm304, %v6990, 0
    %v7137 = vsel %vm304, %v7060, 0
    %7139 = vmatprep.subr.mxu0 0.0
    %7140 = vmatpush1.xpose.msra.mxu0 %v7137
    %7141 = vmatprep.subr.mxu0 0.0
    %7142 = vmatpush1.xpose.msra.mxu0 0.0
    %7143 = vmatprep.subr.mxu0 0.0
    %7144 = vmatpush1.xpose.msra.mxu0 0.0
    %7145 = vmatprep.subr.mxu0 0.0
    %7146 = vmatpush1.xpose.msra.mxu0 0.0
    %7147 = vmatprep.subr.mxu0 0.0
    %7148 = vmatpush1.xpose.msra.mxu0 0.0
    %7149 = vmatprep.subr.mxu0 0.0
    %7150 = vmatpush1.xpose.msra.mxu0 0.0
    %7151 = vmatprep.subr.mxu0 0.0
    %7152 = vmatpush1.xpose.msra.mxu0 0.0
    %7153 = vmatprep.subr.mxu0 0.0
    %7154 = vmatpush1.xpose.msra.mxu0 0.0
    %7155 = vmatprep.subr.mxu0 0.0
    %7156 = vmatpush1.xpose.msra.mxu0 0.0
    %7157 = vmatprep.subr.mxu0 0.0
    %7158 = vmatpush1.xpose.msra.mxu0 0.0
    %7159 = vmatprep.subr.mxu0 0.0
    %7160 = vmatpush1.xpose.msra.mxu0 0.0
    %7161 = vmatprep.subr.mxu0 0.0
    %7162 = vmatpush1.xpose.msra.mxu0 0.0
    %7163 = vmatprep.subr.mxu0 0.0
    %7164 = vmatpush1.xpose.msra.mxu0 0.0
    %7165 = vmatprep.subr.mxu0 0.0
    %7166 = vmatpush1.xpose.msra.mxu0 0.0
    %7167 = vmatprep.subr.mxu0 0.0
    %7168 = vmatpush1.xpose.msra.mxu0 0.0
    %7169 = vmatprep.subr.mxu0 0.0
    %7170 = vmatpush1.xpose.msra.mxu0 0.0
    %7171 = vmatprep.subr.mxu0 0.0
    %7172 = vmatpush1.xpose.msra.mxu0 0.0
    %7173 = vmatprep.subr.mxu0 0.0
    %7174 = vmatpush1.xpose.msra.mxu0 0.0
    %7175 = vmatprep.subr.mxu0 0.0
    %7176 = vmatpush1.xpose.msra.mxu0 0.0
    %7177 = vmatprep.subr.mxu0 0.0
    %7178 = vmatpush1.xpose.msra.mxu0 0.0
    %7179 = vmatprep.subr.mxu0 0.0
    %7180 = vmatpush1.xpose.msra.mxu0 0.0
    %7181 = vmatprep.subr.mxu0 0.0
    %7182 = vmatpush1.xpose.msra.mxu0 0.0
    %7183 = vmatprep.subr.mxu0 0.0
    %7184 = vmatpush1.xpose.msra.mxu0 0.0
    %7185 = vmatprep.subr.mxu0 0.0
    %7186 = vmatpush1.xpose.msra.mxu0 0.0
    %7187 = vmatprep.subr.mxu0 0.0
    %7188 = vmatpush1.xpose.msra.mxu0 0.0
    %7189 = vmatprep.subr.mxu0 0.0
    %7190 = vmatpush1.xpose.msra.mxu0 0.0
    %7191 = vmatprep.subr.mxu0 0.0
    %7192 = vmatpush1.xpose.msra.mxu0 0.0
    %7193 = vmatprep.subr.mxu0 0.0
    %7194 = vmatpush1.xpose.msra.mxu0 0.0
    %7195 = vmatprep.subr.mxu0 0.0
    %7196 = vmatpush1.xpose.msra.mxu0 0.0
    %7197 = vmatprep.subr.mxu0 0.0
    %7198 = vmatpush1.xpose.msra.mxu0 0.0
    %7199 = vmatprep.subr.mxu0 0.0
    %7200 = vmatpush1.xpose.msra.mxu0 0.0
    %7201 = vmatprep.subr.mxu0 0.0
    %7202 = vmatpush1.xpose.msra.mxu0 0.0
    %7203 = vmatprep.mubr.f32.mxu0 0.0
    %7204 = vmatmul.mubr.f32.gmra.mrb[0].mxu0 %v7134
    %v7205 = vpop.f32.mrb[0].mxu0
    %v7206 = vadd.f32 0.0, %v7205
    %v7207 = vpop.f32.mrb[0].mxu0
    %7208 = vdwg.mxu0
    %v7209 = vmul.f32 %v7206, 0.35355338
    %v7210 = vadd.f32 %v7209, %v2002
    %v7211 = vsel %vm304, %v7210, -inf
    %7212 = vmax.xlane.f32.xlu0 %v7211
    %v7213 = vpop.xlane.xlu0 %7212
    %v7214 = vsub.f32 %v7210, %v7213
    %v7215 = vmul.f32 %v7214, 1.442695
    %v7216 = vpow.pop %v7215
    %v7217 = vsel %vm304, %v7216, 0.0
    %7218 = vadd.xlane.f32.xlu0 %v7217
    %v7219 = vpop.xlane.xlu0 %7218
    %v7220 = vrcp.pop %v7219
    %v7221 = vmul.f32 %v7216, %v7220
    %v7223 = vsel %vm304, %v7221, 0
    %7225 = vmatprep.subr.mxu0 0.0
    %7226 = vmatpush1.msra.mxu0 %v7130
    %7227 = vmatprep.subr.mxu0 0.0
    %7228 = vmatpush1.msra.mxu0 0.0
    %7229 = vmatprep.subr.mxu0 0.0
    %7230 = vmatpush1.msra.mxu0 0.0
    %7231 = vmatprep.subr.mxu0 0.0
    %7232 = vmatpush1.msra.mxu0 0.0
    %7233 = vmatprep.subr.mxu0 0.0
    %7234 = vmatpush1.msra.mxu0 0.0
    %7235 = vmatprep.subr.mxu0 0.0
    %7236 = vmatpush1.msra.mxu0 0.0
    %7237 = vmatprep.subr.mxu0 0.0
    %7238 = vmatpush1.msra.mxu0 0.0
    %7239 = vmatprep.subr.mxu0 0.0
    %7240 = vmatpush1.msra.mxu0 0.0
    %7241 = vmatprep.subr.mxu0 0.0
    %7242 = vmatpush1.msra.mxu0 0.0
    %7243 = vmatprep.subr.mxu0 0.0
    %7244 = vmatpush1.msra.mxu0 0.0
    %7245 = vmatprep.subr.mxu0 0.0
    %7246 = vmatpush1.msra.mxu0 0.0
    %7247 = vmatprep.subr.mxu0 0.0
    %7248 = vmatpush1.msra.mxu0 0.0
    %7249 = vmatprep.subr.mxu0 0.0
    %7250 = vmatpush1.msra.mxu0 0.0
    %7251 = vmatprep.subr.mxu0 0.0
    %7252 = vmatpush1.msra.mxu0 0.0
    %7253 = vmatprep.subr.mxu0 0.0
    %7254 = vmatpush1.msra.mxu0 0.0
    %7255 = vmatprep.subr.mxu0 0.0
    %7256 = vmatpush1.msra.mxu0 0.0
    %7257 = vmatprep.subr.mxu0 0.0
    %7258 = vmatpush1.msra.mxu0 0.0
    %7259 = vmatprep.subr.mxu0 0.0
    %7260 = vmatpush1.msra.mxu0 0.0
    %7261 = vmatprep.subr.mxu0 0.0
    %7262 = vmatpush1.msra.mxu0 0.0
    %7263 = vmatprep.subr.mxu0 0.0
    %7264 = vmatpush1.msra.mxu0 0.0
    %7265 = vmatprep.subr.mxu0 0.0
    %7266 = vmatpush1.msra.mxu0 0.0
    %7267 = vmatprep.subr.mxu0 0.0
    %7268 = vmatpush1.msra.mxu0 0.0
    %7269 = vmatprep.subr.mxu0 0.0
    %7270 = vmatpush1.msra.mxu0 0.0
    %7271 = vmatprep.subr.mxu0 0.0
    %7272 = vmatpush1.msra.mxu0 0.0
    %7273 = vmatprep.subr.mxu0 0.0
    %7274 = vmatpush1.msra.mxu0 0.0
    %7275 = vmatprep.subr.mxu0 0.0
    %7276 = vmatpush1.msra.mxu0 0.0
    %7277 = vmatprep.subr.mxu0 0.0
    %7278 = vmatpush1.msra.mxu0 0.0
    %7279 = vmatprep.subr.mxu0 0.0
    %7280 = vmatpush1.msra.mxu0 0.0
    %7281 = vmatprep.subr.mxu0 0.0
    %7282 = vmatpush1.msra.mxu0 0.0
    %7283 = vmatprep.subr.mxu0 0.0
    %7284 = vmatpush1.msra.mxu0 0.0
    %7285 = vmatprep.subr.mxu0 0.0
    %7286 = vmatpush1.msra.mxu0 0.0
    %7287 = vmatprep.subr.mxu0 0.0
    %7288 = vmatpush1.msra.mxu0 0.0
    %7289 = vmatprep.mubr.f32.mxu0 0.0
    %7290 = vmatmul.mubr.f32.gmra.mrb[0].mxu0 %v7223
    %v7291 = vpop.f32.mrb[0].mxu0
    %v7292 = vadd.f32 0.0, %v7291
    %v7293 = vpop.f32.mrb[0].mxu0
    %7294 = vdwg.mxu0
    %v7296 = vsel %vm304, %v7292, 0
    %7298 = vmatprep.subr.mxu0 0.0
    %7299 = vmatpush1.msra.mxu0 %v5468
    %7300 = vmatprep.subr.mxu0 0.0
    %7301 = vmatpush1.msra.mxu0 0.0
    %7302 = vmatprep.subr.mxu0 0.0
    %7303 = vmatpush1.msra.mxu0 0.0
    %7304 = vmatprep.subr.mxu0 0.0
    %7305 = vmatpush1.msra.mxu0 0.0
    %7306 = vmatprep.subr.mxu0 0.0
    %7307 = vmatpush1.msra.mxu0 0.0
    %7308 = vmatprep.subr.mxu0 0.0
    %7309 = vmatpush1.msra.mxu0 0.0
    %7310 = vmatprep.subr.mxu0 0.0
    %7311 = vmatpush1.msra.mxu0 0.0
    %7312 = vmatprep.subr.mxu0 0.0
    %7313 = vmatpush1.msra.mxu0 0.0
    %7314 = vmatprep.subr.mxu0 0.0
    %7315 = vmatpush1.msra.mxu0 0.0
    %7316 = vmatprep.subr.mxu0 0.0
    %7317 = vmatpush1.msra.mxu0 0.0
    %7318 = vmatprep.subr.mxu0 0.0
    %7319 = vmatpush1.msra.mxu0 0.0
    %7320 = vmatprep.subr.mxu0 0.0
    %7321 = vmatpush1.msra.mxu0 0.0
    %7322 = vmatprep.subr.mxu0 0.0
    %7323 = vmatpush1.msra.mxu0 0.0
    %7324 = vmatprep.subr.mxu0 0.0
    %7325 = vmatpush1.msra.mxu0 0.0
    %7326 = vmatprep.subr.mxu0 0.0
    %7327 = vmatpush1.msra.mxu0 0.0
    %7328 = vmatprep.subr.mxu0 0.0
    %7329 = vmatpush1.msra.mxu0 0.0
    %7330 = vmatprep.subr.mxu0 0.0
    %7331 = vmatpush1.msra.mxu0 0.0
    %7332 = vmatprep.subr.mxu0 0.0
    %7333 = vmatpush1.msra.mxu0 0.0
    %7334 = vmatprep.subr.mxu0 0.0
    %7335 = vmatpush1.msra.mxu0 0.0
    %7336 = vmatprep.subr.mxu0 0.0
    %7337 = vmatpush1.msra.mxu0 0.0
    %7338 = vmatprep.subr.mxu0 0.0
    %7339 = vmatpush1.msra.mxu0 0.0
    %7340 = vmatprep.subr.mxu0 0.0
    %7341 = vmatpush1.msra.mxu0 0.0
    %7342 = vmatprep.subr.mxu0 0.0
    %7343 = vmatpush1.msra.mxu0 0.0
    %7344 = vmatprep.subr.mxu0 0.0
    %7345 = vmatpush1.msra.mxu0 0.0
    %7346 = vmatprep.subr.mxu0 0.0
    %7347 = vmatpush1.msra.mxu0 0.0
    %7348 = vmatprep.subr.mxu0 0.0
    %7349 = vmatpush1.msra.mxu0 0.0
    %7350 = vmatprep.subr.mxu0 0.0
    %7351 = vmatpush1.msra.mxu0 0.0
    %7352 = vmatprep.subr.mxu0 0.0
    %7353 = vmatpush1.msra.mxu0 0.0
    %7354 = vmatprep.subr.mxu0 0.0
    %7355 = vmatpush1.msra.mxu0 0.0
    %7356 = vmatprep.subr.mxu0 0.0
    %7357 = vmatpush1.msra.mxu0 0.0
    %7358 = vmatprep.subr.mxu0 0.0
    %7359 = vmatpush1.msra.mxu0 0.0
    %7360 = vmatprep.subr.mxu0 0.0
    %7361 = vmatpush1.msra.mxu0 0.0
    %7362 = vmatprep.mubr.f32.mxu0 0.0
    %7363 = vmatmul.mubr.f32.gmra.mrb[0].mxu0 %v7296
    %v7364 = vpop.f32.mrb[0].mxu0
    %v7365 = vadd.f32 0.0, %v7364
    %v7366 = vpop.f32.mrb[0].mxu0
    %7367 = vdwg.mxu0
    %v7368 = vadd.f32 %v6920, %v7365
    %7369 = vmatprep.subr.mxu0 0.0
    %7370 = vmatpush1.msra.mxu0 %v5544
    %7371 = vmatprep.subr.mxu0 0.0
    %7372 = vmatpush1.msra.mxu0 %v5545
    %7373 = vmatprep.subr.mxu0 0.0
    %7374 = vmatpush1.msra.mxu0 %v5546
    %7375 = vmatprep.subr.mxu0 0.0
    %7376 = vmatpush1.msra.mxu0 %v5547
    %7377 = vmatprep.subr.mxu0 0.0
    %7378 = vmatpush1.msra.mxu0 0.0
    %7379 = vmatprep.subr.mxu0 0.0
    %7380 = vmatpush1.msra.mxu0 0.0
    %7381 = vmatprep.subr.mxu0 0.0
    %7382 = vmatpush1.msra.mxu0 0.0
    %7383 = vmatprep.subr.mxu0 0.0
    %7384 = vmatpush1.msra.mxu0 0.0
    %7385 = vmatprep.subr.mxu0 0.0
    %7386 = vmatpush1.msra.mxu0 0.0
    %7387 = vmatprep.subr.mxu0 0.0
    %7388 = vmatpush1.msra.mxu0 0.0
    %7389 = vmatprep.subr.mxu0 0.0
    %7390 = vmatpush1.msra.mxu0 0.0
    %7391 = vmatprep.subr.mxu0 0.0
    %7392 = vmatpush1.msra.mxu0 0.0
    %7393 = vmatprep.subr.mxu0 0.0
    %7394 = vmatpush1.msra.mxu0 0.0
    %7395 = vmatprep.subr.mxu0 0.0
    %7396 = vmatpush1.msra.mxu0 0.0
    %7397 = vmatprep.subr.mxu0 0.0
    %7398 = vmatpush1.msra.mxu0 0.0
    %7399 = vmatprep.subr.mxu0 0.0
    %7400 = vmatpush1.msra.mxu0 0.0
    %7401 = vmatprep.subr.mxu0 0.0
    %7402 = vmatpush1.msra.mxu0 0.0
    %7403 = vmatprep.subr.mxu0 0.0
    %7404 = vmatpush1.msra.mxu0 0.0
    %7405 = vmatprep.subr.mxu0 0.0
    %7406 = vmatpush1.msra.mxu0 0.0
    %7407 = vmatprep.subr.mxu0 0.0
    %7408 = vmatpush1.msra.mxu0 0.0
    %7409 = vmatprep.subr.mxu0 0.0
    %7410 = vmatpush1.msra.mxu0 0.0
    %7411 = vmatprep.subr.mxu0 0.0
    %7412 = vmatpush1.msra.mxu0 0.0
    %7413 = vmatprep.subr.mxu0 0.0
    %7414 = vmatpush1.msra.mxu0 0.0
    %7415 = vmatprep.subr.mxu0 0.0
    %7416 = vmatpush1.msra.mxu0 0.0
    %7417 = vmatprep.subr.mxu0 0.0
    %7418 = vmatpush1.msra.mxu0 0.0
    %7419 = vmatprep.subr.mxu0 0.0
    %7420 = vmatpush1.msra.mxu0 0.0
    %7421 = vmatprep.subr.mxu0 0.0
    %7422 = vmatpush1.msra.mxu0 0.0
    %7423 = vmatprep.subr.mxu0 0.0
    %7424 = vmatpush1.msra.mxu0 0.0
    %7425 = vmatprep.subr.mxu0 0.0
    %7426 = vmatpush1.msra.mxu0 0.0
    %7427 = vmatprep.subr.mxu0 0.0
    %7428 = vmatpush1.msra.mxu0 0.0
    %7429 = vmatprep.subr.mxu0 0.0
    %7430 = vmatpush1.msra.mxu0 0.0
    %7431 = vmatprep.subr.mxu0 0.0
    %7432 = vmatpush1.msra.mxu0 0.0
    %7433 = vmatprep.mubr.f32.mxu0 0.0
    %7434 = vmatmul.mubr.f32.gmra.mrb[0].mxu0 %v6031
    %v7435 = vpop.f32.mrb[0].mxu0
    %v7436 = vadd.f32 %v5554, %v7435
    %v7437 = vpop.f32.mrb[0].mxu0
    %7438 = vdwg.mxu0
    %7439 = vmatprep.subr.mxu0 0.0
    %7440 = vmatpush1.msra.mxu0 %v5627
    %7441 = vmatprep.subr.mxu0 0.0
    %7442 = vmatpush1.msra.mxu0 %v5628
    %7443 = vmatprep.subr.mxu0 0.0
    %7444 = vmatpush1.msra.mxu0 %v5629
    %7445 = vmatprep.subr.mxu0 0.0
    %7446 = vmatpush1.msra.mxu0 %v5630
    %7447 = vmatprep.subr.mxu0 0.0
    %7448 = vmatpush1.msra.mxu0 0.0
    %7449 = vmatprep.subr.mxu0 0.0
    %7450 = vmatpush1.msra.mxu0 0.0
    %7451 = vmatprep.subr.mxu0 0.0
    %7452 = vmatpush1.msra.mxu0 0.0
    %7453 = vmatprep.subr.mxu0 0.0
    %7454 = vmatpush1.msra.mxu0 0.0
    %7455 = vmatprep.subr.mxu0 0.0
    %7456 = vmatpush1.msra.mxu0 0.0
    %7457 = vmatprep.subr.mxu0 0.0
    %7458 = vmatpush1.msra.mxu0 0.0
    %7459 = vmatprep.subr.mxu0 0.0
    %7460 = vmatpush1.msra.mxu0 0.0
    %7461 = vmatprep.subr.mxu0 0.0
    %7462 = vmatpush1.msra.mxu0 0.0
    %7463 = vmatprep.subr.mxu0 0.0
    %7464 = vmatpush1.msra.mxu0 0.0
    %7465 = vmatprep.subr.mxu0 0.0
    %7466 = vmatpush1.msra.mxu0 0.0
    %7467 = vmatprep.subr.mxu0 0.0
    %7468 = vmatpush1.msra.mxu0 0.0
    %7469 = vmatprep.subr.mxu0 0.0
    %7470 = vmatpush1.msra.mxu0 0.0
    %7471 = vmatprep.subr.mxu0 0.0
    %7472 = vmatpush1.msra.mxu0 0.0
    %7473 = vmatprep.subr.mxu0 0.0
    %7474 = vmatpush1.msra.mxu0 0.0
    %7475 = vmatprep.subr.mxu0 0.0
    %7476 = vmatpush1.msra.mxu0 0.0
    %7477 = vmatprep.subr.mxu0 0.0
    %7478 = vmatpush1.msra.mxu0 0.0
    %7479 = vmatprep.subr.mxu0 0.0
    %7480 = vmatpush1.msra.mxu0 0.0
    %7481 = vmatprep.subr.mxu0 0.0
    %7482 = vmatpush1.msra.mxu0 0.0
    %7483 = vmatprep.subr.mxu0 0.0
    %7484 = vmatpush1.msra.mxu0 0.0
    %7485 = vmatprep.subr.mxu0 0.0
    %7486 = vmatpush1.msra.mxu0 0.0
    %7487 = vmatprep.subr.mxu0 0.0
    %7488 = vmatpush1.msra.mxu0 0.0
    %7489 = vmatprep.subr.mxu0 0.0
    %7490 = vmatpush1.msra.mxu0 0.0
    %7491 = vmatprep.subr.mxu0 0.0
    %7492 = vmatpush1.msra.mxu0 0.0
    %7493 = vmatprep.subr.mxu0 0.0
    %7494 = vmatpush1.msra.mxu0 0.0
    %7495 = vmatprep.subr.mxu0 0.0
    %7496 = vmatpush1.msra.mxu0 0.0
    %7497 = vmatprep.subr.mxu0 0.0
    %7498 = vmatpush1.msra.mxu0 0.0
    %7499 = vmatprep.subr.mxu0 0.0
    %7500 = vmatpush1.msra.mxu0 0.0
    %7501 = vmatprep.subr.mxu0 0.0
    %7502 = vmatpush1.msra.mxu0 0.0
    %7503 = vmatprep.mubr.f32.mxu0 0.0
    %7504 = vmatmul.mubr.f32.gmra.mrb[0].mxu0 %v6031
    %v7505 = vpop.f32.mrb[0].mxu0
    %v7506 = vadd.f32 %v5637, %v7505
    %v7507 = vpop.f32.mrb[0].mxu0
    %7508 = vdwg.mxu0
    %7509 = vmatprep.subr.mxu0 0.0
    %7510 = vmatpush1.msra.mxu0 %v5710
    %7511 = vmatprep.subr.mxu0 0.0
    %7512 = vmatpush1.msra.mxu0 %v5711
    %7513 = vmatprep.subr.mxu0 0.0
    %7514 = vmatpush1.msra.mxu0 %v5712
    %7515 = vmatprep.subr.mxu0 0.0
    %7516 = vmatpush1.msra.mxu0 %v5713
    %7517 = vmatprep.subr.mxu0 0.0
    %7518 = vmatpush1.msra.mxu0 0.0
    %7519 = vmatprep.subr.mxu0 0.0
    %7520 = vmatpush1.msra.mxu0 0.0
    %7521 = vmatprep.subr.mxu0 0.0
    %7522 = vmatpush1.msra.mxu0 0.0
    %7523 = vmatprep.subr.mxu0 0.0
    %7524 = vmatpush1.msra.mxu0 0.0
    %7525 = vmatprep.subr.mxu0 0.0
    %7526 = vmatpush1.msra.mxu0 0.0
    %7527 = vmatprep.subr.mxu0 0.0
    %7528 = vmatpush1.msra.mxu0 0.0
    %7529 = vmatprep.subr.mxu0 0.0
    %7530 = vmatpush1.msra.mxu0 0.0
    %7531 = vmatprep.subr.mxu0 0.0
    %7532 = vmatpush1.msra.mxu0 0.0
    %7533 = vmatprep.subr.mxu0 0.0
    %7534 = vmatpush1.msra.mxu0 0.0
    %7535 = vmatprep.subr.mxu0 0.0
    %7536 = vmatpush1.msra.mxu0 0.0
    %7537 = vmatprep.subr.mxu0 0.0
    %7538 = vmatpush1.msra.mxu0 0.0
    %7539 = vmatprep.subr.mxu0 0.0
    %7540 = vmatpush1.msra.mxu0 0.0
    %7541 = vmatprep.subr.mxu0 0.0
    %7542 = vmatpush1.msra.mxu0 0.0
    %7543 = vmatprep.subr.mxu0 0.0
    %7544 = vmatpush1.msra.mxu0 0.0
    %7545 = vmatprep.subr.mxu0 0.0
    %7546 = vmatpush1.msra.mxu0 0.0
    %7547 = vmatprep.subr.mxu0 0.0
    %7548 = vmatpush1.msra.mxu0 0.0
    %7549 = vmatprep.subr.mxu0 0.0
    %7550 = vmatpush1.msra.mxu0 0.0
    %7551 = vmatprep.subr.mxu0 0.0
    %7552 = vmatpush1.msra.mxu0 0.0
    %7553 = vmatprep.subr.mxu0 0.0
    %7554 = vmatpush1.msra.mxu0 0.0
    %7555 = vmatprep.subr.mxu0 0.0
    %7556 = vmatpush1.msra.mxu0 0.0
    %7557 = vmatprep.subr.mxu0 0.0
    %7558 = vmatpush1.msra.mxu0 0.0
    %7559 = vmatprep.subr.mxu0 0.0
    %7560 = vmatpush1.msra.mxu0 0.0
    %7561 = vmatprep.subr.mxu0 0.0
    %7562 = vmatpush1.msra.mxu0 0.0
    %7563 = vmatprep.subr.mxu0 0.0
    %7564 = vmatpush1.msra.mxu0 0.0
    %7565 = vmatprep.subr.mxu0 0.0
    %7566 = vmatpush1.msra.mxu0 0.0
    %7567 = vmatprep.subr.mxu0 0.0
    %7568 = vmatpush1.msra.mxu0 0.0
    %7569 = vmatprep.subr.mxu0 0.0
    %7570 = vmatpush1.msra.mxu0 0.0
    %7571 = vmatprep.subr.mxu0 0.0
    %7572 = vmatpush1.msra.mxu0 0.0
    %7573 = vmatprep.mubr.f32.mxu0 0.0
    %7574 = vmatmul.mubr.f32.gmra.mrb[0].mxu0 %v6031
    %v7575 = vpop.f32.mrb[0].mxu0
    %v7576 = vadd.f32 %v5720, %v7575
    %v7577 = vpop.f32.mrb[0].mxu0
    %7578 = vdwg.mxu0
    %v7580 = vsel %vm304, %v7436, 0
    %v7583 = vsel %vm304, %v7506, 0
    %7585 = vmatprep.subr.mxu0 0.0
    %7586 = vmatpush1.xpose.msra.mxu0 %v7583
    %7587 = vmatprep.subr.mxu0 0.0
    %7588 = vmatpush1.xpose.msra.mxu0 0.0
    %7589 = vmatprep.subr.mxu0 0.0
    %7590 = vmatpush1.xpose.msra.mxu0 0.0
    %7591 = vmatprep.subr.mxu0 0.0
    %7592 = vmatpush1.xpose.msra.mxu0 0.0
    %7593 = vmatprep.subr.mxu0 0.0
    %7594 = vmatpush1.xpose.msra.mxu0 0.0
    %7595 = vmatprep.subr.mxu0 0.0
    %7596 = vmatpush1.xpose.msra.mxu0 0.0
    %7597 = vmatprep.subr.mxu0 0.0
    %7598 = vmatpush1.xpose.msra.mxu0 0.0
    %7599 = vmatprep.subr.mxu0 0.0
    %7600 = vmatpush1.xpose.msra.mxu0 0.0
    %7601 = vmatprep.subr.mxu0 0.0
    %7602 = vmatpush1.xpose.msra.mxu0 0.0
    %7603 = vmatprep.subr.mxu0 0.0
    %7604 = vmatpush1.xpose.msra.mxu0 0.0
    %7605 = vmatprep.subr.mxu0 0.0
    %7606 = vmatpush1.xpose.msra.mxu0 0.0
    %7607 = vmatprep.subr.mxu0 0.0
    %7608 = vmatpush1.xpose.msra.mxu0 0.0
    %7609 = vmatprep.subr.mxu0 0.0
    %7610 = vmatpush1.xpose.msra.mxu0 0.0
    %7611 = vmatprep.subr.mxu0 0.0
    %7612 = vmatpush1.xpose.msra.mxu0 0.0
    %7613 = vmatprep.subr.mxu0 0.0
    %7614 = vmatpush1.xpose.msra.mxu0 0.0
    %7615 = vmatprep.subr.mxu0 0.0
    %7616 = vmatpush1.xpose.msra.mxu0 0.0
    %7617 = vmatprep.subr.mxu0 0.0
    %7618 = vmatpush1.xpose.msra.mxu0 0.0
    %7619 = vmatprep.subr.mxu0 0.0
    %7620 = vmatpush1.xpose.msra.mxu0 0.0
    %7621 = vmatprep.subr.mxu0 0.0
    %7622 = vmatpush1.xpose.msra.mxu0 0.0
    %7623 = vmatprep.subr.mxu0 0.0
    %7624 = vmatpush1.xpose.msra.mxu0 0.0
    %7625 = vmatprep.subr.mxu0 0.0
    %7626 = vmatpush1.xpose.msra.mxu0 0.0
    %7627 = vmatprep.subr.mxu0 0.0
    %7628 = vmatpush1.xpose.msra.mxu0 0.0
    %7629 = vmatprep.subr.mxu0 0.0
    %7630 = vmatpush1.xpose.msra.mxu0 0.0
    %7631 = vmatprep.subr.mxu0 0.0
    %7632 = vmatpush1.xpose.msra.mxu0 0.0
    %7633 = vmatprep.subr.mxu0 0.0
    %7634 = vmatpush1.xpose.msra.mxu0 0.0
    %7635 = vmatprep.subr.mxu0 0.0
    %7636 = vmatpush1.xpose.msra.mxu0 0.0
    %7637 = vmatprep.subr.mxu0 0.0
    %7638 = vmatpush1.xpose.msra.mxu0 0.0
    %7639 = vmatprep.subr.mxu0 0.0
    %7640 = vmatpush1.xpose.msra.mxu0 0.0
    %7641 = vmatprep.subr.mxu0 0.0
    %7642 = vmatpush1.xpose.msra.mxu0 0.0
    %7643 = vmatprep.subr.mxu0 0.0
    %7644 = vmatpush1.xpose.msra.mxu0 0.0
    %7645 = vmatprep.subr.mxu0 0.0
    %7646 = vmatpush1.xpose.msra.mxu0 0.0
    %7647 = vmatprep.subr.mxu0 0.0
    %7648 = vmatpush1.xpose.msra.mxu0 0.0
    %7649 = vmatprep.mubr.f32.mxu0 0.0
    %7650 = vmatmul.mubr.f32.gmra.mrb[0].mxu0 %v7580
    %v7651 = vpop.f32.mrb[0].mxu0
    %v7652 = vadd.f32 0.0, %v7651
    %v7653 = vpop.f32.mrb[0].mxu0
    %7654 = vdwg.mxu0
    %v7655 = vmul.f32 %v7652, 0.35355338
    %v7656 = vadd.f32 %v7655, %v2002
    %v7657 = vsel %vm304, %v7656, -inf
    %7658 = vmax.xlane.f32.xlu0 %v7657
    %v7659 = vpop.xlane.xlu0 %7658
    %v7660 = vsub.f32 %v7656, %v7659
    %v7661 = vmul.f32 %v7660, 1.442695
    %v7662 = vpow.pop %v7661
    %v7663 = vsel %vm304, %v7662, 0.0
    %7664 = vadd.xlane.f32.xlu0 %v7663
    %v7665 = vpop.xlane.xlu0 %7664
    %v7666 = vrcp.pop %v7665
    %v7667 = vmul.f32 %v7662, %v7666
    %v7669 = vsel %vm304, %v7667, 0
    %7671 = vmatprep.subr.mxu0 0.0
    %7672 = vmatpush1.msra.mxu0 %v7576
    %7673 = vmatprep.subr.mxu0 0.0
    %7674 = vmatpush1.msra.mxu0 0.0
    %7675 = vmatprep.subr.mxu0 0.0
    %7676 = vmatpush1.msra.mxu0 0.0
    %7677 = vmatprep.subr.mxu0 0.0
    %7678 = vmatpush1.msra.mxu0 0.0
    %7679 = vmatprep.subr.mxu0 0.0
    %7680 = vmatpush1.msra.mxu0 0.0
    %7681 = vmatprep.subr.mxu0 0.0
    %7682 = vmatpush1.msra.mxu0 0.0
    %7683 = vmatprep.subr.mxu0 0.0
    %7684 = vmatpush1.msra.mxu0 0.0
    %7685 = vmatprep.subr.mxu0 0.0
    %7686 = vmatpush1.msra.mxu0 0.0
    %7687 = vmatprep.subr.mxu0 0.0
    %7688 = vmatpush1.msra.mxu0 0.0
    %7689 = vmatprep.subr.mxu0 0.0
    %7690 = vmatpush1.msra.mxu0 0.0
    %7691 = vmatprep.subr.mxu0 0.0
    %7692 = vmatpush1.msra.mxu0 0.0
    %7693 = vmatprep.subr.mxu0 0.0
    %7694 = vmatpush1.msra.mxu0 0.0
    %7695 = vmatprep.subr.mxu0 0.0
    %7696 = vmatpush1.msra.mxu0 0.0
    %7697 = vmatprep.subr.mxu0 0.0
    %7698 = vmatpush1.msra.mxu0 0.0
    %7699 = vmatprep.subr.mxu0 0.0
    %7700 = vmatpush1.msra.mxu0 0.0
    %7701 = vmatprep.subr.mxu0 0.0
    %7702 = vmatpush1.msra.mxu0 0.0
    %7703 = vmatprep.subr.mxu0 0.0
    %7704 = vmatpush1.msra.mxu0 0.0
    %7705 = vmatprep.subr.mxu0 0.0
    %7706 = vmatpush1.msra.mxu0 0.0
    %7707 = vmatprep.subr.mxu0 0.0
    %7708 = vmatpush1.msra.mxu0 0.0
    %7709 = vmatprep.subr.mxu0 0.0
    %7710 = vmatpush1.msra.mxu0 0.0
    %7711 = vmatprep.subr.mxu0 0.0
    %7712 = vmatpush1.msra.mxu0 0.0
    %7713 = vmatprep.subr.mxu0 0.0
    %7714 = vmatpush1.msra.mxu0 0.0
    %7715 = vmatprep.subr.mxu0 0.0
    %7716 = vmatpush1.msra.mxu0 0.0
    %7717 = vmatprep.subr.mxu0 0.0
    %7718 = vmatpush1.msra.mxu0 0.0
    %7719 = vmatprep.subr.mxu0 0.0
    %7720 = vmatpush1.msra.mxu0 0.0
    %7721 = vmatprep.subr.mxu0 0.0
    %7722 = vmatpush1.msra.mxu0 0.0
    %7723 = vmatprep.subr.mxu0 0.0
    %7724 = vmatpush1.msra.mxu0 0.0
    %7725 = vmatprep.subr.mxu0 0.0
    %7726 = vmatpush1.msra.mxu0 0.0
    %7727 = vmatprep.subr.mxu0 0.0
    %7728 = vmatpush1.msra.mxu0 0.0
    %7729 = vmatprep.subr.mxu0 0.0
    %7730 = vmatpush1.msra.mxu0 0.0
    %7731 = vmatprep.subr.mxu0 0.0
    %7732 = vmatpush1.msra.mxu0 0.0
    %7733 = vmatprep.subr.mxu0 0.0
    %7734 = vmatpush1.msra.mxu0 0.0
    %7735 = vmatprep.mubr.f32.mxu0 0.0
    %7736 = vmatmul.mubr.f32.gmra.mrb[0].mxu0 %v7669
    %v7737 = vpop.f32.mrb[0].mxu0
    %v7738 = vadd.f32 0.0, %v7737
    %v7739 = vpop.f32.mrb[0].mxu0
    %7740 = vdwg.mxu0
    %v7742 = vsel %vm304, %v7738, 0
    %7744 = vmatprep.subr.mxu0 0.0
    %7745 = vmatpush1.msra.mxu0 %v5955
    %7746 = vmatprep.subr.mxu0 0.0
    %7747 = vmatpush1.msra.mxu0 0.0
    %7748 = vmatprep.subr.mxu0 0.0
    %7749 = vmatpush1.msra.mxu0 0.0
    %7750 = vmatprep.subr.mxu0 0.0
    %7751 = vmatpush1.msra.mxu0 0.0
    %7752 = vmatprep.subr.mxu0 0.0
    %7753 = vmatpush1.msra.mxu0 0.0
    %7754 = vmatprep.subr.mxu0 0.0
    %7755 = vmatpush1.msra.mxu0 0.0
    %7756 = vmatprep.subr.mxu0 0.0
    %7757 = vmatpush1.msra.mxu0 0.0
    %7758 = vmatprep.subr.mxu0 0.0
    %7759 = vmatpush1.msra.mxu0 0.0
    %7760 = vmatprep.subr.mxu0 0.0
    %7761 = vmatpush1.msra.mxu0 0.0
    %7762 = vmatprep.subr.mxu0 0.0
    %7763 = vmatpush1.msra.mxu0 0.0
    %7764 = vmatprep.subr.mxu0 0.0
    %7765 = vmatpush1.msra.mxu0 0.0
    %7766 = vmatprep.subr.mxu0 0.0
    %7767 = vmatpush1.msra.mxu0 0.0
    %7768 = vmatprep.subr.mxu0 0.0
    %7769 = vmatpush1.msra.mxu0 0.0
    %7770 = vmatprep.subr.mxu0 0.0
    %7771 = vmatpush1.msra.mxu0 0.0
    %7772 = vmatprep.subr.mxu0 0.0
    %7773 = vmatpush1.msra.mxu0 0.0
    %7774 = vmatprep.subr.mxu0 0.0
    %7775 = vmatpush1.msra.mxu0 0.0
    %7776 = vmatprep.subr.mxu0 0.0
    %7777 = vmatpush1.msra.mxu0 0.0
    %7778 = vmatprep.subr.mxu0 0.0
    %7779 = vmatpush1.msra.mxu0 0.0
    %7780 = vmatprep.subr.mxu0 0.0
    %7781 = vmatpush1.msra.mxu0 0.0
    %7782 = vmatprep.subr.mxu0 0.0
    %7783 = vmatpush1.msra.mxu0 0.0
    %7784 = vmatprep.subr.mxu0 0.0
    %7785 = vmatpush1.msra.mxu0 0.0
    %7786 = vmatprep.subr.mxu0 0.0
    %7787 = vmatpush1.msra.mxu0 0.0
    %7788 = vmatprep.subr.mxu0 0.0
    %7789 = vmatpush1.msra.mxu0 0.0
    %7790 = vmatprep.subr.mxu0 0.0
    %7791 = vmatpush1.msra.mxu0 0.0
    %7792 = vmatprep.subr.mxu0 0.0
    %7793 = vmatpush1.msra.mxu0 0.0
    %7794 = vmatprep.subr.mxu0 0.0
    %7795 = vmatpush1.msra.mxu0 0.0
    %7796 = vmatprep.subr.mxu0 0.0
    %7797 = vmatpush1.msra.mxu0 0.0
    %7798 = vmatprep.subr.mxu0 0.0
    %7799 = vmatpush1.msra.mxu0 0.0
    %7800 = vmatprep.subr.mxu0 0.0
    %7801 = vmatpush1.msra.mxu0 0.0
    %7802 = vmatprep.subr.mxu0 0.0
    %7803 = vmatpush1.msra.mxu0 0.0
    %7804 = vmatprep.subr.mxu0 0.0
    %7805 = vmatpush1.msra.mxu0 0.0
    %7806 = vmatprep.subr.mxu0 0.0
    %7807 = vmatpush1.msra.mxu0 0.0
    %7808 = vmatprep.mubr.f32.mxu0 0.0
    %7809 = vmatmul.mubr.f32.gmra.mrb[0].mxu0 %v7742
    %v7810 = vpop.f32.mrb[0].mxu0
    %v7811 = vadd.f32 0.0, %v7810
    %v7812 = vpop.f32.mrb[0].mxu0
    %7813 = vdwg.mxu0
    %v7814 = vadd.f32 %v7368, %v7811
    %s7815 = scalar_lea.vmem %s5, 1
    %v7816 = vld [vmem:[%s7815] sm:$0x1]
    %v7818 = vlaneseq
    %v7819 = vshrl.u32 %v7818, 7
    %v7820 = vsub.s32 0, %v7819
    %v7821 = vrot.slane %v7816, %v7820
    %v7823 = vadd.f32 %v6029, %v7821
    %v7824 = vadd.f32 %v7814, %v7821
    %v7825 = vadd.f32 %v4079, %v7823
    %v7826 = vadd.f32 %v4080, %v7824
    %s7827 = scalar_lea.vmem %s6, 1
    %v7828 = vld [vmem:[%s7827] sm:$0x1]
    %s7829 = scalar_lea.vmem %s7, 1
    %v7830 = vld [vmem:[%s7829] sm:$0x1]
    %v7831 = vsel %vm64, %v7825, 0.0
    %7832 = vadd.xlane.f32.xlu0 %v7831
    %v7833 = vpop.xlane.xlu0 %7832
    %v7834 = vsel %vm64, %v7826, 0.0
    %7835 = vadd.xlane.f32.xlu0 %v7834
    %v7836 = vpop.xlane.xlu0 %7835
    %v7837 = vmul.f32 %v7833, %v3807
    %v7838 = vmul.f32 %v7836, %v3807
    %v7839 = vsub.f32 %v7825, %v7837
    %v7840 = vsub.f32 %v7826, %v7838
    %v7841 = vmul.f32 %v7839, %v7839
    %v7842 = vmul.f32 %v7840, %v7840
    %v7843 = vsel %vm64, %v7841, 0.0
    %7844 = vadd.xlane.f32.xlu0 %v7843
    %v7845 = vpop.xlane.xlu0 %7844
    %v7846 = vsel %vm64, %v7842, 0.0
    %7847 = vadd.xlane.f32.xlu0 %v7846
    %v7848 = vpop.xlane.xlu0 %7847
    %v7849 = vmul.f32 %v7845, %v3807
    %v7850 = vmul.f32 %v7848, %v3807
    %v7851 = vadd.f32 %v7849, 1e-05
    %v7852 = vadd.f32 %v7850, 1e-05
    %v7853 = vrsqrt.pop %v7851
    %v7854 = vrsqrt.pop %v7852
    %v7855 = vmul.f32 %v7839, %v7853
    %v7856 = vmul.f32 %v7840, %v7854
    %v7858 = vlaneseq
    %v7859 = vshrl.u32 %v7858, 7
    %v7860 = vsub.s32 0, %v7859
    %v7861 = vrot.slane %v7828, %v7860
    %v7863 = vmul.f32 %v7855, %v7861
    %v7864 = vmul.f32 %v7856, %v7861
    %v7866 = vlaneseq
    %v7867 = vshrl.u32 %v7866, 7
    %v7868 = vsub.s32 0, %v7867
    %v7869 = vrot.slane %v7830, %v7868
    %v7871 = vadd.f32 %v7863, %v7869
    %v7872 = vadd.f32 %v7864, %v7869
    %s7873 = scalar_lea.vmem %s8, 32
    %v7874 = vld [vmem:[%s7873] sm:$0xff]
    %v7875 = vld [vmem:[%s7873 + $0x8] sm:$0xff]
    %v7876 = vld [vmem:[%s7873 + $0x10] sm:$0xff]
    %v7877 = vld [vmem:[%s7873 + $0x18] sm:$0xff]
    %s7878 = scalar_lea.vmem %s9, 1
    %v7879 = vld [vmem:[%s7878] sm:$0x1]
    %v7881 = vlaneseq
    %v7882 = vshrl.u32 %v7881, 7
    %v7883 = vsub.s32 0, %v7882
    %v7884 = vrot.slane %v7879, %v7883
    %v7887 = vsel %vm64, %v7871, 0
    %v7890 = vsel %vm64, %v7872, 0
    %7892 = vmatprep.subr.mxu0 0.0
    %7893 = vmatpush1.msra.mxu0 %v7874
    %7894 = vmatprep.subr.mxu0 0.0
    %7895 = vmatpush1.msra.mxu0 %v7875
    %7896 = vmatprep.subr.mxu0 0.0
    %7897 = vmatpush1.msra.mxu0 %v7876
    %7898 = vmatprep.subr.mxu0 0.0
    %7899 = vmatpush1.msra.mxu0 %v7877
    %7900 = vmatprep.subr.mxu0 0.0
    %7901 = vmatpush1.msra.mxu0 0.0
    %7902 = vmatprep.subr.mxu0 0.0
    %7903 = vmatpush1.msra.mxu0 0.0
    %7904 = vmatprep.subr.mxu0 0.0
    %7905 = vmatpush1.msra.mxu0 0.0
    %7906 = vmatprep.subr.mxu0 0.0
    %7907 = vmatpush1.msra.mxu0 0.0
    %7908 = vmatprep.subr.mxu0 0.0
    %7909 = vmatpush1.msra.mxu0 0.0
    %7910 = vmatprep.subr.mxu0 0.0
    %7911 = vmatpush1.msra.mxu0 0.0
    %7912 = vmatprep.subr.mxu0 0.0
    %7913 = vmatpush1.msra.mxu0 0.0
    %7914 = vmatprep.subr.mxu0 0.0
    %7915 = vmatpush1.msra.mxu0 0.0
    %7916 = vmatprep.subr.mxu0 0.0
    %7917 = vmatpush1.msra.mxu0 0.0
    %7918 = vmatprep.subr.mxu0 0.0
    %7919 = vmatpush1.msra.mxu0 0.0
    %7920 = vmatprep.subr.mxu0 0.0
    %7921 = vmatpush1.msra.mxu0 0.0
    %7922 = vmatprep.subr.mxu0 0.0
    %7923 = vmatpush1.msra.mxu0 0.0
    %7924 = vmatprep.subr.mxu0 0.0
    %7925 = vmatpush1.msra.mxu0 0.0
    %7926 = vmatprep.subr.mxu0 0.0
    %7927 = vmatpush1.msra.mxu0 0.0
    %7928 = vmatprep.subr.mxu0 0.0
    %7929 = vmatpush1.msra.mxu0 0.0
    %7930 = vmatprep.subr.mxu0 0.0
    %7931 = vmatpush1.msra.mxu0 0.0
    %7932 = vmatprep.subr.mxu0 0.0
    %7933 = vmatpush1.msra.mxu0 0.0
    %7934 = vmatprep.subr.mxu0 0.0
    %7935 = vmatpush1.msra.mxu0 0.0
    %7936 = vmatprep.subr.mxu0 0.0
    %7937 = vmatpush1.msra.mxu0 0.0
    %7938 = vmatprep.subr.mxu0 0.0
    %7939 = vmatpush1.msra.mxu0 0.0
    %7940 = vmatprep.subr.mxu0 0.0
    %7941 = vmatpush1.msra.mxu0 0.0
    %7942 = vmatprep.subr.mxu0 0.0
    %7943 = vmatpush1.msra.mxu0 0.0
    %7944 = vmatprep.subr.mxu0 0.0
    %7945 = vmatpush1.msra.mxu0 0.0
    %7946 = vmatprep.subr.mxu0 0.0
    %7947 = vmatpush1.msra.mxu0 0.0
    %7948 = vmatprep.subr.mxu0 0.0
    %7949 = vmatpush1.msra.mxu0 0.0
    %7950 = vmatprep.subr.mxu0 0.0
    %7951 = vmatpush1.msra.mxu0 0.0
    %7952 = vmatprep.subr.mxu0 0.0
    %7953 = vmatpush1.msra.mxu0 0.0
    %7954 = vmatprep.subr.mxu0 0.0
    %7955 = vmatpush1.msra.mxu0 0.0
    %7956 = vmatprep.mubr.f32.mxu0 0.0
    %7957 = vmatmul.mubr.f32.gmra.mrb[0].mxu0 %v7887
    %v7958 = vpop.f32.mrb[0].mxu0
    %v7959 = vadd.f32 %v7884, %v7958
    %v7960 = vpop.f32.mrb[0].mxu0
    %7961 = vmatprep.mubr.f32.mxu0 0.0
    %7962 = vmatmul.mubr.f32.gmra.mrb[0].mxu0 %v7890
    %v7963 = vpop.f32.mrb[0].mxu0
    %v7964 = vadd.f32 %v7884, %v7963
    %v7965 = vpop.f32.mrb[0].mxu0
    %7966 = vdwg.mxu0
    %v7967 = vmax.f32 %v7959, 0.0
    %v7968 = vmax.f32 %v7964, 0.0
    %s7969 = scalar_lea.vmem %s10, 64
    %v7970 = vld [vmem:[%s7969] sm:$0xff]
    %v7971 = vld [vmem:[%s7969 + $0x8] sm:$0xff]
    %v7972 = vld [vmem:[%s7969 + $0x10] sm:$0xff]
    %v7973 = vld [vmem:[%s7969 + $0x18] sm:$0xff]
    %v7974 = vld [vmem:[%s7969 + $0x20] sm:$0xff]
    %v7975 = vld [vmem:[%s7969 + $0x28] sm:$0xff]
    %v7976 = vld [vmem:[%s7969 + $0x30] sm:$0xff]
    %v7977 = vld [vmem:[%s7969 + $0x38] sm:$0xff]
    %s7978 = scalar_lea.vmem %s11, 1
    %v7979 = vld [vmem:[%s7978] sm:$0x1]
    %v7981 = vlaneseq
    %v7982 = vshrl.u32 %v7981, 7
    %v7983 = vsub.s32 0, %v7982
    %v7984 = vrot.slane %v7979, %v7983
    %v7987 = vsel %vm3953, %v7967, 0
    %v7990 = vsel %vm3953, %v7968, 0
    %7992 = vmatprep.subr.mxu0 0.0
    %7993 = vmatpush1.msra.mxu0 %v7970
    %7994 = vmatprep.subr.mxu0 0.0
    %7995 = vmatpush1.msra.mxu0 %v7971
    %7996 = vmatprep.subr.mxu0 0.0
    %7997 = vmatpush1.msra.mxu0 %v7972
    %7998 = vmatprep.subr.mxu0 0.0
    %7999 = vmatpush1.msra.mxu0 %v7973
    %8000 = vmatprep.subr.mxu0 0.0
    %8001 = vmatpush1.msra.mxu0 %v7974
    %8002 = vmatprep.subr.mxu0 0.0
    %8003 = vmatpush1.msra.mxu0 %v7975
    %8004 = vmatprep.subr.mxu0 0.0
    %8005 = vmatpush1.msra.mxu0 %v7976
    %8006 = vmatprep.subr.mxu0 0.0
    %8007 = vmatpush1.msra.mxu0 %v7977
    %8008 = vmatprep.subr.mxu0 0.0
    %8009 = vmatpush1.msra.mxu0 0.0
    %8010 = vmatprep.subr.mxu0 0.0
    %8011 = vmatpush1.msra.mxu0 0.0
    %8012 = vmatprep.subr.mxu0 0.0
    %8013 = vmatpush1.msra.mxu0 0.0
    %8014 = vmatprep.subr.mxu0 0.0
    %8015 = vmatpush1.msra.mxu0 0.0
    %8016 = vmatprep.subr.mxu0 0.0
    %8017 = vmatpush1.msra.mxu0 0.0
    %8018 = vmatprep.subr.mxu0 0.0
    %8019 = vmatpush1.msra.mxu0 0.0
    %8020 = vmatprep.subr.mxu0 0.0
    %8021 = vmatpush1.msra.mxu0 0.0
    %8022 = vmatprep.subr.mxu0 0.0
    %8023 = vmatpush1.msra.mxu0 0.0
    %8024 = vmatprep.subr.mxu0 0.0
    %8025 = vmatpush1.msra.mxu0 0.0
    %8026 = vmatprep.subr.mxu0 0.0
    %8027 = vmatpush1.msra.mxu0 0.0
    %8028 = vmatprep.subr.mxu0 0.0
    %8029 = vmatpush1.msra.mxu0 0.0
    %8030 = vmatprep.subr.mxu0 0.0
    %8031 = vmatpush1.msra.mxu0 0.0
    %8032 = vmatprep.subr.mxu0 0.0
    %8033 = vmatpush1.msra.mxu0 0.0
    %8034 = vmatprep.subr.mxu0 0.0
    %8035 = vmatpush1.msra.mxu0 0.0
    %8036 = vmatprep.subr.mxu0 0.0
    %8037 = vmatpush1.msra.mxu0 0.0
    %8038 = vmatprep.subr.mxu0 0.0
    %8039 = vmatpush1.msra.mxu0 0.0
    %8040 = vmatprep.subr.mxu0 0.0
    %8041 = vmatpush1.msra.mxu0 0.0
    %8042 = vmatprep.subr.mxu0 0.0
    %8043 = vmatpush1.msra.mxu0 0.0
    %8044 = vmatprep.subr.mxu0 0.0
    %8045 = vmatpush1.msra.mxu0 0.0
    %8046 = vmatprep.subr.mxu0 0.0
    %8047 = vmatpush1.msra.mxu0 0.0
    %8048 = vmatprep.subr.mxu0 0.0
    %8049 = vmatpush1.msra.mxu0 0.0
    %8050 = vmatprep.subr.mxu0 0.0
    %8051 = vmatpush1.msra.mxu0 0.0
    %8052 = vmatprep.subr.mxu0 0.0
    %8053 = vmatpush1.msra.mxu0 0.0
    %8054 = vmatprep.subr.mxu0 0.0
    %8055 = vmatpush1.msra.mxu0 0.0
    %8056 = vmatprep.mubr.f32.mxu0 0.0
    %8057 = vmatmul.mubr.f32.gmra.mrb[0].mxu0 %v7987
    %v8058 = vpop.f32.mrb[0].mxu0
    %v8059 = vadd.f32 %v7984, %v8058
    %v8060 = vpop.f32.mrb[0].mxu0
    %8061 = vmatprep.mubr.f32.mxu0 0.0
    %8062 = vmatmul.mubr.f32.gmra.mrb[0].mxu0 %v7990
    %v8063 = vpop.f32.mrb[0].mxu0
    %v8064 = vadd.f32 %v7984, %v8063
    %v8065 = vpop.f32.mrb[0].mxu0
    %8066 = vdwg.mxu0
    %v8067 = vadd.f32 %v7871, %v8059
    %v8068 = vadd.f32 %v7872, %v8064
    %s8069 = scalar_lea.vmem %s12, 1
    %v8070 = vld [vmem:[%s8069] sm:$0x1]
    %s8071 = scalar_lea.vmem %s13, 1
    %v8072 = vld [vmem:[%s8071] sm:$0x1]
    %v8073 = vsel %vm64, %v8067, 0.0
    %8074 = vadd.xlane.f32.xlu0 %v8073
    %v8075 = vpop.xlane.xlu0 %8074
    %v8076 = vsel %vm64, %v8068, 0.0
    %8077 = vadd.xlane.f32.xlu0 %v8076
    %v8078 = vpop.xlane.xlu0 %8077
    %v8079 = vmul.f32 %v8075, %v3807
    %v8080 = vmul.f32 %v8078, %v3807
    %v8081 = vsub.f32 %v8067, %v8079
    %v8082 = vsub.f32 %v8068, %v8080
    %v8083 = vmul.f32 %v8081, %v8081
    %v8084 = vmul.f32 %v8082, %v8082
    %v8085 = vsel %vm64, %v8083, 0.0
    %8086 = vadd.xlane.f32.xlu0 %v8085
    %v8087 = vpop.xlane.xlu0 %8086
    %v8088 = vsel %vm64, %v8084, 0.0
    %8089 = vadd.xlane.f32.xlu0 %v8088
    %v8090 = vpop.xlane.xlu0 %8089
    %v8091 = vmul.f32 %v8087, %v3807
    %v8092 = vmul.f32 %v8090, %v3807
    %v8093 = vadd.f32 %v8091, 1e-05
    %v8094 = vadd.f32 %v8092, 1e-05
    %v8095 = vrsqrt.pop %v8093
    %v8096 = vrsqrt.pop %v8094
    %v8097 = vmul.f32 %v8081, %v8095
    %v8098 = vmul.f32 %v8082, %v8096
    %v8100 = vlaneseq
    %v8101 = vshrl.u32 %v8100, 7
    %v8102 = vsub.s32 0, %v8101
    %v8103 = vrot.slane %v8070, %v8102
    %v8105 = vmul.f32 %v8097, %v8103
    %v8106 = vmul.f32 %v8098, %v8103
    %v8108 = vlaneseq
    %v8109 = vshrl.u32 %v8108, 7
    %v8110 = vsub.s32 0, %v8109
    %v8111 = vrot.slane %v8072, %v8110
    %v8113 = vadd.f32 %v8105, %v8111
    %v8114 = vadd.f32 %v8106, %v8111
    %8115 = vst.msk [vmem:[#allocation2] sm:$0xff] %vm64, %v8113
    %8116 = vst.msk [vmem:[#allocation2 + $0x8] sm:$0xff] %vm64, %v8114
    // Predicated region
    $region58: #{output_token_decoder_forward.1} parent=1 // pred_check
      _
    $region59: #{output_token_decoder_forward.1} parent=1 // pred_check_branch
      %8118 = sbr.rel (0) target = $region61
    $region60: #{output_token_decoder_forward.1} parent=1 // pred_region
      %s8120 = ssub.s32 256, 256
      %8121 = vsyncadd [#allocation3], %s8120
      %s8122 = sshll.u32 [#allocation2], 4
      %s8123 = int_to_ptr.vmem [resolvable:$true] %s8122
      %8128 = dma.vmem_to_hbm [thread:$0]  %s8123, 256, %s14, [#allocation3], 128, 128, 8
    $region61: #{output_token_decoder_forward.1} parent=1 // pred_fallthru
      _
    // Predicated region
    $region62: #{output_token_decoder_forward.1} parent=1 // pred_check
      _
    $region63: #{output_token_decoder_forward.1} parent=1 // pred_check_branch
      %8130 = sbr.rel (0) target = $region65
    $region64: #{output_token_decoder_forward.1} parent=1 // pred_region
      %8131 = dma.done [#allocation3], 256
    $region65: #{output_token_decoder_forward.1} parent=1 // pred_fallthru
      _
    %8132 = vsyncpa [#allocation3], 1

</llo_original>
